<compile_context>
chip_gen: v6e
topology: v6e:2x2x1
jax: 0.10.0
libtpu: 0.0.40
codegen_flags: <defaults>
</compile_context>

<pallas_src>
import functools
import math

import jax
import jax.numpy as jnp
from jax.experimental import pallas as pl
from jax.experimental.pallas import tpu as pltpu


# ------------------------------ in-kernel math helpers -----------------------

def _layernorm(x, w, b, eps=1e-5):
    mu = jnp.mean(x, axis=-1, keepdims=True)
    var = jnp.mean((x - mu) ** 2, axis=-1, keepdims=True)
    return (x - mu) * jax.lax.rsqrt(var + eps) * w + b


def _gelu_tanh(x):
    # tanh-approx GELU: keeps the transcendental on the EUP slot instead of a
    # 10-op erf polynomial on the VALU (tiny numeric delta vs exact-erf GELU).
    c = 0.7978845608028654  # sqrt(2/pi)
    return 0.5 * x * (1.0 + jnp.tanh(c * (x + 0.044715 * x * x * x)))


# ------------------------------ tiling helpers --------------------------------

_ROW_TILE = 512          # row tile for conv-GEMM / LN+QKV (mem-bound: bigger is better)
_FFN_ROW_TILE = 256      # fused out-proj+FFN holds a (TM, inner) f32 intermediate
_ATTN_TOKEN_TILE = 2048  # tokens per attention-core grid step (per-step overhead amortized)
_K_TILE = 512            # contraction tile for the conv im2col GEMM
_VMEM_LIMIT = 32 * 1024 * 1024


def _cparams(*sem):
    return pltpu.CompilerParams(dimension_semantics=tuple(sem),
                                vmem_limit_bytes=_VMEM_LIMIT)


def _row_tiling(M, target):
    """(tile, padded_M): tile is a multiple of 8 (or == M when tiny), capped at
    `target`, and chosen to give >= 2 grid steps when possible (v7x megacore)."""
    if M <= 16:
        return M, M
    half = -(-M // 2)
    tm = min(target, -(-half // 8) * 8)
    mp = -(-M // tm) * tm
    return tm, mp


def _attn_row_tiling(M, n, target=_ATTN_TOKEN_TILE):
    """Token-row tile for the attention core: a multiple of lcm(n, 8) so window
    boundaries and the (8,128) sublane rule are both respected; >= 2 grid steps
    when possible and <= `target` tokens per step."""
    lcm = n * 8 // math.gcd(n, 8)
    want = min(target, max((M + 1) // 2, lcm))
    tr = max(lcm, want // lcm * lcm)
    mp = -(-M // tr) * tr
    return tr, mp


def _pad2d(x, rows, cols):
    pr, pc = rows - x.shape[0], cols - x.shape[1]
    if pr == 0 and pc == 0:
        return x
    return jnp.pad(x, ((0, pr), (0, pc)))


# ------------------------------ conv im2col matmul kernel ---------------------

def _matmul_bias_kernel(a_ref, w_ref, b_ref, o_ref, acc_ref):
    @pl.when(pl.program_id(1) == 0)
    def _():
        acc_ref[...] = jnp.zeros_like(acc_ref)

    acc_ref[...] += jnp.dot(a_ref[...], w_ref[...],
                            preferred_element_type=jnp.float32)

    @pl.when(pl.program_id(1) == pl.num_programs(1) - 1)
    def _():
        o_ref[...] = acc_ref[...] + b_ref[...]


def matmul_bias(a, w, b):
    """(M,K)@(K,N)+(N,), tiled over M and (for large K) over K with an f32
    accumulator scratch; bf16 operands, f32 accumulate/output."""
    M, K = a.shape
    _, N = w.shape
    TM, MP = _row_tiling(M, _ROW_TILE)
    if K <= _K_TILE:
        TK, KP = K, K                   # block last dim == full K is always legal
    else:
        TK = _K_TILE                    # multiple of 128 -> lane rule satisfied
        KP = -(-K // TK) * TK
    a = _pad2d(a, MP, KP)
    w = _pad2d(w, KP, N)
    out = pl.pallas_call(
        _matmul_bias_kernel,
        out_shape=jax.ShapeDtypeStruct((MP, N), jnp.float32),
        grid=(MP // TM, KP // TK),
        in_specs=[pl.BlockSpec((TM, TK), lambda i, k: (i, k)),
                  pl.BlockSpec((TK, N), lambda i, k: (k, 0)),
                  pl.BlockSpec((1, N), lambda i, k: (0, 0))],
        out_specs=pl.BlockSpec((TM, N), lambda i, k: (i, 0)),
        scratch_shapes=[pltpu.VMEM((TM, N), jnp.float32)],
        compiler_params=_cparams("parallel", "arbitrary"),
    )(a, w, b.reshape(1, N))
    return out[:M] if MP != M else out


def conv2d_nhwc(x, w, b, stride, padding):
    """PyTorch Conv2d semantics; NHWC activations, weight (Cout, Cin, K, K).
    Note: the 7x7 stem still materializes a 49x im2col patches matrix in HBM;
    a haloed in-kernel accumulation (or lax.conv) would remove that traffic at
    realistic image sizes."""
    B, H, W, Cin = x.shape
    Cout, _, K, _ = w.shape
    Hout = (H + 2 * padding - K) // stride + 1
    Wout = (W + 2 * padding - K) // stride + 1
    xp = jnp.pad(x, ((0, 0), (padding, padding), (padding, padding), (0, 0)))
    cols = []
    for kh in range(K):
        for kw in range(K):
            cols.append(xp[:, kh:kh + stride * (Hout - 1) + 1:stride,
                            kw:kw + stride * (Wout - 1) + 1:stride, :])
    # Channels stay on the minor (lane) axis: no big transpose after the stack.
    patches = jnp.stack(cols, axis=3)                                  # (B,Ho,Wo,KK,Cin)
    patches = patches.reshape(B * Hout * Wout, K * K * Cin).astype(jnp.bfloat16)
    wmat = w.transpose(2, 3, 1, 0).reshape(K * K * Cin, Cout).astype(jnp.bfloat16)
    out = matmul_bias(patches, wmat, b)                                # (M, Cout) f32
    return out.reshape(B, Hout, Wout, Cout)


# ------------------------------ LayerNorm + QKV projection kernel -------------

def _ln_qkv_kernel(x_ref, lnw_ref, lnb_ref, wqkv_ref, o_ref):
    xn = _layernorm(x_ref[...], lnw_ref[...], lnb_ref[...])
    acc = jnp.dot(xn.astype(jnp.bfloat16), wqkv_ref[...],
                  preferred_element_type=jnp.float32)
    o_ref[...] = acc.astype(o_ref.dtype)          # bf16 out: halves HBM traffic


def ln_qkv_proj(x2d, ln_w, ln_b, w_qkv_bf16):
    M, d = x2d.shape
    d3 = w_qkv_bf16.shape[1]
    TM, MP = _row_tiling(M, _ROW_TILE)
    xp = _pad2d(x2d, MP, d)
    out = pl.pallas_call(
        _ln_qkv_kernel,
        out_shape=jax.ShapeDtypeStruct((MP, d3), jnp.bfloat16),
        grid=(MP // TM,),
        in_specs=[pl.BlockSpec((TM, d), lambda i: (i, 0)),
                  pl.BlockSpec((1, d), lambda i: (0, 0)),
                  pl.BlockSpec((1, d), lambda i: (0, 0)),
                  pl.BlockSpec((d, d3), lambda i: (0, 0))],
        out_specs=pl.BlockSpec((TM, d3), lambda i: (i, 0)),
        compiler_params=_cparams("parallel"),
    )(xp, ln_w.reshape(1, d), ln_b.reshape(1, d), w_qkv_bf16)
    return out[:M] if MP != M else out


# ------------------------------ windowed softmax-attention core ---------------
# Lane-dense layout: the kernel reads a (wb*n, 3d) row block (windows are
# contiguous n-row groups), splits heads with static lane slices in-kernel, and
# writes one dense (wb*n, d) block already in head-concat order.

def _attn_core_kernel(qkv_ref, bias_ref, o_ref, *, heads, dim_head, dim, n, wb):
    blk = qkv_ref[...].reshape(wb, n, 3 * dim)            # bf16 (wb, n, 3d)
    outs = []
    for h in range(heads):                                # static unroll (heads is small)
        q = blk[:, :, h * dim_head:(h + 1) * dim_head]
        k = blk[:, :, dim + h * dim_head:dim + (h + 1) * dim_head]
        v = blk[:, :, 2 * dim + h * dim_head:2 * dim + (h + 1) * dim_head]
        sim = jnp.einsum('bid,bjd->bij', q, k,
                         preferred_element_type=jnp.float32)           # (wb, n, n) f32
        sim = sim + bias_ref[h]
        sim = sim - jnp.max(sim, axis=-1, keepdims=True)
        p = jnp.exp(sim)
        attn = p * pl.reciprocal(jnp.sum(p, axis=-1, keepdims=True), approx=True)
        outs.append(jnp.einsum('bij,bjd->bid', attn.astype(jnp.bfloat16), v,
                               preferred_element_type=jnp.float32))    # (wb, n, dh)
    out = jnp.concatenate(outs, axis=-1)                  # (wb, n, d) head-concat order
    o_ref[...] = out.reshape(wb * n, dim).astype(o_ref.dtype)


def window_attention_core(qkv2d, rel_bias, heads, dim_head, dim, n):
    M, d3 = qkv2d.shape
    TR, MP = _attn_row_tiling(M, n)
    qkv_p = _pad2d(qkv2d, MP, d3)                         # zero rows -> finite softmax
    kernel = functools.partial(_attn_core_kernel, heads=heads, dim_head=dim_head,
                               dim=dim, n=n, wb=TR // n)
    out = pl.pallas_call(
        kernel,
        out_shape=jax.ShapeDtypeStruct((MP, dim), jnp.bfloat16),
        grid=(MP // TR,),
        in_specs=[pl.BlockSpec((TR, d3), lambda i: (i, 0)),
                  pl.BlockSpec((heads, n, n), lambda i: (0, 0, 0))],
        out_specs=pl.BlockSpec((TR, dim), lambda i: (i, 0)),
        compiler_params=_cparams("parallel"),
    )(qkv_p, rel_bias)
    return out[:M] if MP != M else out


# ---------------- fused: attention out-proj + residual + PreNorm FFN ----------

def _outproj_ffn_kernel(o_ref, x_ref, wout_ref, g1_ref,
                        lnw_ref, lnb_ref, w1_ref, b1_ref, w2_ref, b2_ref, g2_ref,
                        y_ref):
    # PreNormResidual(Attention) tail: out @ W_out * gamma1 + x  (residual in f32)
    x1 = (jnp.dot(o_ref[...], wout_ref[...], preferred_element_type=jnp.float32)
          * g1_ref[...] + x_ref[...])
    # PreNormResidual(FeedForward)
    xn = _layernorm(x1, lnw_ref[...], lnb_ref[...])
    h = jnp.dot(xn.astype(jnp.bfloat16), w1_ref[...],
                preferred_element_type=jnp.float32) + b1_ref[...]
    h = _gelu_tanh(h)
    y = jnp.dot(h.astype(jnp.bfloat16), w2_ref[...],
                preferred_element_type=jnp.float32) + b2_ref[...]
    y_ref[...] = y * g2_ref[...] + x1


def outproj_ffn(o2d, x2d, w_out_bf16, gamma1, ffn):
    M, d = x2d.shape
    inner = ffn['w1'].shape[1]
    TM, MP = _row_tiling(M, _FFN_ROW_TILE)
    op = _pad2d(o2d, MP, d)
    xp = _pad2d(x2d, MP, d)
    out = pl.pallas_call(
        _outproj_ffn_kernel,
        out_shape=jax.ShapeDtypeStruct((MP, d), jnp.float32),
        grid=(MP // TM,),
        in_specs=[pl.BlockSpec((TM, d), lambda i: (i, 0)),
                  pl.BlockSpec((TM, d), lambda i: (i, 0)),
                  pl.BlockSpec((d, d), lambda i: (0, 0)),
                  pl.BlockSpec((1, d), lambda i: (0, 0)),
                  pl.BlockSpec((1, d), lambda i: (0, 0)),
                  pl.BlockSpec((1, d), lambda i: (0, 0)),
                  pl.BlockSpec((d, inner), lambda i: (0, 0)),
                  pl.BlockSpec((1, inner), lambda i: (0, 0)),
                  pl.BlockSpec((inner, d), lambda i: (0, 0)),
                  pl.BlockSpec((1, d), lambda i: (0, 0)),
                  pl.BlockSpec((1, d), lambda i: (0, 0))],
        out_specs=pl.BlockSpec((TM, d), lambda i: (i, 0)),
        compiler_params=_cparams("parallel"),
    )(op, xp,
      w_out_bf16, gamma1.reshape(1, d),
      ffn['ln_w'].reshape(1, d), ffn['ln_b'].reshape(1, d),
      ffn['w1'].astype(jnp.bfloat16), ffn['b1'].reshape(1, inner),
      ffn['w2'].astype(jnp.bfloat16), ffn['b2'].reshape(1, d),
      ffn['gamma'].reshape(1, d))
    return out[:M] if MP != M else out


# ---------------- PreNormResidual(Attention) + PreNormResidual(FFN) -----------

def attention_ffn_block(xw, attn_p, ffn_p, heads, dim_head):
    """xw: (N_windows, n_tokens, d) float32 -> same shape."""
    N, n, d = xw.shape
    M = N * n
    scale = dim_head ** -0.5
    x2d = xw.reshape(M, d)

    # Fold q-scaling into the (bias-free) QKV weight; bf16 operands for the MXU.
    w_qkv = jnp.concatenate(
        [attn_p['w_qkv'][:, :d] * scale, attn_p['w_qkv'][:, d:]], axis=1
    ).astype(jnp.bfloat16)

    qkv = ln_qkv_proj(x2d, attn_p['ln_w'], attn_p['ln_b'], w_qkv)       # (M, 3d) bf16
    # Attention core keeps (tokens, channels) layout end-to-end: no XLA transposes.
    o2d = window_attention_core(qkv, attn_p['rel_bias'],
                                heads, dim_head, d, n)                  # (M, d) bf16
    y2d = outproj_ffn(o2d, x2d, attn_p['w_out'].astype(jnp.bfloat16),
                      attn_p['gamma'], ffn_p)                           # (M, d) f32
    return y2d.reshape(N, n, d)


# ------------------------------ window partitioning glue (NHWC) ---------------

def block_partition(x, wh, ww):
    # 'b (h h1) (w w1) c -> (b h w) (h1 w1) c'
    B, H, W, C = x.shape
    h, w = H // wh, W // ww
    x = x.reshape(B, h, wh, w, ww, C).transpose(0, 1, 3, 2, 4, 5)
    return x.reshape(B * h * w, wh * ww, C), (B, h, w)


def block_merge(xw, info, wh, ww):
    B, h, w = info
    C = xw.shape[-1]
    x = xw.reshape(B, h, w, wh, ww, C).transpose(0, 1, 3, 2, 4, 5)
    return x.reshape(B, h * wh, w * ww, C)


def grid_partition(x, wh, ww):
    # 'b (h1 h) (w1 w) c -> (b h w) (h1 w1) c'
    B, H, W, C = x.shape
    h, w = H // wh, W // ww
    x = x.reshape(B, wh, h, ww, w, C).transpose(0, 2, 4, 1, 3, 5)
    return x.reshape(B * h * w, wh * ww, C), (B, h, w)


def grid_merge(xw, info, wh, ww):
    B, h, w = info
    C = xw.shape[-1]
    x = xw.reshape(B, h, w, wh, ww, C).transpose(0, 3, 1, 4, 2, 5)
    return x.reshape(B, wh * h, ww * w, C)


# ------------------------------ parameter init -------------------------------

def rel_pos_indices(wh, ww):
    gh, gw = jnp.meshgrid(jnp.arange(wh), jnp.arange(ww), indexing='ij')
    grid = jnp.stack([gh, gw], axis=-1).reshape(wh * ww, 2)
    rel = grid[:, None, :] - grid[None, :, :]
    rel = rel + jnp.array([wh - 1, ww - 1])
    return rel[..., 0] * (2 * ww - 1) + rel[..., 1]      # (n, n)


def init_attn(key, dim, dim_head, wh, ww):
    heads = dim // dim_head
    k1, k2, k3 = jax.random.split(key, 3)
    emb = 0.02 * jax.random.normal(k3, ((2 * wh - 1) * (2 * ww - 1), heads), jnp.float32)
    idx = rel_pos_indices(wh, ww)
    return dict(
        ln_w=jnp.ones((dim,), jnp.float32),
        ln_b=jnp.zeros((dim,), jnp.float32),
        w_qkv=0.02 * jax.random.normal(k1, (dim, 3 * dim), jnp.float32),
        w_out=0.02 * jax.random.normal(k2, (dim, dim), jnp.float32),
        rel_bias=emb[idx].transpose(2, 0, 1),            # (heads, n, n)
        gamma=jnp.full((dim,), 0.1, jnp.float32),
    )


def init_ffn(key, dim, mult=4):
    inner = int(dim * mult)
    k1, k2 = jax.random.split(key)
    return dict(
        ln_w=jnp.ones((dim,), jnp.float32),
        ln_b=jnp.zeros((dim,), jnp.float32),
        w1=0.02 * jax.random.normal(k1, (dim, inner), jnp.float32),
        b1=jnp.zeros((inner,), jnp.float32),
        w2=0.02 * jax.random.normal(k2, (inner, dim), jnp.float32),
        b2=jnp.zeros((dim,), jnp.float32),
        gamma=jnp.full((dim,), 0.1, jnp.float32),
    )


def init_maxvit(key, dim_input, dim_conv, depth, wh, ww, dim_head):
    num_stages = len(depth)
    kernels = [7, 3, 3, 3][:num_stages]
    strides = [4, 2, 2, 2][:num_stages]
    paddings = [2, 1, 1, 1][:num_stages]
    dims = (dim_input,) + tuple(2 ** i * dim_conv for i in range(num_stages))
    blocks = []
    for K, st, pd, d_in, d_out, layer_depth in zip(kernels, strides, paddings,
                                                   dims[:-1], dims[1:], depth):
        for stage_ind in range(layer_depth):
            key, kc, ka1, kf1, ka2, kf2 = jax.random.split(key, 6)
            cin = d_in if stage_ind == 0 else d_out
            blocks.append(dict(
                kernel=K, stride=st, padding=pd, dim=d_out,
                conv_w=0.02 * jax.random.normal(kc, (d_out, cin, K, K), jnp.float32),
                conv_b=jnp.zeros((d_out,), jnp.float32),
                attn1=init_attn(ka1, d_out, dim_head, wh, ww),
                ffn1=init_ffn(kf1, d_out),
                attn2=init_attn(ka2, d_out, dim_head, wh, ww),
                ffn2=init_ffn(kf2, d_out),
            ))
    return blocks


# ------------------------------ full forward ---------------------------------

def maxvit_forward(x_nchw, blocks, wh, ww, dim_head):
    x = x_nchw.transpose(0, 2, 3, 1)       # NCHW -> NHWC (channels on the lane axis)
    for blk in blocks:
        x = conv2d_nhwc(x, blk['conv_w'], blk['conv_b'], blk['stride'], blk['padding'])
        heads = blk['dim'] // dim_head
        # block (local window) attention + FFN
        xw, info = block_partition(x, wh, ww)
        xw = attention_ffn_block(xw, blk['attn1'], blk['ffn1'], heads, dim_head)
        x = block_merge(xw, info, wh, ww)
        # grid (dilated) attention + FFN
        xw, info = grid_partition(x, wh, ww)
        xw = attention_ffn_block(xw, blk['attn2'], blk['ffn2'], heads, dim_head)
        x = grid_merge(xw, info, wh, ww)
    return x.transpose(0, 3, 1, 2)          # back to NCHW (PyTorch module contract)


# ------------------------------ main ------------------------------------------

if __name__ == "__main__":
    # Small, divisibility-consistent MaxViT config:
    #   dim_input=4, dim_conv=32, depth=(1,1), window 2x2, dim_head=16, dropout=0 (eval)
    B, C_IN, H, W = 2, 4, 32, 32
    WH, WW = 2, 2
    DIM_CONV = 32
    DIM_HEAD = 16
    DEPTH = (1, 1)

    key = jax.random.PRNGKey(0)
    kx, kp = jax.random.split(key)
    x = jax.random.normal(kx, (B, C_IN, H, W), jnp.float32)

    blocks = init_maxvit(kp, C_IN, DIM_CONV, DEPTH, WH, WW, DIM_HEAD)

    fwd = jax.jit(lambda inp: maxvit_forward(inp, blocks, WH, WW, DIM_HEAD))
    out = jax.block_until_ready(fwd(x))

    # stage1: conv stride 4 -> 8x8, stage2: stride 2 -> 4x4, channels 64
    assert out.shape == (B, DIM_CONV * 2, H // 8, W // 8), out.shape
    assert bool(jnp.all(jnp.isfinite(out)))
    print("KERNEL_OK")
</pallas_src>

<mosaic_0001>
module attributes {stable_mosaic.version = 11 : i64} {
  func.func @_matmul_bias_kernel(%arg0: i32, %arg1: i32, %arg2: memref<64x196xbf16, #tpu.memory_space<vmem>>, %arg3: memref<196x32xbf16, #tpu.memory_space<vmem>>, %arg4: memref<1x32xf32, #tpu.memory_space<vmem>>, %arg5: memref<64x32xf32, #tpu.memory_space<vmem>>, %arg6: memref<64x32xf32, #tpu.memory_space<vmem>>) attributes {dimension_semantics = [#tpu.dimension_semantics<parallel>, #tpu.dimension_semantics<arbitrary>], iteration_bounds = array<i64: 2, 1>, scalar_prefetch = 0 : i64, scratch_operands = 1 : i64, tpu.core_type = #tpu.core_type<tc>, window_params = [{transform_indices = @transform_0, window_bounds = array<i64: 64, 196>}, {transform_indices = @transform_1, window_bounds = array<i64: 196, 32>}, {pipeline_mode = #tpu.pipeline_mode<synchronous>, transform_indices = @transform_2, window_bounds = array<i64: 1, 32>}, {transform_indices = @transform_3, window_bounds = array<i64: 64, 32>}]} {
    %c0_i32 = arith.constant 0 : i32
    %0 = arith.cmpi eq, %arg1, %c0_i32 : i32
    %1 = arith.extui %0 : i1 to i32
    %c0_i32_0 = arith.constant 0 : i32
    %2 = arith.cmpi ne, %1, %c0_i32_0 : i32
    scf.if %2 {
      %cst_10 = arith.constant 0.000000e+00 : f32
      %12 = vector.broadcast %cst_10 : f32 to vector<64x32xf32>
      %c0_11 = arith.constant 0 : index
      %c0_12 = arith.constant 0 : index
      %13 = vector.load %arg6[%c0_11, %c0_12] : memref<64x32xf32, #tpu.memory_space<vmem>>, vector<64x32xf32>
      tpu.vector_store %arg6[%c0_11, %c0_12], %12 {strides = array<i32>} : memref<64x32xf32, #tpu.memory_space<vmem>>, vector<64x32xf32>,
    } else {
    }
    %c0 = arith.constant 0 : index
    %c0_1 = arith.constant 0 : index
    %3 = vector.load %arg6[%c0, %c0_1] : memref<64x32xf32, #tpu.memory_space<vmem>>, vector<64x32xf32>
    %c0_2 = arith.constant 0 : index
    %c0_3 = arith.constant 0 : index
    %4 = vector.load %arg2[%c0_2, %c0_3] : memref<64x196xbf16, #tpu.memory_space<vmem>>, vector<64x196xbf16>
    %c0_4 = arith.constant 0 : index
    %c0_5 = arith.constant 0 : index
    %5 = vector.load %arg3[%c0_4, %c0_5] : memref<196x32xbf16, #tpu.memory_space<vmem>>, vector<196x32xbf16>
    %cst = arith.constant dense<0.000000e+00> : vector<64x32xf32>
    %6 = tpu.matmul %4, %5, %cst {dimension_numbers = #tpu.dot_dimension_numbers<[1], [0], [0], [1], [0, 0, 1, 1], [], []>} : vector<64x196xbf16>, vector<196x32xbf16>, vector<64x32xf32> -> vector<64x32xf32>
    %7 = arith.addf %3, %6 : vector<64x32xf32>
    %c0_6 = arith.constant 0 : index
    %c0_7 = arith.constant 0 : index
    %8 = vector.load %arg6[%c0_6, %c0_7] : memref<64x32xf32, #tpu.memory_space<vmem>>, vector<64x32xf32>
    tpu.vector_store %arg6[%c0_6, %c0_7], %7 {strides = array<i32>} : memref<64x32xf32, #tpu.memory_space<vmem>>, vector<64x32xf32>,
    %c0_i32_8 = arith.constant 0 : i32
    %9 = arith.cmpi eq, %arg1, %c0_i32_8 : i32
    %10 = arith.extui %9 : i1 to i32
    %c0_i32_9 = arith.constant 0 : i32
    %11 = arith.cmpi ne, %10, %c0_i32_9 : i32
    scf.if %11 {
      %c0_10 = arith.constant 0 : index
      %c0_11 = arith.constant 0 : index
      %12 = vector.load %arg6[%c0_10, %c0_11] : memref<64x32xf32, #tpu.memory_space<vmem>>, vector<64x32xf32>
      %c0_12 = arith.constant 0 : index
      %c0_13 = arith.constant 0 : index
      %13 = vector.load %arg4[%c0_12, %c0_13] : memref<1x32xf32, #tpu.memory_space<vmem>>, vector<1x32xf32>
      %14 = vector.broadcast %13 : vector<1x32xf32> to vector<64x32xf32>
      %15 = arith.addf %12, %14 : vector<64x32xf32>
      %c0_14 = arith.constant 0 : index
      %c0_15 = arith.constant 0 : index
      %16 = vector.load %arg5[%c0_14, %c0_15] : memref<64x32xf32, #tpu.memory_space<vmem>>, vector<64x32xf32>
      tpu.vector_store %arg5[%c0_14, %c0_15], %15 {strides = array<i32>} : memref<64x32xf32, #tpu.memory_space<vmem>>, vector<64x32xf32>,
    } else {
    }
    return
  }
  func.func @transform_0(%arg0: i32, %arg1: i32) -> (i32, i32) {
    %c0_i32 = arith.constant 0 : i32
    return %arg0, %arg1 : i32, i32
  }
  func.func @transform_1(%arg0: i32, %arg1: i32) -> (i32, i32) {
    %c0_i32 = arith.constant 0 : i32
    %c0_i32_0 = arith.constant 0 : i32
    return %arg1, %c0_i32 : i32, i32
  }
  func.func @transform_2(%arg0: i32, %arg1: i32) -> (i32, i32) {
    %c0_i32 = arith.constant 0 : i32
    %c0_i32_0 = arith.constant 0 : i32
    %c0_i32_1 = arith.constant 0 : i32
    return %c0_i32, %c0_i32_0 : i32, i32
  }
  func.func @transform_3(%arg0: i32, %arg1: i32) -> (i32, i32) {
    %c0_i32 = arith.constant 0 : i32
    %c0_i32_0 = arith.constant 0 : i32
    return %arg0, %c0_i32 : i32, i32
  }
}

module attributes {stable_mosaic.version = 11 : i64} {
  func.func @_ln_qkv_kernel(%arg0: i32, %arg1: memref<64x32xf32, #tpu.memory_space<vmem>>, %arg2: memref<1x32xf32, #tpu.memory_space<vmem>>, %arg3: memref<1x32xf32, #tpu.memory_space<vmem>>, %arg4: memref<32x96xbf16, #tpu.memory_space<vmem>>, %arg5: memref<64x96xbf16, #tpu.memory_space<vmem>>) attributes {dimension_semantics = [#tpu.dimension_semantics<parallel>], iteration_bounds = array<i64: 2>, scalar_prefetch = 0 : i64, scratch_operands = 0 : i64, tpu.core_type = #tpu.core_type<tc>, window_params = [{transform_indices = @transform_0, window_bounds = array<i64: 64, 32>}, {pipeline_mode = #tpu.pipeline_mode<synchronous>, transform_indices = @transform_1, window_bounds = array<i64: 1, 32>}, {pipeline_mode = #tpu.pipeline_mode<synchronous>, transform_indices = @transform_2, window_bounds = array<i64: 1, 32>}, {pipeline_mode = #tpu.pipeline_mode<synchronous>, transform_indices = @transform_3, window_bounds = array<i64: 32, 96>}, {transform_indices = @transform_4, window_bounds = array<i64: 64, 96>}]} {
    %c0 = arith.constant 0 : index
    %c0_0 = arith.constant 0 : index
    %0 = vector.load %arg1[%c0, %c0_0] : memref<64x32xf32, #tpu.memory_space<vmem>>, vector<64x32xf32>
    %c0_1 = arith.constant 0 : index
    %c0_2 = arith.constant 0 : index
    %1 = vector.load %arg2[%c0_1, %c0_2] : memref<1x32xf32, #tpu.memory_space<vmem>>, vector<1x32xf32>
    %c0_3 = arith.constant 0 : index
    %c0_4 = arith.constant 0 : index
    %2 = vector.load %arg3[%c0_3, %c0_4] : memref<1x32xf32, #tpu.memory_space<vmem>>, vector<1x32xf32>
    %cst = arith.constant dense<0.000000e+00> : vector<64xf32>
    %3 = vector.multi_reduction <add>, %0, %cst [1] : vector<64x32xf32> to vector<64xf32>
    %4 = vector.shape_cast %3 : vector<64xf32> to vector<64x1xf32>
    %cst_5 = arith.constant 3.200000e+01 : f32
    %5 = vector.broadcast %cst_5 : f32 to vector<64x1xf32>
    %6 = arith.divf %4, %5 : vector<64x1xf32>
    %7 = vector.broadcast %6 : vector<64x1xf32> to vector<64x32xf32>
    %8 = arith.subf %0, %7 : vector<64x32xf32>
    %9 = arith.mulf %8, %8 : vector<64x32xf32>
    %cst_6 = arith.constant dense<0.000000e+00> : vector<64xf32>
    %10 = vector.multi_reduction <add>, %9, %cst_6 [1] : vector<64x32xf32> to vector<64xf32>
    %11 = vector.shape_cast %10 : vector<64xf32> to vector<64x1xf32>
    %cst_7 = arith.constant 3.200000e+01 : f32
    %12 = vector.broadcast %cst_7 : f32 to vector<64x1xf32>
    %13 = arith.divf %11, %12 : vector<64x1xf32>
    %14 = vector.broadcast %6 : vector<64x1xf32> to vector<64x32xf32>
    %15 = arith.subf %0, %14 : vector<64x32xf32>
    %cst_8 = arith.constant 9.99999974E-6 : f32
    %16 = vector.broadcast %cst_8 : f32 to vector<64x1xf32>
    %17 = arith.addf %13, %16 : vector<64x1xf32>
    %18 = math.rsqrt %17 : vector<64x1xf32>
    %19 = vector.broadcast %18 : vector<64x1xf32> to vector<64x32xf32>
    %20 = arith.mulf %15, %19 : vector<64x32xf32>
    %21 = vector.broadcast %1 : vector<1x32xf32> to vector<64x32xf32>
    %22 = arith.mulf %20, %21 : vector<64x32xf32>
    %23 = vector.broadcast %2 : vector<1x32xf32> to vector<64x32xf32>
    %24 = arith.addf %22, %23 : vector<64x32xf32>
    %25 = arith.truncf %24 : vector<64x32xf32> to vector<64x32xbf16>
    %c0_9 = arith.constant 0 : index
    %c0_10 = arith.constant 0 : index
    %26 = vector.load %arg4[%c0_9, %c0_10] : memref<32x96xbf16, #tpu.memory_space<vmem>>, vector<32x96xbf16>
    %cst_11 = arith.constant dense<0.000000e+00> : vector<64x96xf32>
    %27 = tpu.matmul %25, %26, %cst_11 {dimension_numbers = #tpu.dot_dimension_numbers<[1], [0], [0], [1], [0, 0, 1, 1], [], []>} : vector<64x32xbf16>, vector<32x96xbf16>, vector<64x96xf32> -> vector<64x96xf32>
    %28 = arith.truncf %27 : vector<64x96xf32> to vector<64x96xbf16>
    %c0_12 = arith.constant 0 : index
    %c0_13 = arith.constant 0 : index
    %29 = vector.load %arg5[%c0_12, %c0_13] : memref<64x96xbf16, #tpu.memory_space<vmem>>, vector<64x96xbf16>
    tpu.vector_store %arg5[%c0_12, %c0_13], %28 {strides = array<i32>} : memref<64x96xbf16, #tpu.memory_space<vmem>>, vector<64x96xbf16>,
    return
  }
  func.func @transform_0(%arg0: i32) -> (i32, i32) {
    %c0_i32 = arith.constant 0 : i32
    %c0_i32_0 = arith.constant 0 : i32
    return %arg0, %c0_i32 : i32, i32
  }
  func.func @transform_1(%arg0: i32) -> (i32, i32) {
    %c0_i32 = arith.constant 0 : i32
    %c0_i32_0 = arith.constant 0 : i32
    %c0_i32_1 = arith.constant 0 : i32
    return %c0_i32, %c0_i32_0 : i32, i32
  }
  func.func @transform_2(%arg0: i32) -> (i32, i32) {
    %c0_i32 = arith.constant 0 : i32
    %c0_i32_0 = arith.constant 0 : i32
    %c0_i32_1 = arith.constant 0 : i32
    return %c0_i32, %c0_i32_0 : i32, i32
  }
  func.func @transform_3(%arg0: i32) -> (i32, i32) {
    %c0_i32 = arith.constant 0 : i32
    %c0_i32_0 = arith.constant 0 : i32
    %c0_i32_1 = arith.constant 0 : i32
    return %c0_i32, %c0_i32_0 : i32, i32
  }
  func.func @transform_4(%arg0: i32) -> (i32, i32) {
    %c0_i32 = arith.constant 0 : i32
    %c0_i32_0 = arith.constant 0 : i32
    return %arg0, %c0_i32 : i32, i32
  }
}

module attributes {stable_mosaic.version = 11 : i64} {
  func.func @_attn_core_kernel(%arg0: i32, %arg1: memref<64x96xbf16, #tpu.memory_space<vmem>>, %arg2: memref<2x4x4xf32, #tpu.memory_space<vmem>>, %arg3: memref<64x32xbf16, #tpu.memory_space<vmem>>) attributes {dimension_semantics = [#tpu.dimension_semantics<parallel>], iteration_bounds = array<i64: 2>, scalar_prefetch = 0 : i64, scratch_operands = 0 : i64, tpu.core_type = #tpu.core_type<tc>, window_params = [{transform_indices = @transform_0, window_bounds = array<i64: 64, 96>}, {pipeline_mode = #tpu.pipeline_mode<synchronous>, transform_indices = @transform_1, window_bounds = array<i64: 2, 4, 4>}, {transform_indices = @transform_2, window_bounds = array<i64: 64, 32>}]} {
    %c0 = arith.constant 0 : index
    %c0_0 = arith.constant 0 : index
    %0 = vector.load %arg1[%c0, %c0_0] : memref<64x96xbf16, #tpu.memory_space<vmem>>, vector<64x96xbf16>
    %1 = vector.shape_cast %0 : vector<64x96xbf16> to vector<16x4x96xbf16>
    %2 = vector.extract_strided_slice %1 {offsets = [0, 0, 0], sizes = [16, 4, 16], strides = [1, 1, 1]} : vector<16x4x96xbf16> to vector<16x4x16xbf16>
    %3 = vector.extract_strided_slice %1 {offsets = [0, 0, 32], sizes = [16, 4, 16], strides = [1, 1, 1]} : vector<16x4x96xbf16> to vector<16x4x16xbf16>
    %4 = vector.extract_strided_slice %1 {offsets = [0, 0, 64], sizes = [16, 4, 16], strides = [1, 1, 1]} : vector<16x4x96xbf16> to vector<16x4x16xbf16>
    "tpu.trace_start"() <{level = 10 : i32, message = "bid,bjd->bij"}> : () -> ()
    %cst = arith.constant dense<0.000000e+00> : vector<16x4x4xf32>
    %5 = tpu.matmul %2, %3, %cst {dimension_numbers = #tpu.dot_dimension_numbers<[2], [2], [1], [1], [0, 0, 0, 1, 1, 1], [0], [0]>} : vector<16x4x16xbf16>, vector<16x4x16xbf16>, vector<16x4x4xf32> -> vector<16x4x4xf32>
    "tpu.trace_stop"() : () -> ()
    %c0_1 = arith.constant 0 : index
    %c0_2 = arith.constant 0 : index
    %c0_3 = arith.constant 0 : index
    %6 = vector.load %arg2[%c0_1, %c0_2, %c0_3] : memref<2x4x4xf32, #tpu.memory_space<vmem>>, vector<1x4x4xf32>
    %7 = vector.shape_cast %6 : vector<1x4x4xf32> to vector<4x4xf32>
    %8 = vector.shape_cast %7 : vector<4x4xf32> to vector<1x4x4xf32>
    %9 = vector.broadcast %8 : vector<1x4x4xf32> to vector<16x4x4xf32>
    %10 = arith.addf %5, %9 : vector<16x4x4xf32>
    %cst_4 = arith.constant dense<0xFF800000> : vector<16x4xf32>
    %11 = vector.multi_reduction <maximumf>, %10, %cst_4 [2] : vector<16x4x4xf32> to vector<16x4xf32>
    %12 = vector.shape_cast %11 : vector<16x4xf32> to vector<16x4x1xf32>
    %13 = vector.broadcast %12 : vector<16x4x1xf32> to vector<16x4x4xf32>
    %14 = arith.subf %10, %13 : vector<16x4x4xf32>
    %15 = math.exp %14 : vector<16x4x4xf32>
    %cst_5 = arith.constant dense<0.000000e+00> : vector<16x4xf32>
    %16 = vector.multi_reduction <add>, %15, %cst_5 [2] : vector<16x4x4xf32> to vector<16x4xf32>
    %17 = vector.shape_cast %16 : vector<16x4xf32> to vector<16x4x1xf32>
    %18 = tpu.reciprocal %17 {approx = true} : vector<16x4x1xf32> -> vector<16x4x1xf32>
    %19 = vector.broadcast %18 : vector<16x4x1xf32> to vector<16x4x4xf32>
    %20 = arith.mulf %15, %19 : vector<16x4x4xf32>
    %21 = arith.truncf %20 : vector<16x4x4xf32> to vector<16x4x4xbf16>
    "tpu.trace_start"() <{level = 10 : i32, message = "bij,bjd->bid"}> : () -> ()
    %cst_6 = arith.constant dense<0.000000e+00> : vector<16x4x16xf32>
    %22 = tpu.matmul %21, %4, %cst_6 {dimension_numbers = #tpu.dot_dimension_numbers<[2], [1], [1], [2], [0, 0, 0, 1, 1, 2], [0], [0]>} : vector<16x4x4xbf16>, vector<16x4x16xbf16>, vector<16x4x16xf32> -> vector<16x4x16xf32>
    "tpu.trace_stop"() : () -> ()
    %23 = vector.extract_strided_slice %1 {offsets = [0, 0, 16], sizes = [16, 4, 16], strides = [1, 1, 1]} : vector<16x4x96xbf16> to vector<16x4x16xbf16>
    %24 = vector.extract_strided_slice %1 {offsets = [0, 0, 48], sizes = [16, 4, 16], strides = [1, 1, 1]} : vector<16x4x96xbf16> to vector<16x4x16xbf16>
    %25 = vector.extract_strided_slice %1 {offsets = [0, 0, 80], sizes = [16, 4, 16], strides = [1, 1, 1]} : vector<16x4x96xbf16> to vector<16x4x16xbf16>
    "tpu.trace_start"() <{level = 10 : i32, message = "bid,bjd->bij"}> : () -> ()
    %cst_7 = arith.constant dense<0.000000e+00> : vector<16x4x4xf32>
    %26 = tpu.matmul %23, %24, %cst_7 {dimension_numbers = #tpu.dot_dimension_numbers<[2], [2], [1], [1], [0, 0, 0, 1, 1, 1], [0], [0]>} : vector<16x4x16xbf16>, vector<16x4x16xbf16>, vector<16x4x4xf32> -> vector<16x4x4xf32>
    "tpu.trace_stop"() : () -> ()
    %c1 = arith.constant 1 : index
    %c0_8 = arith.constant 0 : index
    %c0_9 = arith.constant 0 : index
    %27 = vector.load %arg2[%c1, %c0_8, %c0_9] : memref<2x4x4xf32, #tpu.memory_space<vmem>>, vector<1x4x4xf32>
    %28 = vector.shape_cast %27 : vector<1x4x4xf32> to vector<4x4xf32>
    %29 = vector.shape_cast %28 : vector<4x4xf32> to vector<1x4x4xf32>
    %30 = vector.broadcast %29 : vector<1x4x4xf32> to vector<16x4x4xf32>
    %31 = arith.addf %26, %30 : vector<16x4x4xf32>
    %cst_10 = arith.constant dense<0xFF800000> : vector<16x4xf32>
    %32 = vector.multi_reduction <maximumf>, %31, %cst_10 [2] : vector<16x4x4xf32> to vector<16x4xf32>
    %33 = vector.shape_cast %32 : vector<16x4xf32> to vector<16x4x1xf32>
    %34 = vector.broadcast %33 : vector<16x4x1xf32> to vector<16x4x4xf32>
    %35 = arith.subf %31, %34 : vector<16x4x4xf32>
    %36 = math.exp %35 : vector<16x4x4xf32>
    %cst_11 = arith.constant dense<0.000000e+00> : vector<16x4xf32>
    %37 = vector.multi_reduction <add>, %36, %cst_11 [2] : vector<16x4x4xf32> to vector<16x4xf32>
    %38 = vector.shape_cast %37 : vector<16x4xf32> to vector<16x4x1xf32>
    %39 = tpu.reciprocal %38 {approx = true} : vector<16x4x1xf32> -> vector<16x4x1xf32>
    %40 = vector.broadcast %39 : vector<16x4x1xf32> to vector<16x4x4xf32>
    %41 = arith.mulf %36, %40 : vector<16x4x4xf32>
    %42 = arith.truncf %41 : vector<16x4x4xf32> to vector<16x4x4xbf16>
    "tpu.trace_start"() <{level = 10 : i32, message = "bij,bjd->bid"}> : () -> ()
    %cst_12 = arith.constant dense<0.000000e+00> : vector<16x4x16xf32>
    %43 = tpu.matmul %42, %25, %cst_12 {dimension_numbers = #tpu.dot_dimension_numbers<[2], [1], [1], [2], [0, 0, 0, 1, 1, 2], [0], [0]>} : vector<16x4x4xbf16>, vector<16x4x16xbf16>, vector<16x4x16xf32> -> vector<16x4x16xf32>
    "tpu.trace_stop"() : () -> ()
    %44 = tpu.concatenate %22, %43 in 2 : vector<16x4x16xf32>, vector<16x4x16xf32> -> vector<16x4x32xf32>
    %45 = vector.shape_cast %44 : vector<16x4x32xf32> to vector<64x32xf32>
    %46 = arith.truncf %45 : vector<64x32xf32> to vector<64x32xbf16>
    %c0_13 = arith.constant 0 : index
    %c0_14 = arith.constant 0 : index
    %47 = vector.load %arg3[%c0_13, %c0_14] : memref<64x32xbf16, #tpu.memory_space<vmem>>, vector<64x32xbf16>
    tpu.vector_store %arg3[%c0_13, %c0_14], %46 {strides = array<i32>} : memref<64x32xbf16, #tpu.memory_space<vmem>>, vector<64x32xbf16>,
    return
  }
  func.func @transform_0(%arg0: i32) -> (i32, i32) {
    %c0_i32 = arith.constant 0 : i32
    %c0_i32_0 = arith.constant 0 : i32
    return %arg0, %c0_i32 : i32, i32
  }
  func.func @transform_1(%arg0: i32) -> (i32, i32, i32) {
    %c0_i32 = arith.constant 0 : i32
    %c0_i32_0 = arith.constant 0 : i32
    %c0_i32_1 = arith.constant 0 : i32
    %c0_i32_2 = arith.constant 0 : i32
    return %c0_i32, %c0_i32_0, %c0_i32_1 : i32, i32, i32
  }
  func.func @transform_2(%arg0: i32) -> (i32, i32) {
    %c0_i32 = arith.constant 0 : i32
    %c0_i32_0 = arith.constant 0 : i32
    return %arg0, %c0_i32 : i32, i32
  }
}

module attributes {stable_mosaic.version = 11 : i64} {
  func.func @_outproj_ffn_kernel(%arg0: i32, %arg1: memref<64x32xbf16, #tpu.memory_space<vmem>>, %arg2: memref<64x32xf32, #tpu.memory_space<vmem>>, %arg3: memref<32x32xbf16, #tpu.memory_space<vmem>>, %arg4: memref<1x32xf32, #tpu.memory_space<vmem>>, %arg5: memref<1x32xf32, #tpu.memory_space<vmem>>, %arg6: memref<1x32xf32, #tpu.memory_space<vmem>>, %arg7: memref<32x128xbf16, #tpu.memory_space<vmem>>, %arg8: memref<1x128xf32, #tpu.memory_space<vmem>>, %arg9: memref<128x32xbf16, #tpu.memory_space<vmem>>, %arg10: memref<1x32xf32, #tpu.memory_space<vmem>>, %arg11: memref<1x32xf32, #tpu.memory_space<vmem>>, %arg12: memref<64x32xf32, #tpu.memory_space<vmem>>) attributes {dimension_semantics = [#tpu.dimension_semantics<parallel>], iteration_bounds = array<i64: 2>, scalar_prefetch = 0 : i64, scratch_operands = 0 : i64, tpu.core_type = #tpu.core_type<tc>, window_params = [{transform_indices = @transform_0, window_bounds = array<i64: 64, 32>}, {transform_indices = @transform_1, window_bounds = array<i64: 64, 32>}, {pipeline_mode = #tpu.pipeline_mode<synchronous>, transform_indices = @transform_2, window_bounds = array<i64: 32, 32>}, {pipeline_mode = #tpu.pipeline_mode<synchronous>, transform_indices = @transform_3, window_bounds = array<i64: 1, 32>}, {pipeline_mode = #tpu.pipeline_mode<synchronous>, transform_indices = @transform_4, window_bounds = array<i64: 1, 32>}, {pipeline_mode = #tpu.pipeline_mode<synchronous>, transform_indices = @transform_5, window_bounds = array<i64: 1, 32>}, {pipeline_mode = #tpu.pipeline_mode<synchronous>, transform_indices = @transform_6, window_bounds = array<i64: 32, 128>}, {pipeline_mode = #tpu.pipeline_mode<synchronous>, transform_indices = @transform_7, window_bounds = array<i64: 1, 128>}, {pipeline_mode = #tpu.pipeline_mode<synchronous>, transform_indices = @transform_8, window_bounds = array<i64: 128, 32>}, {pipeline_mode = #tpu.pipeline_mode<synchronous>, transform_indices = @transform_9, window_bounds = array<i64: 1, 32>}, {pipeline_mode = #tpu.pipeline_mode<synchronous>, transform_indices = @transform_10, window_bounds = array<i64: 1, 32>}, {transform_indices = @transform_11, window_bounds = array<i64: 64, 32>}]} {
    %c0 = arith.constant 0 : index
    %c0_0 = arith.constant 0 : index
    %0 = vector.load %arg1[%c0, %c0_0] : memref<64x32xbf16, #tpu.memory_space<vmem>>, vector<64x32xbf16>
    %c0_1 = arith.constant 0 : index
    %c0_2 = arith.constant 0 : index
    %1 = vector.load %arg3[%c0_1, %c0_2] : memref<32x32xbf16, #tpu.memory_space<vmem>>, vector<32x32xbf16>
    %cst = arith.constant dense<0.000000e+00> : vector<64x32xf32>
    %2 = tpu.matmul %0, %1, %cst {dimension_numbers = #tpu.dot_dimension_numbers<[1], [0], [0], [1], [0, 0, 1, 1], [], []>} : vector<64x32xbf16>, vector<32x32xbf16>, vector<64x32xf32> -> vector<64x32xf32>
    %c0_3 = arith.constant 0 : index
    %c0_4 = arith.constant 0 : index
    %3 = vector.load %arg4[%c0_3, %c0_4] : memref<1x32xf32, #tpu.memory_space<vmem>>, vector<1x32xf32>
    %4 = vector.broadcast %3 : vector<1x32xf32> to vector<64x32xf32>
    %5 = arith.mulf %2, %4 : vector<64x32xf32>
    %c0_5 = arith.constant 0 : index
    %c0_6 = arith.constant 0 : index
    %6 = vector.load %arg2[%c0_5, %c0_6] : memref<64x32xf32, #tpu.memory_space<vmem>>, vector<64x32xf32>
    %7 = arith.addf %5, %6 : vector<64x32xf32>
    %c0_7 = arith.constant 0 : index
    %c0_8 = arith.constant 0 : index
    %8 = vector.load %arg5[%c0_7, %c0_8] : memref<1x32xf32, #tpu.memory_space<vmem>>, vector<1x32xf32>
    %c0_9 = arith.constant 0 : index
    %c0_10 = arith.constant 0 : index
    %9 = vector.load %arg6[%c0_9, %c0_10] : memref<1x32xf32, #tpu.memory_space<vmem>>, vector<1x32xf32>
    %cst_11 = arith.constant dense<0.000000e+00> : vector<64xf32>
    %10 = vector.multi_reduction <add>, %7, %cst_11 [1] : vector<64x32xf32> to vector<64xf32>
    %11 = vector.shape_cast %10 : vector<64xf32> to vector<64x1xf32>
    %cst_12 = arith.constant 3.200000e+01 : f32
    %12 = vector.broadcast %cst_12 : f32 to vector<64x1xf32>
    %13 = arith.divf %11, %12 : vector<64x1xf32>
    %14 = vector.broadcast %13 : vector<64x1xf32> to vector<64x32xf32>
    %15 = arith.subf %7, %14 : vector<64x32xf32>
    %16 = arith.mulf %15, %15 : vector<64x32xf32>
    %cst_13 = arith.constant dense<0.000000e+00> : vector<64xf32>
    %17 = vector.multi_reduction <add>, %16, %cst_13 [1] : vector<64x32xf32> to vector<64xf32>
    %18 = vector.shape_cast %17 : vector<64xf32> to vector<64x1xf32>
    %cst_14 = arith.constant 3.200000e+01 : f32
    %19 = vector.broadcast %cst_14 : f32 to vector<64x1xf32>
    %20 = arith.divf %18, %19 : vector<64x1xf32>
    %21 = vector.broadcast %13 : vector<64x1xf32> to vector<64x32xf32>
    %22 = arith.subf %7, %21 : vector<64x32xf32>
    %cst_15 = arith.constant 9.99999974E-6 : f32
    %23 = vector.broadcast %cst_15 : f32 to vector<64x1xf32>
    %24 = arith.addf %20, %23 : vector<64x1xf32>
    %25 = math.rsqrt %24 : vector<64x1xf32>
    %26 = vector.broadcast %25 : vector<64x1xf32> to vector<64x32xf32>
    %27 = arith.mulf %22, %26 : vector<64x32xf32>
    %28 = vector.broadcast %8 : vector<1x32xf32> to vector<64x32xf32>
    %29 = arith.mulf %27, %28 : vector<64x32xf32>
    %30 = vector.broadcast %9 : vector<1x32xf32> to vector<64x32xf32>
    %31 = arith.addf %29, %30 : vector<64x32xf32>
    %32 = arith.truncf %31 : vector<64x32xf32> to vector<64x32xbf16>
    %c0_16 = arith.constant 0 : index
    %c0_17 = arith.constant 0 : index
    %33 = vector.load %arg7[%c0_16, %c0_17] : memref<32x128xbf16, #tpu.memory_space<vmem>>, vector<32x128xbf16>
    %cst_18 = arith.constant dense<0.000000e+00> : vector<64x128xf32>
    %34 = tpu.matmul %32, %33, %cst_18 {dimension_numbers = #tpu.dot_dimension_numbers<[1], [0], [0], [1], [0, 0, 1, 1], [], []>} : vector<64x32xbf16>, vector<32x128xbf16>, vector<64x128xf32> -> vector<64x128xf32>
    %c0_19 = arith.constant 0 : index
    %c0_20 = arith.constant 0 : index
    %35 = vector.load %arg8[%c0_19, %c0_20] : memref<1x128xf32, #tpu.memory_space<vmem>>, vector<1x128xf32>
    %36 = vector.broadcast %35 : vector<1x128xf32> to vector<64x128xf32>
    %37 = arith.addf %34, %36 : vector<64x128xf32>
    %cst_21 = arith.constant 5.000000e-01 : f32
    %38 = vector.broadcast %cst_21 : f32 to vector<64x128xf32>
    %39 = arith.mulf %38, %37 : vector<64x128xf32>
    %cst_22 = arith.constant 4.471500e-02 : f32
    %40 = vector.broadcast %cst_22 : f32 to vector<64x128xf32>
    %41 = arith.mulf %40, %37 : vector<64x128xf32>
    %42 = arith.mulf %41, %37 : vector<64x128xf32>
    %43 = arith.mulf %42, %37 : vector<64x128xf32>
    %44 = arith.addf %37, %43 : vector<64x128xf32>
    %cst_23 = arith.constant 0.797884583 : f32
    %45 = vector.broadcast %cst_23 : f32 to vector<64x128xf32>
    %46 = arith.mulf %45, %44 : vector<64x128xf32>
    %47 = math.tanh %46 : vector<64x128xf32>
    %cst_24 = arith.constant 1.000000e+00 : f32
    %48 = vector.broadcast %cst_24 : f32 to vector<64x128xf32>
    %49 = arith.addf %48, %47 : vector<64x128xf32>
    %50 = arith.mulf %39, %49 : vector<64x128xf32>
    %51 = arith.truncf %50 : vector<64x128xf32> to vector<64x128xbf16>
    %c0_25 = arith.constant 0 : index
    %c0_26 = arith.constant 0 : index
    %52 = vector.load %arg9[%c0_25, %c0_26] : memref<128x32xbf16, #tpu.memory_space<vmem>>, vector<128x32xbf16>
    %cst_27 = arith.constant dense<0.000000e+00> : vector<64x32xf32>
    %53 = tpu.matmul %51, %52, %cst_27 {dimension_numbers = #tpu.dot_dimension_numbers<[1], [0], [0], [1], [0, 0, 1, 1], [], []>} : vector<64x128xbf16>, vector<128x32xbf16>, vector<64x32xf32> -> vector<64x32xf32>
    %c0_28 = arith.constant 0 : index
    %c0_29 = arith.constant 0 : index
    %54 = vector.load %arg10[%c0_28, %c0_29] : memref<1x32xf32, #tpu.memory_space<vmem>>, vector<1x32xf32>
    %55 = vector.broadcast %54 : vector<1x32xf32> to vector<64x32xf32>
    %56 = arith.addf %53, %55 : vector<64x32xf32>
    %c0_30 = arith.constant 0 : index
    %c0_31 = arith.constant 0 : index
    %57 = vector.load %arg11[%c0_30, %c0_31] : memref<1x32xf32, #tpu.memory_space<vmem>>, vector<1x32xf32>
    %58 = vector.broadcast %57 : vector<1x32xf32> to vector<64x32xf32>
    %59 = arith.mulf %56, %58 : vector<64x32xf32>
    %60 = arith.addf %59, %7 : vector<64x32xf32>
    %c0_32 = arith.constant 0 : index
    %c0_33 = arith.constant 0 : index
    %61 = vector.load %arg12[%c0_32, %c0_33] : memref<64x32xf32, #tpu.memory_space<vmem>>, vector<64x32xf32>
    tpu.vector_store %arg12[%c0_32, %c0_33], %60 {strides = array<i32>} : memref<64x32xf32, #tpu.memory_space<vmem>>, vector<64x32xf32>,
    return
  }
  func.func @transform_0(%arg0: i32) -> (i32, i32) {
    %c0_i32 = arith.constant 0 : i32
    %c0_i32_0 = arith.constant 0 : i32
    return %arg0, %c0_i32 : i32, i32
  }
  func.func @transform_1(%arg0: i32) -> (i32, i32) {
    %c0_i32 = arith.constant 0 : i32
    %c0_i32_0 = arith.constant 0 : i32
    return %arg0, %c0_i32 : i32, i32
  }
  func.func @transform_2(%arg0: i32) -> (i32, i32) {
    %c0_i32 = arith.constant 0 : i32
    %c0_i32_0 = arith.constant 0 : i32
    %c0_i32_1 = arith.constant 0 : i32
    return %c0_i32, %c0_i32_0 : i32, i32
  }
  func.func @transform_3(%arg0: i32) -> (i32, i32) {
    %c0_i32 = arith.constant 0 : i32
    %c0_i32_0 = arith.constant 0 : i32
    %c0_i32_1 = arith.constant 0 : i32
    return %c0_i32, %c0_i32_0 : i32, i32
  }
  func.func @transform_4(%arg0: i32) -> (i32, i32) {
    %c0_i32 = arith.constant 0 : i32
    %c0_i32_0 = arith.constant 0 : i32
    %c0_i32_1 = arith.constant 0 : i32
    return %c0_i32, %c0_i32_0 : i32, i32
  }
  func.func @transform_5(%arg0: i32) -> (i32, i32) {
    %c0_i32 = arith.constant 0 : i32
    %c0_i32_0 = arith.constant 0 : i32
    %c0_i32_1 = arith.constant 0 : i32
    return %c0_i32, %c0_i32_0 : i32, i32
  }
  func.func @transform_6(%arg0: i32) -> (i32, i32) {
    %c0_i32 = arith.constant 0 : i32
    %c0_i32_0 = arith.constant 0 : i32
    %c0_i32_1 = arith.constant 0 : i32
    return %c0_i32, %c0_i32_0 : i32, i32
  }
  func.func @transform_7(%arg0: i32) -> (i32, i32) {
    %c0_i32 = arith.constant 0 : i32
    %c0_i32_0 = arith.constant 0 : i32
    %c0_i32_1 = arith.constant 0 : i32
    return %c0_i32, %c0_i32_0 : i32, i32
  }
  func.func @transform_8(%arg0: i32) -> (i32, i32) {
    %c0_i32 = arith.constant 0 : i32
    %c0_i32_0 = arith.constant 0 : i32
    %c0_i32_1 = arith.constant 0 : i32
    return %c0_i32, %c0_i32_0 : i32, i32
  }
  func.func @transform_9(%arg0: i32) -> (i32, i32) {
    %c0_i32 = arith.constant 0 : i32
    %c0_i32_0 = arith.constant 0 : i32
    %c0_i32_1 = arith.constant 0 : i32
    return %c0_i32, %c0_i32_0 : i32, i32
  }
  func.func @transform_10(%arg0: i32) -> (i32, i32) {
    %c0_i32 = arith.constant 0 : i32
    %c0_i32_0 = arith.constant 0 : i32
    %c0_i32_1 = arith.constant 0 : i32
    return %c0_i32, %c0_i32_0 : i32, i32
  }
  func.func @transform_11(%arg0: i32) -> (i32, i32) {
    %c0_i32 = arith.constant 0 : i32
    %c0_i32_0 = arith.constant 0 : i32
    return %arg0, %c0_i32 : i32, i32
  }
}

module attributes {stable_mosaic.version = 11 : i64} {
  func.func @_ln_qkv_kernel(%arg0: i32, %arg1: memref<16x64xf32, #tpu.memory_space<vmem>>, %arg2: memref<1x64xf32, #tpu.memory_space<vmem>>, %arg3: memref<1x64xf32, #tpu.memory_space<vmem>>, %arg4: memref<64x192xbf16, #tpu.memory_space<vmem>>, %arg5: memref<16x192xbf16, #tpu.memory_space<vmem>>) attributes {dimension_semantics = [#tpu.dimension_semantics<parallel>], iteration_bounds = array<i64: 2>, scalar_prefetch = 0 : i64, scratch_operands = 0 : i64, tpu.core_type = #tpu.core_type<tc>, window_params = [{transform_indices = @transform_0, window_bounds = array<i64: 16, 64>}, {pipeline_mode = #tpu.pipeline_mode<synchronous>, transform_indices = @transform_1, window_bounds = array<i64: 1, 64>}, {pipeline_mode = #tpu.pipeline_mode<synchronous>, transform_indices = @transform_2, window_bounds = array<i64: 1, 64>}, {pipeline_mode = #tpu.pipeline_mode<synchronous>, transform_indices = @transform_3, window_bounds = array<i64: 64, 192>}, {transform_indices = @transform_4, window_bounds = array<i64: 16, 192>}]} {
    %c0 = arith.constant 0 : index
    %c0_0 = arith.constant 0 : index
    %0 = vector.load %arg1[%c0, %c0_0] : memref<16x64xf32, #tpu.memory_space<vmem>>, vector<16x64xf32>
    %c0_1 = arith.constant 0 : index
    %c0_2 = arith.constant 0 : index
    %1 = vector.load %arg2[%c0_1, %c0_2] : memref<1x64xf32, #tpu.memory_space<vmem>>, vector<1x64xf32>
    %c0_3 = arith.constant 0 : index
    %c0_4 = arith.constant 0 : index
    %2 = vector.load %arg3[%c0_3, %c0_4] : memref<1x64xf32, #tpu.memory_space<vmem>>, vector<1x64xf32>
    %cst = arith.constant dense<0.000000e+00> : vector<16xf32>
    %3 = vector.multi_reduction <add>, %0, %cst [1] : vector<16x64xf32> to vector<16xf32>
    %4 = vector.shape_cast %3 : vector<16xf32> to vector<16x1xf32>
    %cst_5 = arith.constant 6.400000e+01 : f32
    %5 = vector.broadcast %cst_5 : f32 to vector<16x1xf32>
    %6 = arith.divf %4, %5 : vector<16x1xf32>
    %7 = vector.broadcast %6 : vector<16x1xf32> to vector<16x64xf32>
    %8 = arith.subf %0, %7 : vector<16x64xf32>
    %9 = arith.mulf %8, %8 : vector<16x64xf32>
    %cst_6 = arith.constant dense<0.000000e+00> : vector<16xf32>
    %10 = vector.multi_reduction <add>, %9, %cst_6 [1] : vector<16x64xf32> to vector<16xf32>
    %11 = vector.shape_cast %10 : vector<16xf32> to vector<16x1xf32>
    %cst_7 = arith.constant 6.400000e+01 : f32
    %12 = vector.broadcast %cst_7 : f32 to vector<16x1xf32>
    %13 = arith.divf %11, %12 : vector<16x1xf32>
    %14 = vector.broadcast %6 : vector<16x1xf32> to vector<16x64xf32>
    %15 = arith.subf %0, %14 : vector<16x64xf32>
    %cst_8 = arith.constant 9.99999974E-6 : f32
    %16 = vector.broadcast %cst_8 : f32 to vector<16x1xf32>
    %17 = arith.addf %13, %16 : vector<16x1xf32>
    %18 = math.rsqrt %17 : vector<16x1xf32>
    %19 = vector.broadcast %18 : vector<16x1xf32> to vector<16x64xf32>
    %20 = arith.mulf %15, %19 : vector<16x64xf32>
    %21 = vector.broadcast %1 : vector<1x64xf32> to vector<16x64xf32>
    %22 = arith.mulf %20, %21 : vector<16x64xf32>
    %23 = vector.broadcast %2 : vector<1x64xf32> to vector<16x64xf32>
    %24 = arith.addf %22, %23 : vector<16x64xf32>
    %25 = arith.truncf %24 : vector<16x64xf32> to vector<16x64xbf16>
    %c0_9 = arith.constant 0 : index
    %c0_10 = arith.constant 0 : index
    %26 = vector.load %arg4[%c0_9, %c0_10] : memref<64x192xbf16, #tpu.memory_space<vmem>>, vector<64x192xbf16>
    %cst_11 = arith.constant dense<0.000000e+00> : vector<16x192xf32>
    %27 = tpu.matmul %25, %26, %cst_11 {dimension_numbers = #tpu.dot_dimension_numbers<[1], [0], [0], [1], [0, 0, 1, 1], [], []>} : vector<16x64xbf16>, vector<64x192xbf16>, vector<16x192xf32> -> vector<16x192xf32>
    %28 = arith.truncf %27 : vector<16x192xf32> to vector<16x192xbf16>
    %c0_12 = arith.constant 0 : index
    %c0_13 = arith.constant 0 : index
    %29 = vector.load %arg5[%c0_12, %c0_13] : memref<16x192xbf16, #tpu.memory_space<vmem>>, vector<16x192xbf16>
    tpu.vector_store %arg5[%c0_12, %c0_13], %28 {strides = array<i32>} : memref<16x192xbf16, #tpu.memory_space<vmem>>, vector<16x192xbf16>,
    return
  }
  func.func @transform_0(%arg0: i32) -> (i32, i32) {
    %c0_i32 = arith.constant 0 : i32
    %c0_i32_0 = arith.constant 0 : i32
    return %arg0, %c0_i32 : i32, i32
  }
  func.func @transform_1(%arg0: i32) -> (i32, i32) {
    %c0_i32 = arith.constant 0 : i32
    %c0_i32_0 = arith.constant 0 : i32
    %c0_i32_1 = arith.constant 0 : i32
    return %c0_i32, %c0_i32_0 : i32, i32
  }
  func.func @transform_2(%arg0: i32) -> (i32, i32) {
    %c0_i32 = arith.constant 0 : i32
    %c0_i32_0 = arith.constant 0 : i32
    %c0_i32_1 = arith.constant 0 : i32
    return %c0_i32, %c0_i32_0 : i32, i32
  }
  func.func @transform_3(%arg0: i32) -> (i32, i32) {
    %c0_i32 = arith.constant 0 : i32
    %c0_i32_0 = arith.constant 0 : i32
    %c0_i32_1 = arith.constant 0 : i32
    return %c0_i32, %c0_i32_0 : i32, i32
  }
  func.func @transform_4(%arg0: i32) -> (i32, i32) {
    %c0_i32 = arith.constant 0 : i32
    %c0_i32_0 = arith.constant 0 : i32
    return %arg0, %c0_i32 : i32, i32
  }
}

module attributes {stable_mosaic.version = 11 : i64} {
  func.func @_matmul_bias_kernel(%arg0: i32, %arg1: i32, %arg2: memref<16x288xbf16, #tpu.memory_space<vmem>>, %arg3: memref<288x64xbf16, #tpu.memory_space<vmem>>, %arg4: memref<1x64xf32, #tpu.memory_space<vmem>>, %arg5: memref<16x64xf32, #tpu.memory_space<vmem>>, %arg6: memref<16x64xf32, #tpu.memory_space<vmem>>) attributes {dimension_semantics = [#tpu.dimension_semantics<parallel>, #tpu.dimension_semantics<arbitrary>], iteration_bounds = array<i64: 2, 1>, scalar_prefetch = 0 : i64, scratch_operands = 1 : i64, tpu.core_type = #tpu.core_type<tc>, window_params = [{transform_indices = @transform_0, window_bounds = array<i64: 16, 288>}, {transform_indices = @transform_1, window_bounds = array<i64: 288, 64>}, {pipeline_mode = #tpu.pipeline_mode<synchronous>, transform_indices = @transform_2, window_bounds = array<i64: 1, 64>}, {transform_indices = @transform_3, window_bounds = array<i64: 16, 64>}]} {
    %c0_i32 = arith.constant 0 : i32
    %0 = arith.cmpi eq, %arg1, %c0_i32 : i32
    %1 = arith.extui %0 : i1 to i32
    %c0_i32_0 = arith.constant 0 : i32
    %2 = arith.cmpi ne, %1, %c0_i32_0 : i32
    scf.if %2 {
      %cst_10 = arith.constant 0.000000e+00 : f32
      %12 = vector.broadcast %cst_10 : f32 to vector<16x64xf32>
      %c0_11 = arith.constant 0 : index
      %c0_12 = arith.constant 0 : index
      %13 = vector.load %arg6[%c0_11, %c0_12] : memref<16x64xf32, #tpu.memory_space<vmem>>, vector<16x64xf32>
      tpu.vector_store %arg6[%c0_11, %c0_12], %12 {strides = array<i32>} : memref<16x64xf32, #tpu.memory_space<vmem>>, vector<16x64xf32>,
    } else {
    }
    %c0 = arith.constant 0 : index
    %c0_1 = arith.constant 0 : index
    %3 = vector.load %arg6[%c0, %c0_1] : memref<16x64xf32, #tpu.memory_space<vmem>>, vector<16x64xf32>
    %c0_2 = arith.constant 0 : index
    %c0_3 = arith.constant 0 : index
    %4 = vector.load %arg2[%c0_2, %c0_3] : memref<16x288xbf16, #tpu.memory_space<vmem>>, vector<16x288xbf16>
    %c0_4 = arith.constant 0 : index
    %c0_5 = arith.constant 0 : index
    %5 = vector.load %arg3[%c0_4, %c0_5] : memref<288x64xbf16, #tpu.memory_space<vmem>>, vector<288x64xbf16>
    %cst = arith.constant dense<0.000000e+00> : vector<16x64xf32>
    %6 = tpu.matmul %4, %5, %cst {dimension_numbers = #tpu.dot_dimension_numbers<[1], [0], [0], [1], [0, 0, 1, 1], [], []>} : vector<16x288xbf16>, vector<288x64xbf16>, vector<16x64xf32> -> vector<16x64xf32>
    %7 = arith.addf %3, %6 : vector<16x64xf32>
    %c0_6 = arith.constant 0 : index
    %c0_7 = arith.constant 0 : index
    %8 = vector.load %arg6[%c0_6, %c0_7] : memref<16x64xf32, #tpu.memory_space<vmem>>, vector<16x64xf32>
    tpu.vector_store %arg6[%c0_6, %c0_7], %7 {strides = array<i32>} : memref<16x64xf32, #tpu.memory_space<vmem>>, vector<16x64xf32>,
    %c0_i32_8 = arith.constant 0 : i32
    %9 = arith.cmpi eq, %arg1, %c0_i32_8 : i32
    %10 = arith.extui %9 : i1 to i32
    %c0_i32_9 = arith.constant 0 : i32
    %11 = arith.cmpi ne, %10, %c0_i32_9 : i32
    scf.if %11 {
      %c0_10 = arith.constant 0 : index
      %c0_11 = arith.constant 0 : index
      %12 = vector.load %arg6[%c0_10, %c0_11] : memref<16x64xf32, #tpu.memory_space<vmem>>, vector<16x64xf32>
      %c0_12 = arith.constant 0 : index
      %c0_13 = arith.constant 0 : index
      %13 = vector.load %arg4[%c0_12, %c0_13] : memref<1x64xf32, #tpu.memory_space<vmem>>, vector<1x64xf32>
      %14 = vector.broadcast %13 : vector<1x64xf32> to vector<16x64xf32>
      %15 = arith.addf %12, %14 : vector<16x64xf32>
      %c0_14 = arith.constant 0 : index
      %c0_15 = arith.constant 0 : index
      %16 = vector.load %arg5[%c0_14, %c0_15] : memref<16x64xf32, #tpu.memory_space<vmem>>, vector<16x64xf32>
      tpu.vector_store %arg5[%c0_14, %c0_15], %15 {strides = array<i32>} : memref<16x64xf32, #tpu.memory_space<vmem>>, vector<16x64xf32>,
    } else {
    }
    return
  }
  func.func @transform_0(%arg0: i32, %arg1: i32) -> (i32, i32) {
    %c0_i32 = arith.constant 0 : i32
    return %arg0, %arg1 : i32, i32
  }
  func.func @transform_1(%arg0: i32, %arg1: i32) -> (i32, i32) {
    %c0_i32 = arith.constant 0 : i32
    %c0_i32_0 = arith.constant 0 : i32
    return %arg1, %c0_i32 : i32, i32
  }
  func.func @transform_2(%arg0: i32, %arg1: i32) -> (i32, i32) {
    %c0_i32 = arith.constant 0 : i32
    %c0_i32_0 = arith.constant 0 : i32
    %c0_i32_1 = arith.constant 0 : i32
    return %c0_i32, %c0_i32_0 : i32, i32
  }
  func.func @transform_3(%arg0: i32, %arg1: i32) -> (i32, i32) {
    %c0_i32 = arith.constant 0 : i32
    %c0_i32_0 = arith.constant 0 : i32
    return %arg0, %c0_i32 : i32, i32
  }
}

module attributes {stable_mosaic.version = 11 : i64} {
  func.func @_attn_core_kernel(%arg0: i32, %arg1: memref<16x192xbf16, #tpu.memory_space<vmem>>, %arg2: memref<4x4x4xf32, #tpu.memory_space<vmem>>, %arg3: memref<16x64xbf16, #tpu.memory_space<vmem>>) attributes {dimension_semantics = [#tpu.dimension_semantics<parallel>], iteration_bounds = array<i64: 2>, scalar_prefetch = 0 : i64, scratch_operands = 0 : i64, tpu.core_type = #tpu.core_type<tc>, window_params = [{transform_indices = @transform_0, window_bounds = array<i64: 16, 192>}, {pipeline_mode = #tpu.pipeline_mode<synchronous>, transform_indices = @transform_1, window_bounds = array<i64: 4, 4, 4>}, {transform_indices = @transform_2, window_bounds = array<i64: 16, 64>}]} {
    %c0 = arith.constant 0 : index
    %c0_0 = arith.constant 0 : index
    %0 = vector.load %arg1[%c0, %c0_0] : memref<16x192xbf16, #tpu.memory_space<vmem>>, vector<16x192xbf16>
    %1 = vector.shape_cast %0 : vector<16x192xbf16> to vector<4x4x192xbf16>
    %2 = vector.extract_strided_slice %1 {offsets = [0, 0, 0], sizes = [4, 4, 16], strides = [1, 1, 1]} : vector<4x4x192xbf16> to vector<4x4x16xbf16>
    %3 = vector.extract_strided_slice %1 {offsets = [0, 0, 64], sizes = [4, 4, 16], strides = [1, 1, 1]} : vector<4x4x192xbf16> to vector<4x4x16xbf16>
    %4 = vector.extract_strided_slice %1 {offsets = [0, 0, 128], sizes = [4, 4, 16], strides = [1, 1, 1]} : vector<4x4x192xbf16> to vector<4x4x16xbf16>
    "tpu.trace_start"() <{level = 10 : i32, message = "bid,bjd->bij"}> : () -> ()
    %cst = arith.constant dense<0.000000e+00> : vector<4x4x4xf32>
    %5 = tpu.matmul %2, %3, %cst {dimension_numbers = #tpu.dot_dimension_numbers<[2], [2], [1], [1], [0, 0, 0, 1, 1, 1], [0], [0]>} : vector<4x4x16xbf16>, vector<4x4x16xbf16>, vector<4x4x4xf32> -> vector<4x4x4xf32>
    "tpu.trace_stop"() : () -> ()
    %c0_1 = arith.constant 0 : index
    %c0_2 = arith.constant 0 : index
    %c0_3 = arith.constant 0 : index
    %6 = vector.load %arg2[%c0_1, %c0_2, %c0_3] : memref<4x4x4xf32, #tpu.memory_space<vmem>>, vector<1x4x4xf32>
    %7 = vector.shape_cast %6 : vector<1x4x4xf32> to vector<4x4xf32>
    %8 = vector.shape_cast %7 : vector<4x4xf32> to vector<1x4x4xf32>
    %9 = vector.broadcast %8 : vector<1x4x4xf32> to vector<4x4x4xf32>
    %10 = arith.addf %5, %9 : vector<4x4x4xf32>
    %cst_4 = arith.constant dense<0xFF800000> : vector<4x4xf32>
    %11 = vector.multi_reduction <maximumf>, %10, %cst_4 [2] : vector<4x4x4xf32> to vector<4x4xf32>
    %12 = vector.shape_cast %11 : vector<4x4xf32> to vector<4x4x1xf32>
    %13 = vector.broadcast %12 : vector<4x4x1xf32> to vector<4x4x4xf32>
    %14 = arith.subf %10, %13 : vector<4x4x4xf32>
    %15 = math.exp %14 : vector<4x4x4xf32>
    %cst_5 = arith.constant dense<0.000000e+00> : vector<4x4xf32>
    %16 = vector.multi_reduction <add>, %15, %cst_5 [2] : vector<4x4x4xf32> to vector<4x4xf32>
    %17 = vector.shape_cast %16 : vector<4x4xf32> to vector<4x4x1xf32>
    %18 = tpu.reciprocal %17 {approx = true} : vector<4x4x1xf32> -> vector<4x4x1xf32>
    %19 = vector.broadcast %18 : vector<4x4x1xf32> to vector<4x4x4xf32>
    %20 = arith.mulf %15, %19 : vector<4x4x4xf32>
    %21 = arith.truncf %20 : vector<4x4x4xf32> to vector<4x4x4xbf16>
    "tpu.trace_start"() <{level = 10 : i32, message = "bij,bjd->bid"}> : () -> ()
    %cst_6 = arith.constant dense<0.000000e+00> : vector<4x4x16xf32>
    %22 = tpu.matmul %21, %4, %cst_6 {dimension_numbers = #tpu.dot_dimension_numbers<[2], [1], [1], [2], [0, 0, 0, 1, 1, 2], [0], [0]>} : vector<4x4x4xbf16>, vector<4x4x16xbf16>, vector<4x4x16xf32> -> vector<4x4x16xf32>
    "tpu.trace_stop"() : () -> ()
    %23 = vector.extract_strided_slice %1 {offsets = [0, 0, 16], sizes = [4, 4, 16], strides = [1, 1, 1]} : vector<4x4x192xbf16> to vector<4x4x16xbf16>
    %24 = vector.extract_strided_slice %1 {offsets = [0, 0, 80], sizes = [4, 4, 16], strides = [1, 1, 1]} : vector<4x4x192xbf16> to vector<4x4x16xbf16>
    %25 = vector.extract_strided_slice %1 {offsets = [0, 0, 144], sizes = [4, 4, 16], strides = [1, 1, 1]} : vector<4x4x192xbf16> to vector<4x4x16xbf16>
    "tpu.trace_start"() <{level = 10 : i32, message = "bid,bjd->bij"}> : () -> ()
    %cst_7 = arith.constant dense<0.000000e+00> : vector<4x4x4xf32>
    %26 = tpu.matmul %23, %24, %cst_7 {dimension_numbers = #tpu.dot_dimension_numbers<[2], [2], [1], [1], [0, 0, 0, 1, 1, 1], [0], [0]>} : vector<4x4x16xbf16>, vector<4x4x16xbf16>, vector<4x4x4xf32> -> vector<4x4x4xf32>
    "tpu.trace_stop"() : () -> ()
    %c1 = arith.constant 1 : index
    %c0_8 = arith.constant 0 : index
    %c0_9 = arith.constant 0 : index
    %27 = vector.load %arg2[%c1, %c0_8, %c0_9] : memref<4x4x4xf32, #tpu.memory_space<vmem>>, vector<1x4x4xf32>
    %28 = vector.shape_cast %27 : vector<1x4x4xf32> to vector<4x4xf32>
    %29 = vector.shape_cast %28 : vector<4x4xf32> to vector<1x4x4xf32>
    %30 = vector.broadcast %29 : vector<1x4x4xf32> to vector<4x4x4xf32>
    %31 = arith.addf %26, %30 : vector<4x4x4xf32>
    %cst_10 = arith.constant dense<0xFF800000> : vector<4x4xf32>
    %32 = vector.multi_reduction <maximumf>, %31, %cst_10 [2] : vector<4x4x4xf32> to vector<4x4xf32>
    %33 = vector.shape_cast %32 : vector<4x4xf32> to vector<4x4x1xf32>
    %34 = vector.broadcast %33 : vector<4x4x1xf32> to vector<4x4x4xf32>
    %35 = arith.subf %31, %34 : vector<4x4x4xf32>
    %36 = math.exp %35 : vector<4x4x4xf32>
    %cst_11 = arith.constant dense<0.000000e+00> : vector<4x4xf32>
    %37 = vector.multi_reduction <add>, %36, %cst_11 [2] : vector<4x4x4xf32> to vector<4x4xf32>
    %38 = vector.shape_cast %37 : vector<4x4xf32> to vector<4x4x1xf32>
    %39 = tpu.reciprocal %38 {approx = true} : vector<4x4x1xf32> -> vector<4x4x1xf32>
    %40 = vector.broadcast %39 : vector<4x4x1xf32> to vector<4x4x4xf32>
    %41 = arith.mulf %36, %40 : vector<4x4x4xf32>
    %42 = arith.truncf %41 : vector<4x4x4xf32> to vector<4x4x4xbf16>
    "tpu.trace_start"() <{level = 10 : i32, message = "bij,bjd->bid"}> : () -> ()
    %cst_12 = arith.constant dense<0.000000e+00> : vector<4x4x16xf32>
    %43 = tpu.matmul %42, %25, %cst_12 {dimension_numbers = #tpu.dot_dimension_numbers<[2], [1], [1], [2], [0, 0, 0, 1, 1, 2], [0], [0]>} : vector<4x4x4xbf16>, vector<4x4x16xbf16>, vector<4x4x16xf32> -> vector<4x4x16xf32>
    "tpu.trace_stop"() : () -> ()
    %44 = vector.extract_strided_slice %1 {offsets = [0, 0, 32], sizes = [4, 4, 16], strides = [1, 1, 1]} : vector<4x4x192xbf16> to vector<4x4x16xbf16>
    %45 = vector.extract_strided_slice %1 {offsets = [0, 0, 96], sizes = [4, 4, 16], strides = [1, 1, 1]} : vector<4x4x192xbf16> to vector<4x4x16xbf16>
    %46 = vector.extract_strided_slice %1 {offsets = [0, 0, 160], sizes = [4, 4, 16], strides = [1, 1, 1]} : vector<4x4x192xbf16> to vector<4x4x16xbf16>
    "tpu.trace_start"() <{level = 10 : i32, message = "bid,bjd->bij"}> : () -> ()
    %cst_13 = arith.constant dense<0.000000e+00> : vector<4x4x4xf32>
    %47 = tpu.matmul %44, %45, %cst_13 {dimension_numbers = #tpu.dot_dimension_numbers<[2], [2], [1], [1], [0, 0, 0, 1, 1, 1], [0], [0]>} : vector<4x4x16xbf16>, vector<4x4x16xbf16>, vector<4x4x4xf32> -> vector<4x4x4xf32>
    "tpu.trace_stop"() : () -> ()
    %c2 = arith.constant 2 : index
    %c0_14 = arith.constant 0 : index
    %c0_15 = arith.constant 0 : index
    %48 = vector.load %arg2[%c2, %c0_14, %c0_15] : memref<4x4x4xf32, #tpu.memory_space<vmem>>, vector<1x4x4xf32>
    %49 = vector.shape_cast %48 : vector<1x4x4xf32> to vector<4x4xf32>
    %50 = vector.shape_cast %49 : vector<4x4xf32> to vector<1x4x4xf32>
    %51 = vector.broadcast %50 : vector<1x4x4xf32> to vector<4x4x4xf32>
    %52 = arith.addf %47, %51 : vector<4x4x4xf32>
    %cst_16 = arith.constant dense<0xFF800000> : vector<4x4xf32>
    %53 = vector.multi_reduction <maximumf>, %52, %cst_16 [2] : vector<4x4x4xf32> to vector<4x4xf32>
    %54 = vector.shape_cast %53 : vector<4x4xf32> to vector<4x4x1xf32>
    %55 = vector.broadcast %54 : vector<4x4x1xf32> to vector<4x4x4xf32>
    %56 = arith.subf %52, %55 : vector<4x4x4xf32>
    %57 = math.exp %56 : vector<4x4x4xf32>
    %cst_17 = arith.constant dense<0.000000e+00> : vector<4x4xf32>
    %58 = vector.multi_reduction <add>, %57, %cst_17 [2] : vector<4x4x4xf32> to vector<4x4xf32>
    %59 = vector.shape_cast %58 : vector<4x4xf32> to vector<4x4x1xf32>
    %60 = tpu.reciprocal %59 {approx = true} : vector<4x4x1xf32> -> vector<4x4x1xf32>
    %61 = vector.broadcast %60 : vector<4x4x1xf32> to vector<4x4x4xf32>
    %62 = arith.mulf %57, %61 : vector<4x4x4xf32>
    %63 = arith.truncf %62 : vector<4x4x4xf32> to vector<4x4x4xbf16>
    "tpu.trace_start"() <{level = 10 : i32, message = "bij,bjd->bid"}> : () -> ()
    %cst_18 = arith.constant dense<0.000000e+00> : vector<4x4x16xf32>
    %64 = tpu.matmul %63, %46, %cst_18 {dimension_numbers = #tpu.dot_dimension_numbers<[2], [1], [1], [2], [0, 0, 0, 1, 1, 2], [0], [0]>} : vector<4x4x4xbf16>, vector<4x4x16xbf16>, vector<4x4x16xf32> -> vector<4x4x16xf32>
    "tpu.trace_stop"() : () -> ()
    %65 = vector.extract_strided_slice %1 {offsets = [0, 0, 48], sizes = [4, 4, 16], strides = [1, 1, 1]} : vector<4x4x192xbf16> to vector<4x4x16xbf16>
    %66 = vector.extract_strided_slice %1 {offsets = [0, 0, 112], sizes = [4, 4, 16], strides = [1, 1, 1]} : vector<4x4x192xbf16> to vector<4x4x16xbf16>
    %67 = vector.extract_strided_slice %1 {offsets = [0, 0, 176], sizes = [4, 4, 16], strides = [1, 1, 1]} : vector<4x4x192xbf16> to vector<4x4x16xbf16>
    "tpu.trace_start"() <{level = 10 : i32, message = "bid,bjd->bij"}> : () -> ()
    %cst_19 = arith.constant dense<0.000000e+00> : vector<4x4x4xf32>
    %68 = tpu.matmul %65, %66, %cst_19 {dimension_numbers = #tpu.dot_dimension_numbers<[2], [2], [1], [1], [0, 0, 0, 1, 1, 1], [0], [0]>} : vector<4x4x16xbf16>, vector<4x4x16xbf16>, vector<4x4x4xf32> -> vector<4x4x4xf32>
    "tpu.trace_stop"() : () -> ()
    %c3 = arith.constant 3 : index
    %c0_20 = arith.constant 0 : index
    %c0_21 = arith.constant 0 : index
    %69 = vector.load %arg2[%c3, %c0_20, %c0_21] : memref<4x4x4xf32, #tpu.memory_space<vmem>>, vector<1x4x4xf32>
    %70 = vector.shape_cast %69 : vector<1x4x4xf32> to vector<4x4xf32>
    %71 = vector.shape_cast %70 : vector<4x4xf32> to vector<1x4x4xf32>
    %72 = vector.broadcast %71 : vector<1x4x4xf32> to vector<4x4x4xf32>
    %73 = arith.addf %68, %72 : vector<4x4x4xf32>
    %cst_22 = arith.constant dense<0xFF800000> : vector<4x4xf32>
    %74 = vector.multi_reduction <maximumf>, %73, %cst_22 [2] : vector<4x4x4xf32> to vector<4x4xf32>
    %75 = vector.shape_cast %74 : vector<4x4xf32> to vector<4x4x1xf32>
    %76 = vector.broadcast %75 : vector<4x4x1xf32> to vector<4x4x4xf32>
    %77 = arith.subf %73, %76 : vector<4x4x4xf32>
    %78 = math.exp %77 : vector<4x4x4xf32>
    %cst_23 = arith.constant dense<0.000000e+00> : vector<4x4xf32>
    %79 = vector.multi_reduction <add>, %78, %cst_23 [2] : vector<4x4x4xf32> to vector<4x4xf32>
    %80 = vector.shape_cast %79 : vector<4x4xf32> to vector<4x4x1xf32>
    %81 = tpu.reciprocal %80 {approx = true} : vector<4x4x1xf32> -> vector<4x4x1xf32>
    %82 = vector.broadcast %81 : vector<4x4x1xf32> to vector<4x4x4xf32>
    %83 = arith.mulf %78, %82 : vector<4x4x4xf32>
    %84 = arith.truncf %83 : vector<4x4x4xf32> to vector<4x4x4xbf16>
    "tpu.trace_start"() <{level = 10 : i32, message = "bij,bjd->bid"}> : () -> ()
    %cst_24 = arith.constant dense<0.000000e+00> : vector<4x4x16xf32>
    %85 = tpu.matmul %84, %67, %cst_24 {dimension_numbers = #tpu.dot_dimension_numbers<[2], [1], [1], [2], [0, 0, 0, 1, 1, 2], [0], [0]>} : vector<4x4x4xbf16>, vector<4x4x16xbf16>, vector<4x4x16xf32> -> vector<4x4x16xf32>
    "tpu.trace_stop"() : () -> ()
    %86 = tpu.concatenate %22, %43, %64, %85 in 2 : vector<4x4x16xf32>, vector<4x4x16xf32>, vector<4x4x16xf32>, vector<4x4x16xf32> -> vector<4x4x64xf32>
    %87 = vector.shape_cast %86 : vector<4x4x64xf32> to vector<16x64xf32>
    %88 = arith.truncf %87 : vector<16x64xf32> to vector<16x64xbf16>
    %c0_25 = arith.constant 0 : index
    %c0_26 = arith.constant 0 : index
    %89 = vector.load %arg3[%c0_25, %c0_26] : memref<16x64xbf16, #tpu.memory_space<vmem>>, vector<16x64xbf16>
    tpu.vector_store %arg3[%c0_25, %c0_26], %88 {strides = array<i32>} : memref<16x64xbf16, #tpu.memory_space<vmem>>, vector<16x64xbf16>,
    return
  }
  func.func @transform_0(%arg0: i32) -> (i32, i32) {
    %c0_i32 = arith.constant 0 : i32
    %c0_i32_0 = arith.constant 0 : i32
    return %arg0, %c0_i32 : i32, i32
  }
  func.func @transform_1(%arg0: i32) -> (i32, i32, i32) {
    %c0_i32 = arith.constant 0 : i32
    %c0_i32_0 = arith.constant 0 : i32
    %c0_i32_1 = arith.constant 0 : i32
    %c0_i32_2 = arith.constant 0 : i32
    return %c0_i32, %c0_i32_0, %c0_i32_1 : i32, i32, i32
  }
  func.func @transform_2(%arg0: i32) -> (i32, i32) {
    %c0_i32 = arith.constant 0 : i32
    %c0_i32_0 = arith.constant 0 : i32
    return %arg0, %c0_i32 : i32, i32
  }
}

module attributes {stable_mosaic.version = 11 : i64} {
  func.func @_outproj_ffn_kernel(%arg0: i32, %arg1: memref<16x64xbf16, #tpu.memory_space<vmem>>, %arg2: memref<16x64xf32, #tpu.memory_space<vmem>>, %arg3: memref<64x64xbf16, #tpu.memory_space<vmem>>, %arg4: memref<1x64xf32, #tpu.memory_space<vmem>>, %arg5: memref<1x64xf32, #tpu.memory_space<vmem>>, %arg6: memref<1x64xf32, #tpu.memory_space<vmem>>, %arg7: memref<64x256xbf16, #tpu.memory_space<vmem>>, %arg8: memref<1x256xf32, #tpu.memory_space<vmem>>, %arg9: memref<256x64xbf16, #tpu.memory_space<vmem>>, %arg10: memref<1x64xf32, #tpu.memory_space<vmem>>, %arg11: memref<1x64xf32, #tpu.memory_space<vmem>>, %arg12: memref<16x64xf32, #tpu.memory_space<vmem>>) attributes {dimension_semantics = [#tpu.dimension_semantics<parallel>], iteration_bounds = array<i64: 2>, scalar_prefetch = 0 : i64, scratch_operands = 0 : i64, tpu.core_type = #tpu.core_type<tc>, window_params = [{transform_indices = @transform_0, window_bounds = array<i64: 16, 64>}, {transform_indices = @transform_1, window_bounds = array<i64: 16, 64>}, {pipeline_mode = #tpu.pipeline_mode<synchronous>, transform_indices = @transform_2, window_bounds = array<i64: 64, 64>}, {pipeline_mode = #tpu.pipeline_mode<synchronous>, transform_indices = @transform_3, window_bounds = array<i64: 1, 64>}, {pipeline_mode = #tpu.pipeline_mode<synchronous>, transform_indices = @transform_4, window_bounds = array<i64: 1, 64>}, {pipeline_mode = #tpu.pipeline_mode<synchronous>, transform_indices = @transform_5, window_bounds = array<i64: 1, 64>}, {pipeline_mode = #tpu.pipeline_mode<synchronous>, transform_indices = @transform_6, window_bounds = array<i64: 64, 256>}, {pipeline_mode = #tpu.pipeline_mode<synchronous>, transform_indices = @transform_7, window_bounds = array<i64: 1, 256>}, {pipeline_mode = #tpu.pipeline_mode<synchronous>, transform_indices = @transform_8, window_bounds = array<i64: 256, 64>}, {pipeline_mode = #tpu.pipeline_mode<synchronous>, transform_indices = @transform_9, window_bounds = array<i64: 1, 64>}, {pipeline_mode = #tpu.pipeline_mode<synchronous>, transform_indices = @transform_10, window_bounds = array<i64: 1, 64>}, {transform_indices = @transform_11, window_bounds = array<i64: 16, 64>}]} {
    %c0 = arith.constant 0 : index
    %c0_0 = arith.constant 0 : index
    %0 = vector.load %arg1[%c0, %c0_0] : memref<16x64xbf16, #tpu.memory_space<vmem>>, vector<16x64xbf16>
    %c0_1 = arith.constant 0 : index
    %c0_2 = arith.constant 0 : index
    %1 = vector.load %arg3[%c0_1, %c0_2] : memref<64x64xbf16, #tpu.memory_space<vmem>>, vector<64x64xbf16>
    %cst = arith.constant dense<0.000000e+00> : vector<16x64xf32>
    %2 = tpu.matmul %0, %1, %cst {dimension_numbers = #tpu.dot_dimension_numbers<[1], [0], [0], [1], [0, 0, 1, 1], [], []>} : vector<16x64xbf16>, vector<64x64xbf16>, vector<16x64xf32> -> vector<16x64xf32>
    %c0_3 = arith.constant 0 : index
    %c0_4 = arith.constant 0 : index
    %3 = vector.load %arg4[%c0_3, %c0_4] : memref<1x64xf32, #tpu.memory_space<vmem>>, vector<1x64xf32>
    %4 = vector.broadcast %3 : vector<1x64xf32> to vector<16x64xf32>
    %5 = arith.mulf %2, %4 : vector<16x64xf32>
    %c0_5 = arith.constant 0 : index
    %c0_6 = arith.constant 0 : index
    %6 = vector.load %arg2[%c0_5, %c0_6] : memref<16x64xf32, #tpu.memory_space<vmem>>, vector<16x64xf32>
    %7 = arith.addf %5, %6 : vector<16x64xf32>
    %c0_7 = arith.constant 0 : index
    %c0_8 = arith.constant 0 : index
    %8 = vector.load %arg5[%c0_7, %c0_8] : memref<1x64xf32, #tpu.memory_space<vmem>>, vector<1x64xf32>
    %c0_9 = arith.constant 0 : index
    %c0_10 = arith.constant 0 : index
    %9 = vector.load %arg6[%c0_9, %c0_10] : memref<1x64xf32, #tpu.memory_space<vmem>>, vector<1x64xf32>
    %cst_11 = arith.constant dense<0.000000e+00> : vector<16xf32>
    %10 = vector.multi_reduction <add>, %7, %cst_11 [1] : vector<16x64xf32> to vector<16xf32>
    %11 = vector.shape_cast %10 : vector<16xf32> to vector<16x1xf32>
    %cst_12 = arith.constant 6.400000e+01 : f32
    %12 = vector.broadcast %cst_12 : f32 to vector<16x1xf32>
    %13 = arith.divf %11, %12 : vector<16x1xf32>
    %14 = vector.broadcast %13 : vector<16x1xf32> to vector<16x64xf32>
    %15 = arith.subf %7, %14 : vector<16x64xf32>
    %16 = arith.mulf %15, %15 : vector<16x64xf32>
    %cst_13 = arith.constant dense<0.000000e+00> : vector<16xf32>
    %17 = vector.multi_reduction <add>, %16, %cst_13 [1] : vector<16x64xf32> to vector<16xf32>
    %18 = vector.shape_cast %17 : vector<16xf32> to vector<16x1xf32>
    %cst_14 = arith.constant 6.400000e+01 : f32
    %19 = vector.broadcast %cst_14 : f32 to vector<16x1xf32>
    %20 = arith.divf %18, %19 : vector<16x1xf32>
    %21 = vector.broadcast %13 : vector<16x1xf32> to vector<16x64xf32>
    %22 = arith.subf %7, %21 : vector<16x64xf32>
    %cst_15 = arith.constant 9.99999974E-6 : f32
    %23 = vector.broadcast %cst_15 : f32 to vector<16x1xf32>
    %24 = arith.addf %20, %23 : vector<16x1xf32>
    %25 = math.rsqrt %24 : vector<16x1xf32>
    %26 = vector.broadcast %25 : vector<16x1xf32> to vector<16x64xf32>
    %27 = arith.mulf %22, %26 : vector<16x64xf32>
    %28 = vector.broadcast %8 : vector<1x64xf32> to vector<16x64xf32>
    %29 = arith.mulf %27, %28 : vector<16x64xf32>
    %30 = vector.broadcast %9 : vector<1x64xf32> to vector<16x64xf32>
    %31 = arith.addf %29, %30 : vector<16x64xf32>
    %32 = arith.truncf %31 : vector<16x64xf32> to vector<16x64xbf16>
    %c0_16 = arith.constant 0 : index
    %c0_17 = arith.constant 0 : index
    %33 = vector.load %arg7[%c0_16, %c0_17] : memref<64x256xbf16, #tpu.memory_space<vmem>>, vector<64x256xbf16>
    %cst_18 = arith.constant dense<0.000000e+00> : vector<16x256xf32>
    %34 = tpu.matmul %32, %33, %cst_18 {dimension_numbers = #tpu.dot_dimension_numbers<[1], [0], [0], [1], [0, 0, 1, 1], [], []>} : vector<16x64xbf16>, vector<64x256xbf16>, vector<16x256xf32> -> vector<16x256xf32>
    %c0_19 = arith.constant 0 : index
    %c0_20 = arith.constant 0 : index
    %35 = vector.load %arg8[%c0_19, %c0_20] : memref<1x256xf32, #tpu.memory_space<vmem>>, vector<1x256xf32>
    %36 = vector.broadcast %35 : vector<1x256xf32> to vector<16x256xf32>
    %37 = arith.addf %34, %36 : vector<16x256xf32>
    %cst_21 = arith.constant 5.000000e-01 : f32
    %38 = vector.broadcast %cst_21 : f32 to vector<16x256xf32>
    %39 = arith.mulf %38, %37 : vector<16x256xf32>
    %cst_22 = arith.constant 4.471500e-02 : f32
    %40 = vector.broadcast %cst_22 : f32 to vector<16x256xf32>
    %41 = arith.mulf %40, %37 : vector<16x256xf32>
    %42 = arith.mulf %41, %37 : vector<16x256xf32>
    %43 = arith.mulf %42, %37 : vector<16x256xf32>
    %44 = arith.addf %37, %43 : vector<16x256xf32>
    %cst_23 = arith.constant 0.797884583 : f32
    %45 = vector.broadcast %cst_23 : f32 to vector<16x256xf32>
    %46 = arith.mulf %45, %44 : vector<16x256xf32>
    %47 = math.tanh %46 : vector<16x256xf32>
    %cst_24 = arith.constant 1.000000e+00 : f32
    %48 = vector.broadcast %cst_24 : f32 to vector<16x256xf32>
    %49 = arith.addf %48, %47 : vector<16x256xf32>
    %50 = arith.mulf %39, %49 : vector<16x256xf32>
    %51 = arith.truncf %50 : vector<16x256xf32> to vector<16x256xbf16>
    %c0_25 = arith.constant 0 : index
    %c0_26 = arith.constant 0 : index
    %52 = vector.load %arg9[%c0_25, %c0_26] : memref<256x64xbf16, #tpu.memory_space<vmem>>, vector<256x64xbf16>
    %cst_27 = arith.constant dense<0.000000e+00> : vector<16x64xf32>
    %53 = tpu.matmul %51, %52, %cst_27 {dimension_numbers = #tpu.dot_dimension_numbers<[1], [0], [0], [1], [0, 0, 1, 1], [], []>} : vector<16x256xbf16>, vector<256x64xbf16>, vector<16x64xf32> -> vector<16x64xf32>
    %c0_28 = arith.constant 0 : index
    %c0_29 = arith.constant 0 : index
    %54 = vector.load %arg10[%c0_28, %c0_29] : memref<1x64xf32, #tpu.memory_space<vmem>>, vector<1x64xf32>
    %55 = vector.broadcast %54 : vector<1x64xf32> to vector<16x64xf32>
    %56 = arith.addf %53, %55 : vector<16x64xf32>
    %c0_30 = arith.constant 0 : index
    %c0_31 = arith.constant 0 : index
    %57 = vector.load %arg11[%c0_30, %c0_31] : memref<1x64xf32, #tpu.memory_space<vmem>>, vector<1x64xf32>
    %58 = vector.broadcast %57 : vector<1x64xf32> to vector<16x64xf32>
    %59 = arith.mulf %56, %58 : vector<16x64xf32>
    %60 = arith.addf %59, %7 : vector<16x64xf32>
    %c0_32 = arith.constant 0 : index
    %c0_33 = arith.constant 0 : index
    %61 = vector.load %arg12[%c0_32, %c0_33] : memref<16x64xf32, #tpu.memory_space<vmem>>, vector<16x64xf32>
    tpu.vector_store %arg12[%c0_32, %c0_33], %60 {strides = array<i32>} : memref<16x64xf32, #tpu.memory_space<vmem>>, vector<16x64xf32>,
    return
  }
  func.func @transform_0(%arg0: i32) -> (i32, i32) {
    %c0_i32 = arith.constant 0 : i32
    %c0_i32_0 = arith.constant 0 : i32
    return %arg0, %c0_i32 : i32, i32
  }
  func.func @transform_1(%arg0: i32) -> (i32, i32) {
    %c0_i32 = arith.constant 0 : i32
    %c0_i32_0 = arith.constant 0 : i32
    return %arg0, %c0_i32 : i32, i32
  }
  func.func @transform_2(%arg0: i32) -> (i32, i32) {
    %c0_i32 = arith.constant 0 : i32
    %c0_i32_0 = arith.constant 0 : i32
    %c0_i32_1 = arith.constant 0 : i32
    return %c0_i32, %c0_i32_0 : i32, i32
  }
  func.func @transform_3(%arg0: i32) -> (i32, i32) {
    %c0_i32 = arith.constant 0 : i32
    %c0_i32_0 = arith.constant 0 : i32
    %c0_i32_1 = arith.constant 0 : i32
    return %c0_i32, %c0_i32_0 : i32, i32
  }
  func.func @transform_4(%arg0: i32) -> (i32, i32) {
    %c0_i32 = arith.constant 0 : i32
    %c0_i32_0 = arith.constant 0 : i32
    %c0_i32_1 = arith.constant 0 : i32
    return %c0_i32, %c0_i32_0 : i32, i32
  }
  func.func @transform_5(%arg0: i32) -> (i32, i32) {
    %c0_i32 = arith.constant 0 : i32
    %c0_i32_0 = arith.constant 0 : i32
    %c0_i32_1 = arith.constant 0 : i32
    return %c0_i32, %c0_i32_0 : i32, i32
  }
  func.func @transform_6(%arg0: i32) -> (i32, i32) {
    %c0_i32 = arith.constant 0 : i32
    %c0_i32_0 = arith.constant 0 : i32
    %c0_i32_1 = arith.constant 0 : i32
    return %c0_i32, %c0_i32_0 : i32, i32
  }
  func.func @transform_7(%arg0: i32) -> (i32, i32) {
    %c0_i32 = arith.constant 0 : i32
    %c0_i32_0 = arith.constant 0 : i32
    %c0_i32_1 = arith.constant 0 : i32
    return %c0_i32, %c0_i32_0 : i32, i32
  }
  func.func @transform_8(%arg0: i32) -> (i32, i32) {
    %c0_i32 = arith.constant 0 : i32
    %c0_i32_0 = arith.constant 0 : i32
    %c0_i32_1 = arith.constant 0 : i32
    return %c0_i32, %c0_i32_0 : i32, i32
  }
  func.func @transform_9(%arg0: i32) -> (i32, i32) {
    %c0_i32 = arith.constant 0 : i32
    %c0_i32_0 = arith.constant 0 : i32
    %c0_i32_1 = arith.constant 0 : i32
    return %c0_i32, %c0_i32_0 : i32, i32
  }
  func.func @transform_10(%arg0: i32) -> (i32, i32) {
    %c0_i32 = arith.constant 0 : i32
    %c0_i32_0 = arith.constant 0 : i32
    %c0_i32_1 = arith.constant 0 : i32
    return %c0_i32, %c0_i32_0 : i32, i32
  }
  func.func @transform_11(%arg0: i32) -> (i32, i32) {
    %c0_i32 = arith.constant 0 : i32
    %c0_i32_0 = arith.constant 0 : i32
    return %arg0, %c0_i32 : i32, i32
  }
}

</mosaic_0001>

<llo_original>
// kernel: _lambda_.15
$region0: #{_lambda_.15}
  #allocation0 [shape = 'u32[]', space=smem, size = 0x4, offset = 0x4, fixed_abs, tag = 'smem constant byte address 0x4 - core index']
  #allocation1 [shape = 'u32[144,128]{1,0:T(1,128)}', space=vmem, size = 0x12000, scoped, tag = 'internal scratch']
  %s0 = inlined_call_operand.vmem [shape: f32[128,32], index: 0, kind: input, shape index: {}]
  %s1 = inlined_call_operand.vmem [shape: f32[1,32], index: 1, kind: input, shape index: {}]
  %s2 = inlined_call_operand.vmem [shape: f32[1,32], index: 2, kind: input, shape index: {}]
  %s3 = inlined_call_operand.vmem [shape: bf16[32,96], index: 3, kind: input, shape index: {}]
  %s4 = inlined_call_operand.vmem [shape: bf16[128,96], index: 4, kind: output, shape index: {}]
  %s5 = sld [smem:[#allocation0]]
  $region49: #{_lambda_.15} parent=0
    _
  %s7 = ssub.s32 1, %s5
  %s8 = scalar_select 0, %s7, %s5
  loop: start=0, step=1, limit=4
  $region2: #{_lambda_.15} parent=0 // loop_pre_header
    _
  $region3: #{_lambda_.15} parent=0 // loop_header
    %s10 = sphi 0, %s14
    %p11 = scmp.ge.s32.totalorder %s10, 4
    %s20 = sphi 0, %s22
    %s23 = sphi 0, %s20
    %s24 = sphi 0, %s23
    %s40 = sphi 0, %s24
    %s44 = sphi 0, %s44
    %s46 = sphi 0, %s44
    %s47 = sphi 0, %s46
    %s61 = sphi 0, %s47
    %s65 = sphi 0, %s65
    %s67 = sphi 0, %s65
    %s68 = sphi 0, %s67
    %s82 = sphi 0, %s68
    %s86 = sphi 0, %s86
    %s88 = sphi 0, %s86
    %s89 = sphi 0, %s88
    %s103 = sphi 0, %s89
    %s109 = sphi 0, %s111
    %s112 = sphi 0, %s109
    %s113 = sphi 0, %s112
    %s129 = sphi 0, %s113
  $region4: #{_lambda_.15} parent=0 // loop_header_branch
    %13 = sbr.rel (%p11) target = $region8
  $region5: #{_lambda_.15} parent=0 // loop_body
    %s15 = ssub.s32 %s10, 1
    %s16 = ssub.s32 %s10, 2
    %s17 = sadd.s32 %s10, 1
    %s18 = ssub.s32 %s10, %s17
    %p19 = scmp.eq.s32.totalorder %s18, 0
    %s21 = sadd.s32 %s20, 1
    %s22 = scalar_select %p19, %s20, %s21
    %p25 = pneg %p19
    %p26 = scmp.eq.s32.totalorder %s10, 1
    %p27 = por %p25, %p26
    %p28 = scmp.ne.s32.totalorder %s20, %s23
    %p29 = scmp.eq.s32.totalorder %s10, 0
    %p30 = por %p28, %p29
    %p31 = scmp.ne.s32.totalorder %s20, %s23
    %p32 = scmp.eq.s32.totalorder %s15, 1
    %p33 = por %p31, %p32
    %p34 = scmp.ne.s32.totalorder %s23, %s24
    %p35 = scmp.eq.s32.totalorder %s15, 0
    %p36 = por %p34, %p35
    %p37 = scmp.ne.s32.totalorder %s23, %s24
    %p38 = scmp.eq.s32.totalorder %s16, 1
    %p39 = por %p37, %p38
    %p41 = scmp.ne.s32.totalorder %s24, %s40
    %p42 = scmp.eq.s32.totalorder %s16, 0
    %p43 = por %p41, %p42
    %s45 = sadd.s32 %s44, 1
    %p48 = scmp.eq.s32.totalorder %s10, 1
    %p49 = scmp.ne.s32.totalorder %s44, %s46
    %p50 = scmp.eq.s32.totalorder %s10, 0
    %p51 = por %p49, %p50
    %p52 = scmp.ne.s32.totalorder %s44, %s46
    %p53 = scmp.eq.s32.totalorder %s15, 1
    %p54 = por %p52, %p53
    %p55 = scmp.ne.s32.totalorder %s46, %s47
    %p56 = scmp.eq.s32.totalorder %s15, 0
    %p57 = por %p55, %p56
    %p58 = scmp.ne.s32.totalorder %s46, %s47
    %p59 = scmp.eq.s32.totalorder %s16, 1
    %p60 = por %p58, %p59
    %p62 = scmp.ne.s32.totalorder %s47, %s61
    %p63 = scmp.eq.s32.totalorder %s16, 0
    %p64 = por %p62, %p63
    %s66 = sadd.s32 %s65, 1
    %p69 = scmp.eq.s32.totalorder %s10, 1
    %p70 = scmp.ne.s32.totalorder %s65, %s67
    %p71 = scmp.eq.s32.totalorder %s10, 0
    %p72 = por %p70, %p71
    %p73 = scmp.ne.s32.totalorder %s65, %s67
    %p74 = scmp.eq.s32.totalorder %s15, 1
    %p75 = por %p73, %p74
    %p76 = scmp.ne.s32.totalorder %s67, %s68
    %p77 = scmp.eq.s32.totalorder %s15, 0
    %p78 = por %p76, %p77
    %p79 = scmp.ne.s32.totalorder %s67, %s68
    %p80 = scmp.eq.s32.totalorder %s16, 1
    %p81 = por %p79, %p80
    %p83 = scmp.ne.s32.totalorder %s68, %s82
    %p84 = scmp.eq.s32.totalorder %s16, 0
    %p85 = por %p83, %p84
    %s87 = sadd.s32 %s86, 1
    %p90 = scmp.eq.s32.totalorder %s10, 1
    %p91 = scmp.ne.s32.totalorder %s86, %s88
    %p92 = scmp.eq.s32.totalorder %s10, 0
    %p93 = por %p91, %p92
    %p94 = scmp.ne.s32.totalorder %s86, %s88
    %p95 = scmp.eq.s32.totalorder %s15, 1
    %p96 = por %p94, %p95
    %p97 = scmp.ne.s32.totalorder %s88, %s89
    %p98 = scmp.eq.s32.totalorder %s15, 0
    %p99 = por %p97, %p98
    %p100 = scmp.ne.s32.totalorder %s88, %s89
    %p101 = scmp.eq.s32.totalorder %s16, 1
    %p102 = por %p100, %p101
    %p104 = scmp.ne.s32.totalorder %s89, %s103
    %p105 = scmp.eq.s32.totalorder %s16, 0
    %p106 = por %p104, %p105
    %s107 = ssub.s32 %s10, %s17
    %p108 = scmp.eq.s32.totalorder %s107, 0
    %s110 = sadd.s32 %s109, 1
    %s111 = scalar_select %p108, %s109, %s110
    %p114 = pneg %p108
    %p115 = scmp.eq.s32.totalorder %s10, 1
    %p116 = por %p114, %p115
    %p117 = scmp.ne.s32.totalorder %s109, %s112
    %p118 = scmp.eq.s32.totalorder %s10, 0
    %p119 = por %p117, %p118
    %p120 = scmp.ne.s32.totalorder %s109, %s112
    %p121 = scmp.eq.s32.totalorder %s15, 1
    %p122 = por %p120, %p121
    %p123 = scmp.ne.s32.totalorder %s112, %s113
    %p124 = scmp.eq.s32.totalorder %s15, 0
    %p125 = por %p123, %p124
    %p126 = scmp.ne.s32.totalorder %s112, %s113
    %p127 = scmp.eq.s32.totalorder %s16, 1
    %p128 = por %p126, %p127
    %p130 = scmp.ne.s32.totalorder %s113, %s129
    %p131 = scmp.eq.s32.totalorder %s16, 0
    %p132 = por %p130, %p131
    %p133 = scmp.le.s32.totalorder 1, %s10
    %p134 = scmp.lt.s32.totalorder %s10, 3
    %p135 = pnand %p133, %p134
    %p136 = pneg %p135
    // Predicated region
    $region9: #{_lambda_.15} parent=5 // pred_check
      _
    $region10: #{_lambda_.15} parent=5 // pred_check_branch
      %138 = sbr.rel (%p135) target = $region12
    $region11: #{_lambda_.15} parent=5 // pred_region
      %s139 = ssub.s32 %s10, 1
      // Predicated region
      $region13: #{_lambda_.15} parent=11 // pred_check
        %p140 = pneg %p57
      $region14: #{_lambda_.15} parent=11 // pred_check_branch
        %142 = sbr.rel (%p140) target = $region16
      $region15: #{_lambda_.15} parent=11 // pred_region
        _
      $region16: #{_lambda_.15} parent=11 // pred_fallthru
        _
      // Predicated region
      $region17: #{_lambda_.15} parent=11 // pred_check
        %p143 = pneg %p78
      $region18: #{_lambda_.15} parent=11 // pred_check_branch
        %145 = sbr.rel (%p143) target = $region20
      $region19: #{_lambda_.15} parent=11 // pred_region
        _
      $region20: #{_lambda_.15} parent=11 // pred_fallthru
        _
      // Predicated region
      $region21: #{_lambda_.15} parent=11 // pred_check
        %p146 = pneg %p99
      $region22: #{_lambda_.15} parent=11 // pred_check_branch
        %148 = sbr.rel (%p146) target = $region24
      $region23: #{_lambda_.15} parent=11 // pred_region
        _
      $region24: #{_lambda_.15} parent=11 // pred_fallthru
        _
    $region12: #{_lambda_.15} parent=5 // pred_fallthru
      _
    %p149 = scmp.lt.s32.totalorder %s10, 2
    // Predicated region
    $region25: #{_lambda_.15} parent=5 // pred_check
      %p150 = pneg %p149
    $region26: #{_lambda_.15} parent=5 // pred_check_branch
      %152 = sbr.rel (%p150) target = $region28
    $region27: #{_lambda_.15} parent=5 // pred_region
      // Predicated region
      $region29: #{_lambda_.15} parent=27 // pred_check
        %p153 = pneg %p30
      $region30: #{_lambda_.15} parent=27 // pred_check_branch
        %155 = sbr.rel (%p153) target = $region32
      $region31: #{_lambda_.15} parent=27 // pred_region
        %s156 = smul.u32 8, %s10
        %p157 = scmp.lt.s32.totalorder %s156, 15
        %s158 = scalar_select %p157, %s156, 15
        %s159 = smul.addr %s158, 8
        %s160 = scalar_lea.vmem %s0, %s159
        %s161 = smul.u32 8, %s10
      $region32: #{_lambda_.15} parent=27 // pred_fallthru
        _
    $region28: #{_lambda_.15} parent=5 // pred_fallthru
      _
    %p162 = scmp.le.s32.totalorder 1, %s10
    %p163 = scmp.lt.s32.totalorder %s10, 3
    %p164 = pnand %p162, %p163
    %p165 = pneg %p164
    // Predicated region
    $region33: #{_lambda_.15} parent=5 // pred_check
      _
    $region34: #{_lambda_.15} parent=5 // pred_check_branch
      %167 = sbr.rel (%p164) target = $region36
    $region35: #{_lambda_.15} parent=5 // pred_region
      %s168 = ssub.s32 %s10, 1
      %s169 = smul.u32 8, %s15
      %p170 = scmp.lt.s32.totalorder %s169, 15
      %s171 = scalar_select %p170, %s169, 15
      %s172 = smul.addr %s171, 8
      %s173 = scalar_lea.vmem %s0, %s172
      %p174 = pneg %p36
      %p175 = pneg %p33
      %p176 = pneg %p57
      %p177 = pneg %p54
      %p178 = pneg %p78
      %p179 = pneg %p75
      %p180 = pneg %p99
      %p181 = pneg %p96
      %p182 = pneg %p125
      %p183 = pneg %p122
      %s184 = smul.u32 8, %s15
      %p185 = scmp.lt.s32.totalorder %s184, 15
      %s186 = scalar_select %p185, %s184, 15
      %s187 = smul.addr %s186, 4
      %s188 = scalar_lea.vmem %s4, %s187
      %s189 = smul.u32 8, %s15
      %p190 = scmp.lt.s32.totalorder %s189, 15
      %s191 = scalar_select %p190, %s189, 15
      %s192 = smul.addr %s191, 8
      %s193 = scalar_lea.vmem %s0, %s192
      %s194 = smul.u32 8, %s15
      %s195 = smul.u32 8, %s15
      %p196 = scmp.lt.s32.totalorder %s195, 15
      %s197 = scalar_select %p196, %s195, 15
      %s198 = smul.addr %s197, 4
      %s199 = scalar_lea.vmem %s4, %s198
      %s200 = smul.u32 8, %s15
      %v202 = vld [vmem:[%s193] sm:$0xff]
      %v203 = vld [vmem:[%s193 + $0x8] sm:$0xff]
      %v204 = vld [vmem:[%s193 + $0x10] sm:$0xff]
      %v205 = vld [vmem:[%s193 + $0x18] sm:$0xff]
      %v206 = vld [vmem:[%s193 + $0x20] sm:$0xff]
      %v207 = vld [vmem:[%s193 + $0x28] sm:$0xff]
      %v208 = vld [vmem:[%s193 + $0x30] sm:$0xff]
      %v209 = vld [vmem:[%s193 + $0x38] sm:$0xff]
      %v210 = vld [vmem:[%s1] sm:$0x1]
      %v211 = vld [vmem:[%s2] sm:$0x1]
      %vm212 = vcmask 261120
      %v213 = vsel %vm212, %v202, 0.0
      %214 = vadd.xlane.f32.xlu0 %v213
      %v215 = vpop.xlane.xlu0 %214
      %v216 = vsel %vm212, %v203, 0.0
      %217 = vadd.xlane.f32.xlu0 %v216
      %v218 = vpop.xlane.xlu0 %217
      %v219 = vsel %vm212, %v204, 0.0
      %220 = vadd.xlane.f32.xlu0 %v219
      %v221 = vpop.xlane.xlu0 %220
      %v222 = vsel %vm212, %v205, 0.0
      %223 = vadd.xlane.f32.xlu0 %v222
      %v224 = vpop.xlane.xlu0 %223
      %v225 = vsel %vm212, %v206, 0.0
      %226 = vadd.xlane.f32.xlu0 %v225
      %v227 = vpop.xlane.xlu0 %226
      %v228 = vsel %vm212, %v207, 0.0
      %229 = vadd.xlane.f32.xlu0 %v228
      %v230 = vpop.xlane.xlu0 %229
      %v231 = vsel %vm212, %v208, 0.0
      %232 = vadd.xlane.f32.xlu0 %v231
      %v233 = vpop.xlane.xlu0 %232
      %v234 = vsel %vm212, %v209, 0.0
      %235 = vadd.xlane.f32.xlu0 %v234
      %v236 = vpop.xlane.xlu0 %235
      %v237 = vrcp.pop 32.0
      %v238 = vmul.f32 %v215, %v237
      %v239 = vmul.f32 %v218, %v237
      %v240 = vmul.f32 %v221, %v237
      %v241 = vmul.f32 %v224, %v237
      %v242 = vmul.f32 %v227, %v237
      %v243 = vmul.f32 %v230, %v237
      %v244 = vmul.f32 %v233, %v237
      %v245 = vmul.f32 %v236, %v237
      %v246 = vsub.f32 %v202, %v238
      %v247 = vsub.f32 %v203, %v239
      %v248 = vsub.f32 %v204, %v240
      %v249 = vsub.f32 %v205, %v241
      %v250 = vsub.f32 %v206, %v242
      %v251 = vsub.f32 %v207, %v243
      %v252 = vsub.f32 %v208, %v244
      %v253 = vsub.f32 %v209, %v245
      %v254 = vmul.f32 %v246, %v246
      %v255 = vmul.f32 %v247, %v247
      %v256 = vmul.f32 %v248, %v248
      %v257 = vmul.f32 %v249, %v249
      %v258 = vmul.f32 %v250, %v250
      %v259 = vmul.f32 %v251, %v251
      %v260 = vmul.f32 %v252, %v252
      %v261 = vmul.f32 %v253, %v253
      %v262 = vsel %vm212, %v254, 0.0
      %263 = vadd.xlane.f32.xlu0 %v262
      %v264 = vpop.xlane.xlu0 %263
      %v265 = vsel %vm212, %v255, 0.0
      %266 = vadd.xlane.f32.xlu0 %v265
      %v267 = vpop.xlane.xlu0 %266
      %v268 = vsel %vm212, %v256, 0.0
      %269 = vadd.xlane.f32.xlu0 %v268
      %v270 = vpop.xlane.xlu0 %269
      %v271 = vsel %vm212, %v257, 0.0
      %272 = vadd.xlane.f32.xlu0 %v271
      %v273 = vpop.xlane.xlu0 %272
      %v274 = vsel %vm212, %v258, 0.0
      %275 = vadd.xlane.f32.xlu0 %v274
      %v276 = vpop.xlane.xlu0 %275
      %v277 = vsel %vm212, %v259, 0.0
      %278 = vadd.xlane.f32.xlu0 %v277
      %v279 = vpop.xlane.xlu0 %278
      %v280 = vsel %vm212, %v260, 0.0
      %281 = vadd.xlane.f32.xlu0 %v280
      %v282 = vpop.xlane.xlu0 %281
      %v283 = vsel %vm212, %v261, 0.0
      %284 = vadd.xlane.f32.xlu0 %v283
      %v285 = vpop.xlane.xlu0 %284
      %v286 = vmul.f32 %v264, %v237
      %v287 = vmul.f32 %v267, %v237
      %v288 = vmul.f32 %v270, %v237
      %v289 = vmul.f32 %v273, %v237
      %v290 = vmul.f32 %v276, %v237
      %v291 = vmul.f32 %v279, %v237
      %v292 = vmul.f32 %v282, %v237
      %v293 = vmul.f32 %v285, %v237
      %v294 = vadd.f32 %v286, 1e-05
      %v295 = vadd.f32 %v287, 1e-05
      %v296 = vadd.f32 %v288, 1e-05
      %v297 = vadd.f32 %v289, 1e-05
      %v298 = vadd.f32 %v290, 1e-05
      %v299 = vadd.f32 %v291, 1e-05
      %v300 = vadd.f32 %v292, 1e-05
      %v301 = vadd.f32 %v293, 1e-05
      %v302 = vrsqrt.pop %v294
      %v303 = vrsqrt.pop %v295
      %v304 = vrsqrt.pop %v296
      %v305 = vrsqrt.pop %v297
      %v306 = vrsqrt.pop %v298
      %v307 = vrsqrt.pop %v299
      %v308 = vrsqrt.pop %v300
      %v309 = vrsqrt.pop %v301
      %v310 = vmul.f32 %v246, %v302
      %v311 = vmul.f32 %v247, %v303
      %v312 = vmul.f32 %v248, %v304
      %v313 = vmul.f32 %v249, %v305
      %v314 = vmul.f32 %v250, %v306
      %v315 = vmul.f32 %v251, %v307
      %v316 = vmul.f32 %v252, %v308
      %v317 = vmul.f32 %v253, %v309
      %v319 = vlaneseq
      %v320 = vshrl.u32 %v319, 7
      %v321 = vsub.s32 0, %v320
      %v322 = vrot.slane %v210, %v321
      %v324 = vmul.f32 %v310, %v322
      %v325 = vmul.f32 %v311, %v322
      %v326 = vmul.f32 %v312, %v322
      %v327 = vmul.f32 %v313, %v322
      %v328 = vmul.f32 %v314, %v322
      %v329 = vmul.f32 %v315, %v322
      %v330 = vmul.f32 %v316, %v322
      %v331 = vmul.f32 %v317, %v322
      %v333 = vlaneseq
      %v334 = vshrl.u32 %v333, 7
      %v335 = vsub.s32 0, %v334
      %v336 = vrot.slane %v211, %v335
      %v338 = vadd.f32 %v324, %v336
      %v339 = vadd.f32 %v325, %v336
      %v340 = vadd.f32 %v326, %v336
      %v341 = vadd.f32 %v327, %v336
      %v342 = vadd.f32 %v328, %v336
      %v343 = vadd.f32 %v329, %v336
      %v344 = vadd.f32 %v330, %v336
      %v345 = vadd.f32 %v331, %v336
      %v346 = vpack.c.bf16 %v339, %v338
      %v347 = vpack.c.bf16 %v341, %v340
      %v348 = vpack.c.bf16 %v343, %v342
      %v349 = vpack.c.bf16 %v345, %v344
      %v350 = vld [vmem:[%s3] sm:$0xf]
      %v351 = vld [vmem:[%s3 + $0x4] sm:$0xf]
      %v352 = vld [vmem:[%s3 + $0x8] sm:$0xf]
      %v353 = vld [vmem:[%s3 + $0xc] sm:$0xf]
      %v358 = vunpack.c.l.b16 %v350
      %v359 = vunpack.c.l.b16 %v351
      %v360 = vunpack.c.l.b16 %v352
      %v361 = vunpack.c.l.b16 %v353
      %v362 = vpack.c.b16 %v359, %v358
      %v363 = vpack.c.b16 %v361, %v360
      %v367 = vsel %vm212, %v346, 0
      %v370 = vsel %vm212, %v347, 0
      %v373 = vsel %vm212, %v348, 0
      %v376 = vsel %vm212, %v349, 0
      %378 = vmatprep.subr.bf16.mxu0 0
      %379 = vmatpush1.bf16.msra.mxu0 0
      %380 = vmatprep.subr.bf16.mxu0 0
      %381 = vmatpush1.bf16.msra.mxu0 0
      %382 = vmatprep.subr.bf16.mxu0 0
      %383 = vmatpush1.bf16.msra.mxu0 0
      %384 = vmatprep.subr.bf16.mxu0 0
      %385 = vmatpush1.bf16.msra.mxu0 0
      %386 = vmatprep.subr.bf16.mxu0 0
      %387 = vmatpush1.bf16.msra.mxu0 0
      %388 = vmatprep.subr.bf16.mxu0 0
      %389 = vmatpush1.bf16.msra.mxu0 0
      %390 = vmatprep.subr.bf16.mxu0 0
      %391 = vmatpush1.bf16.msra.mxu0 %v363
      %392 = vmatprep.subr.bf16.mxu0 0
      %393 = vmatpush1.bf16.msra.mxu0 %v362
      %394 = vmatprep.subr.bf16.mxu0 0
      %395 = vmatpush2.bf16.msra.mxu0 0
      %396 = vmatprep.subr.bf16.mxu0 0
      %397 = vmatpush2.bf16.msra.mxu0 0
      %398 = vmatprep.subr.bf16.mxu0 0
      %399 = vmatpush2.bf16.msra.mxu0 0
      %400 = vmatprep.subr.bf16.mxu0 0
      %401 = vmatpush2.bf16.msra.mxu0 0
      %402 = vmatprep.subr.bf16.mxu0 0
      %403 = vmatpush2.bf16.msra.mxu0 0
      %404 = vmatprep.subr.bf16.mxu0 0
      %405 = vmatpush2.bf16.msra.mxu0 0
      %406 = vmatprep.subr.bf16.mxu0 0
      %407 = vmatpush2.bf16.msra.mxu0 0
      %408 = vmatprep.subr.bf16.mxu0 0
      %409 = vmatpush2.bf16.msra.mxu0 0
      %410 = vmatprep.mubr.bf16.mxu0 0
      %411 = vmatmul.mubr.bf16.gmra.mxu0 %v367
      %v412 = vpop.f32.mrf.mxu0
      %v413 = vadd.f32 0.0, %v412
      %v414 = vpop.f32.mrf.mxu0
      %v415 = vpop.f32.mrf.mxu0
      %v416 = vadd.f32 0.0, %v415
      %v417 = vpop.f32.mrf.mxu0
      %418 = vmatprep.mubr.bf16.mxu0 0
      %419 = vmatmul.mubr.bf16.gmra.mxu0 %v370
      %v420 = vpop.f32.mrf.mxu0
      %v421 = vadd.f32 0.0, %v420
      %v422 = vpop.f32.mrf.mxu0
      %v423 = vpop.f32.mrf.mxu0
      %v424 = vadd.f32 0.0, %v423
      %v425 = vpop.f32.mrf.mxu0
      %426 = vmatprep.mubr.bf16.mxu0 0
      %427 = vmatmul.mubr.bf16.gmra.mxu0 %v373
      %v428 = vpop.f32.mrf.mxu0
      %v429 = vadd.f32 0.0, %v428
      %v430 = vpop.f32.mrf.mxu0
      %v431 = vpop.f32.mrf.mxu0
      %v432 = vadd.f32 0.0, %v431
      %v433 = vpop.f32.mrf.mxu0
      %434 = vmatprep.mubr.bf16.mxu0 0
      %435 = vmatmul.mubr.bf16.gmra.mxu0 %v376
      %v436 = vpop.f32.mrf.mxu0
      %v437 = vadd.f32 0.0, %v436
      %v438 = vpop.f32.mrf.mxu0
      %v439 = vpop.f32.mrf.mxu0
      %v440 = vadd.f32 0.0, %v439
      %v441 = vpop.f32.mrf.mxu0
      %442 = vdwg.mxu0
      %v443 = vpack.c.bf16 %v416, %v413
      %v444 = vpack.c.bf16 %v424, %v421
      %v445 = vpack.c.bf16 %v432, %v429
      %v446 = vpack.c.bf16 %v440, %v437
      %v451 = vunpack.c.l.b16 %v443
      %v452 = vunpack.c.h.b16 %v443
      %v453 = vunpack.c.l.b16 %v444
      %v454 = vunpack.c.h.b16 %v444
      %v455 = vunpack.c.l.b16 %v445
      %v456 = vunpack.c.h.b16 %v445
      %v457 = vunpack.c.l.b16 %v446
      %v458 = vunpack.c.h.b16 %v446
      %v459 = vpack.c.b16 %v451, %v451
      %v460 = vpack.c.b16 %v452, %v452
      %v461 = vpack.c.b16 %v453, %v453
      %v462 = vpack.c.b16 %v454, %v454
      %v463 = vpack.c.b16 %v455, %v455
      %v464 = vpack.c.b16 %v456, %v456
      %v465 = vpack.c.b16 %v457, %v457
      %v466 = vpack.c.b16 %v458, %v458
      %vm475 = vcmask 781312
      %476 = vst.msk [vmem:[%s199] sm:$0xf] %vm475, %v459
      %477 = vst.msk [vmem:[%s199 + $0x4] sm:$0xf] %vm475, %v460
      %478 = vst.msk [vmem:[%s199 + $0x8] sm:$0xf] %vm475, %v461
      %479 = vst.msk [vmem:[%s199 + $0xc] sm:$0xf] %vm475, %v462
      %480 = vst.msk [vmem:[%s199 + $0x10] sm:$0xf] %vm475, %v463
      %481 = vst.msk [vmem:[%s199 + $0x14] sm:$0xf] %vm475, %v464
      %482 = vst.msk [vmem:[%s199 + $0x18] sm:$0xf] %vm475, %v465
      %483 = vst.msk [vmem:[%s199 + $0x1c] sm:$0xf] %vm475, %v466
      %s484 = smul.u32 8, %s15
      %p485 = scmp.lt.s32.totalorder %s484, 15
      %s486 = scalar_select %p485, %s484, 15
      %s487 = smul.addr %s486, 4
      %s488 = scalar_lea.vmem %s4, %s487
      // Predicated region
      $region37: #{_lambda_.15} parent=35 // pred_check
        %p489 = pneg %p122
      $region38: #{_lambda_.15} parent=35 // pred_check_branch
        %491 = sbr.rel (%p489) target = $region40
      $region39: #{_lambda_.15} parent=35 // pred_region
        %s492 = smul.u32 8, %s15
      $region40: #{_lambda_.15} parent=35 // pred_fallthru
        _
    $region36: #{_lambda_.15} parent=5 // pred_fallthru
      _
    %p493 = scmp.le.s32.totalorder 2, %s10
    // Predicated region
    $region41: #{_lambda_.15} parent=5 // pred_check
      %p494 = pneg %p493
    $region42: #{_lambda_.15} parent=5 // pred_check_branch
      %496 = sbr.rel (%p494) target = $region44
    $region43: #{_lambda_.15} parent=5 // pred_region
      %s497 = ssub.s32 %s10, 2
      // Predicated region
      $region45: #{_lambda_.15} parent=43 // pred_check
        %p498 = pneg %p128
      $region46: #{_lambda_.15} parent=43 // pred_check_branch
        %500 = sbr.rel (%p498) target = $region48
      $region47: #{_lambda_.15} parent=43 // pred_region
        %s501 = smul.u32 8, %s16
        %p502 = scmp.lt.s32.totalorder %s501, 15
        %s503 = scalar_select %p502, %s501, 15
        %s504 = smul.addr %s503, 4
        %s505 = scalar_lea.vmem %s4, %s504
      $region48: #{_lambda_.15} parent=43 // pred_fallthru
        _
    $region44: #{_lambda_.15} parent=5 // pred_fallthru
      _
  $region6: #{_lambda_.15} parent=0 // loop_footer
    %s14 = sadd.s32 1, %s10
  $region7: #{_lambda_.15} parent=0 // loop_footer_branch
    %9 = sbr.rel target = $region3
  $region8: #{_lambda_.15} parent=0 // loop_exit
    _

// kernel: _lambda_.14
$region0: #{_lambda_.14}
  #allocation0 [shape = 'u32[]', space=smem, size = 0x4, offset = 0x4, fixed_abs, tag = 'smem constant byte address 0x4 - core index']
  #allocation1 [shape = 'u32[144,128]{1,0:T(1,128)}', space=vmem, size = 0x12000, scoped, tag = 'internal scratch']
  #allocation2 [shape = 'f32[64,32]{1,0:T(8,128)}', space=vmem, size = 0x8000, scoped, tag = 'scratch operand']
  %s0 = inlined_call_operand.vmem [shape: bf16[128,196], index: 0, kind: input, shape index: {}]
  %s1 = inlined_call_operand.vmem [shape: bf16[196,32], index: 1, kind: input, shape index: {}]
  %s2 = inlined_call_operand.vmem [shape: f32[1,32], index: 2, kind: input, shape index: {}]
  %s3 = inlined_call_operand.vmem [shape: f32[128,32], index: 3, kind: output, shape index: {}]
  %s4 = sld [smem:[#allocation0]]
  $region53: #{_lambda_.14} parent=0
    _
  %s6 = ssub.s32 1, %s4
  %s7 = scalar_select 0, %s6, %s4
  loop: start=0, step=1, limit=4
  $region2: #{_lambda_.14} parent=0 // loop_pre_header
    _
  $region3: #{_lambda_.14} parent=0 // loop_header
    %s9 = sphi 0, %s13
    %p10 = scmp.ge.s32.totalorder %s9, 4
    %s16 = sphi 0, %s28
    %s17 = sphi 0, %s24
    %s18 = sphi 0, %s16
    %s19 = sphi 0, %s17
    %s20 = sphi 0, %s18
    %s21 = sphi 0, %s19
    %s33 = sphi 0, %s35
    %s36 = sphi 0, %s33
    %s37 = sphi 0, %s36
    %s53 = sphi 0, %s37
    %s59 = sphi 0, %s61
    %s62 = sphi 0, %s59
    %s63 = sphi 0, %s62
    %s79 = sphi 0, %s63
    %s83 = sphi 0, %s83
    %s85 = sphi 0, %s83
    %s86 = sphi 0, %s85
    %s100 = sphi 0, %s86
    %s106 = sphi 0, %s108
    %s109 = sphi 0, %s106
    %s110 = sphi 0, %s109
    %s126 = sphi 0, %s110
  $region4: #{_lambda_.14} parent=0 // loop_header_branch
    %12 = sbr.rel (%p10) target = $region8
  $region5: #{_lambda_.14} parent=0 // loop_body
    %s14 = ssub.s32 %s9, 1
    %s15 = ssub.s32 %s9, 2
    %s22 = sadd.s32 1, %s17
    %p23 = scmp.ge.s32.totalorder %s22, 1
    %s24 = scalar_select %p23, 0, %s22
    %s25 = sadd.s32 1, %s16
    %s26 = scalar_select %p23, %s25, %s16
    %p27 = scmp.ge.s32.totalorder %s26, 2
    %s28 = scalar_select %p27, 0, %s26
    %s29 = ssub.s32 %s16, %s28
    %s30 = ssub.s32 %s17, %s24
    %s31 = sor.u32 %s29, %s30
    %p32 = scmp.eq.s32.totalorder %s31, 0
    %s34 = sadd.s32 %s33, 1
    %s35 = scalar_select %p32, %s33, %s34
    %p38 = pneg %p32
    %p39 = scmp.eq.s32.totalorder %s9, 1
    %p40 = por %p38, %p39
    %p41 = scmp.ne.s32.totalorder %s33, %s36
    %p42 = scmp.eq.s32.totalorder %s9, 0
    %p43 = por %p41, %p42
    %p44 = scmp.ne.s32.totalorder %s33, %s36
    %p45 = scmp.eq.s32.totalorder %s14, 1
    %p46 = por %p44, %p45
    %p47 = scmp.ne.s32.totalorder %s36, %s37
    %p48 = scmp.eq.s32.totalorder %s14, 0
    %p49 = por %p47, %p48
    %p50 = scmp.ne.s32.totalorder %s36, %s37
    %p51 = scmp.eq.s32.totalorder %s15, 1
    %p52 = por %p50, %p51
    %p54 = scmp.ne.s32.totalorder %s37, %s53
    %p55 = scmp.eq.s32.totalorder %s15, 0
    %p56 = por %p54, %p55
    %s57 = ssub.s32 %s17, %s24
    %p58 = scmp.eq.s32.totalorder %s57, 0
    %s60 = sadd.s32 %s59, 1
    %s61 = scalar_select %p58, %s59, %s60
    %p64 = pneg %p58
    %p65 = scmp.eq.s32.totalorder %s9, 1
    %p66 = por %p64, %p65
    %p67 = scmp.ne.s32.totalorder %s59, %s62
    %p68 = scmp.eq.s32.totalorder %s9, 0
    %p69 = por %p67, %p68
    %p70 = scmp.ne.s32.totalorder %s59, %s62
    %p71 = scmp.eq.s32.totalorder %s14, 1
    %p72 = por %p70, %p71
    %p73 = scmp.ne.s32.totalorder %s62, %s63
    %p74 = scmp.eq.s32.totalorder %s14, 0
    %p75 = por %p73, %p74
    %p76 = scmp.ne.s32.totalorder %s62, %s63
    %p77 = scmp.eq.s32.totalorder %s15, 1
    %p78 = por %p76, %p77
    %p80 = scmp.ne.s32.totalorder %s63, %s79
    %p81 = scmp.eq.s32.totalorder %s15, 0
    %p82 = por %p80, %p81
    %s84 = sadd.s32 %s83, 1
    %p87 = scmp.eq.s32.totalorder %s9, 1
    %p88 = scmp.ne.s32.totalorder %s83, %s85
    %p89 = scmp.eq.s32.totalorder %s9, 0
    %p90 = por %p88, %p89
    %p91 = scmp.ne.s32.totalorder %s83, %s85
    %p92 = scmp.eq.s32.totalorder %s14, 1
    %p93 = por %p91, %p92
    %p94 = scmp.ne.s32.totalorder %s85, %s86
    %p95 = scmp.eq.s32.totalorder %s14, 0
    %p96 = por %p94, %p95
    %p97 = scmp.ne.s32.totalorder %s85, %s86
    %p98 = scmp.eq.s32.totalorder %s15, 1
    %p99 = por %p97, %p98
    %p101 = scmp.ne.s32.totalorder %s86, %s100
    %p102 = scmp.eq.s32.totalorder %s15, 0
    %p103 = por %p101, %p102
    %s104 = ssub.s32 %s16, %s28
    %p105 = scmp.eq.s32.totalorder %s104, 0
    %s107 = sadd.s32 %s106, 1
    %s108 = scalar_select %p105, %s106, %s107
    %p111 = pneg %p105
    %p112 = scmp.eq.s32.totalorder %s9, 1
    %p113 = por %p111, %p112
    %p114 = scmp.ne.s32.totalorder %s106, %s109
    %p115 = scmp.eq.s32.totalorder %s9, 0
    %p116 = por %p114, %p115
    %p117 = scmp.ne.s32.totalorder %s106, %s109
    %p118 = scmp.eq.s32.totalorder %s14, 1
    %p119 = por %p117, %p118
    %p120 = scmp.ne.s32.totalorder %s109, %s110
    %p121 = scmp.eq.s32.totalorder %s14, 0
    %p122 = por %p120, %p121
    %p123 = scmp.ne.s32.totalorder %s109, %s110
    %p124 = scmp.eq.s32.totalorder %s15, 1
    %p125 = por %p123, %p124
    %p127 = scmp.ne.s32.totalorder %s110, %s126
    %p128 = scmp.eq.s32.totalorder %s15, 0
    %p129 = por %p127, %p128
    %p130 = scmp.le.s32.totalorder 1, %s9
    %p131 = scmp.lt.s32.totalorder %s9, 3
    %p132 = pnand %p130, %p131
    %p133 = pneg %p132
    // Predicated region
    $region9: #{_lambda_.14} parent=5 // pred_check
      _
    $region10: #{_lambda_.14} parent=5 // pred_check_branch
      %135 = sbr.rel (%p132) target = $region12
    $region11: #{_lambda_.14} parent=5 // pred_region
      %s136 = ssub.s32 %s9, 1
      // Predicated region
      $region13: #{_lambda_.14} parent=11 // pred_check
        %p137 = pneg %p75
      $region14: #{_lambda_.14} parent=11 // pred_check_branch
        %139 = sbr.rel (%p137) target = $region16
      $region15: #{_lambda_.14} parent=11 // pred_region
        %s140 = smul.u32 25, %s19
        %p141 = scmp.lt.s32.totalorder %s140, 24
        %s142 = scalar_select %p141, %s140, 24
        %s143 = smul.addr %s142, 4
        %s144 = scalar_lea.vmem %s1, %s143
        %s145 = smul.u32 25, %s19
      $region16: #{_lambda_.14} parent=11 // pred_fallthru
        _
      // Predicated region
      $region17: #{_lambda_.14} parent=11 // pred_check
        %p146 = pneg %p96
      $region18: #{_lambda_.14} parent=11 // pred_check_branch
        %148 = sbr.rel (%p146) target = $region20
      $region19: #{_lambda_.14} parent=11 // pred_region
        _
      $region20: #{_lambda_.14} parent=11 // pred_fallthru
        _
    $region12: #{_lambda_.14} parent=5 // pred_fallthru
      _
    %p149 = scmp.lt.s32.totalorder %s9, 2
    // Predicated region
    $region21: #{_lambda_.14} parent=5 // pred_check
      %p150 = pneg %p149
    $region22: #{_lambda_.14} parent=5 // pred_check_branch
      %152 = sbr.rel (%p150) target = $region24
    $region23: #{_lambda_.14} parent=5 // pred_region
      // Predicated region
      $region25: #{_lambda_.14} parent=23 // pred_check
        %p153 = pneg %p43
      $region26: #{_lambda_.14} parent=23 // pred_check_branch
        %155 = sbr.rel (%p153) target = $region28
      $region27: #{_lambda_.14} parent=23 // pred_region
        %s156 = smul.u32 8, %s16
        %s157 = smul.u32 2, %s17
        %p158 = scmp.lt.s32.totalorder %s156, 15
        %s159 = scalar_select %p158, %s156, 15
        %p160 = scmp.lt.s32.totalorder %s157, 1
        %s161 = scalar_select %p160, %s157, 1
        %s162 = smul.addr %s159, 2
        %s163 = sadd.s32 %s161, %s162
        %s164 = smul.addr %s163, 4
        %s165 = scalar_lea.vmem %s0, %s164
        %s166 = smul.u32 8, %s16
        %s167 = smul.u32 2, %s17
      $region28: #{_lambda_.14} parent=23 // pred_fallthru
        _
    $region24: #{_lambda_.14} parent=5 // pred_fallthru
      _
    %p168 = scmp.le.s32.totalorder 1, %s9
    %p169 = scmp.lt.s32.totalorder %s9, 3
    %p170 = pnand %p168, %p169
    %p171 = pneg %p170
    // Predicated region
    $region29: #{_lambda_.14} parent=5 // pred_check
      _
    $region30: #{_lambda_.14} parent=5 // pred_check_branch
      %173 = sbr.rel (%p170) target = $region32
    $region31: #{_lambda_.14} parent=5 // pred_region
      %s174 = ssub.s32 %s9, 1
      %s175 = smul.u32 8, %s18
      %s176 = smul.u32 2, %s19
      %p177 = scmp.lt.s32.totalorder %s175, 15
      %s178 = scalar_select %p177, %s175, 15
      %p179 = scmp.lt.s32.totalorder %s176, 1
      %s180 = scalar_select %p179, %s176, 1
      %s181 = smul.addr %s178, 2
      %s182 = sadd.s32 %s180, %s181
      %s183 = smul.addr %s182, 4
      %s184 = scalar_lea.vmem %s0, %s183
      %p185 = pneg %p49
      %p186 = pneg %p46
      %s187 = smul.u32 25, %s19
      %p188 = scmp.lt.s32.totalorder %s187, 24
      %s189 = scalar_select %p188, %s187, 24
      %s190 = smul.addr %s189, 4
      %s191 = scalar_lea.vmem %s1, %s190
      %p192 = pneg %p75
      %p193 = pneg %p72
      %p194 = pneg %p96
      %p195 = pneg %p93
      %p196 = pneg %p122
      %p197 = pneg %p119
      %s198 = smul.u32 8, %s18
      %p199 = scmp.lt.s32.totalorder %s198, 15
      %s200 = scalar_select %p199, %s198, 15
      %s201 = smul.addr %s200, 8
      %s202 = scalar_lea.vmem %s3, %s201
      %s203 = smul.u32 8, %s18
      %s204 = smul.u32 2, %s19
      %p205 = scmp.lt.s32.totalorder %s203, 15
      %s206 = scalar_select %p205, %s203, 15
      %p207 = scmp.lt.s32.totalorder %s204, 1
      %s208 = scalar_select %p207, %s204, 1
      %s209 = smul.addr %s206, 2
      %s210 = sadd.s32 %s208, %s209
      %s211 = smul.addr %s210, 4
      %s212 = scalar_lea.vmem %s0, %s211
      %s213 = smul.u32 8, %s18
      %s214 = smul.u32 2, %s19
      %s215 = smul.u32 25, %s19
      %p216 = scmp.lt.s32.totalorder %s215, 24
      %s217 = scalar_select %p216, %s215, 24
      %s218 = smul.addr %s217, 4
      %s219 = scalar_lea.vmem %s1, %s218
      %s220 = smul.u32 25, %s19
      %s221 = smul.u32 8, %s18
      %p222 = scmp.lt.s32.totalorder %s221, 15
      %s223 = scalar_select %p222, %s221, 15
      %s224 = smul.addr %s223, 8
      %s225 = scalar_lea.vmem %s3, %s224
      %s226 = smul.u32 8, %s18
      %p228 = scmp.eq.s32.totalorder %s19, 0
      // Predicated region
      $region33: #{_lambda_.14} parent=31 // pred_check
        %p229 = pneg %p228
      $region34: #{_lambda_.14} parent=31 // pred_check_branch
        %231 = sbr.rel (%p229) target = $region36
      $region35: #{_lambda_.14} parent=31 // pred_region
        %vm232 = vcmask 261120
        %233 = vst.msk [vmem:[#allocation2] sm:$0xff] %vm232, 0.0
        %234 = vst.msk [vmem:[#allocation2 + $0x8] sm:$0xff] %vm232, 0.0
        %235 = vst.msk [vmem:[#allocation2 + $0x10] sm:$0xff] %vm232, 0.0
        %236 = vst.msk [vmem:[#allocation2 + $0x18] sm:$0xff] %vm232, 0.0
        %237 = vst.msk [vmem:[#allocation2 + $0x20] sm:$0xff] %vm232, 0.0
        %238 = vst.msk [vmem:[#allocation2 + $0x28] sm:$0xff] %vm232, 0.0
        %239 = vst.msk [vmem:[#allocation2 + $0x30] sm:$0xff] %vm232, 0.0
        %240 = vst.msk [vmem:[#allocation2 + $0x38] sm:$0xff] %vm232, 0.0
      $region36: #{_lambda_.14} parent=31 // pred_fallthru
        _
      %v241 = vld [vmem:[#allocation2] sm:$0xff]
      %v242 = vld [vmem:[#allocation2 + $0x8] sm:$0xff]
      %v243 = vld [vmem:[#allocation2 + $0x10] sm:$0xff]
      %v244 = vld [vmem:[#allocation2 + $0x18] sm:$0xff]
      %v245 = vld [vmem:[#allocation2 + $0x20] sm:$0xff]
      %v246 = vld [vmem:[#allocation2 + $0x28] sm:$0xff]
      %v247 = vld [vmem:[#allocation2 + $0x30] sm:$0xff]
      %v248 = vld [vmem:[#allocation2 + $0x38] sm:$0xff]
      %v249 = vld [vmem:[%s212] sm:$0xff]
      %v250 = vld [vmem:[%s212 + $0x8] sm:$0xff]
      %v251 = vld [vmem:[%s212 + $0x10] sm:$0xff]
      %v252 = vld [vmem:[%s212 + $0x18] sm:$0xff]
      %v253 = vld [vmem:[%s212 + $0x20] sm:$0xff]
      %v254 = vld [vmem:[%s212 + $0x28] sm:$0xff]
      %v255 = vld [vmem:[%s212 + $0x30] sm:$0xff]
      %v256 = vld [vmem:[%s212 + $0x38] sm:$0xff]
      %v257 = vld [vmem:[%s219] sm:$0xf]
      %v258 = vld [vmem:[%s219 + $0x4] sm:$0xf]
      %v259 = vld [vmem:[%s219 + $0x8] sm:$0xf]
      %v260 = vld [vmem:[%s219 + $0xc] sm:$0xf]
      %v261 = vld [vmem:[%s219 + $0x10] sm:$0xf]
      %v262 = vld [vmem:[%s219 + $0x14] sm:$0xf]
      %v263 = vld [vmem:[%s219 + $0x18] sm:$0xf]
      %v264 = vld [vmem:[%s219 + $0x1c] sm:$0xf]
      %v265 = vld [vmem:[%s219 + $0x20] sm:$0xf]
      %v266 = vld [vmem:[%s219 + $0x24] sm:$0xf]
      %v267 = vld [vmem:[%s219 + $0x28] sm:$0xf]
      %v268 = vld [vmem:[%s219 + $0x2c] sm:$0xf]
      %v269 = vld [vmem:[%s219 + $0x30] sm:$0xf]
      %v270 = vld [vmem:[%s219 + $0x34] sm:$0xf]
      %v271 = vld [vmem:[%s219 + $0x38] sm:$0xf]
      %v272 = vld [vmem:[%s219 + $0x3c] sm:$0xf]
      %v273 = vld [vmem:[%s219 + $0x40] sm:$0xf]
      %v274 = vld [vmem:[%s219 + $0x44] sm:$0xf]
      %v275 = vld [vmem:[%s219 + $0x48] sm:$0xf]
      %v276 = vld [vmem:[%s219 + $0x4c] sm:$0xf]
      %v277 = vld [vmem:[%s219 + $0x50] sm:$0xf]
      %v278 = vld [vmem:[%s219 + $0x54] sm:$0xf]
      %v279 = vld [vmem:[%s219 + $0x58] sm:$0xf]
      %v280 = vld [vmem:[%s219 + $0x5c] sm:$0xf]
      %v281 = vld [vmem:[%s219 + $0x60] sm:$0x3]
      %v290 = vunpack.c.l.b16 %v249
      %v291 = vunpack.c.h.b16 %v249
      %v292 = vunpack.c.l.b16 %v250
      %v293 = vunpack.c.h.b16 %v250
      %v294 = vunpack.c.l.b16 %v251
      %v295 = vunpack.c.h.b16 %v251
      %v296 = vunpack.c.l.b16 %v252
      %v297 = vunpack.c.h.b16 %v252
      %v298 = vunpack.c.l.b16 %v253
      %v299 = vunpack.c.h.b16 %v253
      %v300 = vunpack.c.l.b16 %v254
      %v301 = vunpack.c.h.b16 %v254
      %v302 = vunpack.c.l.b16 %v255
      %v303 = vunpack.c.h.b16 %v255
      %v304 = vunpack.c.l.b16 %v256
      %v305 = vunpack.c.h.b16 %v256
      %v306 = vpack.c.b16 %v292, %v290
      %v307 = vpack.c.b16 %v293, %v291
      %v308 = vpack.c.b16 %v296, %v294
      %v309 = vpack.c.b16 %v297, %v295
      %v310 = vpack.c.b16 %v300, %v298
      %v311 = vpack.c.b16 %v301, %v299
      %v312 = vpack.c.b16 %v304, %v302
      %v313 = vpack.c.b16 %v305, %v303
      %v343 = vunpack.c.l.b16 %v257
      %v344 = vunpack.c.l.b16 %v258
      %v345 = vunpack.c.l.b16 %v259
      %v346 = vunpack.c.l.b16 %v260
      %v347 = vunpack.c.l.b16 %v261
      %v348 = vunpack.c.l.b16 %v262
      %v349 = vunpack.c.l.b16 %v263
      %v350 = vunpack.c.l.b16 %v264
      %v351 = vunpack.c.l.b16 %v265
      %v352 = vunpack.c.l.b16 %v266
      %v353 = vunpack.c.l.b16 %v267
      %v354 = vunpack.c.l.b16 %v268
      %v355 = vunpack.c.l.b16 %v269
      %v356 = vunpack.c.l.b16 %v270
      %v357 = vunpack.c.l.b16 %v271
      %v358 = vunpack.c.l.b16 %v272
      %v359 = vunpack.c.l.b16 %v273
      %v360 = vunpack.c.l.b16 %v274
      %v361 = vunpack.c.l.b16 %v275
      %v362 = vunpack.c.l.b16 %v276
      %v363 = vunpack.c.l.b16 %v277
      %v364 = vunpack.c.l.b16 %v278
      %v365 = vunpack.c.l.b16 %v279
      %v366 = vunpack.c.l.b16 %v280
      %v367 = vunpack.c.l.b16 %v281
      %v368 = vpack.c.b16 %v344, %v343
      %v369 = vpack.c.b16 %v346, %v345
      %v370 = vpack.c.b16 %v348, %v347
      %v371 = vpack.c.b16 %v350, %v349
      %v372 = vpack.c.b16 %v352, %v351
      %v373 = vpack.c.b16 %v354, %v353
      %v374 = vpack.c.b16 %v356, %v355
      %v375 = vpack.c.b16 %v358, %v357
      %v376 = vpack.c.b16 %v360, %v359
      %v377 = vpack.c.b16 %v362, %v361
      %v378 = vpack.c.b16 %v364, %v363
      %v379 = vpack.c.b16 %v366, %v365
      %v380 = vpack.c.b16 %v367, %v367
      %vm393 = vcmask 556032
      %v395 = vsel %vm393, %v307, 0
      %v398 = vsel %vm393, %v309, 0
      %v401 = vsel %vm393, %v311, 0
      %v404 = vsel %vm393, %v313, 0
      %vm406 = vcmask 1041408
      %v408 = vsel %vm406, %v380, 0
      %410 = vmatprep.subr.bf16.mxu0 0
      %411 = vmatpush1.bf16.msra.mxu0 %v375
      %412 = vmatprep.subr.bf16.mxu0 0
      %413 = vmatpush1.bf16.msra.mxu0 %v374
      %414 = vmatprep.subr.bf16.mxu0 0
      %415 = vmatpush1.bf16.msra.mxu0 %v373
      %416 = vmatprep.subr.bf16.mxu0 0
      %417 = vmatpush1.bf16.msra.mxu0 %v372
      %418 = vmatprep.subr.bf16.mxu0 0
      %419 = vmatpush1.bf16.msra.mxu0 %v371
      %420 = vmatprep.subr.bf16.mxu0 0
      %421 = vmatpush1.bf16.msra.mxu0 %v370
      %422 = vmatprep.subr.bf16.mxu0 0
      %423 = vmatpush1.bf16.msra.mxu0 %v369
      %424 = vmatprep.subr.bf16.mxu0 0
      %425 = vmatpush1.bf16.msra.mxu0 %v368
      %426 = vmatprep.subr.bf16.mxu0 0
      %427 = vmatpush2.bf16.msra.mxu0 0
      %428 = vmatprep.subr.bf16.mxu0 0
      %429 = vmatpush2.bf16.msra.mxu0 0
      %430 = vmatprep.subr.bf16.mxu0 0
      %431 = vmatpush2.bf16.msra.mxu0 0
      %432 = vmatprep.subr.bf16.mxu0 0
      %433 = vmatpush2.bf16.msra.mxu0 %v408
      %434 = vmatprep.subr.bf16.mxu0 0
      %435 = vmatpush2.bf16.msra.mxu0 %v379
      %436 = vmatprep.subr.bf16.mxu0 0
      %437 = vmatpush2.bf16.msra.mxu0 %v378
      %438 = vmatprep.subr.bf16.mxu0 0
      %439 = vmatpush2.bf16.msra.mxu0 %v377
      %440 = vmatprep.subr.bf16.mxu0 0
      %441 = vmatpush2.bf16.msra.mxu0 %v376
      %442 = vmatprep.mubr.bf16.mxu0 %v395
      %443 = vmatmul.mubr.bf16.gmra.mxu0 %v306
      %v444 = vpop.f32.mrf.mxu0
      %v445 = vadd.f32 0.0, %v444
      %v446 = vpop.f32.mrf.mxu0
      %v447 = vpop.f32.mrf.mxu0
      %v448 = vadd.f32 0.0, %v447
      %v449 = vpop.f32.mrf.mxu0
      %450 = vmatprep.mubr.bf16.mxu0 %v398
      %451 = vmatmul.mubr.bf16.gmra.mxu0 %v308
      %v452 = vpop.f32.mrf.mxu0
      %v453 = vadd.f32 0.0, %v452
      %v454 = vpop.f32.mrf.mxu0
      %v455 = vpop.f32.mrf.mxu0
      %v456 = vadd.f32 0.0, %v455
      %v457 = vpop.f32.mrf.mxu0
      %458 = vmatprep.mubr.bf16.mxu0 %v401
      %459 = vmatmul.mubr.bf16.gmra.mxu0 %v310
      %v460 = vpop.f32.mrf.mxu0
      %v461 = vadd.f32 0.0, %v460
      %v462 = vpop.f32.mrf.mxu0
      %v463 = vpop.f32.mrf.mxu0
      %v464 = vadd.f32 0.0, %v463
      %v465 = vpop.f32.mrf.mxu0
      %466 = vmatprep.mubr.bf16.mxu0 %v404
      %467 = vmatmul.mubr.bf16.gmra.mxu0 %v312
      %v468 = vpop.f32.mrf.mxu0
      %v469 = vadd.f32 0.0, %v468
      %v470 = vpop.f32.mrf.mxu0
      %v471 = vpop.f32.mrf.mxu0
      %v472 = vadd.f32 0.0, %v471
      %v473 = vpop.f32.mrf.mxu0
      %474 = vdwg.mxu0
      %v475 = vadd.f32 %v241, %v445
      %v476 = vadd.f32 %v242, %v448
      %v477 = vadd.f32 %v243, %v453
      %v478 = vadd.f32 %v244, %v456
      %v479 = vadd.f32 %v245, %v461
      %v480 = vadd.f32 %v246, %v464
      %v481 = vadd.f32 %v247, %v469
      %v482 = vadd.f32 %v248, %v472
      %vm483 = vcmask 261120
      %484 = vst.msk [vmem:[#allocation2] sm:$0xff] %vm483, %v475
      %485 = vst.msk [vmem:[#allocation2 + $0x8] sm:$0xff] %vm483, %v476
      %486 = vst.msk [vmem:[#allocation2 + $0x10] sm:$0xff] %vm483, %v477
      %487 = vst.msk [vmem:[#allocation2 + $0x18] sm:$0xff] %vm483, %v478
      %488 = vst.msk [vmem:[#allocation2 + $0x20] sm:$0xff] %vm483, %v479
      %489 = vst.msk [vmem:[#allocation2 + $0x28] sm:$0xff] %vm483, %v480
      %490 = vst.msk [vmem:[#allocation2 + $0x30] sm:$0xff] %vm483, %v481
      %491 = vst.msk [vmem:[#allocation2 + $0x38] sm:$0xff] %vm483, %v482
      // Predicated region
      $region37: #{_lambda_.14} parent=31 // pred_check
        %p492 = pneg %p228
      $region38: #{_lambda_.14} parent=31 // pred_check_branch
        %494 = sbr.rel (%p492) target = $region40
      $region39: #{_lambda_.14} parent=31 // pred_region
        %v495 = vld [vmem:[#allocation2] sm:$0xff]
        %v496 = vld [vmem:[#allocation2 + $0x8] sm:$0xff]
        %v497 = vld [vmem:[#allocation2 + $0x10] sm:$0xff]
        %v498 = vld [vmem:[#allocation2 + $0x18] sm:$0xff]
        %v499 = vld [vmem:[#allocation2 + $0x20] sm:$0xff]
        %v500 = vld [vmem:[#allocation2 + $0x28] sm:$0xff]
        %v501 = vld [vmem:[#allocation2 + $0x30] sm:$0xff]
        %v502 = vld [vmem:[#allocation2 + $0x38] sm:$0xff]
        %v503 = vld [vmem:[%s2] sm:$0x1]
        %v505 = vlaneseq
        %v506 = vshrl.u32 %v505, 7
        %v507 = vsub.s32 0, %v506
        %v508 = vrot.slane %v503, %v507
        %v510 = vadd.f32 %v495, %v508
        %v511 = vadd.f32 %v496, %v508
        %v512 = vadd.f32 %v497, %v508
        %v513 = vadd.f32 %v498, %v508
        %v514 = vadd.f32 %v499, %v508
        %v515 = vadd.f32 %v500, %v508
        %v516 = vadd.f32 %v501, %v508
        %v517 = vadd.f32 %v502, %v508
        %518 = vst.msk [vmem:[%s225] sm:$0xff] %vm483, %v510
        %519 = vst.msk [vmem:[%s225 + $0x8] sm:$0xff] %vm483, %v511
        %520 = vst.msk [vmem:[%s225 + $0x10] sm:$0xff] %vm483, %v512
        %521 = vst.msk [vmem:[%s225 + $0x18] sm:$0xff] %vm483, %v513
        %522 = vst.msk [vmem:[%s225 + $0x20] sm:$0xff] %vm483, %v514
        %523 = vst.msk [vmem:[%s225 + $0x28] sm:$0xff] %vm483, %v515
        %524 = vst.msk [vmem:[%s225 + $0x30] sm:$0xff] %vm483, %v516
        %525 = vst.msk [vmem:[%s225 + $0x38] sm:$0xff] %vm483, %v517
      $region40: #{_lambda_.14} parent=31 // pred_fallthru
        _
      %s526 = smul.u32 8, %s18
      %p527 = scmp.lt.s32.totalorder %s526, 15
      %s528 = scalar_select %p527, %s526, 15
      %s529 = smul.addr %s528, 8
      %s530 = scalar_lea.vmem %s3, %s529
      // Predicated region
      $region41: #{_lambda_.14} parent=31 // pred_check
        %p531 = pneg %p119
      $region42: #{_lambda_.14} parent=31 // pred_check_branch
        %533 = sbr.rel (%p531) target = $region44
      $region43: #{_lambda_.14} parent=31 // pred_region
        %s534 = smul.u32 8, %s18
      $region44: #{_lambda_.14} parent=31 // pred_fallthru
        _
    $region32: #{_lambda_.14} parent=5 // pred_fallthru
      _
    %p535 = scmp.le.s32.totalorder 2, %s9
    // Predicated region
    $region45: #{_lambda_.14} parent=5 // pred_check
      %p536 = pneg %p535
    $region46: #{_lambda_.14} parent=5 // pred_check_branch
      %538 = sbr.rel (%p536) target = $region48
    $region47: #{_lambda_.14} parent=5 // pred_region
      %s539 = ssub.s32 %s9, 2
      // Predicated region
      $region49: #{_lambda_.14} parent=47 // pred_check
        %p540 = pneg %p125
      $region50: #{_lambda_.14} parent=47 // pred_check_branch
        %542 = sbr.rel (%p540) target = $region52
      $region51: #{_lambda_.14} parent=47 // pred_region
        %s543 = smul.u32 8, %s20
        %p544 = scmp.lt.s32.totalorder %s543, 15
        %s545 = scalar_select %p544, %s543, 15
        %s546 = smul.addr %s545, 8
        %s547 = scalar_lea.vmem %s3, %s546
      $region52: #{_lambda_.14} parent=47 // pred_fallthru
        _
    $region48: #{_lambda_.14} parent=5 // pred_fallthru
      _
  $region6: #{_lambda_.14} parent=0 // loop_footer
    %s13 = sadd.s32 1, %s9
  $region7: #{_lambda_.14} parent=0 // loop_footer_branch
    %8 = sbr.rel target = $region3
  $region8: #{_lambda_.14} parent=0 // loop_exit
    _

// kernel: _lambda_.17
$region0: #{_lambda_.17}
  #allocation0 [shape = 'u32[]', space=smem, size = 0x4, offset = 0x4, fixed_abs, tag = 'smem constant byte address 0x4 - core index']
  #allocation1 [shape = 'u32[144,128]{1,0:T(1,128)}', space=vmem, size = 0x12000, scoped, tag = 'internal scratch']
  %s0 = inlined_call_operand.vmem [shape: bf16[128,32], index: 0, kind: input, shape index: {}]
  %s1 = inlined_call_operand.vmem [shape: f32[128,32], index: 1, kind: input, shape index: {}]
  %s2 = inlined_call_operand.vmem [shape: bf16[32,32], index: 2, kind: input, shape index: {}]
  %s3 = inlined_call_operand.vmem [shape: f32[1,32], index: 3, kind: input, shape index: {}, may-alias: {3,10}]
  %s4 = inlined_call_operand.vmem [shape: f32[1,32], index: 4, kind: input, shape index: {}]
  %s5 = inlined_call_operand.vmem [shape: f32[1,32], index: 5, kind: input, shape index: {}, may-alias: {5,9}]
  %s6 = inlined_call_operand.vmem [shape: bf16[32,128], index: 6, kind: input, shape index: {}]
  %s7 = inlined_call_operand.vmem [shape: f32[1,128], index: 7, kind: input, shape index: {}]
  %s8 = inlined_call_operand.vmem [shape: bf16[128,32], index: 8, kind: input, shape index: {}]
  %s9 = inlined_call_operand.vmem [shape: f32[1,32], index: 9, kind: input, shape index: {}, may-alias: {5,9}]
  %s10 = inlined_call_operand.vmem [shape: f32[1,32], index: 10, kind: input, shape index: {}, may-alias: {3,10}]
  %s11 = inlined_call_operand.vmem [shape: f32[128,32], index: 11, kind: output, shape index: {}]
  %s12 = sld [smem:[#allocation0]]
  $region77: #{_lambda_.17} parent=0
    _
  %s14 = ssub.s32 1, %s12
  %s15 = scalar_select 0, %s14, %s12
  loop: start=0, step=1, limit=4
  $region2: #{_lambda_.17} parent=0 // loop_pre_header
    _
  $region3: #{_lambda_.17} parent=0 // loop_header
    %s17 = sphi 0, %s21
    %p18 = scmp.ge.s32.totalorder %s17, 4
    %s27 = sphi 0, %s29
    %s30 = sphi 0, %s27
    %s31 = sphi 0, %s30
    %s47 = sphi 0, %s31
    %s53 = sphi 0, %s55
    %s56 = sphi 0, %s53
    %s57 = sphi 0, %s56
    %s73 = sphi 0, %s57
    %s77 = sphi 0, %s77
    %s79 = sphi 0, %s77
    %s80 = sphi 0, %s79
    %s94 = sphi 0, %s80
    %s98 = sphi 0, %s98
    %s100 = sphi 0, %s98
    %s101 = sphi 0, %s100
    %s115 = sphi 0, %s101
    %s119 = sphi 0, %s119
    %s121 = sphi 0, %s119
    %s122 = sphi 0, %s121
    %s136 = sphi 0, %s122
    %s140 = sphi 0, %s140
    %s142 = sphi 0, %s140
    %s143 = sphi 0, %s142
    %s157 = sphi 0, %s143
    %s161 = sphi 0, %s161
    %s163 = sphi 0, %s161
    %s164 = sphi 0, %s163
    %s178 = sphi 0, %s164
    %s182 = sphi 0, %s182
    %s184 = sphi 0, %s182
    %s185 = sphi 0, %s184
    %s199 = sphi 0, %s185
    %s203 = sphi 0, %s203
    %s205 = sphi 0, %s203
    %s206 = sphi 0, %s205
    %s220 = sphi 0, %s206
    %s224 = sphi 0, %s224
    %s226 = sphi 0, %s224
    %s227 = sphi 0, %s226
    %s241 = sphi 0, %s227
    %s245 = sphi 0, %s245
    %s247 = sphi 0, %s245
    %s248 = sphi 0, %s247
    %s262 = sphi 0, %s248
    %s268 = sphi 0, %s270
    %s271 = sphi 0, %s268
    %s272 = sphi 0, %s271
    %s288 = sphi 0, %s272
  $region4: #{_lambda_.17} parent=0 // loop_header_branch
    %20 = sbr.rel (%p18) target = $region8
  $region5: #{_lambda_.17} parent=0 // loop_body
    %s22 = ssub.s32 %s17, 1
    %s23 = ssub.s32 %s17, 2
    %s24 = sadd.s32 %s17, 1
    %s25 = ssub.s32 %s17, %s24
    %p26 = scmp.eq.s32.totalorder %s25, 0
    %s28 = sadd.s32 %s27, 1
    %s29 = scalar_select %p26, %s27, %s28
    %p32 = pneg %p26
    %p33 = scmp.eq.s32.totalorder %s17, 1
    %p34 = por %p32, %p33
    %p35 = scmp.ne.s32.totalorder %s27, %s30
    %p36 = scmp.eq.s32.totalorder %s17, 0
    %p37 = por %p35, %p36
    %p38 = scmp.ne.s32.totalorder %s27, %s30
    %p39 = scmp.eq.s32.totalorder %s22, 1
    %p40 = por %p38, %p39
    %p41 = scmp.ne.s32.totalorder %s30, %s31
    %p42 = scmp.eq.s32.totalorder %s22, 0
    %p43 = por %p41, %p42
    %p44 = scmp.ne.s32.totalorder %s30, %s31
    %p45 = scmp.eq.s32.totalorder %s23, 1
    %p46 = por %p44, %p45
    %p48 = scmp.ne.s32.totalorder %s31, %s47
    %p49 = scmp.eq.s32.totalorder %s23, 0
    %p50 = por %p48, %p49
    %s51 = ssub.s32 %s17, %s24
    %p52 = scmp.eq.s32.totalorder %s51, 0
    %s54 = sadd.s32 %s53, 1
    %s55 = scalar_select %p52, %s53, %s54
    %p58 = pneg %p52
    %p59 = scmp.eq.s32.totalorder %s17, 1
    %p60 = por %p58, %p59
    %p61 = scmp.ne.s32.totalorder %s53, %s56
    %p62 = scmp.eq.s32.totalorder %s17, 0
    %p63 = por %p61, %p62
    %p64 = scmp.ne.s32.totalorder %s53, %s56
    %p65 = scmp.eq.s32.totalorder %s22, 1
    %p66 = por %p64, %p65
    %p67 = scmp.ne.s32.totalorder %s56, %s57
    %p68 = scmp.eq.s32.totalorder %s22, 0
    %p69 = por %p67, %p68
    %p70 = scmp.ne.s32.totalorder %s56, %s57
    %p71 = scmp.eq.s32.totalorder %s23, 1
    %p72 = por %p70, %p71
    %p74 = scmp.ne.s32.totalorder %s57, %s73
    %p75 = scmp.eq.s32.totalorder %s23, 0
    %p76 = por %p74, %p75
    %s78 = sadd.s32 %s77, 1
    %p81 = scmp.eq.s32.totalorder %s17, 1
    %p82 = scmp.ne.s32.totalorder %s77, %s79
    %p83 = scmp.eq.s32.totalorder %s17, 0
    %p84 = por %p82, %p83
    %p85 = scmp.ne.s32.totalorder %s77, %s79
    %p86 = scmp.eq.s32.totalorder %s22, 1
    %p87 = por %p85, %p86
    %p88 = scmp.ne.s32.totalorder %s79, %s80
    %p89 = scmp.eq.s32.totalorder %s22, 0
    %p90 = por %p88, %p89
    %p91 = scmp.ne.s32.totalorder %s79, %s80
    %p92 = scmp.eq.s32.totalorder %s23, 1
    %p93 = por %p91, %p92
    %p95 = scmp.ne.s32.totalorder %s80, %s94
    %p96 = scmp.eq.s32.totalorder %s23, 0
    %p97 = por %p95, %p96
    %s99 = sadd.s32 %s98, 1
    %p102 = scmp.eq.s32.totalorder %s17, 1
    %p103 = scmp.ne.s32.totalorder %s98, %s100
    %p104 = scmp.eq.s32.totalorder %s17, 0
    %p105 = por %p103, %p104
    %p106 = scmp.ne.s32.totalorder %s98, %s100
    %p107 = scmp.eq.s32.totalorder %s22, 1
    %p108 = por %p106, %p107
    %p109 = scmp.ne.s32.totalorder %s100, %s101
    %p110 = scmp.eq.s32.totalorder %s22, 0
    %p111 = por %p109, %p110
    %p112 = scmp.ne.s32.totalorder %s100, %s101
    %p113 = scmp.eq.s32.totalorder %s23, 1
    %p114 = por %p112, %p113
    %p116 = scmp.ne.s32.totalorder %s101, %s115
    %p117 = scmp.eq.s32.totalorder %s23, 0
    %p118 = por %p116, %p117
    %s120 = sadd.s32 %s119, 1
    %p123 = scmp.eq.s32.totalorder %s17, 1
    %p124 = scmp.ne.s32.totalorder %s119, %s121
    %p125 = scmp.eq.s32.totalorder %s17, 0
    %p126 = por %p124, %p125
    %p127 = scmp.ne.s32.totalorder %s119, %s121
    %p128 = scmp.eq.s32.totalorder %s22, 1
    %p129 = por %p127, %p128
    %p130 = scmp.ne.s32.totalorder %s121, %s122
    %p131 = scmp.eq.s32.totalorder %s22, 0
    %p132 = por %p130, %p131
    %p133 = scmp.ne.s32.totalorder %s121, %s122
    %p134 = scmp.eq.s32.totalorder %s23, 1
    %p135 = por %p133, %p134
    %p137 = scmp.ne.s32.totalorder %s122, %s136
    %p138 = scmp.eq.s32.totalorder %s23, 0
    %p139 = por %p137, %p138
    %s141 = sadd.s32 %s140, 1
    %p144 = scmp.eq.s32.totalorder %s17, 1
    %p145 = scmp.ne.s32.totalorder %s140, %s142
    %p146 = scmp.eq.s32.totalorder %s17, 0
    %p147 = por %p145, %p146
    %p148 = scmp.ne.s32.totalorder %s140, %s142
    %p149 = scmp.eq.s32.totalorder %s22, 1
    %p150 = por %p148, %p149
    %p151 = scmp.ne.s32.totalorder %s142, %s143
    %p152 = scmp.eq.s32.totalorder %s22, 0
    %p153 = por %p151, %p152
    %p154 = scmp.ne.s32.totalorder %s142, %s143
    %p155 = scmp.eq.s32.totalorder %s23, 1
    %p156 = por %p154, %p155
    %p158 = scmp.ne.s32.totalorder %s143, %s157
    %p159 = scmp.eq.s32.totalorder %s23, 0
    %p160 = por %p158, %p159
    %s162 = sadd.s32 %s161, 1
    %p165 = scmp.eq.s32.totalorder %s17, 1
    %p166 = scmp.ne.s32.totalorder %s161, %s163
    %p167 = scmp.eq.s32.totalorder %s17, 0
    %p168 = por %p166, %p167
    %p169 = scmp.ne.s32.totalorder %s161, %s163
    %p170 = scmp.eq.s32.totalorder %s22, 1
    %p171 = por %p169, %p170
    %p172 = scmp.ne.s32.totalorder %s163, %s164
    %p173 = scmp.eq.s32.totalorder %s22, 0
    %p174 = por %p172, %p173
    %p175 = scmp.ne.s32.totalorder %s163, %s164
    %p176 = scmp.eq.s32.totalorder %s23, 1
    %p177 = por %p175, %p176
    %p179 = scmp.ne.s32.totalorder %s164, %s178
    %p180 = scmp.eq.s32.totalorder %s23, 0
    %p181 = por %p179, %p180
    %s183 = sadd.s32 %s182, 1
    %p186 = scmp.eq.s32.totalorder %s17, 1
    %p187 = scmp.ne.s32.totalorder %s182, %s184
    %p188 = scmp.eq.s32.totalorder %s17, 0
    %p189 = por %p187, %p188
    %p190 = scmp.ne.s32.totalorder %s182, %s184
    %p191 = scmp.eq.s32.totalorder %s22, 1
    %p192 = por %p190, %p191
    %p193 = scmp.ne.s32.totalorder %s184, %s185
    %p194 = scmp.eq.s32.totalorder %s22, 0
    %p195 = por %p193, %p194
    %p196 = scmp.ne.s32.totalorder %s184, %s185
    %p197 = scmp.eq.s32.totalorder %s23, 1
    %p198 = por %p196, %p197
    %p200 = scmp.ne.s32.totalorder %s185, %s199
    %p201 = scmp.eq.s32.totalorder %s23, 0
    %p202 = por %p200, %p201
    %s204 = sadd.s32 %s203, 1
    %p207 = scmp.eq.s32.totalorder %s17, 1
    %p208 = scmp.ne.s32.totalorder %s203, %s205
    %p209 = scmp.eq.s32.totalorder %s17, 0
    %p210 = por %p208, %p209
    %p211 = scmp.ne.s32.totalorder %s203, %s205
    %p212 = scmp.eq.s32.totalorder %s22, 1
    %p213 = por %p211, %p212
    %p214 = scmp.ne.s32.totalorder %s205, %s206
    %p215 = scmp.eq.s32.totalorder %s22, 0
    %p216 = por %p214, %p215
    %p217 = scmp.ne.s32.totalorder %s205, %s206
    %p218 = scmp.eq.s32.totalorder %s23, 1
    %p219 = por %p217, %p218
    %p221 = scmp.ne.s32.totalorder %s206, %s220
    %p222 = scmp.eq.s32.totalorder %s23, 0
    %p223 = por %p221, %p222
    %s225 = sadd.s32 %s224, 1
    %p228 = scmp.eq.s32.totalorder %s17, 1
    %p229 = scmp.ne.s32.totalorder %s224, %s226
    %p230 = scmp.eq.s32.totalorder %s17, 0
    %p231 = por %p229, %p230
    %p232 = scmp.ne.s32.totalorder %s224, %s226
    %p233 = scmp.eq.s32.totalorder %s22, 1
    %p234 = por %p232, %p233
    %p235 = scmp.ne.s32.totalorder %s226, %s227
    %p236 = scmp.eq.s32.totalorder %s22, 0
    %p237 = por %p235, %p236
    %p238 = scmp.ne.s32.totalorder %s226, %s227
    %p239 = scmp.eq.s32.totalorder %s23, 1
    %p240 = por %p238, %p239
    %p242 = scmp.ne.s32.totalorder %s227, %s241
    %p243 = scmp.eq.s32.totalorder %s23, 0
    %p244 = por %p242, %p243
    %s246 = sadd.s32 %s245, 1
    %p249 = scmp.eq.s32.totalorder %s17, 1
    %p250 = scmp.ne.s32.totalorder %s245, %s247
    %p251 = scmp.eq.s32.totalorder %s17, 0
    %p252 = por %p250, %p251
    %p253 = scmp.ne.s32.totalorder %s245, %s247
    %p254 = scmp.eq.s32.totalorder %s22, 1
    %p255 = por %p253, %p254
    %p256 = scmp.ne.s32.totalorder %s247, %s248
    %p257 = scmp.eq.s32.totalorder %s22, 0
    %p258 = por %p256, %p257
    %p259 = scmp.ne.s32.totalorder %s247, %s248
    %p260 = scmp.eq.s32.totalorder %s23, 1
    %p261 = por %p259, %p260
    %p263 = scmp.ne.s32.totalorder %s248, %s262
    %p264 = scmp.eq.s32.totalorder %s23, 0
    %p265 = por %p263, %p264
    %s266 = ssub.s32 %s17, %s24
    %p267 = scmp.eq.s32.totalorder %s266, 0
    %s269 = sadd.s32 %s268, 1
    %s270 = scalar_select %p267, %s268, %s269
    %p273 = pneg %p267
    %p274 = scmp.eq.s32.totalorder %s17, 1
    %p275 = por %p273, %p274
    %p276 = scmp.ne.s32.totalorder %s268, %s271
    %p277 = scmp.eq.s32.totalorder %s17, 0
    %p278 = por %p276, %p277
    %p279 = scmp.ne.s32.totalorder %s268, %s271
    %p280 = scmp.eq.s32.totalorder %s22, 1
    %p281 = por %p279, %p280
    %p282 = scmp.ne.s32.totalorder %s271, %s272
    %p283 = scmp.eq.s32.totalorder %s22, 0
    %p284 = por %p282, %p283
    %p285 = scmp.ne.s32.totalorder %s271, %s272
    %p286 = scmp.eq.s32.totalorder %s23, 1
    %p287 = por %p285, %p286
    %p289 = scmp.ne.s32.totalorder %s272, %s288
    %p290 = scmp.eq.s32.totalorder %s23, 0
    %p291 = por %p289, %p290
    %p292 = scmp.le.s32.totalorder 1, %s17
    %p293 = scmp.lt.s32.totalorder %s17, 3
    %p294 = pnand %p292, %p293
    %p295 = pneg %p294
    // Predicated region
    $region9: #{_lambda_.17} parent=5 // pred_check
      _
    $region10: #{_lambda_.17} parent=5 // pred_check_branch
      %297 = sbr.rel (%p294) target = $region12
    $region11: #{_lambda_.17} parent=5 // pred_region
      %s298 = ssub.s32 %s17, 1
      // Predicated region
      $region13: #{_lambda_.17} parent=11 // pred_check
        %p299 = pneg %p90
      $region14: #{_lambda_.17} parent=11 // pred_check_branch
        %301 = sbr.rel (%p299) target = $region16
      $region15: #{_lambda_.17} parent=11 // pred_region
        _
      $region16: #{_lambda_.17} parent=11 // pred_fallthru
        _
      // Predicated region
      $region17: #{_lambda_.17} parent=11 // pred_check
        %p302 = pneg %p111
      $region18: #{_lambda_.17} parent=11 // pred_check_branch
        %304 = sbr.rel (%p302) target = $region20
      $region19: #{_lambda_.17} parent=11 // pred_region
        _
      $region20: #{_lambda_.17} parent=11 // pred_fallthru
        _
      // Predicated region
      $region21: #{_lambda_.17} parent=11 // pred_check
        %p305 = pneg %p132
      $region22: #{_lambda_.17} parent=11 // pred_check_branch
        %307 = sbr.rel (%p305) target = $region24
      $region23: #{_lambda_.17} parent=11 // pred_region
        _
      $region24: #{_lambda_.17} parent=11 // pred_fallthru
        _
      // Predicated region
      $region25: #{_lambda_.17} parent=11 // pred_check
        %p308 = pneg %p153
      $region26: #{_lambda_.17} parent=11 // pred_check_branch
        %310 = sbr.rel (%p308) target = $region28
      $region27: #{_lambda_.17} parent=11 // pred_region
        _
      $region28: #{_lambda_.17} parent=11 // pred_fallthru
        _
      // Predicated region
      $region29: #{_lambda_.17} parent=11 // pred_check
        %p311 = pneg %p174
      $region30: #{_lambda_.17} parent=11 // pred_check_branch
        %313 = sbr.rel (%p311) target = $region32
      $region31: #{_lambda_.17} parent=11 // pred_region
        _
      $region32: #{_lambda_.17} parent=11 // pred_fallthru
        _
      // Predicated region
      $region33: #{_lambda_.17} parent=11 // pred_check
        %p314 = pneg %p195
      $region34: #{_lambda_.17} parent=11 // pred_check_branch
        %316 = sbr.rel (%p314) target = $region36
      $region35: #{_lambda_.17} parent=11 // pred_region
        _
      $region36: #{_lambda_.17} parent=11 // pred_fallthru
        _
      // Predicated region
      $region37: #{_lambda_.17} parent=11 // pred_check
        %p317 = pneg %p216
      $region38: #{_lambda_.17} parent=11 // pred_check_branch
        %319 = sbr.rel (%p317) target = $region40
      $region39: #{_lambda_.17} parent=11 // pred_region
        _
      $region40: #{_lambda_.17} parent=11 // pred_fallthru
        _
      // Predicated region
      $region41: #{_lambda_.17} parent=11 // pred_check
        %p320 = pneg %p237
      $region42: #{_lambda_.17} parent=11 // pred_check_branch
        %322 = sbr.rel (%p320) target = $region44
      $region43: #{_lambda_.17} parent=11 // pred_region
        _
      $region44: #{_lambda_.17} parent=11 // pred_fallthru
        _
      // Predicated region
      $region45: #{_lambda_.17} parent=11 // pred_check
        %p323 = pneg %p258
      $region46: #{_lambda_.17} parent=11 // pred_check_branch
        %325 = sbr.rel (%p323) target = $region48
      $region47: #{_lambda_.17} parent=11 // pred_region
        _
      $region48: #{_lambda_.17} parent=11 // pred_fallthru
        _
    $region12: #{_lambda_.17} parent=5 // pred_fallthru
      _
    %p326 = scmp.lt.s32.totalorder %s17, 2
    // Predicated region
    $region49: #{_lambda_.17} parent=5 // pred_check
      %p327 = pneg %p326
    $region50: #{_lambda_.17} parent=5 // pred_check_branch
      %329 = sbr.rel (%p327) target = $region52
    $region51: #{_lambda_.17} parent=5 // pred_region
      // Predicated region
      $region53: #{_lambda_.17} parent=51 // pred_check
        %p330 = pneg %p37
      $region54: #{_lambda_.17} parent=51 // pred_check_branch
        %332 = sbr.rel (%p330) target = $region56
      $region55: #{_lambda_.17} parent=51 // pred_region
        %s333 = smul.u32 8, %s17
        %p334 = scmp.lt.s32.totalorder %s333, 15
        %s335 = scalar_select %p334, %s333, 15
        %s336 = smul.addr %s335, 4
        %s337 = scalar_lea.vmem %s0, %s336
        %s338 = smul.u32 8, %s17
      $region56: #{_lambda_.17} parent=51 // pred_fallthru
        _
      // Predicated region
      $region57: #{_lambda_.17} parent=51 // pred_check
        %p339 = pneg %p63
      $region58: #{_lambda_.17} parent=51 // pred_check_branch
        %341 = sbr.rel (%p339) target = $region60
      $region59: #{_lambda_.17} parent=51 // pred_region
        %s342 = smul.u32 8, %s17
        %p343 = scmp.lt.s32.totalorder %s342, 15
        %s344 = scalar_select %p343, %s342, 15
        %s345 = smul.addr %s344, 8
        %s346 = scalar_lea.vmem %s1, %s345
        %s347 = smul.u32 8, %s17
      $region60: #{_lambda_.17} parent=51 // pred_fallthru
        _
    $region52: #{_lambda_.17} parent=5 // pred_fallthru
      _
    %p348 = scmp.le.s32.totalorder 1, %s17
    %p349 = scmp.lt.s32.totalorder %s17, 3
    %p350 = pnand %p348, %p349
    %p351 = pneg %p350
    // Predicated region
    $region61: #{_lambda_.17} parent=5 // pred_check
      _
    $region62: #{_lambda_.17} parent=5 // pred_check_branch
      %353 = sbr.rel (%p350) target = $region64
    $region63: #{_lambda_.17} parent=5 // pred_region
      %s354 = ssub.s32 %s17, 1
      %s355 = smul.u32 8, %s22
      %p356 = scmp.lt.s32.totalorder %s355, 15
      %s357 = scalar_select %p356, %s355, 15
      %s358 = smul.addr %s357, 4
      %s359 = scalar_lea.vmem %s0, %s358
      %p360 = pneg %p43
      %p361 = pneg %p40
      %s362 = smul.u32 8, %s22
      %p363 = scmp.lt.s32.totalorder %s362, 15
      %s364 = scalar_select %p363, %s362, 15
      %s365 = smul.addr %s364, 8
      %s366 = scalar_lea.vmem %s1, %s365
      %p367 = pneg %p69
      %p368 = pneg %p66
      %p369 = pneg %p90
      %p370 = pneg %p87
      %p371 = pneg %p111
      %p372 = pneg %p108
      %p373 = pneg %p132
      %p374 = pneg %p129
      %p375 = pneg %p153
      %p376 = pneg %p150
      %p377 = pneg %p174
      %p378 = pneg %p171
      %p379 = pneg %p195
      %p380 = pneg %p192
      %p381 = pneg %p216
      %p382 = pneg %p213
      %p383 = pneg %p237
      %p384 = pneg %p234
      %p385 = pneg %p258
      %p386 = pneg %p255
      %p387 = pneg %p284
      %p388 = pneg %p281
      %s389 = smul.u32 8, %s22
      %p390 = scmp.lt.s32.totalorder %s389, 15
      %s391 = scalar_select %p390, %s389, 15
      %s392 = smul.addr %s391, 8
      %s393 = scalar_lea.vmem %s11, %s392
      %s394 = smul.u32 8, %s22
      %p395 = scmp.lt.s32.totalorder %s394, 15
      %s396 = scalar_select %p395, %s394, 15
      %s397 = smul.addr %s396, 4
      %s398 = scalar_lea.vmem %s0, %s397
      %s399 = smul.u32 8, %s22
      %s400 = smul.u32 8, %s22
      %p401 = scmp.lt.s32.totalorder %s400, 15
      %s402 = scalar_select %p401, %s400, 15
      %s403 = smul.addr %s402, 8
      %s404 = scalar_lea.vmem %s1, %s403
      %s405 = smul.u32 8, %s22
      %s406 = smul.u32 8, %s22
      %p407 = scmp.lt.s32.totalorder %s406, 15
      %s408 = scalar_select %p407, %s406, 15
      %s409 = smul.addr %s408, 8
      %s410 = scalar_lea.vmem %s11, %s409
      %s411 = smul.u32 8, %s22
      %v413 = vld [vmem:[%s398] sm:$0xf]
      %v414 = vld [vmem:[%s398 + $0x4] sm:$0xf]
      %v415 = vld [vmem:[%s398 + $0x8] sm:$0xf]
      %v416 = vld [vmem:[%s398 + $0xc] sm:$0xf]
      %v417 = vld [vmem:[%s398 + $0x10] sm:$0xf]
      %v418 = vld [vmem:[%s398 + $0x14] sm:$0xf]
      %v419 = vld [vmem:[%s398 + $0x18] sm:$0xf]
      %v420 = vld [vmem:[%s398 + $0x1c] sm:$0xf]
      %v421 = vld [vmem:[%s2] sm:$0xf]
      %v422 = vld [vmem:[%s2 + $0x4] sm:$0xf]
      %v423 = vld [vmem:[%s2 + $0x8] sm:$0xf]
      %v424 = vld [vmem:[%s2 + $0xc] sm:$0xf]
      %v433 = vunpack.c.l.b16 %v413
      %v434 = vunpack.c.l.b16 %v414
      %v435 = vunpack.c.l.b16 %v415
      %v436 = vunpack.c.l.b16 %v416
      %v437 = vunpack.c.l.b16 %v417
      %v438 = vunpack.c.l.b16 %v418
      %v439 = vunpack.c.l.b16 %v419
      %v440 = vunpack.c.l.b16 %v420
      %v441 = vpack.c.b16 %v434, %v433
      %v442 = vpack.c.b16 %v436, %v435
      %v443 = vpack.c.b16 %v438, %v437
      %v444 = vpack.c.b16 %v440, %v439
      %v449 = vunpack.c.l.b16 %v421
      %v450 = vunpack.c.l.b16 %v422
      %v451 = vunpack.c.l.b16 %v423
      %v452 = vunpack.c.l.b16 %v424
      %v453 = vpack.c.b16 %v450, %v449
      %v454 = vpack.c.b16 %v452, %v451
      %vm457 = vcmask 261120
      %v459 = vsel %vm457, %v441, 0
      %v462 = vsel %vm457, %v442, 0
      %v465 = vsel %vm457, %v443, 0
      %v468 = vsel %vm457, %v444, 0
      %470 = vmatprep.subr.bf16.mxu0 0
      %471 = vmatpush1.bf16.msra.mxu0 0
      %472 = vmatprep.subr.bf16.mxu0 0
      %473 = vmatpush1.bf16.msra.mxu0 0
      %474 = vmatprep.subr.bf16.mxu0 0
      %475 = vmatpush1.bf16.msra.mxu0 0
      %476 = vmatprep.subr.bf16.mxu0 0
      %477 = vmatpush1.bf16.msra.mxu0 0
      %478 = vmatprep.subr.bf16.mxu0 0
      %479 = vmatpush1.bf16.msra.mxu0 0
      %480 = vmatprep.subr.bf16.mxu0 0
      %481 = vmatpush1.bf16.msra.mxu0 0
      %482 = vmatprep.subr.bf16.mxu0 0
      %483 = vmatpush1.bf16.msra.mxu0 %v454
      %484 = vmatprep.subr.bf16.mxu0 0
      %485 = vmatpush1.bf16.msra.mxu0 %v453
      %486 = vmatprep.subr.bf16.mxu0 0
      %487 = vmatpush2.bf16.msra.mxu0 0
      %488 = vmatprep.subr.bf16.mxu0 0
      %489 = vmatpush2.bf16.msra.mxu0 0
      %490 = vmatprep.subr.bf16.mxu0 0
      %491 = vmatpush2.bf16.msra.mxu0 0
      %492 = vmatprep.subr.bf16.mxu0 0
      %493 = vmatpush2.bf16.msra.mxu0 0
      %494 = vmatprep.subr.bf16.mxu0 0
      %495 = vmatpush2.bf16.msra.mxu0 0
      %496 = vmatprep.subr.bf16.mxu0 0
      %497 = vmatpush2.bf16.msra.mxu0 0
      %498 = vmatprep.subr.bf16.mxu0 0
      %499 = vmatpush2.bf16.msra.mxu0 0
      %500 = vmatprep.subr.bf16.mxu0 0
      %501 = vmatpush2.bf16.msra.mxu0 0
      %502 = vmatprep.mubr.bf16.mxu0 0
      %503 = vmatmul.mubr.bf16.gmra.mxu0 %v459
      %v504 = vpop.f32.mrf.mxu0
      %v505 = vadd.f32 0.0, %v504
      %v506 = vpop.f32.mrf.mxu0
      %v507 = vpop.f32.mrf.mxu0
      %v508 = vadd.f32 0.0, %v507
      %v509 = vpop.f32.mrf.mxu0
      %510 = vmatprep.mubr.bf16.mxu0 0
      %511 = vmatmul.mubr.bf16.gmra.mxu0 %v462
      %v512 = vpop.f32.mrf.mxu0
      %v513 = vadd.f32 0.0, %v512
      %v514 = vpop.f32.mrf.mxu0
      %v515 = vpop.f32.mrf.mxu0
      %v516 = vadd.f32 0.0, %v515
      %v517 = vpop.f32.mrf.mxu0
      %518 = vmatprep.mubr.bf16.mxu0 0
      %519 = vmatmul.mubr.bf16.gmra.mxu0 %v465
      %v520 = vpop.f32.mrf.mxu0
      %v521 = vadd.f32 0.0, %v520
      %v522 = vpop.f32.mrf.mxu0
      %v523 = vpop.f32.mrf.mxu0
      %v524 = vadd.f32 0.0, %v523
      %v525 = vpop.f32.mrf.mxu0
      %526 = vmatprep.mubr.bf16.mxu0 0
      %527 = vmatmul.mubr.bf16.gmra.mxu0 %v468
      %v528 = vpop.f32.mrf.mxu0
      %v529 = vadd.f32 0.0, %v528
      %v530 = vpop.f32.mrf.mxu0
      %v531 = vpop.f32.mrf.mxu0
      %v532 = vadd.f32 0.0, %v531
      %v533 = vpop.f32.mrf.mxu0
      %534 = vdwg.mxu0
      %v535 = vld [vmem:[%s3] sm:$0x1]
      %v537 = vlaneseq
      %v538 = vshrl.u32 %v537, 7
      %v539 = vsub.s32 0, %v538
      %v540 = vrot.slane %v535, %v539
      %v542 = vmul.f32 %v505, %v540
      %v543 = vmul.f32 %v508, %v540
      %v544 = vmul.f32 %v513, %v540
      %v545 = vmul.f32 %v516, %v540
      %v546 = vmul.f32 %v521, %v540
      %v547 = vmul.f32 %v524, %v540
      %v548 = vmul.f32 %v529, %v540
      %v549 = vmul.f32 %v532, %v540
      %v550 = vld [vmem:[%s404] sm:$0xff]
      %v551 = vld [vmem:[%s404 + $0x8] sm:$0xff]
      %v552 = vld [vmem:[%s404 + $0x10] sm:$0xff]
      %v553 = vld [vmem:[%s404 + $0x18] sm:$0xff]
      %v554 = vld [vmem:[%s404 + $0x20] sm:$0xff]
      %v555 = vld [vmem:[%s404 + $0x28] sm:$0xff]
      %v556 = vld [vmem:[%s404 + $0x30] sm:$0xff]
      %v557 = vld [vmem:[%s404 + $0x38] sm:$0xff]
      %v558 = vadd.f32 %v542, %v550
      %v559 = vadd.f32 %v543, %v551
      %v560 = vadd.f32 %v544, %v552
      %v561 = vadd.f32 %v545, %v553
      %v562 = vadd.f32 %v546, %v554
      %v563 = vadd.f32 %v547, %v555
      %v564 = vadd.f32 %v548, %v556
      %v565 = vadd.f32 %v549, %v557
      %v566 = vld [vmem:[%s4] sm:$0x1]
      %v567 = vld [vmem:[%s5] sm:$0x1]
      %v568 = vsel %vm457, %v558, 0.0
      %569 = vadd.xlane.f32.xlu0 %v568
      %v570 = vpop.xlane.xlu0 %569
      %v571 = vsel %vm457, %v559, 0.0
      %572 = vadd.xlane.f32.xlu0 %v571
      %v573 = vpop.xlane.xlu0 %572
      %v574 = vsel %vm457, %v560, 0.0
      %575 = vadd.xlane.f32.xlu0 %v574
      %v576 = vpop.xlane.xlu0 %575
      %v577 = vsel %vm457, %v561, 0.0
      %578 = vadd.xlane.f32.xlu0 %v577
      %v579 = vpop.xlane.xlu0 %578
      %v580 = vsel %vm457, %v562, 0.0
      %581 = vadd.xlane.f32.xlu0 %v580
      %v582 = vpop.xlane.xlu0 %581
      %v583 = vsel %vm457, %v563, 0.0
      %584 = vadd.xlane.f32.xlu0 %v583
      %v585 = vpop.xlane.xlu0 %584
      %v586 = vsel %vm457, %v564, 0.0
      %587 = vadd.xlane.f32.xlu0 %v586
      %v588 = vpop.xlane.xlu0 %587
      %v589 = vsel %vm457, %v565, 0.0
      %590 = vadd.xlane.f32.xlu0 %v589
      %v591 = vpop.xlane.xlu0 %590
      %v592 = vrcp.pop 32.0
      %v593 = vmul.f32 %v570, %v592
      %v594 = vmul.f32 %v573, %v592
      %v595 = vmul.f32 %v576, %v592
      %v596 = vmul.f32 %v579, %v592
      %v597 = vmul.f32 %v582, %v592
      %v598 = vmul.f32 %v585, %v592
      %v599 = vmul.f32 %v588, %v592
      %v600 = vmul.f32 %v591, %v592
      %v601 = vsub.f32 %v558, %v593
      %v602 = vsub.f32 %v559, %v594
      %v603 = vsub.f32 %v560, %v595
      %v604 = vsub.f32 %v561, %v596
      %v605 = vsub.f32 %v562, %v597
      %v606 = vsub.f32 %v563, %v598
      %v607 = vsub.f32 %v564, %v599
      %v608 = vsub.f32 %v565, %v600
      %v609 = vmul.f32 %v601, %v601
      %v610 = vmul.f32 %v602, %v602
      %v611 = vmul.f32 %v603, %v603
      %v612 = vmul.f32 %v604, %v604
      %v613 = vmul.f32 %v605, %v605
      %v614 = vmul.f32 %v606, %v606
      %v615 = vmul.f32 %v607, %v607
      %v616 = vmul.f32 %v608, %v608
      %v617 = vsel %vm457, %v609, 0.0
      %618 = vadd.xlane.f32.xlu0 %v617
      %v619 = vpop.xlane.xlu0 %618
      %v620 = vsel %vm457, %v610, 0.0
      %621 = vadd.xlane.f32.xlu0 %v620
      %v622 = vpop.xlane.xlu0 %621
      %v623 = vsel %vm457, %v611, 0.0
      %624 = vadd.xlane.f32.xlu0 %v623
      %v625 = vpop.xlane.xlu0 %624
      %v626 = vsel %vm457, %v612, 0.0
      %627 = vadd.xlane.f32.xlu0 %v626
      %v628 = vpop.xlane.xlu0 %627
      %v629 = vsel %vm457, %v613, 0.0
      %630 = vadd.xlane.f32.xlu0 %v629
      %v631 = vpop.xlane.xlu0 %630
      %v632 = vsel %vm457, %v614, 0.0
      %633 = vadd.xlane.f32.xlu0 %v632
      %v634 = vpop.xlane.xlu0 %633
      %v635 = vsel %vm457, %v615, 0.0
      %636 = vadd.xlane.f32.xlu0 %v635
      %v637 = vpop.xlane.xlu0 %636
      %v638 = vsel %vm457, %v616, 0.0
      %639 = vadd.xlane.f32.xlu0 %v638
      %v640 = vpop.xlane.xlu0 %639
      %v641 = vmul.f32 %v619, %v592
      %v642 = vmul.f32 %v622, %v592
      %v643 = vmul.f32 %v625, %v592
      %v644 = vmul.f32 %v628, %v592
      %v645 = vmul.f32 %v631, %v592
      %v646 = vmul.f32 %v634, %v592
      %v647 = vmul.f32 %v637, %v592
      %v648 = vmul.f32 %v640, %v592
      %v649 = vadd.f32 %v641, 1e-05
      %v650 = vadd.f32 %v642, 1e-05
      %v651 = vadd.f32 %v643, 1e-05
      %v652 = vadd.f32 %v644, 1e-05
      %v653 = vadd.f32 %v645, 1e-05
      %v654 = vadd.f32 %v646, 1e-05
      %v655 = vadd.f32 %v647, 1e-05
      %v656 = vadd.f32 %v648, 1e-05
      %v657 = vrsqrt.pop %v649
      %v658 = vrsqrt.pop %v650
      %v659 = vrsqrt.pop %v651
      %v660 = vrsqrt.pop %v652
      %v661 = vrsqrt.pop %v653
      %v662 = vrsqrt.pop %v654
      %v663 = vrsqrt.pop %v655
      %v664 = vrsqrt.pop %v656
      %v665 = vmul.f32 %v601, %v657
      %v666 = vmul.f32 %v602, %v658
      %v667 = vmul.f32 %v603, %v659
      %v668 = vmul.f32 %v604, %v660
      %v669 = vmul.f32 %v605, %v661
      %v670 = vmul.f32 %v606, %v662
      %v671 = vmul.f32 %v607, %v663
      %v672 = vmul.f32 %v608, %v664
      %v674 = vlaneseq
      %v675 = vshrl.u32 %v674, 7
      %v676 = vsub.s32 0, %v675
      %v677 = vrot.slane %v566, %v676
      %v679 = vmul.f32 %v665, %v677
      %v680 = vmul.f32 %v666, %v677
      %v681 = vmul.f32 %v667, %v677
      %v682 = vmul.f32 %v668, %v677
      %v683 = vmul.f32 %v669, %v677
      %v684 = vmul.f32 %v670, %v677
      %v685 = vmul.f32 %v671, %v677
      %v686 = vmul.f32 %v672, %v677
      %v688 = vlaneseq
      %v689 = vshrl.u32 %v688, 7
      %v690 = vsub.s32 0, %v689
      %v691 = vrot.slane %v567, %v690
      %v693 = vadd.f32 %v679, %v691
      %v694 = vadd.f32 %v680, %v691
      %v695 = vadd.f32 %v681, %v691
      %v696 = vadd.f32 %v682, %v691
      %v697 = vadd.f32 %v683, %v691
      %v698 = vadd.f32 %v684, %v691
      %v699 = vadd.f32 %v685, %v691
      %v700 = vadd.f32 %v686, %v691
      %v701 = vpack.c.bf16 %v694, %v693
      %v702 = vpack.c.bf16 %v696, %v695
      %v703 = vpack.c.bf16 %v698, %v697
      %v704 = vpack.c.bf16 %v700, %v699
      %v705 = vld [vmem:[%s6] sm:$0xf]
      %v706 = vld [vmem:[%s6 + $0x4] sm:$0xf]
      %v707 = vld [vmem:[%s6 + $0x8] sm:$0xf]
      %v708 = vld [vmem:[%s6 + $0xc] sm:$0xf]
      %v709 = vld [vmem:[%s7] sm:$0x1]
      %v711 = vlaneseq
      %v712 = vshrl.u32 %v711, 7
      %v713 = vsub.s32 0, %v712
      %v714 = vrot.slane %v709, %v713
      %v720 = vunpack.c.l.b16 %v705
      %v721 = vunpack.c.l.b16 %v706
      %v722 = vunpack.c.l.b16 %v707
      %v723 = vunpack.c.l.b16 %v708
      %v724 = vpack.c.b16 %v721, %v720
      %v725 = vpack.c.b16 %v723, %v722
      %v729 = vsel %vm457, %v701, 0
      %v732 = vsel %vm457, %v702, 0
      %v735 = vsel %vm457, %v703, 0
      %v738 = vsel %vm457, %v704, 0
      %740 = vmatprep.subr.bf16.mxu0 0
      %741 = vmatpush1.bf16.msra.mxu0 0
      %742 = vmatprep.subr.bf16.mxu0 0
      %743 = vmatpush1.bf16.msra.mxu0 0
      %744 = vmatprep.subr.bf16.mxu0 0
      %745 = vmatpush1.bf16.msra.mxu0 0
      %746 = vmatprep.subr.bf16.mxu0 0
      %747 = vmatpush1.bf16.msra.mxu0 0
      %748 = vmatprep.subr.bf16.mxu0 0
      %749 = vmatpush1.bf16.msra.mxu0 0
      %750 = vmatprep.subr.bf16.mxu0 0
      %751 = vmatpush1.bf16.msra.mxu0 0
      %752 = vmatprep.subr.bf16.mxu0 0
      %753 = vmatpush1.bf16.msra.mxu0 %v725
      %754 = vmatprep.subr.bf16.mxu0 0
      %755 = vmatpush1.bf16.msra.mxu0 %v724
      %756 = vmatprep.subr.bf16.mxu0 0
      %757 = vmatpush2.bf16.msra.mxu0 0
      %758 = vmatprep.subr.bf16.mxu0 0
      %759 = vmatpush2.bf16.msra.mxu0 0
      %760 = vmatprep.subr.bf16.mxu0 0
      %761 = vmatpush2.bf16.msra.mxu0 0
      %762 = vmatprep.subr.bf16.mxu0 0
      %763 = vmatpush2.bf16.msra.mxu0 0
      %764 = vmatprep.subr.bf16.mxu0 0
      %765 = vmatpush2.bf16.msra.mxu0 0
      %766 = vmatprep.subr.bf16.mxu0 0
      %767 = vmatpush2.bf16.msra.mxu0 0
      %768 = vmatprep.subr.bf16.mxu0 0
      %769 = vmatpush2.bf16.msra.mxu0 0
      %770 = vmatprep.subr.bf16.mxu0 0
      %771 = vmatpush2.bf16.msra.mxu0 0
      %772 = vmatprep.mubr.bf16.mxu0 0
      %773 = vmatmul.mubr.bf16.gmra.mxu0 %v729
      %v774 = vpop.f32.mrf.mxu0
      %v775 = vadd.f32 %v714, %v774
      %v776 = vpop.f32.mrf.mxu0
      %v777 = vpop.f32.mrf.mxu0
      %v778 = vadd.f32 %v714, %v777
      %v779 = vpop.f32.mrf.mxu0
      %780 = vmatprep.mubr.bf16.mxu0 0
      %781 = vmatmul.mubr.bf16.gmra.mxu0 %v732
      %v782 = vpop.f32.mrf.mxu0
      %v783 = vadd.f32 %v714, %v782
      %v784 = vpop.f32.mrf.mxu0
      %v785 = vpop.f32.mrf.mxu0
      %v786 = vadd.f32 %v714, %v785
      %v787 = vpop.f32.mrf.mxu0
      %788 = vmatprep.mubr.bf16.mxu0 0
      %789 = vmatmul.mubr.bf16.gmra.mxu0 %v735
      %v790 = vpop.f32.mrf.mxu0
      %v791 = vadd.f32 %v714, %v790
      %v792 = vpop.f32.mrf.mxu0
      %v793 = vpop.f32.mrf.mxu0
      %v794 = vadd.f32 %v714, %v793
      %v795 = vpop.f32.mrf.mxu0
      %796 = vmatprep.mubr.bf16.mxu0 0
      %797 = vmatmul.mubr.bf16.gmra.mxu0 %v738
      %v798 = vpop.f32.mrf.mxu0
      %v799 = vadd.f32 %v714, %v798
      %v800 = vpop.f32.mrf.mxu0
      %v801 = vpop.f32.mrf.mxu0
      %v802 = vadd.f32 %v714, %v801
      %v803 = vpop.f32.mrf.mxu0
      %804 = vdwg.mxu0
      %v805 = vmul.f32 %v775, 0.5
      %v806 = vmul.f32 %v778, 0.5
      %v807 = vmul.f32 %v783, 0.5
      %v808 = vmul.f32 %v786, 0.5
      %v809 = vmul.f32 %v791, 0.5
      %v810 = vmul.f32 %v794, 0.5
      %v811 = vmul.f32 %v799, 0.5
      %v812 = vmul.f32 %v802, 0.5
      %v813 = vmul.f32 %v775, 0.044715
      %v814 = vmul.f32 %v778, 0.044715
      %v815 = vmul.f32 %v783, 0.044715
      %v816 = vmul.f32 %v786, 0.044715
      %v817 = vmul.f32 %v791, 0.044715
      %v818 = vmul.f32 %v794, 0.044715
      %v819 = vmul.f32 %v799, 0.044715
      %v820 = vmul.f32 %v802, 0.044715
      %v821 = vmul.f32 %v813, %v775
      %v822 = vmul.f32 %v814, %v778
      %v823 = vmul.f32 %v815, %v783
      %v824 = vmul.f32 %v816, %v786
      %v825 = vmul.f32 %v817, %v791
      %v826 = vmul.f32 %v818, %v794
      %v827 = vmul.f32 %v819, %v799
      %v828 = vmul.f32 %v820, %v802
      %v829 = vmul.f32 %v821, %v775
      %v830 = vmul.f32 %v822, %v778
      %v831 = vmul.f32 %v823, %v783
      %v832 = vmul.f32 %v824, %v786
      %v833 = vmul.f32 %v825, %v791
      %v834 = vmul.f32 %v826, %v794
      %v835 = vmul.f32 %v827, %v799
      %v836 = vmul.f32 %v828, %v802
      %v837 = vadd.f32 %v775, %v829
      %v838 = vadd.f32 %v778, %v830
      %v839 = vadd.f32 %v783, %v831
      %v840 = vadd.f32 %v786, %v832
      %v841 = vadd.f32 %v791, %v833
      %v842 = vadd.f32 %v794, %v834
      %v843 = vadd.f32 %v799, %v835
      %v844 = vadd.f32 %v802, %v836
      %v845 = vmul.f32 %v837, 0.7978846
      %v846 = vmul.f32 %v838, 0.7978846
      %v847 = vmul.f32 %v839, 0.7978846
      %v848 = vmul.f32 %v840, 0.7978846
      %v849 = vmul.f32 %v841, 0.7978846
      %v850 = vmul.f32 %v842, 0.7978846
      %v851 = vmul.f32 %v843, 0.7978846
      %v852 = vmul.f32 %v844, 0.7978846
      %v853 = vtanh.pop %v845
      %v854 = vtanh.pop %v846
      %v855 = vtanh.pop %v847
      %v856 = vtanh.pop %v848
      %v857 = vtanh.pop %v849
      %v858 = vtanh.pop %v850
      %v859 = vtanh.pop %v851
      %v860 = vtanh.pop %v852
      %v861 = vadd.f32 %v853, 1.0
      %v862 = vadd.f32 %v854, 1.0
      %v863 = vadd.f32 %v855, 1.0
      %v864 = vadd.f32 %v856, 1.0
      %v865 = vadd.f32 %v857, 1.0
      %v866 = vadd.f32 %v858, 1.0
      %v867 = vadd.f32 %v859, 1.0
      %v868 = vadd.f32 %v860, 1.0
      %v869 = vmul.f32 %v805, %v861
      %v870 = vmul.f32 %v806, %v862
      %v871 = vmul.f32 %v807, %v863
      %v872 = vmul.f32 %v808, %v864
      %v873 = vmul.f32 %v809, %v865
      %v874 = vmul.f32 %v810, %v866
      %v875 = vmul.f32 %v811, %v867
      %v876 = vmul.f32 %v812, %v868
      %v877 = vpack.c.bf16 %v870, %v869
      %v878 = vpack.c.bf16 %v872, %v871
      %v879 = vpack.c.bf16 %v874, %v873
      %v880 = vpack.c.bf16 %v876, %v875
      %v881 = vld [vmem:[%s8] sm:$0xf]
      %v882 = vld [vmem:[%s8 + $0x4] sm:$0xf]
      %v883 = vld [vmem:[%s8 + $0x8] sm:$0xf]
      %v884 = vld [vmem:[%s8 + $0xc] sm:$0xf]
      %v885 = vld [vmem:[%s8 + $0x10] sm:$0xf]
      %v886 = vld [vmem:[%s8 + $0x14] sm:$0xf]
      %v887 = vld [vmem:[%s8 + $0x18] sm:$0xf]
      %v888 = vld [vmem:[%s8 + $0x1c] sm:$0xf]
      %v889 = vld [vmem:[%s8 + $0x20] sm:$0xf]
      %v890 = vld [vmem:[%s8 + $0x24] sm:$0xf]
      %v891 = vld [vmem:[%s8 + $0x28] sm:$0xf]
      %v892 = vld [vmem:[%s8 + $0x2c] sm:$0xf]
      %v893 = vld [vmem:[%s8 + $0x30] sm:$0xf]
      %v894 = vld [vmem:[%s8 + $0x34] sm:$0xf]
      %v895 = vld [vmem:[%s8 + $0x38] sm:$0xf]
      %v896 = vld [vmem:[%s8 + $0x3c] sm:$0xf]
      %v897 = vld [vmem:[%s9] sm:$0x1]
      %v899 = vlaneseq
      %v900 = vshrl.u32 %v899, 7
      %v901 = vsub.s32 0, %v900
      %v902 = vrot.slane %v897, %v901
      %v920 = vunpack.c.l.b16 %v881
      %v921 = vunpack.c.l.b16 %v882
      %v922 = vunpack.c.l.b16 %v883
      %v923 = vunpack.c.l.b16 %v884
      %v924 = vunpack.c.l.b16 %v885
      %v925 = vunpack.c.l.b16 %v886
      %v926 = vunpack.c.l.b16 %v887
      %v927 = vunpack.c.l.b16 %v888
      %v928 = vunpack.c.l.b16 %v889
      %v929 = vunpack.c.l.b16 %v890
      %v930 = vunpack.c.l.b16 %v891
      %v931 = vunpack.c.l.b16 %v892
      %v932 = vunpack.c.l.b16 %v893
      %v933 = vunpack.c.l.b16 %v894
      %v934 = vunpack.c.l.b16 %v895
      %v935 = vunpack.c.l.b16 %v896
      %v936 = vpack.c.b16 %v921, %v920
      %v937 = vpack.c.b16 %v923, %v922
      %v938 = vpack.c.b16 %v925, %v924
      %v939 = vpack.c.b16 %v927, %v926
      %v940 = vpack.c.b16 %v929, %v928
      %v941 = vpack.c.b16 %v931, %v930
      %v942 = vpack.c.b16 %v933, %v932
      %v943 = vpack.c.b16 %v935, %v934
      %952 = vmatprep.subr.bf16.mxu0 0
      %953 = vmatpush1.bf16.msra.mxu0 %v943
      %954 = vmatprep.subr.bf16.mxu0 0
      %955 = vmatpush1.bf16.msra.mxu0 %v942
      %956 = vmatprep.subr.bf16.mxu0 0
      %957 = vmatpush1.bf16.msra.mxu0 %v941
      %958 = vmatprep.subr.bf16.mxu0 0
      %959 = vmatpush1.bf16.msra.mxu0 %v940
      %960 = vmatprep.subr.bf16.mxu0 0
      %961 = vmatpush1.bf16.msra.mxu0 %v939
      %962 = vmatprep.subr.bf16.mxu0 0
      %963 = vmatpush1.bf16.msra.mxu0 %v938
      %964 = vmatprep.subr.bf16.mxu0 0
      %965 = vmatpush1.bf16.msra.mxu0 %v937
      %966 = vmatprep.subr.bf16.mxu0 0
      %967 = vmatpush1.bf16.msra.mxu0 %v936
      %968 = vmatprep.subr.bf16.mxu0 0
      %969 = vmatpush2.bf16.msra.mxu0 0
      %970 = vmatprep.subr.bf16.mxu0 0
      %971 = vmatpush2.bf16.msra.mxu0 0
      %972 = vmatprep.subr.bf16.mxu0 0
      %973 = vmatpush2.bf16.msra.mxu0 0
      %974 = vmatprep.subr.bf16.mxu0 0
      %975 = vmatpush2.bf16.msra.mxu0 0
      %976 = vmatprep.subr.bf16.mxu0 0
      %977 = vmatpush2.bf16.msra.mxu0 0
      %978 = vmatprep.subr.bf16.mxu0 0
      %979 = vmatpush2.bf16.msra.mxu0 0
      %980 = vmatprep.subr.bf16.mxu0 0
      %981 = vmatpush2.bf16.msra.mxu0 0
      %982 = vmatprep.subr.bf16.mxu0 0
      %983 = vmatpush2.bf16.msra.mxu0 0
      %984 = vmatprep.mubr.bf16.mxu0 0
      %985 = vmatmul.mubr.bf16.gmra.mxu0 %v877
      %v986 = vpop.f32.mrf.mxu0
      %v987 = vadd.f32 %v902, %v986
      %v988 = vpop.f32.mrf.mxu0
      %v989 = vpop.f32.mrf.mxu0
      %v990 = vadd.f32 %v902, %v989
      %v991 = vpop.f32.mrf.mxu0
      %992 = vmatprep.mubr.bf16.mxu0 0
      %993 = vmatmul.mubr.bf16.gmra.mxu0 %v878
      %v994 = vpop.f32.mrf.mxu0
      %v995 = vadd.f32 %v902, %v994
      %v996 = vpop.f32.mrf.mxu0
      %v997 = vpop.f32.mrf.mxu0
      %v998 = vadd.f32 %v902, %v997
      %v999 = vpop.f32.mrf.mxu0
      %1000 = vmatprep.mubr.bf16.mxu0 0
      %1001 = vmatmul.mubr.bf16.gmra.mxu0 %v879
      %v1002 = vpop.f32.mrf.mxu0
      %v1003 = vadd.f32 %v902, %v1002
      %v1004 = vpop.f32.mrf.mxu0
      %v1005 = vpop.f32.mrf.mxu0
      %v1006 = vadd.f32 %v902, %v1005
      %v1007 = vpop.f32.mrf.mxu0
      %1008 = vmatprep.mubr.bf16.mxu0 0
      %1009 = vmatmul.mubr.bf16.gmra.mxu0 %v880
      %v1010 = vpop.f32.mrf.mxu0
      %v1011 = vadd.f32 %v902, %v1010
      %v1012 = vpop.f32.mrf.mxu0
      %v1013 = vpop.f32.mrf.mxu0
      %v1014 = vadd.f32 %v902, %v1013
      %v1015 = vpop.f32.mrf.mxu0
      %1016 = vdwg.mxu0
      %v1017 = vld [vmem:[%s10] sm:$0x1]
      %v1019 = vlaneseq
      %v1020 = vshrl.u32 %v1019, 7
      %v1021 = vsub.s32 0, %v1020
      %v1022 = vrot.slane %v1017, %v1021
      %v1024 = vmul.f32 %v987, %v1022
      %v1025 = vmul.f32 %v990, %v1022
      %v1026 = vmul.f32 %v995, %v1022
      %v1027 = vmul.f32 %v998, %v1022
      %v1028 = vmul.f32 %v1003, %v1022
      %v1029 = vmul.f32 %v1006, %v1022
      %v1030 = vmul.f32 %v1011, %v1022
      %v1031 = vmul.f32 %v1014, %v1022
      %v1032 = vadd.f32 %v1024, %v558
      %v1033 = vadd.f32 %v1025, %v559
      %v1034 = vadd.f32 %v1026, %v560
      %v1035 = vadd.f32 %v1027, %v561
      %v1036 = vadd.f32 %v1028, %v562
      %v1037 = vadd.f32 %v1029, %v563
      %v1038 = vadd.f32 %v1030, %v564
      %v1039 = vadd.f32 %v1031, %v565
      %1040 = vst.msk [vmem:[%s410] sm:$0xff] %vm457, %v1032
      %1041 = vst.msk [vmem:[%s410 + $0x8] sm:$0xff] %vm457, %v1033
      %1042 = vst.msk [vmem:[%s410 + $0x10] sm:$0xff] %vm457, %v1034
      %1043 = vst.msk [vmem:[%s410 + $0x18] sm:$0xff] %vm457, %v1035
      %1044 = vst.msk [vmem:[%s410 + $0x20] sm:$0xff] %vm457, %v1036
      %1045 = vst.msk [vmem:[%s410 + $0x28] sm:$0xff] %vm457, %v1037
      %1046 = vst.msk [vmem:[%s410 + $0x30] sm:$0xff] %vm457, %v1038
      %1047 = vst.msk [vmem:[%s410 + $0x38] sm:$0xff] %vm457, %v1039
      %s1048 = smul.u32 8, %s22
      %p1049 = scmp.lt.s32.totalorder %s1048, 15
      %s1050 = scalar_select %p1049, %s1048, 15
      %s1051 = smul.addr %s1050, 8
      %s1052 = scalar_lea.vmem %s11, %s1051
      // Predicated region
      $region65: #{_lambda_.17} parent=63 // pred_check
        %p1053 = pneg %p281
      $region66: #{_lambda_.17} parent=63 // pred_check_branch
        %1055 = sbr.rel (%p1053) target = $region68
      $region67: #{_lambda_.17} parent=63 // pred_region
        %s1056 = smul.u32 8, %s22
      $region68: #{_lambda_.17} parent=63 // pred_fallthru
        _
    $region64: #{_lambda_.17} parent=5 // pred_fallthru
      _
    %p1057 = scmp.le.s32.totalorder 2, %s17
    // Predicated region
    $region69: #{_lambda_.17} parent=5 // pred_check
      %p1058 = pneg %p1057
    $region70: #{_lambda_.17} parent=5 // pred_check_branch
      %1060 = sbr.rel (%p1058) target = $region72
    $region71: #{_lambda_.17} parent=5 // pred_region
      %s1061 = ssub.s32 %s17, 2
      // Predicated region
      $region73: #{_lambda_.17} parent=71 // pred_check
        %p1062 = pneg %p287
      $region74: #{_lambda_.17} parent=71 // pred_check_branch
        %1064 = sbr.rel (%p1062) target = $region76
      $region75: #{_lambda_.17} parent=71 // pred_region
        %s1065 = smul.u32 8, %s23
        %p1066 = scmp.lt.s32.totalorder %s1065, 15
        %s1067 = scalar_select %p1066, %s1065, 15
        %s1068 = smul.addr %s1067, 8
        %s1069 = scalar_lea.vmem %s11, %s1068
      $region76: #{_lambda_.17} parent=71 // pred_fallthru
        _
    $region72: #{_lambda_.17} parent=5 // pred_fallthru
      _
  $region6: #{_lambda_.17} parent=0 // loop_footer
    %s21 = sadd.s32 1, %s17
  $region7: #{_lambda_.17} parent=0 // loop_footer_branch
    %16 = sbr.rel target = $region3
  $region8: #{_lambda_.17} parent=0 // loop_exit
    _

// kernel: _lambda_.16
$region0: #{_lambda_.16}
  #allocation0 [shape = 'u32[]', space=smem, size = 0x4, offset = 0x4, fixed_abs, tag = 'smem constant byte address 0x4 - core index']
  #allocation1 [shape = 'u32[144,128]{1,0:T(1,128)}', space=vmem, size = 0x12000, scoped, tag = 'internal scratch']
  %s0 = inlined_call_operand.vmem [shape: bf16[128,96], index: 0, kind: input, shape index: {}]
  %s1 = inlined_call_operand.vmem [shape: f32[2,4,4], index: 1, kind: input, shape index: {}]
  %s2 = inlined_call_operand.vmem [shape: bf16[128,32], index: 2, kind: output, shape index: {}]
  %s3 = sld [smem:[#allocation0]]
  $region41: #{_lambda_.16} parent=0
    _
  %s5 = ssub.s32 1, %s3
  %s6 = scalar_select 0, %s5, %s3
  loop: start=0, step=1, limit=4
  $region2: #{_lambda_.16} parent=0 // loop_pre_header
    _
  $region3: #{_lambda_.16} parent=0 // loop_header
    %s8 = sphi 0, %s12
    %p9 = scmp.ge.s32.totalorder %s8, 4
    %s18 = sphi 0, %s20
    %s21 = sphi 0, %s18
    %s22 = sphi 0, %s21
    %s38 = sphi 0, %s22
    %s42 = sphi 0, %s42
    %s44 = sphi 0, %s42
    %s45 = sphi 0, %s44
    %s59 = sphi 0, %s45
    %s65 = sphi 0, %s67
    %s68 = sphi 0, %s65
    %s69 = sphi 0, %s68
    %s85 = sphi 0, %s69
  $region4: #{_lambda_.16} parent=0 // loop_header_branch
    %11 = sbr.rel (%p9) target = $region8
  $region5: #{_lambda_.16} parent=0 // loop_body
    %s13 = ssub.s32 %s8, 1
    %s14 = ssub.s32 %s8, 2
    %s15 = sadd.s32 %s8, 1
    %s16 = ssub.s32 %s8, %s15
    %p17 = scmp.eq.s32.totalorder %s16, 0
    %s19 = sadd.s32 %s18, 1
    %s20 = scalar_select %p17, %s18, %s19
    %p23 = pneg %p17
    %p24 = scmp.eq.s32.totalorder %s8, 1
    %p25 = por %p23, %p24
    %p26 = scmp.ne.s32.totalorder %s18, %s21
    %p27 = scmp.eq.s32.totalorder %s8, 0
    %p28 = por %p26, %p27
    %p29 = scmp.ne.s32.totalorder %s18, %s21
    %p30 = scmp.eq.s32.totalorder %s13, 1
    %p31 = por %p29, %p30
    %p32 = scmp.ne.s32.totalorder %s21, %s22
    %p33 = scmp.eq.s32.totalorder %s13, 0
    %p34 = por %p32, %p33
    %p35 = scmp.ne.s32.totalorder %s21, %s22
    %p36 = scmp.eq.s32.totalorder %s14, 1
    %p37 = por %p35, %p36
    %p39 = scmp.ne.s32.totalorder %s22, %s38
    %p40 = scmp.eq.s32.totalorder %s14, 0
    %p41 = por %p39, %p40
    %s43 = sadd.s32 %s42, 1
    %p46 = scmp.eq.s32.totalorder %s8, 1
    %p47 = scmp.ne.s32.totalorder %s42, %s44
    %p48 = scmp.eq.s32.totalorder %s8, 0
    %p49 = por %p47, %p48
    %p50 = scmp.ne.s32.totalorder %s42, %s44
    %p51 = scmp.eq.s32.totalorder %s13, 1
    %p52 = por %p50, %p51
    %p53 = scmp.ne.s32.totalorder %s44, %s45
    %p54 = scmp.eq.s32.totalorder %s13, 0
    %p55 = por %p53, %p54
    %p56 = scmp.ne.s32.totalorder %s44, %s45
    %p57 = scmp.eq.s32.totalorder %s14, 1
    %p58 = por %p56, %p57
    %p60 = scmp.ne.s32.totalorder %s45, %s59
    %p61 = scmp.eq.s32.totalorder %s14, 0
    %p62 = por %p60, %p61
    %s63 = ssub.s32 %s8, %s15
    %p64 = scmp.eq.s32.totalorder %s63, 0
    %s66 = sadd.s32 %s65, 1
    %s67 = scalar_select %p64, %s65, %s66
    %p70 = pneg %p64
    %p71 = scmp.eq.s32.totalorder %s8, 1
    %p72 = por %p70, %p71
    %p73 = scmp.ne.s32.totalorder %s65, %s68
    %p74 = scmp.eq.s32.totalorder %s8, 0
    %p75 = por %p73, %p74
    %p76 = scmp.ne.s32.totalorder %s65, %s68
    %p77 = scmp.eq.s32.totalorder %s13, 1
    %p78 = por %p76, %p77
    %p79 = scmp.ne.s32.totalorder %s68, %s69
    %p80 = scmp.eq.s32.totalorder %s13, 0
    %p81 = por %p79, %p80
    %p82 = scmp.ne.s32.totalorder %s68, %s69
    %p83 = scmp.eq.s32.totalorder %s14, 1
    %p84 = por %p82, %p83
    %p86 = scmp.ne.s32.totalorder %s69, %s85
    %p87 = scmp.eq.s32.totalorder %s14, 0
    %p88 = por %p86, %p87
    %p89 = scmp.le.s32.totalorder 1, %s8
    %p90 = scmp.lt.s32.totalorder %s8, 3
    %p91 = pnand %p89, %p90
    %p92 = pneg %p91
    // Predicated region
    $region9: #{_lambda_.16} parent=5 // pred_check
      _
    $region10: #{_lambda_.16} parent=5 // pred_check_branch
      %94 = sbr.rel (%p91) target = $region12
    $region11: #{_lambda_.16} parent=5 // pred_region
      %s95 = ssub.s32 %s8, 1
      // Predicated region
      $region13: #{_lambda_.16} parent=11 // pred_check
        %p96 = pneg %p55
      $region14: #{_lambda_.16} parent=11 // pred_check_branch
        %98 = sbr.rel (%p96) target = $region16
      $region15: #{_lambda_.16} parent=11 // pred_region
        _
      $region16: #{_lambda_.16} parent=11 // pred_fallthru
        _
    $region12: #{_lambda_.16} parent=5 // pred_fallthru
      _
    %p99 = scmp.lt.s32.totalorder %s8, 2
    // Predicated region
    $region17: #{_lambda_.16} parent=5 // pred_check
      %p100 = pneg %p99
    $region18: #{_lambda_.16} parent=5 // pred_check_branch
      %102 = sbr.rel (%p100) target = $region20
    $region19: #{_lambda_.16} parent=5 // pred_region
      // Predicated region
      $region21: #{_lambda_.16} parent=19 // pred_check
        %p103 = pneg %p28
      $region22: #{_lambda_.16} parent=19 // pred_check_branch
        %105 = sbr.rel (%p103) target = $region24
      $region23: #{_lambda_.16} parent=19 // pred_region
        %s106 = smul.u32 8, %s8
        %p107 = scmp.lt.s32.totalorder %s106, 15
        %s108 = scalar_select %p107, %s106, 15
        %s109 = smul.addr %s108, 4
        %s110 = scalar_lea.vmem %s0, %s109
        %s111 = smul.u32 8, %s8
      $region24: #{_lambda_.16} parent=19 // pred_fallthru
        _
    $region20: #{_lambda_.16} parent=5 // pred_fallthru
      _
    %p112 = scmp.le.s32.totalorder 1, %s8
    %p113 = scmp.lt.s32.totalorder %s8, 3
    %p114 = pnand %p112, %p113
    %p115 = pneg %p114
    // Predicated region
    $region25: #{_lambda_.16} parent=5 // pred_check
      _
    $region26: #{_lambda_.16} parent=5 // pred_check_branch
      %117 = sbr.rel (%p114) target = $region28
    $region27: #{_lambda_.16} parent=5 // pred_region
      %s118 = ssub.s32 %s8, 1
      %s119 = smul.u32 8, %s13
      %p120 = scmp.lt.s32.totalorder %s119, 15
      %s121 = scalar_select %p120, %s119, 15
      %s122 = smul.addr %s121, 4
      %s123 = scalar_lea.vmem %s0, %s122
      %p124 = pneg %p34
      %p125 = pneg %p31
      %p126 = pneg %p55
      %p127 = pneg %p52
      %p128 = pneg %p81
      %p129 = pneg %p78
      %s130 = smul.u32 8, %s13
      %p131 = scmp.lt.s32.totalorder %s130, 15
      %s132 = scalar_select %p131, %s130, 15
      %s133 = smul.addr %s132, 4
      %s134 = scalar_lea.vmem %s2, %s133
      %s135 = smul.u32 8, %s13
      %p136 = scmp.lt.s32.totalorder %s135, 15
      %s137 = scalar_select %p136, %s135, 15
      %s138 = smul.addr %s137, 4
      %s139 = scalar_lea.vmem %s0, %s138
      %s140 = smul.u32 8, %s13
      %s141 = smul.u32 8, %s13
      %p142 = scmp.lt.s32.totalorder %s141, 15
      %s143 = scalar_select %p142, %s141, 15
      %s144 = smul.addr %s143, 4
      %s145 = scalar_lea.vmem %s2, %s144
      %s146 = smul.u32 8, %s13
      %v148 = vld [vmem:[%s139] sm:$0xf]
      %v149 = vld [vmem:[%s139 + $0x4] sm:$0xf]
      %v150 = vld [vmem:[%s139 + $0x8] sm:$0xf]
      %v151 = vld [vmem:[%s139 + $0xc] sm:$0xf]
      %v152 = vld [vmem:[%s139 + $0x10] sm:$0xf]
      %v153 = vld [vmem:[%s139 + $0x14] sm:$0xf]
      %v154 = vld [vmem:[%s139 + $0x18] sm:$0xf]
      %v155 = vld [vmem:[%s139 + $0x1c] sm:$0xf]
      %v165 = vunpack.c.l.s4 1983009808
      %v166 = vunpack.c.0.s8 %v165
      %v167 = vlaneseq
      %v168 = vshrl.u32 %v167, 7
      %v169 = vsub.s32 %v166, %v168
      %v170 = vrot.slane %v148, %v169
      %v171 = vcombine.high %v170, %v170
      %v173 = vunpack.c.l.s4 1983009808
      %v174 = vunpack.c.0.s8 %v173
      %v175 = vlaneseq
      %v176 = vshrl.u32 %v175, 7
      %v177 = vsub.s32 %v174, %v176
      %v178 = vrot.slane %v149, %v177
      %v179 = vcombine.high %v178, %v178
      %v181 = vunpack.c.l.s4 1983009808
      %v182 = vunpack.c.0.s8 %v181
      %v183 = vlaneseq
      %v184 = vshrl.u32 %v183, 7
      %v185 = vsub.s32 %v182, %v184
      %v186 = vrot.slane %v150, %v185
      %v187 = vcombine.high %v186, %v186
      %v189 = vunpack.c.l.s4 1983009808
      %v190 = vunpack.c.0.s8 %v189
      %v191 = vlaneseq
      %v192 = vshrl.u32 %v191, 7
      %v193 = vsub.s32 %v190, %v192
      %v194 = vrot.slane %v151, %v193
      %v195 = vcombine.high %v194, %v194
      %v197 = vunpack.c.l.s4 1983009808
      %v198 = vunpack.c.0.s8 %v197
      %v199 = vlaneseq
      %v200 = vshrl.u32 %v199, 7
      %v201 = vsub.s32 %v198, %v200
      %v202 = vrot.slane %v152, %v201
      %v203 = vcombine.high %v202, %v202
      %v205 = vunpack.c.l.s4 1983009808
      %v206 = vunpack.c.0.s8 %v205
      %v207 = vlaneseq
      %v208 = vshrl.u32 %v207, 7
      %v209 = vsub.s32 %v206, %v208
      %v210 = vrot.slane %v153, %v209
      %v211 = vcombine.high %v210, %v210
      %v213 = vunpack.c.l.s4 1983009808
      %v214 = vunpack.c.0.s8 %v213
      %v215 = vlaneseq
      %v216 = vshrl.u32 %v215, 7
      %v217 = vsub.s32 %v214, %v216
      %v218 = vrot.slane %v154, %v217
      %v219 = vcombine.high %v218, %v218
      %v221 = vunpack.c.l.s4 1983009808
      %v222 = vunpack.c.0.s8 %v221
      %v223 = vlaneseq
      %v224 = vshrl.u32 %v223, 7
      %v225 = vsub.s32 %v222, %v224
      %v226 = vrot.slane %v155, %v225
      %v227 = vcombine.high %v226, %v226
      %v228 = vld [vmem:[%s1] sm:$0xf]
      %v230 = vunpack.c.l.s4 1983009808
      %v231 = vunpack.c.0.s8 %v230
      %v232 = vlaneseq
      %v233 = vshrl.u32 %v232, 7
      %v234 = vsub.s32 %v231, %v233
      %v235 = vrot.slane %v170, %v234
      %236 = vrot.lane.b32.xlu0 %v235, 96
      %v237 = vpop.permute.xlu0 %236
      %vm238 = vcmask 130048
      %v240 = vsel %vm238, %v170, 0
      %v243 = vsel %vm238, %v237, 0
      %245 = vmatprep.subr.bf16.mxu0 0
      %246 = vmatpush1.bf16.xpose.msra.mxu0 0
      %247 = vmatprep.subr.bf16.mxu0 0
      %248 = vmatpush1.bf16.xpose.msra.mxu0 0
      %249 = vmatprep.subr.bf16.mxu0 0
      %250 = vmatpush1.bf16.xpose.msra.mxu0 0
      %251 = vmatprep.subr.bf16.mxu0 0
      %252 = vmatpush1.bf16.xpose.msra.mxu0 0
      %253 = vmatprep.subr.bf16.mxu0 0
      %254 = vmatpush1.bf16.xpose.msra.mxu0 0
      %255 = vmatprep.subr.bf16.mxu0 0
      %256 = vmatpush1.bf16.xpose.msra.mxu0 0
      %257 = vmatprep.subr.bf16.mxu0 0
      %258 = vmatpush1.bf16.xpose.msra.mxu0 0
      %259 = vmatprep.subr.bf16.mxu0 0
      %260 = vmatpush1.bf16.xpose.msra.mxu0 %v243
      %261 = vmatprep.subr.bf16.mxu0 0
      %262 = vmatpush2.bf16.xpose.msra.mxu0 0
      %263 = vmatprep.subr.bf16.mxu0 0
      %264 = vmatpush2.bf16.xpose.msra.mxu0 0
      %265 = vmatprep.subr.bf16.mxu0 0
      %266 = vmatpush2.bf16.xpose.msra.mxu0 0
      %267 = vmatprep.subr.bf16.mxu0 0
      %268 = vmatpush2.bf16.xpose.msra.mxu0 0
      %269 = vmatprep.subr.bf16.mxu0 0
      %270 = vmatpush2.bf16.xpose.msra.mxu0 0
      %271 = vmatprep.subr.bf16.mxu0 0
      %272 = vmatpush2.bf16.xpose.msra.mxu0 0
      %273 = vmatprep.subr.bf16.mxu0 0
      %274 = vmatpush2.bf16.xpose.msra.mxu0 0
      %275 = vmatprep.subr.bf16.mxu0 0
      %276 = vmatpush2.bf16.xpose.msra.mxu0 0
      %277 = vmatprep.mubr.bf16.mxu0 0
      %278 = vmatmul.mubr.bf16.gmra.mxu0 %v240
      %v279 = vpop.f32.mrf.mxu0
      %v280 = vadd.f32 %v228, %v279
      %v281 = vpop.f32.mrf.mxu0
      %v282 = vpop.f32.mrf.mxu0
      %v283 = vpop.f32.mrf.mxu0
      %284 = vdwg.mxu0
      %v286 = vunpack.c.l.s4 1983009808
      %v287 = vunpack.c.0.s8 %v286
      %v288 = vlaneseq
      %v289 = vshrl.u32 %v288, 7
      %v290 = vsub.s32 %v287, %v289
      %v291 = vrot.slane %v171, %v290
      %292 = vrot.lane.b32.xlu0 %v291, 96
      %v293 = vpop.permute.xlu0 %292
      %v295 = vsel %vm238, %v171, 0
      %v298 = vsel %vm238, %v293, 0
      %300 = vmatprep.subr.bf16.mxu0 0
      %301 = vmatpush1.bf16.xpose.msra.mxu0 0
      %302 = vmatprep.subr.bf16.mxu0 0
      %303 = vmatpush1.bf16.xpose.msra.mxu0 0
      %304 = vmatprep.subr.bf16.mxu0 0
      %305 = vmatpush1.bf16.xpose.msra.mxu0 0
      %306 = vmatprep.subr.bf16.mxu0 0
      %307 = vmatpush1.bf16.xpose.msra.mxu0 0
      %308 = vmatprep.subr.bf16.mxu0 0
      %309 = vmatpush1.bf16.xpose.msra.mxu0 0
      %310 = vmatprep.subr.bf16.mxu0 0
      %311 = vmatpush1.bf16.xpose.msra.mxu0 0
      %312 = vmatprep.subr.bf16.mxu0 0
      %313 = vmatpush1.bf16.xpose.msra.mxu0 0
      %314 = vmatprep.subr.bf16.mxu0 0
      %315 = vmatpush1.bf16.xpose.msra.mxu0 %v298
      %316 = vmatprep.subr.bf16.mxu0 0
      %317 = vmatpush2.bf16.xpose.msra.mxu0 0
      %318 = vmatprep.subr.bf16.mxu0 0
      %319 = vmatpush2.bf16.xpose.msra.mxu0 0
      %320 = vmatprep.subr.bf16.mxu0 0
      %321 = vmatpush2.bf16.xpose.msra.mxu0 0
      %322 = vmatprep.subr.bf16.mxu0 0
      %323 = vmatpush2.bf16.xpose.msra.mxu0 0
      %324 = vmatprep.subr.bf16.mxu0 0
      %325 = vmatpush2.bf16.xpose.msra.mxu0 0
      %326 = vmatprep.subr.bf16.mxu0 0
      %327 = vmatpush2.bf16.xpose.msra.mxu0 0
      %328 = vmatprep.subr.bf16.mxu0 0
      %329 = vmatpush2.bf16.xpose.msra.mxu0 0
      %330 = vmatprep.subr.bf16.mxu0 0
      %331 = vmatpush2.bf16.xpose.msra.mxu0 0
      %332 = vmatprep.mubr.bf16.mxu0 0
      %333 = vmatmul.mubr.bf16.gmra.mxu0 %v295
      %v334 = vpop.f32.mrf.mxu0
      %v335 = vadd.f32 %v228, %v334
      %v336 = vpop.f32.mrf.mxu0
      %v337 = vpop.f32.mrf.mxu0
      %v338 = vpop.f32.mrf.mxu0
      %339 = vdwg.mxu0
      %v341 = vunpack.c.l.s4 1983009808
      %v342 = vunpack.c.0.s8 %v341
      %v343 = vlaneseq
      %v344 = vshrl.u32 %v343, 7
      %v345 = vsub.s32 %v342, %v344
      %v346 = vrot.slane %v178, %v345
      %347 = vrot.lane.b32.xlu0 %v346, 96
      %v348 = vpop.permute.xlu0 %347
      %v350 = vsel %vm238, %v178, 0
      %v353 = vsel %vm238, %v348, 0
      %355 = vmatprep.subr.bf16.mxu0 0
      %356 = vmatpush1.bf16.xpose.msra.mxu0 0
      %357 = vmatprep.subr.bf16.mxu0 0
      %358 = vmatpush1.bf16.xpose.msra.mxu0 0
      %359 = vmatprep.subr.bf16.mxu0 0
      %360 = vmatpush1.bf16.xpose.msra.mxu0 0
      %361 = vmatprep.subr.bf16.mxu0 0
      %362 = vmatpush1.bf16.xpose.msra.mxu0 0
      %363 = vmatprep.subr.bf16.mxu0 0
      %364 = vmatpush1.bf16.xpose.msra.mxu0 0
      %365 = vmatprep.subr.bf16.mxu0 0
      %366 = vmatpush1.bf16.xpose.msra.mxu0 0
      %367 = vmatprep.subr.bf16.mxu0 0
      %368 = vmatpush1.bf16.xpose.msra.mxu0 0
      %369 = vmatprep.subr.bf16.mxu0 0
      %370 = vmatpush1.bf16.xpose.msra.mxu0 %v353
      %371 = vmatprep.subr.bf16.mxu0 0
      %372 = vmatpush2.bf16.xpose.msra.mxu0 0
      %373 = vmatprep.subr.bf16.mxu0 0
      %374 = vmatpush2.bf16.xpose.msra.mxu0 0
      %375 = vmatprep.subr.bf16.mxu0 0
      %376 = vmatpush2.bf16.xpose.msra.mxu0 0
      %377 = vmatprep.subr.bf16.mxu0 0
      %378 = vmatpush2.bf16.xpose.msra.mxu0 0
      %379 = vmatprep.subr.bf16.mxu0 0
      %380 = vmatpush2.bf16.xpose.msra.mxu0 0
      %381 = vmatprep.subr.bf16.mxu0 0
      %382 = vmatpush2.bf16.xpose.msra.mxu0 0
      %383 = vmatprep.subr.bf16.mxu0 0
      %384 = vmatpush2.bf16.xpose.msra.mxu0 0
      %385 = vmatprep.subr.bf16.mxu0 0
      %386 = vmatpush2.bf16.xpose.msra.mxu0 0
      %387 = vmatprep.mubr.bf16.mxu0 0
      %388 = vmatmul.mubr.bf16.gmra.mxu0 %v350
      %v389 = vpop.f32.mrf.mxu0
      %v390 = vadd.f32 %v228, %v389
      %v391 = vpop.f32.mrf.mxu0
      %v392 = vpop.f32.mrf.mxu0
      %v393 = vpop.f32.mrf.mxu0
      %394 = vdwg.mxu0
      %v396 = vunpack.c.l.s4 1983009808
      %v397 = vunpack.c.0.s8 %v396
      %v398 = vlaneseq
      %v399 = vshrl.u32 %v398, 7
      %v400 = vsub.s32 %v397, %v399
      %v401 = vrot.slane %v179, %v400
      %402 = vrot.lane.b32.xlu0 %v401, 96
      %v403 = vpop.permute.xlu0 %402
      %v405 = vsel %vm238, %v179, 0
      %v408 = vsel %vm238, %v403, 0
      %410 = vmatprep.subr.bf16.mxu0 0
      %411 = vmatpush1.bf16.xpose.msra.mxu0 0
      %412 = vmatprep.subr.bf16.mxu0 0
      %413 = vmatpush1.bf16.xpose.msra.mxu0 0
      %414 = vmatprep.subr.bf16.mxu0 0
      %415 = vmatpush1.bf16.xpose.msra.mxu0 0
      %416 = vmatprep.subr.bf16.mxu0 0
      %417 = vmatpush1.bf16.xpose.msra.mxu0 0
      %418 = vmatprep.subr.bf16.mxu0 0
      %419 = vmatpush1.bf16.xpose.msra.mxu0 0
      %420 = vmatprep.subr.bf16.mxu0 0
      %421 = vmatpush1.bf16.xpose.msra.mxu0 0
      %422 = vmatprep.subr.bf16.mxu0 0
      %423 = vmatpush1.bf16.xpose.msra.mxu0 0
      %424 = vmatprep.subr.bf16.mxu0 0
      %425 = vmatpush1.bf16.xpose.msra.mxu0 %v408
      %426 = vmatprep.subr.bf16.mxu0 0
      %427 = vmatpush2.bf16.xpose.msra.mxu0 0
      %428 = vmatprep.subr.bf16.mxu0 0
      %429 = vmatpush2.bf16.xpose.msra.mxu0 0
      %430 = vmatprep.subr.bf16.mxu0 0
      %431 = vmatpush2.bf16.xpose.msra.mxu0 0
      %432 = vmatprep.subr.bf16.mxu0 0
      %433 = vmatpush2.bf16.xpose.msra.mxu0 0
      %434 = vmatprep.subr.bf16.mxu0 0
      %435 = vmatpush2.bf16.xpose.msra.mxu0 0
      %436 = vmatprep.subr.bf16.mxu0 0
      %437 = vmatpush2.bf16.xpose.msra.mxu0 0
      %438 = vmatprep.subr.bf16.mxu0 0
      %439 = vmatpush2.bf16.xpose.msra.mxu0 0
      %440 = vmatprep.subr.bf16.mxu0 0
      %441 = vmatpush2.bf16.xpose.msra.mxu0 0
      %442 = vmatprep.mubr.bf16.mxu0 0
      %443 = vmatmul.mubr.bf16.gmra.mxu0 %v405
      %v444 = vpop.f32.mrf.mxu0
      %v445 = vadd.f32 %v228, %v444
      %v446 = vpop.f32.mrf.mxu0
      %v447 = vpop.f32.mrf.mxu0
      %v448 = vpop.f32.mrf.mxu0
      %449 = vdwg.mxu0
      %v451 = vunpack.c.l.s4 1983009808
      %v452 = vunpack.c.0.s8 %v451
      %v453 = vlaneseq
      %v454 = vshrl.u32 %v453, 7
      %v455 = vsub.s32 %v452, %v454
      %v456 = vrot.slane %v186, %v455
      %457 = vrot.lane.b32.xlu0 %v456, 96
      %v458 = vpop.permute.xlu0 %457
      %v460 = vsel %vm238, %v186, 0
      %v463 = vsel %vm238, %v458, 0
      %465 = vmatprep.subr.bf16.mxu0 0
      %466 = vmatpush1.bf16.xpose.msra.mxu0 0
      %467 = vmatprep.subr.bf16.mxu0 0
      %468 = vmatpush1.bf16.xpose.msra.mxu0 0
      %469 = vmatprep.subr.bf16.mxu0 0
      %470 = vmatpush1.bf16.xpose.msra.mxu0 0
      %471 = vmatprep.subr.bf16.mxu0 0
      %472 = vmatpush1.bf16.xpose.msra.mxu0 0
      %473 = vmatprep.subr.bf16.mxu0 0
      %474 = vmatpush1.bf16.xpose.msra.mxu0 0
      %475 = vmatprep.subr.bf16.mxu0 0
      %476 = vmatpush1.bf16.xpose.msra.mxu0 0
      %477 = vmatprep.subr.bf16.mxu0 0
      %478 = vmatpush1.bf16.xpose.msra.mxu0 0
      %479 = vmatprep.subr.bf16.mxu0 0
      %480 = vmatpush1.bf16.xpose.msra.mxu0 %v463
      %481 = vmatprep.subr.bf16.mxu0 0
      %482 = vmatpush2.bf16.xpose.msra.mxu0 0
      %483 = vmatprep.subr.bf16.mxu0 0
      %484 = vmatpush2.bf16.xpose.msra.mxu0 0
      %485 = vmatprep.subr.bf16.mxu0 0
      %486 = vmatpush2.bf16.xpose.msra.mxu0 0
      %487 = vmatprep.subr.bf16.mxu0 0
      %488 = vmatpush2.bf16.xpose.msra.mxu0 0
      %489 = vmatprep.subr.bf16.mxu0 0
      %490 = vmatpush2.bf16.xpose.msra.mxu0 0
      %491 = vmatprep.subr.bf16.mxu0 0
      %492 = vmatpush2.bf16.xpose.msra.mxu0 0
      %493 = vmatprep.subr.bf16.mxu0 0
      %494 = vmatpush2.bf16.xpose.msra.mxu0 0
      %495 = vmatprep.subr.bf16.mxu0 0
      %496 = vmatpush2.bf16.xpose.msra.mxu0 0
      %497 = vmatprep.mubr.bf16.mxu0 0
      %498 = vmatmul.mubr.bf16.gmra.mxu0 %v460
      %v499 = vpop.f32.mrf.mxu0
      %v500 = vadd.f32 %v228, %v499
      %v501 = vpop.f32.mrf.mxu0
      %v502 = vpop.f32.mrf.mxu0
      %v503 = vpop.f32.mrf.mxu0
      %504 = vdwg.mxu0
      %v506 = vunpack.c.l.s4 1983009808
      %v507 = vunpack.c.0.s8 %v506
      %v508 = vlaneseq
      %v509 = vshrl.u32 %v508, 7
      %v510 = vsub.s32 %v507, %v509
      %v511 = vrot.slane %v187, %v510
      %512 = vrot.lane.b32.xlu0 %v511, 96
      %v513 = vpop.permute.xlu0 %512
      %v515 = vsel %vm238, %v187, 0
      %v518 = vsel %vm238, %v513, 0
      %520 = vmatprep.subr.bf16.mxu0 0
      %521 = vmatpush1.bf16.xpose.msra.mxu0 0
      %522 = vmatprep.subr.bf16.mxu0 0
      %523 = vmatpush1.bf16.xpose.msra.mxu0 0
      %524 = vmatprep.subr.bf16.mxu0 0
      %525 = vmatpush1.bf16.xpose.msra.mxu0 0
      %526 = vmatprep.subr.bf16.mxu0 0
      %527 = vmatpush1.bf16.xpose.msra.mxu0 0
      %528 = vmatprep.subr.bf16.mxu0 0
      %529 = vmatpush1.bf16.xpose.msra.mxu0 0
      %530 = vmatprep.subr.bf16.mxu0 0
      %531 = vmatpush1.bf16.xpose.msra.mxu0 0
      %532 = vmatprep.subr.bf16.mxu0 0
      %533 = vmatpush1.bf16.xpose.msra.mxu0 0
      %534 = vmatprep.subr.bf16.mxu0 0
      %535 = vmatpush1.bf16.xpose.msra.mxu0 %v518
      %536 = vmatprep.subr.bf16.mxu0 0
      %537 = vmatpush2.bf16.xpose.msra.mxu0 0
      %538 = vmatprep.subr.bf16.mxu0 0
      %539 = vmatpush2.bf16.xpose.msra.mxu0 0
      %540 = vmatprep.subr.bf16.mxu0 0
      %541 = vmatpush2.bf16.xpose.msra.mxu0 0
      %542 = vmatprep.subr.bf16.mxu0 0
      %543 = vmatpush2.bf16.xpose.msra.mxu0 0
      %544 = vmatprep.subr.bf16.mxu0 0
      %545 = vmatpush2.bf16.xpose.msra.mxu0 0
      %546 = vmatprep.subr.bf16.mxu0 0
      %547 = vmatpush2.bf16.xpose.msra.mxu0 0
      %548 = vmatprep.subr.bf16.mxu0 0
      %549 = vmatpush2.bf16.xpose.msra.mxu0 0
      %550 = vmatprep.subr.bf16.mxu0 0
      %551 = vmatpush2.bf16.xpose.msra.mxu0 0
      %552 = vmatprep.mubr.bf16.mxu0 0
      %553 = vmatmul.mubr.bf16.gmra.mxu0 %v515
      %v554 = vpop.f32.mrf.mxu0
      %v555 = vadd.f32 %v228, %v554
      %v556 = vpop.f32.mrf.mxu0
      %v557 = vpop.f32.mrf.mxu0
      %v558 = vpop.f32.mrf.mxu0
      %559 = vdwg.mxu0
      %v561 = vunpack.c.l.s4 1983009808
      %v562 = vunpack.c.0.s8 %v561
      %v563 = vlaneseq
      %v564 = vshrl.u32 %v563, 7
      %v565 = vsub.s32 %v562, %v564
      %v566 = vrot.slane %v194, %v565
      %567 = vrot.lane.b32.xlu0 %v566, 96
      %v568 = vpop.permute.xlu0 %567
      %v570 = vsel %vm238, %v194, 0
      %v573 = vsel %vm238, %v568, 0
      %575 = vmatprep.subr.bf16.mxu0 0
      %576 = vmatpush1.bf16.xpose.msra.mxu0 0
      %577 = vmatprep.subr.bf16.mxu0 0
      %578 = vmatpush1.bf16.xpose.msra.mxu0 0
      %579 = vmatprep.subr.bf16.mxu0 0
      %580 = vmatpush1.bf16.xpose.msra.mxu0 0
      %581 = vmatprep.subr.bf16.mxu0 0
      %582 = vmatpush1.bf16.xpose.msra.mxu0 0
      %583 = vmatprep.subr.bf16.mxu0 0
      %584 = vmatpush1.bf16.xpose.msra.mxu0 0
      %585 = vmatprep.subr.bf16.mxu0 0
      %586 = vmatpush1.bf16.xpose.msra.mxu0 0
      %587 = vmatprep.subr.bf16.mxu0 0
      %588 = vmatpush1.bf16.xpose.msra.mxu0 0
      %589 = vmatprep.subr.bf16.mxu0 0
      %590 = vmatpush1.bf16.xpose.msra.mxu0 %v573
      %591 = vmatprep.subr.bf16.mxu0 0
      %592 = vmatpush2.bf16.xpose.msra.mxu0 0
      %593 = vmatprep.subr.bf16.mxu0 0
      %594 = vmatpush2.bf16.xpose.msra.mxu0 0
      %595 = vmatprep.subr.bf16.mxu0 0
      %596 = vmatpush2.bf16.xpose.msra.mxu0 0
      %597 = vmatprep.subr.bf16.mxu0 0
      %598 = vmatpush2.bf16.xpose.msra.mxu0 0
      %599 = vmatprep.subr.bf16.mxu0 0
      %600 = vmatpush2.bf16.xpose.msra.mxu0 0
      %601 = vmatprep.subr.bf16.mxu0 0
      %602 = vmatpush2.bf16.xpose.msra.mxu0 0
      %603 = vmatprep.subr.bf16.mxu0 0
      %604 = vmatpush2.bf16.xpose.msra.mxu0 0
      %605 = vmatprep.subr.bf16.mxu0 0
      %606 = vmatpush2.bf16.xpose.msra.mxu0 0
      %607 = vmatprep.mubr.bf16.mxu0 0
      %608 = vmatmul.mubr.bf16.gmra.mxu0 %v570
      %v609 = vpop.f32.mrf.mxu0
      %v610 = vadd.f32 %v228, %v609
      %v611 = vpop.f32.mrf.mxu0
      %v612 = vpop.f32.mrf.mxu0
      %v613 = vpop.f32.mrf.mxu0
      %614 = vdwg.mxu0
      %v616 = vunpack.c.l.s4 1983009808
      %v617 = vunpack.c.0.s8 %v616
      %v618 = vlaneseq
      %v619 = vshrl.u32 %v618, 7
      %v620 = vsub.s32 %v617, %v619
      %v621 = vrot.slane %v195, %v620
      %622 = vrot.lane.b32.xlu0 %v621, 96
      %v623 = vpop.permute.xlu0 %622
      %v625 = vsel %vm238, %v195, 0
      %v628 = vsel %vm238, %v623, 0
      %630 = vmatprep.subr.bf16.mxu0 0
      %631 = vmatpush1.bf16.xpose.msra.mxu0 0
      %632 = vmatprep.subr.bf16.mxu0 0
      %633 = vmatpush1.bf16.xpose.msra.mxu0 0
      %634 = vmatprep.subr.bf16.mxu0 0
      %635 = vmatpush1.bf16.xpose.msra.mxu0 0
      %636 = vmatprep.subr.bf16.mxu0 0
      %637 = vmatpush1.bf16.xpose.msra.mxu0 0
      %638 = vmatprep.subr.bf16.mxu0 0
      %639 = vmatpush1.bf16.xpose.msra.mxu0 0
      %640 = vmatprep.subr.bf16.mxu0 0
      %641 = vmatpush1.bf16.xpose.msra.mxu0 0
      %642 = vmatprep.subr.bf16.mxu0 0
      %643 = vmatpush1.bf16.xpose.msra.mxu0 0
      %644 = vmatprep.subr.bf16.mxu0 0
      %645 = vmatpush1.bf16.xpose.msra.mxu0 %v628
      %646 = vmatprep.subr.bf16.mxu0 0
      %647 = vmatpush2.bf16.xpose.msra.mxu0 0
      %648 = vmatprep.subr.bf16.mxu0 0
      %649 = vmatpush2.bf16.xpose.msra.mxu0 0
      %650 = vmatprep.subr.bf16.mxu0 0
      %651 = vmatpush2.bf16.xpose.msra.mxu0 0
      %652 = vmatprep.subr.bf16.mxu0 0
      %653 = vmatpush2.bf16.xpose.msra.mxu0 0
      %654 = vmatprep.subr.bf16.mxu0 0
      %655 = vmatpush2.bf16.xpose.msra.mxu0 0
      %656 = vmatprep.subr.bf16.mxu0 0
      %657 = vmatpush2.bf16.xpose.msra.mxu0 0
      %658 = vmatprep.subr.bf16.mxu0 0
      %659 = vmatpush2.bf16.xpose.msra.mxu0 0
      %660 = vmatprep.subr.bf16.mxu0 0
      %661 = vmatpush2.bf16.xpose.msra.mxu0 0
      %662 = vmatprep.mubr.bf16.mxu0 0
      %663 = vmatmul.mubr.bf16.gmra.mxu0 %v625
      %v664 = vpop.f32.mrf.mxu0
      %v665 = vadd.f32 %v228, %v664
      %v666 = vpop.f32.mrf.mxu0
      %v667 = vpop.f32.mrf.mxu0
      %v668 = vpop.f32.mrf.mxu0
      %669 = vdwg.mxu0
      %v671 = vunpack.c.l.s4 1983009808
      %v672 = vunpack.c.0.s8 %v671
      %v673 = vlaneseq
      %v674 = vshrl.u32 %v673, 7
      %v675 = vsub.s32 %v672, %v674
      %v676 = vrot.slane %v202, %v675
      %677 = vrot.lane.b32.xlu0 %v676, 96
      %v678 = vpop.permute.xlu0 %677
      %v680 = vsel %vm238, %v202, 0
      %v683 = vsel %vm238, %v678, 0
      %685 = vmatprep.subr.bf16.mxu0 0
      %686 = vmatpush1.bf16.xpose.msra.mxu0 0
      %687 = vmatprep.subr.bf16.mxu0 0
      %688 = vmatpush1.bf16.xpose.msra.mxu0 0
      %689 = vmatprep.subr.bf16.mxu0 0
      %690 = vmatpush1.bf16.xpose.msra.mxu0 0
      %691 = vmatprep.subr.bf16.mxu0 0
      %692 = vmatpush1.bf16.xpose.msra.mxu0 0
      %693 = vmatprep.subr.bf16.mxu0 0
      %694 = vmatpush1.bf16.xpose.msra.mxu0 0
      %695 = vmatprep.subr.bf16.mxu0 0
      %696 = vmatpush1.bf16.xpose.msra.mxu0 0
      %697 = vmatprep.subr.bf16.mxu0 0
      %698 = vmatpush1.bf16.xpose.msra.mxu0 0
      %699 = vmatprep.subr.bf16.mxu0 0
      %700 = vmatpush1.bf16.xpose.msra.mxu0 %v683
      %701 = vmatprep.subr.bf16.mxu0 0
      %702 = vmatpush2.bf16.xpose.msra.mxu0 0
      %703 = vmatprep.subr.bf16.mxu0 0
      %704 = vmatpush2.bf16.xpose.msra.mxu0 0
      %705 = vmatprep.subr.bf16.mxu0 0
      %706 = vmatpush2.bf16.xpose.msra.mxu0 0
      %707 = vmatprep.subr.bf16.mxu0 0
      %708 = vmatpush2.bf16.xpose.msra.mxu0 0
      %709 = vmatprep.subr.bf16.mxu0 0
      %710 = vmatpush2.bf16.xpose.msra.mxu0 0
      %711 = vmatprep.subr.bf16.mxu0 0
      %712 = vmatpush2.bf16.xpose.msra.mxu0 0
      %713 = vmatprep.subr.bf16.mxu0 0
      %714 = vmatpush2.bf16.xpose.msra.mxu0 0
      %715 = vmatprep.subr.bf16.mxu0 0
      %716 = vmatpush2.bf16.xpose.msra.mxu0 0
      %717 = vmatprep.mubr.bf16.mxu0 0
      %718 = vmatmul.mubr.bf16.gmra.mxu0 %v680
      %v719 = vpop.f32.mrf.mxu0
      %v720 = vadd.f32 %v228, %v719
      %v721 = vpop.f32.mrf.mxu0
      %v722 = vpop.f32.mrf.mxu0
      %v723 = vpop.f32.mrf.mxu0
      %724 = vdwg.mxu0
      %v726 = vunpack.c.l.s4 1983009808
      %v727 = vunpack.c.0.s8 %v726
      %v728 = vlaneseq
      %v729 = vshrl.u32 %v728, 7
      %v730 = vsub.s32 %v727, %v729
      %v731 = vrot.slane %v203, %v730
      %732 = vrot.lane.b32.xlu0 %v731, 96
      %v733 = vpop.permute.xlu0 %732
      %v735 = vsel %vm238, %v203, 0
      %v738 = vsel %vm238, %v733, 0
      %740 = vmatprep.subr.bf16.mxu0 0
      %741 = vmatpush1.bf16.xpose.msra.mxu0 0
      %742 = vmatprep.subr.bf16.mxu0 0
      %743 = vmatpush1.bf16.xpose.msra.mxu0 0
      %744 = vmatprep.subr.bf16.mxu0 0
      %745 = vmatpush1.bf16.xpose.msra.mxu0 0
      %746 = vmatprep.subr.bf16.mxu0 0
      %747 = vmatpush1.bf16.xpose.msra.mxu0 0
      %748 = vmatprep.subr.bf16.mxu0 0
      %749 = vmatpush1.bf16.xpose.msra.mxu0 0
      %750 = vmatprep.subr.bf16.mxu0 0
      %751 = vmatpush1.bf16.xpose.msra.mxu0 0
      %752 = vmatprep.subr.bf16.mxu0 0
      %753 = vmatpush1.bf16.xpose.msra.mxu0 0
      %754 = vmatprep.subr.bf16.mxu0 0
      %755 = vmatpush1.bf16.xpose.msra.mxu0 %v738
      %756 = vmatprep.subr.bf16.mxu0 0
      %757 = vmatpush2.bf16.xpose.msra.mxu0 0
      %758 = vmatprep.subr.bf16.mxu0 0
      %759 = vmatpush2.bf16.xpose.msra.mxu0 0
      %760 = vmatprep.subr.bf16.mxu0 0
      %761 = vmatpush2.bf16.xpose.msra.mxu0 0
      %762 = vmatprep.subr.bf16.mxu0 0
      %763 = vmatpush2.bf16.xpose.msra.mxu0 0
      %764 = vmatprep.subr.bf16.mxu0 0
      %765 = vmatpush2.bf16.xpose.msra.mxu0 0
      %766 = vmatprep.subr.bf16.mxu0 0
      %767 = vmatpush2.bf16.xpose.msra.mxu0 0
      %768 = vmatprep.subr.bf16.mxu0 0
      %769 = vmatpush2.bf16.xpose.msra.mxu0 0
      %770 = vmatprep.subr.bf16.mxu0 0
      %771 = vmatpush2.bf16.xpose.msra.mxu0 0
      %772 = vmatprep.mubr.bf16.mxu0 0
      %773 = vmatmul.mubr.bf16.gmra.mxu0 %v735
      %v774 = vpop.f32.mrf.mxu0
      %v775 = vadd.f32 %v228, %v774
      %v776 = vpop.f32.mrf.mxu0
      %v777 = vpop.f32.mrf.mxu0
      %v778 = vpop.f32.mrf.mxu0
      %779 = vdwg.mxu0
      %v781 = vunpack.c.l.s4 1983009808
      %v782 = vunpack.c.0.s8 %v781
      %v783 = vlaneseq
      %v784 = vshrl.u32 %v783, 7
      %v785 = vsub.s32 %v782, %v784
      %v786 = vrot.slane %v210, %v785
      %787 = vrot.lane.b32.xlu0 %v786, 96
      %v788 = vpop.permute.xlu0 %787
      %v790 = vsel %vm238, %v210, 0
      %v793 = vsel %vm238, %v788, 0
      %795 = vmatprep.subr.bf16.mxu0 0
      %796 = vmatpush1.bf16.xpose.msra.mxu0 0
      %797 = vmatprep.subr.bf16.mxu0 0
      %798 = vmatpush1.bf16.xpose.msra.mxu0 0
      %799 = vmatprep.subr.bf16.mxu0 0
      %800 = vmatpush1.bf16.xpose.msra.mxu0 0
      %801 = vmatprep.subr.bf16.mxu0 0
      %802 = vmatpush1.bf16.xpose.msra.mxu0 0
      %803 = vmatprep.subr.bf16.mxu0 0
      %804 = vmatpush1.bf16.xpose.msra.mxu0 0
      %805 = vmatprep.subr.bf16.mxu0 0
      %806 = vmatpush1.bf16.xpose.msra.mxu0 0
      %807 = vmatprep.subr.bf16.mxu0 0
      %808 = vmatpush1.bf16.xpose.msra.mxu0 0
      %809 = vmatprep.subr.bf16.mxu0 0
      %810 = vmatpush1.bf16.xpose.msra.mxu0 %v793
      %811 = vmatprep.subr.bf16.mxu0 0
      %812 = vmatpush2.bf16.xpose.msra.mxu0 0
      %813 = vmatprep.subr.bf16.mxu0 0
      %814 = vmatpush2.bf16.xpose.msra.mxu0 0
      %815 = vmatprep.subr.bf16.mxu0 0
      %816 = vmatpush2.bf16.xpose.msra.mxu0 0
      %817 = vmatprep.subr.bf16.mxu0 0
      %818 = vmatpush2.bf16.xpose.msra.mxu0 0
      %819 = vmatprep.subr.bf16.mxu0 0
      %820 = vmatpush2.bf16.xpose.msra.mxu0 0
      %821 = vmatprep.subr.bf16.mxu0 0
      %822 = vmatpush2.bf16.xpose.msra.mxu0 0
      %823 = vmatprep.subr.bf16.mxu0 0
      %824 = vmatpush2.bf16.xpose.msra.mxu0 0
      %825 = vmatprep.subr.bf16.mxu0 0
      %826 = vmatpush2.bf16.xpose.msra.mxu0 0
      %827 = vmatprep.mubr.bf16.mxu0 0
      %828 = vmatmul.mubr.bf16.gmra.mxu0 %v790
      %v829 = vpop.f32.mrf.mxu0
      %v830 = vadd.f32 %v228, %v829
      %v831 = vpop.f32.mrf.mxu0
      %v832 = vpop.f32.mrf.mxu0
      %v833 = vpop.f32.mrf.mxu0
      %834 = vdwg.mxu0
      %v836 = vunpack.c.l.s4 1983009808
      %v837 = vunpack.c.0.s8 %v836
      %v838 = vlaneseq
      %v839 = vshrl.u32 %v838, 7
      %v840 = vsub.s32 %v837, %v839
      %v841 = vrot.slane %v211, %v840
      %842 = vrot.lane.b32.xlu0 %v841, 96
      %v843 = vpop.permute.xlu0 %842
      %v845 = vsel %vm238, %v211, 0
      %v848 = vsel %vm238, %v843, 0
      %850 = vmatprep.subr.bf16.mxu0 0
      %851 = vmatpush1.bf16.xpose.msra.mxu0 0
      %852 = vmatprep.subr.bf16.mxu0 0
      %853 = vmatpush1.bf16.xpose.msra.mxu0 0
      %854 = vmatprep.subr.bf16.mxu0 0
      %855 = vmatpush1.bf16.xpose.msra.mxu0 0
      %856 = vmatprep.subr.bf16.mxu0 0
      %857 = vmatpush1.bf16.xpose.msra.mxu0 0
      %858 = vmatprep.subr.bf16.mxu0 0
      %859 = vmatpush1.bf16.xpose.msra.mxu0 0
      %860 = vmatprep.subr.bf16.mxu0 0
      %861 = vmatpush1.bf16.xpose.msra.mxu0 0
      %862 = vmatprep.subr.bf16.mxu0 0
      %863 = vmatpush1.bf16.xpose.msra.mxu0 0
      %864 = vmatprep.subr.bf16.mxu0 0
      %865 = vmatpush1.bf16.xpose.msra.mxu0 %v848
      %866 = vmatprep.subr.bf16.mxu0 0
      %867 = vmatpush2.bf16.xpose.msra.mxu0 0
      %868 = vmatprep.subr.bf16.mxu0 0
      %869 = vmatpush2.bf16.xpose.msra.mxu0 0
      %870 = vmatprep.subr.bf16.mxu0 0
      %871 = vmatpush2.bf16.xpose.msra.mxu0 0
      %872 = vmatprep.subr.bf16.mxu0 0
      %873 = vmatpush2.bf16.xpose.msra.mxu0 0
      %874 = vmatprep.subr.bf16.mxu0 0
      %875 = vmatpush2.bf16.xpose.msra.mxu0 0
      %876 = vmatprep.subr.bf16.mxu0 0
      %877 = vmatpush2.bf16.xpose.msra.mxu0 0
      %878 = vmatprep.subr.bf16.mxu0 0
      %879 = vmatpush2.bf16.xpose.msra.mxu0 0
      %880 = vmatprep.subr.bf16.mxu0 0
      %881 = vmatpush2.bf16.xpose.msra.mxu0 0
      %882 = vmatprep.mubr.bf16.mxu0 0
      %883 = vmatmul.mubr.bf16.gmra.mxu0 %v845
      %v884 = vpop.f32.mrf.mxu0
      %v885 = vadd.f32 %v228, %v884
      %v886 = vpop.f32.mrf.mxu0
      %v887 = vpop.f32.mrf.mxu0
      %v888 = vpop.f32.mrf.mxu0
      %889 = vdwg.mxu0
      %v891 = vunpack.c.l.s4 1983009808
      %v892 = vunpack.c.0.s8 %v891
      %v893 = vlaneseq
      %v894 = vshrl.u32 %v893, 7
      %v895 = vsub.s32 %v892, %v894
      %v896 = vrot.slane %v218, %v895
      %897 = vrot.lane.b32.xlu0 %v896, 96
      %v898 = vpop.permute.xlu0 %897
      %v900 = vsel %vm238, %v218, 0
      %v903 = vsel %vm238, %v898, 0
      %905 = vmatprep.subr.bf16.mxu0 0
      %906 = vmatpush1.bf16.xpose.msra.mxu0 0
      %907 = vmatprep.subr.bf16.mxu0 0
      %908 = vmatpush1.bf16.xpose.msra.mxu0 0
      %909 = vmatprep.subr.bf16.mxu0 0
      %910 = vmatpush1.bf16.xpose.msra.mxu0 0
      %911 = vmatprep.subr.bf16.mxu0 0
      %912 = vmatpush1.bf16.xpose.msra.mxu0 0
      %913 = vmatprep.subr.bf16.mxu0 0
      %914 = vmatpush1.bf16.xpose.msra.mxu0 0
      %915 = vmatprep.subr.bf16.mxu0 0
      %916 = vmatpush1.bf16.xpose.msra.mxu0 0
      %917 = vmatprep.subr.bf16.mxu0 0
      %918 = vmatpush1.bf16.xpose.msra.mxu0 0
      %919 = vmatprep.subr.bf16.mxu0 0
      %920 = vmatpush1.bf16.xpose.msra.mxu0 %v903
      %921 = vmatprep.subr.bf16.mxu0 0
      %922 = vmatpush2.bf16.xpose.msra.mxu0 0
      %923 = vmatprep.subr.bf16.mxu0 0
      %924 = vmatpush2.bf16.xpose.msra.mxu0 0
      %925 = vmatprep.subr.bf16.mxu0 0
      %926 = vmatpush2.bf16.xpose.msra.mxu0 0
      %927 = vmatprep.subr.bf16.mxu0 0
      %928 = vmatpush2.bf16.xpose.msra.mxu0 0
      %929 = vmatprep.subr.bf16.mxu0 0
      %930 = vmatpush2.bf16.xpose.msra.mxu0 0
      %931 = vmatprep.subr.bf16.mxu0 0
      %932 = vmatpush2.bf16.xpose.msra.mxu0 0
      %933 = vmatprep.subr.bf16.mxu0 0
      %934 = vmatpush2.bf16.xpose.msra.mxu0 0
      %935 = vmatprep.subr.bf16.mxu0 0
      %936 = vmatpush2.bf16.xpose.msra.mxu0 0
      %937 = vmatprep.mubr.bf16.mxu0 0
      %938 = vmatmul.mubr.bf16.gmra.mxu0 %v900
      %v939 = vpop.f32.mrf.mxu0
      %v940 = vadd.f32 %v228, %v939
      %v941 = vpop.f32.mrf.mxu0
      %v942 = vpop.f32.mrf.mxu0
      %v943 = vpop.f32.mrf.mxu0
      %944 = vdwg.mxu0
      %v946 = vunpack.c.l.s4 1983009808
      %v947 = vunpack.c.0.s8 %v946
      %v948 = vlaneseq
      %v949 = vshrl.u32 %v948, 7
      %v950 = vsub.s32 %v947, %v949
      %v951 = vrot.slane %v219, %v950
      %952 = vrot.lane.b32.xlu0 %v951, 96
      %v953 = vpop.permute.xlu0 %952
      %v955 = vsel %vm238, %v219, 0
      %v958 = vsel %vm238, %v953, 0
      %960 = vmatprep.subr.bf16.mxu0 0
      %961 = vmatpush1.bf16.xpose.msra.mxu0 0
      %962 = vmatprep.subr.bf16.mxu0 0
      %963 = vmatpush1.bf16.xpose.msra.mxu0 0
      %964 = vmatprep.subr.bf16.mxu0 0
      %965 = vmatpush1.bf16.xpose.msra.mxu0 0
      %966 = vmatprep.subr.bf16.mxu0 0
      %967 = vmatpush1.bf16.xpose.msra.mxu0 0
      %968 = vmatprep.subr.bf16.mxu0 0
      %969 = vmatpush1.bf16.xpose.msra.mxu0 0
      %970 = vmatprep.subr.bf16.mxu0 0
      %971 = vmatpush1.bf16.xpose.msra.mxu0 0
      %972 = vmatprep.subr.bf16.mxu0 0
      %973 = vmatpush1.bf16.xpose.msra.mxu0 0
      %974 = vmatprep.subr.bf16.mxu0 0
      %975 = vmatpush1.bf16.xpose.msra.mxu0 %v958
      %976 = vmatprep.subr.bf16.mxu0 0
      %977 = vmatpush2.bf16.xpose.msra.mxu0 0
      %978 = vmatprep.subr.bf16.mxu0 0
      %979 = vmatpush2.bf16.xpose.msra.mxu0 0
      %980 = vmatprep.subr.bf16.mxu0 0
      %981 = vmatpush2.bf16.xpose.msra.mxu0 0
      %982 = vmatprep.subr.bf16.mxu0 0
      %983 = vmatpush2.bf16.xpose.msra.mxu0 0
      %984 = vmatprep.subr.bf16.mxu0 0
      %985 = vmatpush2.bf16.xpose.msra.mxu0 0
      %986 = vmatprep.subr.bf16.mxu0 0
      %987 = vmatpush2.bf16.xpose.msra.mxu0 0
      %988 = vmatprep.subr.bf16.mxu0 0
      %989 = vmatpush2.bf16.xpose.msra.mxu0 0
      %990 = vmatprep.subr.bf16.mxu0 0
      %991 = vmatpush2.bf16.xpose.msra.mxu0 0
      %992 = vmatprep.mubr.bf16.mxu0 0
      %993 = vmatmul.mubr.bf16.gmra.mxu0 %v955
      %v994 = vpop.f32.mrf.mxu0
      %v995 = vadd.f32 %v228, %v994
      %v996 = vpop.f32.mrf.mxu0
      %v997 = vpop.f32.mrf.mxu0
      %v998 = vpop.f32.mrf.mxu0
      %999 = vdwg.mxu0
      %v1001 = vunpack.c.l.s4 1983009808
      %v1002 = vunpack.c.0.s8 %v1001
      %v1003 = vlaneseq
      %v1004 = vshrl.u32 %v1003, 7
      %v1005 = vsub.s32 %v1002, %v1004
      %v1006 = vrot.slane %v226, %v1005
      %1007 = vrot.lane.b32.xlu0 %v1006, 96
      %v1008 = vpop.permute.xlu0 %1007
      %v1010 = vsel %vm238, %v226, 0
      %v1013 = vsel %vm238, %v1008, 0
      %1015 = vmatprep.subr.bf16.mxu0 0
      %1016 = vmatpush1.bf16.xpose.msra.mxu0 0
      %1017 = vmatprep.subr.bf16.mxu0 0
      %1018 = vmatpush1.bf16.xpose.msra.mxu0 0
      %1019 = vmatprep.subr.bf16.mxu0 0
      %1020 = vmatpush1.bf16.xpose.msra.mxu0 0
      %1021 = vmatprep.subr.bf16.mxu0 0
      %1022 = vmatpush1.bf16.xpose.msra.mxu0 0
      %1023 = vmatprep.subr.bf16.mxu0 0
      %1024 = vmatpush1.bf16.xpose.msra.mxu0 0
      %1025 = vmatprep.subr.bf16.mxu0 0
      %1026 = vmatpush1.bf16.xpose.msra.mxu0 0
      %1027 = vmatprep.subr.bf16.mxu0 0
      %1028 = vmatpush1.bf16.xpose.msra.mxu0 0
      %1029 = vmatprep.subr.bf16.mxu0 0
      %1030 = vmatpush1.bf16.xpose.msra.mxu0 %v1013
      %1031 = vmatprep.subr.bf16.mxu0 0
      %1032 = vmatpush2.bf16.xpose.msra.mxu0 0
      %1033 = vmatprep.subr.bf16.mxu0 0
      %1034 = vmatpush2.bf16.xpose.msra.mxu0 0
      %1035 = vmatprep.subr.bf16.mxu0 0
      %1036 = vmatpush2.bf16.xpose.msra.mxu0 0
      %1037 = vmatprep.subr.bf16.mxu0 0
      %1038 = vmatpush2.bf16.xpose.msra.mxu0 0
      %1039 = vmatprep.subr.bf16.mxu0 0
      %1040 = vmatpush2.bf16.xpose.msra.mxu0 0
      %1041 = vmatprep.subr.bf16.mxu0 0
      %1042 = vmatpush2.bf16.xpose.msra.mxu0 0
      %1043 = vmatprep.subr.bf16.mxu0 0
      %1044 = vmatpush2.bf16.xpose.msra.mxu0 0
      %1045 = vmatprep.subr.bf16.mxu0 0
      %1046 = vmatpush2.bf16.xpose.msra.mxu0 0
      %1047 = vmatprep.mubr.bf16.mxu0 0
      %1048 = vmatmul.mubr.bf16.gmra.mxu0 %v1010
      %v1049 = vpop.f32.mrf.mxu0
      %v1050 = vadd.f32 %v228, %v1049
      %v1051 = vpop.f32.mrf.mxu0
      %v1052 = vpop.f32.mrf.mxu0
      %v1053 = vpop.f32.mrf.mxu0
      %1054 = vdwg.mxu0
      %v1056 = vunpack.c.l.s4 1983009808
      %v1057 = vunpack.c.0.s8 %v1056
      %v1058 = vlaneseq
      %v1059 = vshrl.u32 %v1058, 7
      %v1060 = vsub.s32 %v1057, %v1059
      %v1061 = vrot.slane %v227, %v1060
      %1062 = vrot.lane.b32.xlu0 %v1061, 96
      %v1063 = vpop.permute.xlu0 %1062
      %v1065 = vsel %vm238, %v227, 0
      %v1068 = vsel %vm238, %v1063, 0
      %1070 = vmatprep.subr.bf16.mxu0 0
      %1071 = vmatpush1.bf16.xpose.msra.mxu0 0
      %1072 = vmatprep.subr.bf16.mxu0 0
      %1073 = vmatpush1.bf16.xpose.msra.mxu0 0
      %1074 = vmatprep.subr.bf16.mxu0 0
      %1075 = vmatpush1.bf16.xpose.msra.mxu0 0
      %1076 = vmatprep.subr.bf16.mxu0 0
      %1077 = vmatpush1.bf16.xpose.msra.mxu0 0
      %1078 = vmatprep.subr.bf16.mxu0 0
      %1079 = vmatpush1.bf16.xpose.msra.mxu0 0
      %1080 = vmatprep.subr.bf16.mxu0 0
      %1081 = vmatpush1.bf16.xpose.msra.mxu0 0
      %1082 = vmatprep.subr.bf16.mxu0 0
      %1083 = vmatpush1.bf16.xpose.msra.mxu0 0
      %1084 = vmatprep.subr.bf16.mxu0 0
      %1085 = vmatpush1.bf16.xpose.msra.mxu0 %v1068
      %1086 = vmatprep.subr.bf16.mxu0 0
      %1087 = vmatpush2.bf16.xpose.msra.mxu0 0
      %1088 = vmatprep.subr.bf16.mxu0 0
      %1089 = vmatpush2.bf16.xpose.msra.mxu0 0
      %1090 = vmatprep.subr.bf16.mxu0 0
      %1091 = vmatpush2.bf16.xpose.msra.mxu0 0
      %1092 = vmatprep.subr.bf16.mxu0 0
      %1093 = vmatpush2.bf16.xpose.msra.mxu0 0
      %1094 = vmatprep.subr.bf16.mxu0 0
      %1095 = vmatpush2.bf16.xpose.msra.mxu0 0
      %1096 = vmatprep.subr.bf16.mxu0 0
      %1097 = vmatpush2.bf16.xpose.msra.mxu0 0
      %1098 = vmatprep.subr.bf16.mxu0 0
      %1099 = vmatpush2.bf16.xpose.msra.mxu0 0
      %1100 = vmatprep.subr.bf16.mxu0 0
      %1101 = vmatpush2.bf16.xpose.msra.mxu0 0
      %1102 = vmatprep.mubr.bf16.mxu0 0
      %1103 = vmatmul.mubr.bf16.gmra.mxu0 %v1065
      %v1104 = vpop.f32.mrf.mxu0
      %v1105 = vadd.f32 %v228, %v1104
      %v1106 = vpop.f32.mrf.mxu0
      %v1107 = vpop.f32.mrf.mxu0
      %v1108 = vpop.f32.mrf.mxu0
      %1109 = vdwg.mxu0
      %vm1110 = vcmask 27648
      %v1111 = vsel %vm1110, %v280, -inf
      %1112 = vmax.xlane.f32.xlu0 %v1111
      %v1113 = vpop.xlane.xlu0 %1112
      %v1114 = vsel %vm1110, %v335, -inf
      %1115 = vmax.xlane.f32.xlu0 %v1114
      %v1116 = vpop.xlane.xlu0 %1115
      %v1117 = vsel %vm1110, %v390, -inf
      %1118 = vmax.xlane.f32.xlu0 %v1117
      %v1119 = vpop.xlane.xlu0 %1118
      %v1120 = vsel %vm1110, %v445, -inf
      %1121 = vmax.xlane.f32.xlu0 %v1120
      %v1122 = vpop.xlane.xlu0 %1121
      %v1123 = vsel %vm1110, %v500, -inf
      %1124 = vmax.xlane.f32.xlu0 %v1123
      %v1125 = vpop.xlane.xlu0 %1124
      %v1126 = vsel %vm1110, %v555, -inf
      %1127 = vmax.xlane.f32.xlu0 %v1126
      %v1128 = vpop.xlane.xlu0 %1127
      %v1129 = vsel %vm1110, %v610, -inf
      %1130 = vmax.xlane.f32.xlu0 %v1129
      %v1131 = vpop.xlane.xlu0 %1130
      %v1132 = vsel %vm1110, %v665, -inf
      %1133 = vmax.xlane.f32.xlu0 %v1132
      %v1134 = vpop.xlane.xlu0 %1133
      %v1135 = vsel %vm1110, %v720, -inf
      %1136 = vmax.xlane.f32.xlu0 %v1135
      %v1137 = vpop.xlane.xlu0 %1136
      %v1138 = vsel %vm1110, %v775, -inf
      %1139 = vmax.xlane.f32.xlu0 %v1138
      %v1140 = vpop.xlane.xlu0 %1139
      %v1141 = vsel %vm1110, %v830, -inf
      %1142 = vmax.xlane.f32.xlu0 %v1141
      %v1143 = vpop.xlane.xlu0 %1142
      %v1144 = vsel %vm1110, %v885, -inf
      %1145 = vmax.xlane.f32.xlu0 %v1144
      %v1146 = vpop.xlane.xlu0 %1145
      %v1147 = vsel %vm1110, %v940, -inf
      %1148 = vmax.xlane.f32.xlu0 %v1147
      %v1149 = vpop.xlane.xlu0 %1148
      %v1150 = vsel %vm1110, %v995, -inf
      %1151 = vmax.xlane.f32.xlu0 %v1150
      %v1152 = vpop.xlane.xlu0 %1151
      %v1153 = vsel %vm1110, %v1050, -inf
      %1154 = vmax.xlane.f32.xlu0 %v1153
      %v1155 = vpop.xlane.xlu0 %1154
      %v1156 = vsel %vm1110, %v1105, -inf
      %1157 = vmax.xlane.f32.xlu0 %v1156
      %v1158 = vpop.xlane.xlu0 %1157
      %v1159 = vsub.f32 %v280, %v1113
      %v1160 = vsub.f32 %v335, %v1116
      %v1161 = vsub.f32 %v390, %v1119
      %v1162 = vsub.f32 %v445, %v1122
      %v1163 = vsub.f32 %v500, %v1125
      %v1164 = vsub.f32 %v555, %v1128
      %v1165 = vsub.f32 %v610, %v1131
      %v1166 = vsub.f32 %v665, %v1134
      %v1167 = vsub.f32 %v720, %v1137
      %v1168 = vsub.f32 %v775, %v1140
      %v1169 = vsub.f32 %v830, %v1143
      %v1170 = vsub.f32 %v885, %v1146
      %v1171 = vsub.f32 %v940, %v1149
      %v1172 = vsub.f32 %v995, %v1152
      %v1173 = vsub.f32 %v1050, %v1155
      %v1174 = vsub.f32 %v1105, %v1158
      %v1175 = vmul.f32 %v1159, 1.442695
      %v1176 = vpow.pop %v1175
      %v1177 = vmul.f32 %v1160, 1.442695
      %v1178 = vpow.pop %v1177
      %v1179 = vmul.f32 %v1161, 1.442695
      %v1180 = vpow.pop %v1179
      %v1181 = vmul.f32 %v1162, 1.442695
      %v1182 = vpow.pop %v1181
      %v1183 = vmul.f32 %v1163, 1.442695
      %v1184 = vpow.pop %v1183
      %v1185 = vmul.f32 %v1164, 1.442695
      %v1186 = vpow.pop %v1185
      %v1187 = vmul.f32 %v1165, 1.442695
      %v1188 = vpow.pop %v1187
      %v1189 = vmul.f32 %v1166, 1.442695
      %v1190 = vpow.pop %v1189
      %v1191 = vmul.f32 %v1167, 1.442695
      %v1192 = vpow.pop %v1191
      %v1193 = vmul.f32 %v1168, 1.442695
      %v1194 = vpow.pop %v1193
      %v1195 = vmul.f32 %v1169, 1.442695
      %v1196 = vpow.pop %v1195
      %v1197 = vmul.f32 %v1170, 1.442695
      %v1198 = vpow.pop %v1197
      %v1199 = vmul.f32 %v1171, 1.442695
      %v1200 = vpow.pop %v1199
      %v1201 = vmul.f32 %v1172, 1.442695
      %v1202 = vpow.pop %v1201
      %v1203 = vmul.f32 %v1173, 1.442695
      %v1204 = vpow.pop %v1203
      %v1205 = vmul.f32 %v1174, 1.442695
      %v1206 = vpow.pop %v1205
      %v1207 = vsel %vm1110, %v1176, 0.0
      %1208 = vadd.xlane.f32.xlu0 %v1207
      %v1209 = vpop.xlane.xlu0 %1208
      %v1210 = vsel %vm1110, %v1178, 0.0
      %1211 = vadd.xlane.f32.xlu0 %v1210
      %v1212 = vpop.xlane.xlu0 %1211
      %v1213 = vsel %vm1110, %v1180, 0.0
      %1214 = vadd.xlane.f32.xlu0 %v1213
      %v1215 = vpop.xlane.xlu0 %1214
      %v1216 = vsel %vm1110, %v1182, 0.0
      %1217 = vadd.xlane.f32.xlu0 %v1216
      %v1218 = vpop.xlane.xlu0 %1217
      %v1219 = vsel %vm1110, %v1184, 0.0
      %1220 = vadd.xlane.f32.xlu0 %v1219
      %v1221 = vpop.xlane.xlu0 %1220
      %v1222 = vsel %vm1110, %v1186, 0.0
      %1223 = vadd.xlane.f32.xlu0 %v1222
      %v1224 = vpop.xlane.xlu0 %1223
      %v1225 = vsel %vm1110, %v1188, 0.0
      %1226 = vadd.xlane.f32.xlu0 %v1225
      %v1227 = vpop.xlane.xlu0 %1226
      %v1228 = vsel %vm1110, %v1190, 0.0
      %1229 = vadd.xlane.f32.xlu0 %v1228
      %v1230 = vpop.xlane.xlu0 %1229
      %v1231 = vsel %vm1110, %v1192, 0.0
      %1232 = vadd.xlane.f32.xlu0 %v1231
      %v1233 = vpop.xlane.xlu0 %1232
      %v1234 = vsel %vm1110, %v1194, 0.0
      %1235 = vadd.xlane.f32.xlu0 %v1234
      %v1236 = vpop.xlane.xlu0 %1235
      %v1237 = vsel %vm1110, %v1196, 0.0
      %1238 = vadd.xlane.f32.xlu0 %v1237
      %v1239 = vpop.xlane.xlu0 %1238
      %v1240 = vsel %vm1110, %v1198, 0.0
      %1241 = vadd.xlane.f32.xlu0 %v1240
      %v1242 = vpop.xlane.xlu0 %1241
      %v1243 = vsel %vm1110, %v1200, 0.0
      %1244 = vadd.xlane.f32.xlu0 %v1243
      %v1245 = vpop.xlane.xlu0 %1244
      %v1246 = vsel %vm1110, %v1202, 0.0
      %1247 = vadd.xlane.f32.xlu0 %v1246
      %v1248 = vpop.xlane.xlu0 %1247
      %v1249 = vsel %vm1110, %v1204, 0.0
      %1250 = vadd.xlane.f32.xlu0 %v1249
      %v1251 = vpop.xlane.xlu0 %1250
      %v1252 = vsel %vm1110, %v1206, 0.0
      %1253 = vadd.xlane.f32.xlu0 %v1252
      %v1254 = vpop.xlane.xlu0 %1253
      %v1255 = vrcp.pop %v1209
      %v1256 = vrcp.pop %v1212
      %v1257 = vrcp.pop %v1215
      %v1258 = vrcp.pop %v1218
      %v1259 = vrcp.pop %v1221
      %v1260 = vrcp.pop %v1224
      %v1261 = vrcp.pop %v1227
      %v1262 = vrcp.pop %v1230
      %v1263 = vrcp.pop %v1233
      %v1264 = vrcp.pop %v1236
      %v1265 = vrcp.pop %v1239
      %v1266 = vrcp.pop %v1242
      %v1267 = vrcp.pop %v1245
      %v1268 = vrcp.pop %v1248
      %v1269 = vrcp.pop %v1251
      %v1270 = vrcp.pop %v1254
      %v1271 = vmul.f32 %v1176, %v1255
      %v1272 = vmul.f32 %v1178, %v1256
      %v1273 = vmul.f32 %v1180, %v1257
      %v1274 = vmul.f32 %v1182, %v1258
      %v1275 = vmul.f32 %v1184, %v1259
      %v1276 = vmul.f32 %v1186, %v1260
      %v1277 = vmul.f32 %v1188, %v1261
      %v1278 = vmul.f32 %v1190, %v1262
      %v1279 = vmul.f32 %v1192, %v1263
      %v1280 = vmul.f32 %v1194, %v1264
      %v1281 = vmul.f32 %v1196, %v1265
      %v1282 = vmul.f32 %v1198, %v1266
      %v1283 = vmul.f32 %v1200, %v1267
      %v1284 = vmul.f32 %v1202, %v1268
      %v1285 = vmul.f32 %v1204, %v1269
      %v1286 = vmul.f32 %v1206, %v1270
      %v1287 = vpack.c.bf16 %v1271, %v1271
      %v1288 = vpack.c.bf16 %v1272, %v1272
      %v1289 = vpack.c.bf16 %v1273, %v1273
      %v1290 = vpack.c.bf16 %v1274, %v1274
      %v1291 = vpack.c.bf16 %v1275, %v1275
      %v1292 = vpack.c.bf16 %v1276, %v1276
      %v1293 = vpack.c.bf16 %v1277, %v1277
      %v1294 = vpack.c.bf16 %v1278, %v1278
      %v1295 = vpack.c.bf16 %v1279, %v1279
      %v1296 = vpack.c.bf16 %v1280, %v1280
      %v1297 = vpack.c.bf16 %v1281, %v1281
      %v1298 = vpack.c.bf16 %v1282, %v1282
      %v1299 = vpack.c.bf16 %v1283, %v1283
      %v1300 = vpack.c.bf16 %v1284, %v1284
      %v1301 = vpack.c.bf16 %v1285, %v1285
      %v1302 = vpack.c.bf16 %v1286, %v1286
      %1303 = vrot.lane.b32.xlu0 %v235, 64
      %v1304 = vpop.permute.xlu0 %1303
      %vm1305 = vcmask 31744
      %v1307 = vsel %vm1305, %v1287, 0
      %vm1309 = vcmask 1041408
      %v1311 = vsel %vm1309, %v1304, 0
      %1313 = vmatprep.subr.bf16.mxu0 0
      %1314 = vmatpush1.bf16.msra.mxu0 0
      %1315 = vmatprep.subr.bf16.mxu0 0
      %1316 = vmatpush1.bf16.msra.mxu0 0
      %1317 = vmatprep.subr.bf16.mxu0 0
      %1318 = vmatpush1.bf16.msra.mxu0 0
      %1319 = vmatprep.subr.bf16.mxu0 0
      %1320 = vmatpush1.bf16.msra.mxu0 0
      %1321 = vmatprep.subr.bf16.mxu0 0
      %1322 = vmatpush1.bf16.msra.mxu0 0
      %1323 = vmatprep.subr.bf16.mxu0 0
      %1324 = vmatpush1.bf16.msra.mxu0 0
      %1325 = vmatprep.subr.bf16.mxu0 0
      %1326 = vmatpush1.bf16.msra.mxu0 0
      %1327 = vmatprep.subr.bf16.mxu0 0
      %1328 = vmatpush1.bf16.msra.mxu0 %v1311
      %1329 = vmatprep.subr.bf16.mxu0 0
      %1330 = vmatpush2.bf16.msra.mxu0 0
      %1331 = vmatprep.subr.bf16.mxu0 0
      %1332 = vmatpush2.bf16.msra.mxu0 0
      %1333 = vmatprep.subr.bf16.mxu0 0
      %1334 = vmatpush2.bf16.msra.mxu0 0
      %1335 = vmatprep.subr.bf16.mxu0 0
      %1336 = vmatpush2.bf16.msra.mxu0 0
      %1337 = vmatprep.subr.bf16.mxu0 0
      %1338 = vmatpush2.bf16.msra.mxu0 0
      %1339 = vmatprep.subr.bf16.mxu0 0
      %1340 = vmatpush2.bf16.msra.mxu0 0
      %1341 = vmatprep.subr.bf16.mxu0 0
      %1342 = vmatpush2.bf16.msra.mxu0 0
      %1343 = vmatprep.subr.bf16.mxu0 0
      %1344 = vmatpush2.bf16.msra.mxu0 0
      %1345 = vmatprep.mubr.bf16.mxu0 0
      %1346 = vmatmul.mubr.bf16.gmra.mxu0 %v1307
      %v1347 = vpop.f32.mrf.mxu0
      %v1348 = vadd.f32 0.0, %v1347
      %v1349 = vpop.f32.mrf.mxu0
      %v1350 = vpop.f32.mrf.mxu0
      %v1351 = vpop.f32.mrf.mxu0
      %1352 = vdwg.mxu0
      %1353 = vrot.lane.b32.xlu0 %v291, 64
      %v1354 = vpop.permute.xlu0 %1353
      %v1356 = vsel %vm1305, %v1288, 0
      %v1359 = vsel %vm1309, %v1354, 0
      %1361 = vmatprep.subr.bf16.mxu0 0
      %1362 = vmatpush1.bf16.msra.mxu0 0
      %1363 = vmatprep.subr.bf16.mxu0 0
      %1364 = vmatpush1.bf16.msra.mxu0 0
      %1365 = vmatprep.subr.bf16.mxu0 0
      %1366 = vmatpush1.bf16.msra.mxu0 0
      %1367 = vmatprep.subr.bf16.mxu0 0
      %1368 = vmatpush1.bf16.msra.mxu0 0
      %1369 = vmatprep.subr.bf16.mxu0 0
      %1370 = vmatpush1.bf16.msra.mxu0 0
      %1371 = vmatprep.subr.bf16.mxu0 0
      %1372 = vmatpush1.bf16.msra.mxu0 0
      %1373 = vmatprep.subr.bf16.mxu0 0
      %1374 = vmatpush1.bf16.msra.mxu0 0
      %1375 = vmatprep.subr.bf16.mxu0 0
      %1376 = vmatpush1.bf16.msra.mxu0 %v1359
      %1377 = vmatprep.subr.bf16.mxu0 0
      %1378 = vmatpush2.bf16.msra.mxu0 0
      %1379 = vmatprep.subr.bf16.mxu0 0
      %1380 = vmatpush2.bf16.msra.mxu0 0
      %1381 = vmatprep.subr.bf16.mxu0 0
      %1382 = vmatpush2.bf16.msra.mxu0 0
      %1383 = vmatprep.subr.bf16.mxu0 0
      %1384 = vmatpush2.bf16.msra.mxu0 0
      %1385 = vmatprep.subr.bf16.mxu0 0
      %1386 = vmatpush2.bf16.msra.mxu0 0
      %1387 = vmatprep.subr.bf16.mxu0 0
      %1388 = vmatpush2.bf16.msra.mxu0 0
      %1389 = vmatprep.subr.bf16.mxu0 0
      %1390 = vmatpush2.bf16.msra.mxu0 0
      %1391 = vmatprep.subr.bf16.mxu0 0
      %1392 = vmatpush2.bf16.msra.mxu0 0
      %1393 = vmatprep.mubr.bf16.mxu0 0
      %1394 = vmatmul.mubr.bf16.gmra.mxu0 %v1356
      %v1395 = vpop.f32.mrf.mxu0
      %v1396 = vadd.f32 0.0, %v1395
      %v1397 = vpop.f32.mrf.mxu0
      %v1398 = vpop.f32.mrf.mxu0
      %v1399 = vpop.f32.mrf.mxu0
      %1400 = vdwg.mxu0
      %1401 = vrot.lane.b32.xlu0 %v346, 64
      %v1402 = vpop.permute.xlu0 %1401
      %v1404 = vsel %vm1305, %v1289, 0
      %v1407 = vsel %vm1309, %v1402, 0
      %1409 = vmatprep.subr.bf16.mxu0 0
      %1410 = vmatpush1.bf16.msra.mxu0 0
      %1411 = vmatprep.subr.bf16.mxu0 0
      %1412 = vmatpush1.bf16.msra.mxu0 0
      %1413 = vmatprep.subr.bf16.mxu0 0
      %1414 = vmatpush1.bf16.msra.mxu0 0
      %1415 = vmatprep.subr.bf16.mxu0 0
      %1416 = vmatpush1.bf16.msra.mxu0 0
      %1417 = vmatprep.subr.bf16.mxu0 0
      %1418 = vmatpush1.bf16.msra.mxu0 0
      %1419 = vmatprep.subr.bf16.mxu0 0
      %1420 = vmatpush1.bf16.msra.mxu0 0
      %1421 = vmatprep.subr.bf16.mxu0 0
      %1422 = vmatpush1.bf16.msra.mxu0 0
      %1423 = vmatprep.subr.bf16.mxu0 0
      %1424 = vmatpush1.bf16.msra.mxu0 %v1407
      %1425 = vmatprep.subr.bf16.mxu0 0
      %1426 = vmatpush2.bf16.msra.mxu0 0
      %1427 = vmatprep.subr.bf16.mxu0 0
      %1428 = vmatpush2.bf16.msra.mxu0 0
      %1429 = vmatprep.subr.bf16.mxu0 0
      %1430 = vmatpush2.bf16.msra.mxu0 0
      %1431 = vmatprep.subr.bf16.mxu0 0
      %1432 = vmatpush2.bf16.msra.mxu0 0
      %1433 = vmatprep.subr.bf16.mxu0 0
      %1434 = vmatpush2.bf16.msra.mxu0 0
      %1435 = vmatprep.subr.bf16.mxu0 0
      %1436 = vmatpush2.bf16.msra.mxu0 0
      %1437 = vmatprep.subr.bf16.mxu0 0
      %1438 = vmatpush2.bf16.msra.mxu0 0
      %1439 = vmatprep.subr.bf16.mxu0 0
      %1440 = vmatpush2.bf16.msra.mxu0 0
      %1441 = vmatprep.mubr.bf16.mxu0 0
      %1442 = vmatmul.mubr.bf16.gmra.mxu0 %v1404
      %v1443 = vpop.f32.mrf.mxu0
      %v1444 = vadd.f32 0.0, %v1443
      %v1445 = vpop.f32.mrf.mxu0
      %v1446 = vpop.f32.mrf.mxu0
      %v1447 = vpop.f32.mrf.mxu0
      %1448 = vdwg.mxu0
      %1449 = vrot.lane.b32.xlu0 %v401, 64
      %v1450 = vpop.permute.xlu0 %1449
      %v1452 = vsel %vm1305, %v1290, 0
      %v1455 = vsel %vm1309, %v1450, 0
      %1457 = vmatprep.subr.bf16.mxu0 0
      %1458 = vmatpush1.bf16.msra.mxu0 0
      %1459 = vmatprep.subr.bf16.mxu0 0
      %1460 = vmatpush1.bf16.msra.mxu0 0
      %1461 = vmatprep.subr.bf16.mxu0 0
      %1462 = vmatpush1.bf16.msra.mxu0 0
      %1463 = vmatprep.subr.bf16.mxu0 0
      %1464 = vmatpush1.bf16.msra.mxu0 0
      %1465 = vmatprep.subr.bf16.mxu0 0
      %1466 = vmatpush1.bf16.msra.mxu0 0
      %1467 = vmatprep.subr.bf16.mxu0 0
      %1468 = vmatpush1.bf16.msra.mxu0 0
      %1469 = vmatprep.subr.bf16.mxu0 0
      %1470 = vmatpush1.bf16.msra.mxu0 0
      %1471 = vmatprep.subr.bf16.mxu0 0
      %1472 = vmatpush1.bf16.msra.mxu0 %v1455
      %1473 = vmatprep.subr.bf16.mxu0 0
      %1474 = vmatpush2.bf16.msra.mxu0 0
      %1475 = vmatprep.subr.bf16.mxu0 0
      %1476 = vmatpush2.bf16.msra.mxu0 0
      %1477 = vmatprep.subr.bf16.mxu0 0
      %1478 = vmatpush2.bf16.msra.mxu0 0
      %1479 = vmatprep.subr.bf16.mxu0 0
      %1480 = vmatpush2.bf16.msra.mxu0 0
      %1481 = vmatprep.subr.bf16.mxu0 0
      %1482 = vmatpush2.bf16.msra.mxu0 0
      %1483 = vmatprep.subr.bf16.mxu0 0
      %1484 = vmatpush2.bf16.msra.mxu0 0
      %1485 = vmatprep.subr.bf16.mxu0 0
      %1486 = vmatpush2.bf16.msra.mxu0 0
      %1487 = vmatprep.subr.bf16.mxu0 0
      %1488 = vmatpush2.bf16.msra.mxu0 0
      %1489 = vmatprep.mubr.bf16.mxu0 0
      %1490 = vmatmul.mubr.bf16.gmra.mxu0 %v1452
      %v1491 = vpop.f32.mrf.mxu0
      %v1492 = vadd.f32 0.0, %v1491
      %v1493 = vpop.f32.mrf.mxu0
      %v1494 = vpop.f32.mrf.mxu0
      %v1495 = vpop.f32.mrf.mxu0
      %1496 = vdwg.mxu0
      %1497 = vrot.lane.b32.xlu0 %v456, 64
      %v1498 = vpop.permute.xlu0 %1497
      %v1500 = vsel %vm1305, %v1291, 0
      %v1503 = vsel %vm1309, %v1498, 0
      %1505 = vmatprep.subr.bf16.mxu0 0
      %1506 = vmatpush1.bf16.msra.mxu0 0
      %1507 = vmatprep.subr.bf16.mxu0 0
      %1508 = vmatpush1.bf16.msra.mxu0 0
      %1509 = vmatprep.subr.bf16.mxu0 0
      %1510 = vmatpush1.bf16.msra.mxu0 0
      %1511 = vmatprep.subr.bf16.mxu0 0
      %1512 = vmatpush1.bf16.msra.mxu0 0
      %1513 = vmatprep.subr.bf16.mxu0 0
      %1514 = vmatpush1.bf16.msra.mxu0 0
      %1515 = vmatprep.subr.bf16.mxu0 0
      %1516 = vmatpush1.bf16.msra.mxu0 0
      %1517 = vmatprep.subr.bf16.mxu0 0
      %1518 = vmatpush1.bf16.msra.mxu0 0
      %1519 = vmatprep.subr.bf16.mxu0 0
      %1520 = vmatpush1.bf16.msra.mxu0 %v1503
      %1521 = vmatprep.subr.bf16.mxu0 0
      %1522 = vmatpush2.bf16.msra.mxu0 0
      %1523 = vmatprep.subr.bf16.mxu0 0
      %1524 = vmatpush2.bf16.msra.mxu0 0
      %1525 = vmatprep.subr.bf16.mxu0 0
      %1526 = vmatpush2.bf16.msra.mxu0 0
      %1527 = vmatprep.subr.bf16.mxu0 0
      %1528 = vmatpush2.bf16.msra.mxu0 0
      %1529 = vmatprep.subr.bf16.mxu0 0
      %1530 = vmatpush2.bf16.msra.mxu0 0
      %1531 = vmatprep.subr.bf16.mxu0 0
      %1532 = vmatpush2.bf16.msra.mxu0 0
      %1533 = vmatprep.subr.bf16.mxu0 0
      %1534 = vmatpush2.bf16.msra.mxu0 0
      %1535 = vmatprep.subr.bf16.mxu0 0
      %1536 = vmatpush2.bf16.msra.mxu0 0
      %1537 = vmatprep.mubr.bf16.mxu0 0
      %1538 = vmatmul.mubr.bf16.gmra.mxu0 %v1500
      %v1539 = vpop.f32.mrf.mxu0
      %v1540 = vadd.f32 0.0, %v1539
      %v1541 = vpop.f32.mrf.mxu0
      %v1542 = vpop.f32.mrf.mxu0
      %v1543 = vpop.f32.mrf.mxu0
      %1544 = vdwg.mxu0
      %1545 = vrot.lane.b32.xlu0 %v511, 64
      %v1546 = vpop.permute.xlu0 %1545
      %v1548 = vsel %vm1305, %v1292, 0
      %v1551 = vsel %vm1309, %v1546, 0
      %1553 = vmatprep.subr.bf16.mxu0 0
      %1554 = vmatpush1.bf16.msra.mxu0 0
      %1555 = vmatprep.subr.bf16.mxu0 0
      %1556 = vmatpush1.bf16.msra.mxu0 0
      %1557 = vmatprep.subr.bf16.mxu0 0
      %1558 = vmatpush1.bf16.msra.mxu0 0
      %1559 = vmatprep.subr.bf16.mxu0 0
      %1560 = vmatpush1.bf16.msra.mxu0 0
      %1561 = vmatprep.subr.bf16.mxu0 0
      %1562 = vmatpush1.bf16.msra.mxu0 0
      %1563 = vmatprep.subr.bf16.mxu0 0
      %1564 = vmatpush1.bf16.msra.mxu0 0
      %1565 = vmatprep.subr.bf16.mxu0 0
      %1566 = vmatpush1.bf16.msra.mxu0 0
      %1567 = vmatprep.subr.bf16.mxu0 0
      %1568 = vmatpush1.bf16.msra.mxu0 %v1551
      %1569 = vmatprep.subr.bf16.mxu0 0
      %1570 = vmatpush2.bf16.msra.mxu0 0
      %1571 = vmatprep.subr.bf16.mxu0 0
      %1572 = vmatpush2.bf16.msra.mxu0 0
      %1573 = vmatprep.subr.bf16.mxu0 0
      %1574 = vmatpush2.bf16.msra.mxu0 0
      %1575 = vmatprep.subr.bf16.mxu0 0
      %1576 = vmatpush2.bf16.msra.mxu0 0
      %1577 = vmatprep.subr.bf16.mxu0 0
      %1578 = vmatpush2.bf16.msra.mxu0 0
      %1579 = vmatprep.subr.bf16.mxu0 0
      %1580 = vmatpush2.bf16.msra.mxu0 0
      %1581 = vmatprep.subr.bf16.mxu0 0
      %1582 = vmatpush2.bf16.msra.mxu0 0
      %1583 = vmatprep.subr.bf16.mxu0 0
      %1584 = vmatpush2.bf16.msra.mxu0 0
      %1585 = vmatprep.mubr.bf16.mxu0 0
      %1586 = vmatmul.mubr.bf16.gmra.mxu0 %v1548
      %v1587 = vpop.f32.mrf.mxu0
      %v1588 = vadd.f32 0.0, %v1587
      %v1589 = vpop.f32.mrf.mxu0
      %v1590 = vpop.f32.mrf.mxu0
      %v1591 = vpop.f32.mrf.mxu0
      %1592 = vdwg.mxu0
      %1593 = vrot.lane.b32.xlu0 %v566, 64
      %v1594 = vpop.permute.xlu0 %1593
      %v1596 = vsel %vm1305, %v1293, 0
      %v1599 = vsel %vm1309, %v1594, 0
      %1601 = vmatprep.subr.bf16.mxu0 0
      %1602 = vmatpush1.bf16.msra.mxu0 0
      %1603 = vmatprep.subr.bf16.mxu0 0
      %1604 = vmatpush1.bf16.msra.mxu0 0
      %1605 = vmatprep.subr.bf16.mxu0 0
      %1606 = vmatpush1.bf16.msra.mxu0 0
      %1607 = vmatprep.subr.bf16.mxu0 0
      %1608 = vmatpush1.bf16.msra.mxu0 0
      %1609 = vmatprep.subr.bf16.mxu0 0
      %1610 = vmatpush1.bf16.msra.mxu0 0
      %1611 = vmatprep.subr.bf16.mxu0 0
      %1612 = vmatpush1.bf16.msra.mxu0 0
      %1613 = vmatprep.subr.bf16.mxu0 0
      %1614 = vmatpush1.bf16.msra.mxu0 0
      %1615 = vmatprep.subr.bf16.mxu0 0
      %1616 = vmatpush1.bf16.msra.mxu0 %v1599
      %1617 = vmatprep.subr.bf16.mxu0 0
      %1618 = vmatpush2.bf16.msra.mxu0 0
      %1619 = vmatprep.subr.bf16.mxu0 0
      %1620 = vmatpush2.bf16.msra.mxu0 0
      %1621 = vmatprep.subr.bf16.mxu0 0
      %1622 = vmatpush2.bf16.msra.mxu0 0
      %1623 = vmatprep.subr.bf16.mxu0 0
      %1624 = vmatpush2.bf16.msra.mxu0 0
      %1625 = vmatprep.subr.bf16.mxu0 0
      %1626 = vmatpush2.bf16.msra.mxu0 0
      %1627 = vmatprep.subr.bf16.mxu0 0
      %1628 = vmatpush2.bf16.msra.mxu0 0
      %1629 = vmatprep.subr.bf16.mxu0 0
      %1630 = vmatpush2.bf16.msra.mxu0 0
      %1631 = vmatprep.subr.bf16.mxu0 0
      %1632 = vmatpush2.bf16.msra.mxu0 0
      %1633 = vmatprep.mubr.bf16.mxu0 0
      %1634 = vmatmul.mubr.bf16.gmra.mxu0 %v1596
      %v1635 = vpop.f32.mrf.mxu0
      %v1636 = vadd.f32 0.0, %v1635
      %v1637 = vpop.f32.mrf.mxu0
      %v1638 = vpop.f32.mrf.mxu0
      %v1639 = vpop.f32.mrf.mxu0
      %1640 = vdwg.mxu0
      %1641 = vrot.lane.b32.xlu0 %v621, 64
      %v1642 = vpop.permute.xlu0 %1641
      %v1644 = vsel %vm1305, %v1294, 0
      %v1647 = vsel %vm1309, %v1642, 0
      %1649 = vmatprep.subr.bf16.mxu0 0
      %1650 = vmatpush1.bf16.msra.mxu0 0
      %1651 = vmatprep.subr.bf16.mxu0 0
      %1652 = vmatpush1.bf16.msra.mxu0 0
      %1653 = vmatprep.subr.bf16.mxu0 0
      %1654 = vmatpush1.bf16.msra.mxu0 0
      %1655 = vmatprep.subr.bf16.mxu0 0
      %1656 = vmatpush1.bf16.msra.mxu0 0
      %1657 = vmatprep.subr.bf16.mxu0 0
      %1658 = vmatpush1.bf16.msra.mxu0 0
      %1659 = vmatprep.subr.bf16.mxu0 0
      %1660 = vmatpush1.bf16.msra.mxu0 0
      %1661 = vmatprep.subr.bf16.mxu0 0
      %1662 = vmatpush1.bf16.msra.mxu0 0
      %1663 = vmatprep.subr.bf16.mxu0 0
      %1664 = vmatpush1.bf16.msra.mxu0 %v1647
      %1665 = vmatprep.subr.bf16.mxu0 0
      %1666 = vmatpush2.bf16.msra.mxu0 0
      %1667 = vmatprep.subr.bf16.mxu0 0
      %1668 = vmatpush2.bf16.msra.mxu0 0
      %1669 = vmatprep.subr.bf16.mxu0 0
      %1670 = vmatpush2.bf16.msra.mxu0 0
      %1671 = vmatprep.subr.bf16.mxu0 0
      %1672 = vmatpush2.bf16.msra.mxu0 0
      %1673 = vmatprep.subr.bf16.mxu0 0
      %1674 = vmatpush2.bf16.msra.mxu0 0
      %1675 = vmatprep.subr.bf16.mxu0 0
      %1676 = vmatpush2.bf16.msra.mxu0 0
      %1677 = vmatprep.subr.bf16.mxu0 0
      %1678 = vmatpush2.bf16.msra.mxu0 0
      %1679 = vmatprep.subr.bf16.mxu0 0
      %1680 = vmatpush2.bf16.msra.mxu0 0
      %1681 = vmatprep.mubr.bf16.mxu0 0
      %1682 = vmatmul.mubr.bf16.gmra.mxu0 %v1644
      %v1683 = vpop.f32.mrf.mxu0
      %v1684 = vadd.f32 0.0, %v1683
      %v1685 = vpop.f32.mrf.mxu0
      %v1686 = vpop.f32.mrf.mxu0
      %v1687 = vpop.f32.mrf.mxu0
      %1688 = vdwg.mxu0
      %1689 = vrot.lane.b32.xlu0 %v676, 64
      %v1690 = vpop.permute.xlu0 %1689
      %v1692 = vsel %vm1305, %v1295, 0
      %v1695 = vsel %vm1309, %v1690, 0
      %1697 = vmatprep.subr.bf16.mxu0 0
      %1698 = vmatpush1.bf16.msra.mxu0 0
      %1699 = vmatprep.subr.bf16.mxu0 0
      %1700 = vmatpush1.bf16.msra.mxu0 0
      %1701 = vmatprep.subr.bf16.mxu0 0
      %1702 = vmatpush1.bf16.msra.mxu0 0
      %1703 = vmatprep.subr.bf16.mxu0 0
      %1704 = vmatpush1.bf16.msra.mxu0 0
      %1705 = vmatprep.subr.bf16.mxu0 0
      %1706 = vmatpush1.bf16.msra.mxu0 0
      %1707 = vmatprep.subr.bf16.mxu0 0
      %1708 = vmatpush1.bf16.msra.mxu0 0
      %1709 = vmatprep.subr.bf16.mxu0 0
      %1710 = vmatpush1.bf16.msra.mxu0 0
      %1711 = vmatprep.subr.bf16.mxu0 0
      %1712 = vmatpush1.bf16.msra.mxu0 %v1695
      %1713 = vmatprep.subr.bf16.mxu0 0
      %1714 = vmatpush2.bf16.msra.mxu0 0
      %1715 = vmatprep.subr.bf16.mxu0 0
      %1716 = vmatpush2.bf16.msra.mxu0 0
      %1717 = vmatprep.subr.bf16.mxu0 0
      %1718 = vmatpush2.bf16.msra.mxu0 0
      %1719 = vmatprep.subr.bf16.mxu0 0
      %1720 = vmatpush2.bf16.msra.mxu0 0
      %1721 = vmatprep.subr.bf16.mxu0 0
      %1722 = vmatpush2.bf16.msra.mxu0 0
      %1723 = vmatprep.subr.bf16.mxu0 0
      %1724 = vmatpush2.bf16.msra.mxu0 0
      %1725 = vmatprep.subr.bf16.mxu0 0
      %1726 = vmatpush2.bf16.msra.mxu0 0
      %1727 = vmatprep.subr.bf16.mxu0 0
      %1728 = vmatpush2.bf16.msra.mxu0 0
      %1729 = vmatprep.mubr.bf16.mxu0 0
      %1730 = vmatmul.mubr.bf16.gmra.mxu0 %v1692
      %v1731 = vpop.f32.mrf.mxu0
      %v1732 = vadd.f32 0.0, %v1731
      %v1733 = vpop.f32.mrf.mxu0
      %v1734 = vpop.f32.mrf.mxu0
      %v1735 = vpop.f32.mrf.mxu0
      %1736 = vdwg.mxu0
      %1737 = vrot.lane.b32.xlu0 %v731, 64
      %v1738 = vpop.permute.xlu0 %1737
      %v1740 = vsel %vm1305, %v1296, 0
      %v1743 = vsel %vm1309, %v1738, 0
      %1745 = vmatprep.subr.bf16.mxu0 0
      %1746 = vmatpush1.bf16.msra.mxu0 0
      %1747 = vmatprep.subr.bf16.mxu0 0
      %1748 = vmatpush1.bf16.msra.mxu0 0
      %1749 = vmatprep.subr.bf16.mxu0 0
      %1750 = vmatpush1.bf16.msra.mxu0 0
      %1751 = vmatprep.subr.bf16.mxu0 0
      %1752 = vmatpush1.bf16.msra.mxu0 0
      %1753 = vmatprep.subr.bf16.mxu0 0
      %1754 = vmatpush1.bf16.msra.mxu0 0
      %1755 = vmatprep.subr.bf16.mxu0 0
      %1756 = vmatpush1.bf16.msra.mxu0 0
      %1757 = vmatprep.subr.bf16.mxu0 0
      %1758 = vmatpush1.bf16.msra.mxu0 0
      %1759 = vmatprep.subr.bf16.mxu0 0
      %1760 = vmatpush1.bf16.msra.mxu0 %v1743
      %1761 = vmatprep.subr.bf16.mxu0 0
      %1762 = vmatpush2.bf16.msra.mxu0 0
      %1763 = vmatprep.subr.bf16.mxu0 0
      %1764 = vmatpush2.bf16.msra.mxu0 0
      %1765 = vmatprep.subr.bf16.mxu0 0
      %1766 = vmatpush2.bf16.msra.mxu0 0
      %1767 = vmatprep.subr.bf16.mxu0 0
      %1768 = vmatpush2.bf16.msra.mxu0 0
      %1769 = vmatprep.subr.bf16.mxu0 0
      %1770 = vmatpush2.bf16.msra.mxu0 0
      %1771 = vmatprep.subr.bf16.mxu0 0
      %1772 = vmatpush2.bf16.msra.mxu0 0
      %1773 = vmatprep.subr.bf16.mxu0 0
      %1774 = vmatpush2.bf16.msra.mxu0 0
      %1775 = vmatprep.subr.bf16.mxu0 0
      %1776 = vmatpush2.bf16.msra.mxu0 0
      %1777 = vmatprep.mubr.bf16.mxu0 0
      %1778 = vmatmul.mubr.bf16.gmra.mxu0 %v1740
      %v1779 = vpop.f32.mrf.mxu0
      %v1780 = vadd.f32 0.0, %v1779
      %v1781 = vpop.f32.mrf.mxu0
      %v1782 = vpop.f32.mrf.mxu0
      %v1783 = vpop.f32.mrf.mxu0
      %1784 = vdwg.mxu0
      %1785 = vrot.lane.b32.xlu0 %v786, 64
      %v1786 = vpop.permute.xlu0 %1785
      %v1788 = vsel %vm1305, %v1297, 0
      %v1791 = vsel %vm1309, %v1786, 0
      %1793 = vmatprep.subr.bf16.mxu0 0
      %1794 = vmatpush1.bf16.msra.mxu0 0
      %1795 = vmatprep.subr.bf16.mxu0 0
      %1796 = vmatpush1.bf16.msra.mxu0 0
      %1797 = vmatprep.subr.bf16.mxu0 0
      %1798 = vmatpush1.bf16.msra.mxu0 0
      %1799 = vmatprep.subr.bf16.mxu0 0
      %1800 = vmatpush1.bf16.msra.mxu0 0
      %1801 = vmatprep.subr.bf16.mxu0 0
      %1802 = vmatpush1.bf16.msra.mxu0 0
      %1803 = vmatprep.subr.bf16.mxu0 0
      %1804 = vmatpush1.bf16.msra.mxu0 0
      %1805 = vmatprep.subr.bf16.mxu0 0
      %1806 = vmatpush1.bf16.msra.mxu0 0
      %1807 = vmatprep.subr.bf16.mxu0 0
      %1808 = vmatpush1.bf16.msra.mxu0 %v1791
      %1809 = vmatprep.subr.bf16.mxu0 0
      %1810 = vmatpush2.bf16.msra.mxu0 0
      %1811 = vmatprep.subr.bf16.mxu0 0
      %1812 = vmatpush2.bf16.msra.mxu0 0
      %1813 = vmatprep.subr.bf16.mxu0 0
      %1814 = vmatpush2.bf16.msra.mxu0 0
      %1815 = vmatprep.subr.bf16.mxu0 0
      %1816 = vmatpush2.bf16.msra.mxu0 0
      %1817 = vmatprep.subr.bf16.mxu0 0
      %1818 = vmatpush2.bf16.msra.mxu0 0
      %1819 = vmatprep.subr.bf16.mxu0 0
      %1820 = vmatpush2.bf16.msra.mxu0 0
      %1821 = vmatprep.subr.bf16.mxu0 0
      %1822 = vmatpush2.bf16.msra.mxu0 0
      %1823 = vmatprep.subr.bf16.mxu0 0
      %1824 = vmatpush2.bf16.msra.mxu0 0
      %1825 = vmatprep.mubr.bf16.mxu0 0
      %1826 = vmatmul.mubr.bf16.gmra.mxu0 %v1788
      %v1827 = vpop.f32.mrf.mxu0
      %v1828 = vadd.f32 0.0, %v1827
      %v1829 = vpop.f32.mrf.mxu0
      %v1830 = vpop.f32.mrf.mxu0
      %v1831 = vpop.f32.mrf.mxu0
      %1832 = vdwg.mxu0
      %1833 = vrot.lane.b32.xlu0 %v841, 64
      %v1834 = vpop.permute.xlu0 %1833
      %v1836 = vsel %vm1305, %v1298, 0
      %v1839 = vsel %vm1309, %v1834, 0
      %1841 = vmatprep.subr.bf16.mxu0 0
      %1842 = vmatpush1.bf16.msra.mxu0 0
      %1843 = vmatprep.subr.bf16.mxu0 0
      %1844 = vmatpush1.bf16.msra.mxu0 0
      %1845 = vmatprep.subr.bf16.mxu0 0
      %1846 = vmatpush1.bf16.msra.mxu0 0
      %1847 = vmatprep.subr.bf16.mxu0 0
      %1848 = vmatpush1.bf16.msra.mxu0 0
      %1849 = vmatprep.subr.bf16.mxu0 0
      %1850 = vmatpush1.bf16.msra.mxu0 0
      %1851 = vmatprep.subr.bf16.mxu0 0
      %1852 = vmatpush1.bf16.msra.mxu0 0
      %1853 = vmatprep.subr.bf16.mxu0 0
      %1854 = vmatpush1.bf16.msra.mxu0 0
      %1855 = vmatprep.subr.bf16.mxu0 0
      %1856 = vmatpush1.bf16.msra.mxu0 %v1839
      %1857 = vmatprep.subr.bf16.mxu0 0
      %1858 = vmatpush2.bf16.msra.mxu0 0
      %1859 = vmatprep.subr.bf16.mxu0 0
      %1860 = vmatpush2.bf16.msra.mxu0 0
      %1861 = vmatprep.subr.bf16.mxu0 0
      %1862 = vmatpush2.bf16.msra.mxu0 0
      %1863 = vmatprep.subr.bf16.mxu0 0
      %1864 = vmatpush2.bf16.msra.mxu0 0
      %1865 = vmatprep.subr.bf16.mxu0 0
      %1866 = vmatpush2.bf16.msra.mxu0 0
      %1867 = vmatprep.subr.bf16.mxu0 0
      %1868 = vmatpush2.bf16.msra.mxu0 0
      %1869 = vmatprep.subr.bf16.mxu0 0
      %1870 = vmatpush2.bf16.msra.mxu0 0
      %1871 = vmatprep.subr.bf16.mxu0 0
      %1872 = vmatpush2.bf16.msra.mxu0 0
      %1873 = vmatprep.mubr.bf16.mxu0 0
      %1874 = vmatmul.mubr.bf16.gmra.mxu0 %v1836
      %v1875 = vpop.f32.mrf.mxu0
      %v1876 = vadd.f32 0.0, %v1875
      %v1877 = vpop.f32.mrf.mxu0
      %v1878 = vpop.f32.mrf.mxu0
      %v1879 = vpop.f32.mrf.mxu0
      %1880 = vdwg.mxu0
      %1881 = vrot.lane.b32.xlu0 %v896, 64
      %v1882 = vpop.permute.xlu0 %1881
      %v1884 = vsel %vm1305, %v1299, 0
      %v1887 = vsel %vm1309, %v1882, 0
      %1889 = vmatprep.subr.bf16.mxu0 0
      %1890 = vmatpush1.bf16.msra.mxu0 0
      %1891 = vmatprep.subr.bf16.mxu0 0
      %1892 = vmatpush1.bf16.msra.mxu0 0
      %1893 = vmatprep.subr.bf16.mxu0 0
      %1894 = vmatpush1.bf16.msra.mxu0 0
      %1895 = vmatprep.subr.bf16.mxu0 0
      %1896 = vmatpush1.bf16.msra.mxu0 0
      %1897 = vmatprep.subr.bf16.mxu0 0
      %1898 = vmatpush1.bf16.msra.mxu0 0
      %1899 = vmatprep.subr.bf16.mxu0 0
      %1900 = vmatpush1.bf16.msra.mxu0 0
      %1901 = vmatprep.subr.bf16.mxu0 0
      %1902 = vmatpush1.bf16.msra.mxu0 0
      %1903 = vmatprep.subr.bf16.mxu0 0
      %1904 = vmatpush1.bf16.msra.mxu0 %v1887
      %1905 = vmatprep.subr.bf16.mxu0 0
      %1906 = vmatpush2.bf16.msra.mxu0 0
      %1907 = vmatprep.subr.bf16.mxu0 0
      %1908 = vmatpush2.bf16.msra.mxu0 0
      %1909 = vmatprep.subr.bf16.mxu0 0
      %1910 = vmatpush2.bf16.msra.mxu0 0
      %1911 = vmatprep.subr.bf16.mxu0 0
      %1912 = vmatpush2.bf16.msra.mxu0 0
      %1913 = vmatprep.subr.bf16.mxu0 0
      %1914 = vmatpush2.bf16.msra.mxu0 0
      %1915 = vmatprep.subr.bf16.mxu0 0
      %1916 = vmatpush2.bf16.msra.mxu0 0
      %1917 = vmatprep.subr.bf16.mxu0 0
      %1918 = vmatpush2.bf16.msra.mxu0 0
      %1919 = vmatprep.subr.bf16.mxu0 0
      %1920 = vmatpush2.bf16.msra.mxu0 0
      %1921 = vmatprep.mubr.bf16.mxu0 0
      %1922 = vmatmul.mubr.bf16.gmra.mxu0 %v1884
      %v1923 = vpop.f32.mrf.mxu0
      %v1924 = vadd.f32 0.0, %v1923
      %v1925 = vpop.f32.mrf.mxu0
      %v1926 = vpop.f32.mrf.mxu0
      %v1927 = vpop.f32.mrf.mxu0
      %1928 = vdwg.mxu0
      %1929 = vrot.lane.b32.xlu0 %v951, 64
      %v1930 = vpop.permute.xlu0 %1929
      %v1932 = vsel %vm1305, %v1300, 0
      %v1935 = vsel %vm1309, %v1930, 0
      %1937 = vmatprep.subr.bf16.mxu0 0
      %1938 = vmatpush1.bf16.msra.mxu0 0
      %1939 = vmatprep.subr.bf16.mxu0 0
      %1940 = vmatpush1.bf16.msra.mxu0 0
      %1941 = vmatprep.subr.bf16.mxu0 0
      %1942 = vmatpush1.bf16.msra.mxu0 0
      %1943 = vmatprep.subr.bf16.mxu0 0
      %1944 = vmatpush1.bf16.msra.mxu0 0
      %1945 = vmatprep.subr.bf16.mxu0 0
      %1946 = vmatpush1.bf16.msra.mxu0 0
      %1947 = vmatprep.subr.bf16.mxu0 0
      %1948 = vmatpush1.bf16.msra.mxu0 0
      %1949 = vmatprep.subr.bf16.mxu0 0
      %1950 = vmatpush1.bf16.msra.mxu0 0
      %1951 = vmatprep.subr.bf16.mxu0 0
      %1952 = vmatpush1.bf16.msra.mxu0 %v1935
      %1953 = vmatprep.subr.bf16.mxu0 0
      %1954 = vmatpush2.bf16.msra.mxu0 0
      %1955 = vmatprep.subr.bf16.mxu0 0
      %1956 = vmatpush2.bf16.msra.mxu0 0
      %1957 = vmatprep.subr.bf16.mxu0 0
      %1958 = vmatpush2.bf16.msra.mxu0 0
      %1959 = vmatprep.subr.bf16.mxu0 0
      %1960 = vmatpush2.bf16.msra.mxu0 0
      %1961 = vmatprep.subr.bf16.mxu0 0
      %1962 = vmatpush2.bf16.msra.mxu0 0
      %1963 = vmatprep.subr.bf16.mxu0 0
      %1964 = vmatpush2.bf16.msra.mxu0 0
      %1965 = vmatprep.subr.bf16.mxu0 0
      %1966 = vmatpush2.bf16.msra.mxu0 0
      %1967 = vmatprep.subr.bf16.mxu0 0
      %1968 = vmatpush2.bf16.msra.mxu0 0
      %1969 = vmatprep.mubr.bf16.mxu0 0
      %1970 = vmatmul.mubr.bf16.gmra.mxu0 %v1932
      %v1971 = vpop.f32.mrf.mxu0
      %v1972 = vadd.f32 0.0, %v1971
      %v1973 = vpop.f32.mrf.mxu0
      %v1974 = vpop.f32.mrf.mxu0
      %v1975 = vpop.f32.mrf.mxu0
      %1976 = vdwg.mxu0
      %1977 = vrot.lane.b32.xlu0 %v1006, 64
      %v1978 = vpop.permute.xlu0 %1977
      %v1980 = vsel %vm1305, %v1301, 0
      %v1983 = vsel %vm1309, %v1978, 0
      %1985 = vmatprep.subr.bf16.mxu0 0
      %1986 = vmatpush1.bf16.msra.mxu0 0
      %1987 = vmatprep.subr.bf16.mxu0 0
      %1988 = vmatpush1.bf16.msra.mxu0 0
      %1989 = vmatprep.subr.bf16.mxu0 0
      %1990 = vmatpush1.bf16.msra.mxu0 0
      %1991 = vmatprep.subr.bf16.mxu0 0
      %1992 = vmatpush1.bf16.msra.mxu0 0
      %1993 = vmatprep.subr.bf16.mxu0 0
      %1994 = vmatpush1.bf16.msra.mxu0 0
      %1995 = vmatprep.subr.bf16.mxu0 0
      %1996 = vmatpush1.bf16.msra.mxu0 0
      %1997 = vmatprep.subr.bf16.mxu0 0
      %1998 = vmatpush1.bf16.msra.mxu0 0
      %1999 = vmatprep.subr.bf16.mxu0 0
      %2000 = vmatpush1.bf16.msra.mxu0 %v1983
      %2001 = vmatprep.subr.bf16.mxu0 0
      %2002 = vmatpush2.bf16.msra.mxu0 0
      %2003 = vmatprep.subr.bf16.mxu0 0
      %2004 = vmatpush2.bf16.msra.mxu0 0
      %2005 = vmatprep.subr.bf16.mxu0 0
      %2006 = vmatpush2.bf16.msra.mxu0 0
      %2007 = vmatprep.subr.bf16.mxu0 0
      %2008 = vmatpush2.bf16.msra.mxu0 0
      %2009 = vmatprep.subr.bf16.mxu0 0
      %2010 = vmatpush2.bf16.msra.mxu0 0
      %2011 = vmatprep.subr.bf16.mxu0 0
      %2012 = vmatpush2.bf16.msra.mxu0 0
      %2013 = vmatprep.subr.bf16.mxu0 0
      %2014 = vmatpush2.bf16.msra.mxu0 0
      %2015 = vmatprep.subr.bf16.mxu0 0
      %2016 = vmatpush2.bf16.msra.mxu0 0
      %2017 = vmatprep.mubr.bf16.mxu0 0
      %2018 = vmatmul.mubr.bf16.gmra.mxu0 %v1980
      %v2019 = vpop.f32.mrf.mxu0
      %v2020 = vadd.f32 0.0, %v2019
      %v2021 = vpop.f32.mrf.mxu0
      %v2022 = vpop.f32.mrf.mxu0
      %v2023 = vpop.f32.mrf.mxu0
      %2024 = vdwg.mxu0
      %2025 = vrot.lane.b32.xlu0 %v1061, 64
      %v2026 = vpop.permute.xlu0 %2025
      %v2028 = vsel %vm1305, %v1302, 0
      %v2031 = vsel %vm1309, %v2026, 0
      %2033 = vmatprep.subr.bf16.mxu0 0
      %2034 = vmatpush1.bf16.msra.mxu0 0
      %2035 = vmatprep.subr.bf16.mxu0 0
      %2036 = vmatpush1.bf16.msra.mxu0 0
      %2037 = vmatprep.subr.bf16.mxu0 0
      %2038 = vmatpush1.bf16.msra.mxu0 0
      %2039 = vmatprep.subr.bf16.mxu0 0
      %2040 = vmatpush1.bf16.msra.mxu0 0
      %2041 = vmatprep.subr.bf16.mxu0 0
      %2042 = vmatpush1.bf16.msra.mxu0 0
      %2043 = vmatprep.subr.bf16.mxu0 0
      %2044 = vmatpush1.bf16.msra.mxu0 0
      %2045 = vmatprep.subr.bf16.mxu0 0
      %2046 = vmatpush1.bf16.msra.mxu0 0
      %2047 = vmatprep.subr.bf16.mxu0 0
      %2048 = vmatpush1.bf16.msra.mxu0 %v2031
      %2049 = vmatprep.subr.bf16.mxu0 0
      %2050 = vmatpush2.bf16.msra.mxu0 0
      %2051 = vmatprep.subr.bf16.mxu0 0
      %2052 = vmatpush2.bf16.msra.mxu0 0
      %2053 = vmatprep.subr.bf16.mxu0 0
      %2054 = vmatpush2.bf16.msra.mxu0 0
      %2055 = vmatprep.subr.bf16.mxu0 0
      %2056 = vmatpush2.bf16.msra.mxu0 0
      %2057 = vmatprep.subr.bf16.mxu0 0
      %2058 = vmatpush2.bf16.msra.mxu0 0
      %2059 = vmatprep.subr.bf16.mxu0 0
      %2060 = vmatpush2.bf16.msra.mxu0 0
      %2061 = vmatprep.subr.bf16.mxu0 0
      %2062 = vmatpush2.bf16.msra.mxu0 0
      %2063 = vmatprep.subr.bf16.mxu0 0
      %2064 = vmatpush2.bf16.msra.mxu0 0
      %2065 = vmatprep.mubr.bf16.mxu0 0
      %2066 = vmatmul.mubr.bf16.gmra.mxu0 %v2028
      %v2067 = vpop.f32.mrf.mxu0
      %v2068 = vadd.f32 0.0, %v2067
      %v2069 = vpop.f32.mrf.mxu0
      %v2070 = vpop.f32.mrf.mxu0
      %v2071 = vpop.f32.mrf.mxu0
      %2072 = vdwg.mxu0
      %s2073 = scalar_lea.vmem %s1, 4
      %v2074 = vld [vmem:[%s2073] sm:$0xf]
      %2075 = vrot.lane.b32.xlu0 %v235, 112
      %v2076 = vpop.permute.xlu0 %2075
      %2077 = vrot.lane.b32.xlu0 %v235, 80
      %v2078 = vpop.permute.xlu0 %2077
      %v2080 = vsel %vm238, %v2076, 0
      %v2083 = vsel %vm238, %v2078, 0
      %2085 = vmatprep.subr.bf16.mxu0 0
      %2086 = vmatpush1.bf16.xpose.msra.mxu0 0
      %2087 = vmatprep.subr.bf16.mxu0 0
      %2088 = vmatpush1.bf16.xpose.msra.mxu0 0
      %2089 = vmatprep.subr.bf16.mxu0 0
      %2090 = vmatpush1.bf16.xpose.msra.mxu0 0
      %2091 = vmatprep.subr.bf16.mxu0 0
      %2092 = vmatpush1.bf16.xpose.msra.mxu0 0
      %2093 = vmatprep.subr.bf16.mxu0 0
      %2094 = vmatpush1.bf16.xpose.msra.mxu0 0
      %2095 = vmatprep.subr.bf16.mxu0 0
      %2096 = vmatpush1.bf16.xpose.msra.mxu0 0
      %2097 = vmatprep.subr.bf16.mxu0 0
      %2098 = vmatpush1.bf16.xpose.msra.mxu0 0
      %2099 = vmatprep.subr.bf16.mxu0 0
      %2100 = vmatpush1.bf16.xpose.msra.mxu0 %v2083
      %2101 = vmatprep.subr.bf16.mxu0 0
      %2102 = vmatpush2.bf16.xpose.msra.mxu0 0
      %2103 = vmatprep.subr.bf16.mxu0 0
      %2104 = vmatpush2.bf16.xpose.msra.mxu0 0
      %2105 = vmatprep.subr.bf16.mxu0 0
      %2106 = vmatpush2.bf16.xpose.msra.mxu0 0
      %2107 = vmatprep.subr.bf16.mxu0 0
      %2108 = vmatpush2.bf16.xpose.msra.mxu0 0
      %2109 = vmatprep.subr.bf16.mxu0 0
      %2110 = vmatpush2.bf16.xpose.msra.mxu0 0
      %2111 = vmatprep.subr.bf16.mxu0 0
      %2112 = vmatpush2.bf16.xpose.msra.mxu0 0
      %2113 = vmatprep.subr.bf16.mxu0 0
      %2114 = vmatpush2.bf16.xpose.msra.mxu0 0
      %2115 = vmatprep.subr.bf16.mxu0 0
      %2116 = vmatpush2.bf16.xpose.msra.mxu0 0
      %2117 = vmatprep.mubr.bf16.mxu0 0
      %2118 = vmatmul.mubr.bf16.gmra.mxu0 %v2080
      %v2119 = vpop.f32.mrf.mxu0
      %v2120 = vadd.f32 %v2074, %v2119
      %v2121 = vpop.f32.mrf.mxu0
      %v2122 = vpop.f32.mrf.mxu0
      %v2123 = vpop.f32.mrf.mxu0
      %2124 = vdwg.mxu0
      %2125 = vrot.lane.b32.xlu0 %v291, 112
      %v2126 = vpop.permute.xlu0 %2125
      %2127 = vrot.lane.b32.xlu0 %v291, 80
      %v2128 = vpop.permute.xlu0 %2127
      %v2130 = vsel %vm238, %v2126, 0
      %v2133 = vsel %vm238, %v2128, 0
      %2135 = vmatprep.subr.bf16.mxu0 0
      %2136 = vmatpush1.bf16.xpose.msra.mxu0 0
      %2137 = vmatprep.subr.bf16.mxu0 0
      %2138 = vmatpush1.bf16.xpose.msra.mxu0 0
      %2139 = vmatprep.subr.bf16.mxu0 0
      %2140 = vmatpush1.bf16.xpose.msra.mxu0 0
      %2141 = vmatprep.subr.bf16.mxu0 0
      %2142 = vmatpush1.bf16.xpose.msra.mxu0 0
      %2143 = vmatprep.subr.bf16.mxu0 0
      %2144 = vmatpush1.bf16.xpose.msra.mxu0 0
      %2145 = vmatprep.subr.bf16.mxu0 0
      %2146 = vmatpush1.bf16.xpose.msra.mxu0 0
      %2147 = vmatprep.subr.bf16.mxu0 0
      %2148 = vmatpush1.bf16.xpose.msra.mxu0 0
      %2149 = vmatprep.subr.bf16.mxu0 0
      %2150 = vmatpush1.bf16.xpose.msra.mxu0 %v2133
      %2151 = vmatprep.subr.bf16.mxu0 0
      %2152 = vmatpush2.bf16.xpose.msra.mxu0 0
      %2153 = vmatprep.subr.bf16.mxu0 0
      %2154 = vmatpush2.bf16.xpose.msra.mxu0 0
      %2155 = vmatprep.subr.bf16.mxu0 0
      %2156 = vmatpush2.bf16.xpose.msra.mxu0 0
      %2157 = vmatprep.subr.bf16.mxu0 0
      %2158 = vmatpush2.bf16.xpose.msra.mxu0 0
      %2159 = vmatprep.subr.bf16.mxu0 0
      %2160 = vmatpush2.bf16.xpose.msra.mxu0 0
      %2161 = vmatprep.subr.bf16.mxu0 0
      %2162 = vmatpush2.bf16.xpose.msra.mxu0 0
      %2163 = vmatprep.subr.bf16.mxu0 0
      %2164 = vmatpush2.bf16.xpose.msra.mxu0 0
      %2165 = vmatprep.subr.bf16.mxu0 0
      %2166 = vmatpush2.bf16.xpose.msra.mxu0 0
      %2167 = vmatprep.mubr.bf16.mxu0 0
      %2168 = vmatmul.mubr.bf16.gmra.mxu0 %v2130
      %v2169 = vpop.f32.mrf.mxu0
      %v2170 = vadd.f32 %v2074, %v2169
      %v2171 = vpop.f32.mrf.mxu0
      %v2172 = vpop.f32.mrf.mxu0
      %v2173 = vpop.f32.mrf.mxu0
      %2174 = vdwg.mxu0
      %2175 = vrot.lane.b32.xlu0 %v346, 112
      %v2176 = vpop.permute.xlu0 %2175
      %2177 = vrot.lane.b32.xlu0 %v346, 80
      %v2178 = vpop.permute.xlu0 %2177
      %v2180 = vsel %vm238, %v2176, 0
      %v2183 = vsel %vm238, %v2178, 0
      %2185 = vmatprep.subr.bf16.mxu0 0
      %2186 = vmatpush1.bf16.xpose.msra.mxu0 0
      %2187 = vmatprep.subr.bf16.mxu0 0
      %2188 = vmatpush1.bf16.xpose.msra.mxu0 0
      %2189 = vmatprep.subr.bf16.mxu0 0
      %2190 = vmatpush1.bf16.xpose.msra.mxu0 0
      %2191 = vmatprep.subr.bf16.mxu0 0
      %2192 = vmatpush1.bf16.xpose.msra.mxu0 0
      %2193 = vmatprep.subr.bf16.mxu0 0
      %2194 = vmatpush1.bf16.xpose.msra.mxu0 0
      %2195 = vmatprep.subr.bf16.mxu0 0
      %2196 = vmatpush1.bf16.xpose.msra.mxu0 0
      %2197 = vmatprep.subr.bf16.mxu0 0
      %2198 = vmatpush1.bf16.xpose.msra.mxu0 0
      %2199 = vmatprep.subr.bf16.mxu0 0
      %2200 = vmatpush1.bf16.xpose.msra.mxu0 %v2183
      %2201 = vmatprep.subr.bf16.mxu0 0
      %2202 = vmatpush2.bf16.xpose.msra.mxu0 0
      %2203 = vmatprep.subr.bf16.mxu0 0
      %2204 = vmatpush2.bf16.xpose.msra.mxu0 0
      %2205 = vmatprep.subr.bf16.mxu0 0
      %2206 = vmatpush2.bf16.xpose.msra.mxu0 0
      %2207 = vmatprep.subr.bf16.mxu0 0
      %2208 = vmatpush2.bf16.xpose.msra.mxu0 0
      %2209 = vmatprep.subr.bf16.mxu0 0
      %2210 = vmatpush2.bf16.xpose.msra.mxu0 0
      %2211 = vmatprep.subr.bf16.mxu0 0
      %2212 = vmatpush2.bf16.xpose.msra.mxu0 0
      %2213 = vmatprep.subr.bf16.mxu0 0
      %2214 = vmatpush2.bf16.xpose.msra.mxu0 0
      %2215 = vmatprep.subr.bf16.mxu0 0
      %2216 = vmatpush2.bf16.xpose.msra.mxu0 0
      %2217 = vmatprep.mubr.bf16.mxu0 0
      %2218 = vmatmul.mubr.bf16.gmra.mxu0 %v2180
      %v2219 = vpop.f32.mrf.mxu0
      %v2220 = vadd.f32 %v2074, %v2219
      %v2221 = vpop.f32.mrf.mxu0
      %v2222 = vpop.f32.mrf.mxu0
      %v2223 = vpop.f32.mrf.mxu0
      %2224 = vdwg.mxu0
      %2225 = vrot.lane.b32.xlu0 %v401, 112
      %v2226 = vpop.permute.xlu0 %2225
      %2227 = vrot.lane.b32.xlu0 %v401, 80
      %v2228 = vpop.permute.xlu0 %2227
      %v2230 = vsel %vm238, %v2226, 0
      %v2233 = vsel %vm238, %v2228, 0
      %2235 = vmatprep.subr.bf16.mxu0 0
      %2236 = vmatpush1.bf16.xpose.msra.mxu0 0
      %2237 = vmatprep.subr.bf16.mxu0 0
      %2238 = vmatpush1.bf16.xpose.msra.mxu0 0
      %2239 = vmatprep.subr.bf16.mxu0 0
      %2240 = vmatpush1.bf16.xpose.msra.mxu0 0
      %2241 = vmatprep.subr.bf16.mxu0 0
      %2242 = vmatpush1.bf16.xpose.msra.mxu0 0
      %2243 = vmatprep.subr.bf16.mxu0 0
      %2244 = vmatpush1.bf16.xpose.msra.mxu0 0
      %2245 = vmatprep.subr.bf16.mxu0 0
      %2246 = vmatpush1.bf16.xpose.msra.mxu0 0
      %2247 = vmatprep.subr.bf16.mxu0 0
      %2248 = vmatpush1.bf16.xpose.msra.mxu0 0
      %2249 = vmatprep.subr.bf16.mxu0 0
      %2250 = vmatpush1.bf16.xpose.msra.mxu0 %v2233
      %2251 = vmatprep.subr.bf16.mxu0 0
      %2252 = vmatpush2.bf16.xpose.msra.mxu0 0
      %2253 = vmatprep.subr.bf16.mxu0 0
      %2254 = vmatpush2.bf16.xpose.msra.mxu0 0
      %2255 = vmatprep.subr.bf16.mxu0 0
      %2256 = vmatpush2.bf16.xpose.msra.mxu0 0
      %2257 = vmatprep.subr.bf16.mxu0 0
      %2258 = vmatpush2.bf16.xpose.msra.mxu0 0
      %2259 = vmatprep.subr.bf16.mxu0 0
      %2260 = vmatpush2.bf16.xpose.msra.mxu0 0
      %2261 = vmatprep.subr.bf16.mxu0 0
      %2262 = vmatpush2.bf16.xpose.msra.mxu0 0
      %2263 = vmatprep.subr.bf16.mxu0 0
      %2264 = vmatpush2.bf16.xpose.msra.mxu0 0
      %2265 = vmatprep.subr.bf16.mxu0 0
      %2266 = vmatpush2.bf16.xpose.msra.mxu0 0
      %2267 = vmatprep.mubr.bf16.mxu0 0
      %2268 = vmatmul.mubr.bf16.gmra.mxu0 %v2230
      %v2269 = vpop.f32.mrf.mxu0
      %v2270 = vadd.f32 %v2074, %v2269
      %v2271 = vpop.f32.mrf.mxu0
      %v2272 = vpop.f32.mrf.mxu0
      %v2273 = vpop.f32.mrf.mxu0
      %2274 = vdwg.mxu0
      %2275 = vrot.lane.b32.xlu0 %v456, 112
      %v2276 = vpop.permute.xlu0 %2275
      %2277 = vrot.lane.b32.xlu0 %v456, 80
      %v2278 = vpop.permute.xlu0 %2277
      %v2280 = vsel %vm238, %v2276, 0
      %v2283 = vsel %vm238, %v2278, 0
      %2285 = vmatprep.subr.bf16.mxu0 0
      %2286 = vmatpush1.bf16.xpose.msra.mxu0 0
      %2287 = vmatprep.subr.bf16.mxu0 0
      %2288 = vmatpush1.bf16.xpose.msra.mxu0 0
      %2289 = vmatprep.subr.bf16.mxu0 0
      %2290 = vmatpush1.bf16.xpose.msra.mxu0 0
      %2291 = vmatprep.subr.bf16.mxu0 0
      %2292 = vmatpush1.bf16.xpose.msra.mxu0 0
      %2293 = vmatprep.subr.bf16.mxu0 0
      %2294 = vmatpush1.bf16.xpose.msra.mxu0 0
      %2295 = vmatprep.subr.bf16.mxu0 0
      %2296 = vmatpush1.bf16.xpose.msra.mxu0 0
      %2297 = vmatprep.subr.bf16.mxu0 0
      %2298 = vmatpush1.bf16.xpose.msra.mxu0 0
      %2299 = vmatprep.subr.bf16.mxu0 0
      %2300 = vmatpush1.bf16.xpose.msra.mxu0 %v2283
      %2301 = vmatprep.subr.bf16.mxu0 0
      %2302 = vmatpush2.bf16.xpose.msra.mxu0 0
      %2303 = vmatprep.subr.bf16.mxu0 0
      %2304 = vmatpush2.bf16.xpose.msra.mxu0 0
      %2305 = vmatprep.subr.bf16.mxu0 0
      %2306 = vmatpush2.bf16.xpose.msra.mxu0 0
      %2307 = vmatprep.subr.bf16.mxu0 0
      %2308 = vmatpush2.bf16.xpose.msra.mxu0 0
      %2309 = vmatprep.subr.bf16.mxu0 0
      %2310 = vmatpush2.bf16.xpose.msra.mxu0 0
      %2311 = vmatprep.subr.bf16.mxu0 0
      %2312 = vmatpush2.bf16.xpose.msra.mxu0 0
      %2313 = vmatprep.subr.bf16.mxu0 0
      %2314 = vmatpush2.bf16.xpose.msra.mxu0 0
      %2315 = vmatprep.subr.bf16.mxu0 0
      %2316 = vmatpush2.bf16.xpose.msra.mxu0 0
      %2317 = vmatprep.mubr.bf16.mxu0 0
      %2318 = vmatmul.mubr.bf16.gmra.mxu0 %v2280
      %v2319 = vpop.f32.mrf.mxu0
      %v2320 = vadd.f32 %v2074, %v2319
      %v2321 = vpop.f32.mrf.mxu0
      %v2322 = vpop.f32.mrf.mxu0
      %v2323 = vpop.f32.mrf.mxu0
      %2324 = vdwg.mxu0
      %2325 = vrot.lane.b32.xlu0 %v511, 112
      %v2326 = vpop.permute.xlu0 %2325
      %2327 = vrot.lane.b32.xlu0 %v511, 80
      %v2328 = vpop.permute.xlu0 %2327
      %v2330 = vsel %vm238, %v2326, 0
      %v2333 = vsel %vm238, %v2328, 0
      %2335 = vmatprep.subr.bf16.mxu0 0
      %2336 = vmatpush1.bf16.xpose.msra.mxu0 0
      %2337 = vmatprep.subr.bf16.mxu0 0
      %2338 = vmatpush1.bf16.xpose.msra.mxu0 0
      %2339 = vmatprep.subr.bf16.mxu0 0
      %2340 = vmatpush1.bf16.xpose.msra.mxu0 0
      %2341 = vmatprep.subr.bf16.mxu0 0
      %2342 = vmatpush1.bf16.xpose.msra.mxu0 0
      %2343 = vmatprep.subr.bf16.mxu0 0
      %2344 = vmatpush1.bf16.xpose.msra.mxu0 0
      %2345 = vmatprep.subr.bf16.mxu0 0
      %2346 = vmatpush1.bf16.xpose.msra.mxu0 0
      %2347 = vmatprep.subr.bf16.mxu0 0
      %2348 = vmatpush1.bf16.xpose.msra.mxu0 0
      %2349 = vmatprep.subr.bf16.mxu0 0
      %2350 = vmatpush1.bf16.xpose.msra.mxu0 %v2333
      %2351 = vmatprep.subr.bf16.mxu0 0
      %2352 = vmatpush2.bf16.xpose.msra.mxu0 0
      %2353 = vmatprep.subr.bf16.mxu0 0
      %2354 = vmatpush2.bf16.xpose.msra.mxu0 0
      %2355 = vmatprep.subr.bf16.mxu0 0
      %2356 = vmatpush2.bf16.xpose.msra.mxu0 0
      %2357 = vmatprep.subr.bf16.mxu0 0
      %2358 = vmatpush2.bf16.xpose.msra.mxu0 0
      %2359 = vmatprep.subr.bf16.mxu0 0
      %2360 = vmatpush2.bf16.xpose.msra.mxu0 0
      %2361 = vmatprep.subr.bf16.mxu0 0
      %2362 = vmatpush2.bf16.xpose.msra.mxu0 0
      %2363 = vmatprep.subr.bf16.mxu0 0
      %2364 = vmatpush2.bf16.xpose.msra.mxu0 0
      %2365 = vmatprep.subr.bf16.mxu0 0
      %2366 = vmatpush2.bf16.xpose.msra.mxu0 0
      %2367 = vmatprep.mubr.bf16.mxu0 0
      %2368 = vmatmul.mubr.bf16.gmra.mxu0 %v2330
      %v2369 = vpop.f32.mrf.mxu0
      %v2370 = vadd.f32 %v2074, %v2369
      %v2371 = vpop.f32.mrf.mxu0
      %v2372 = vpop.f32.mrf.mxu0
      %v2373 = vpop.f32.mrf.mxu0
      %2374 = vdwg.mxu0
      %2375 = vrot.lane.b32.xlu0 %v566, 112
      %v2376 = vpop.permute.xlu0 %2375
      %2377 = vrot.lane.b32.xlu0 %v566, 80
      %v2378 = vpop.permute.xlu0 %2377
      %v2380 = vsel %vm238, %v2376, 0
      %v2383 = vsel %vm238, %v2378, 0
      %2385 = vmatprep.subr.bf16.mxu0 0
      %2386 = vmatpush1.bf16.xpose.msra.mxu0 0
      %2387 = vmatprep.subr.bf16.mxu0 0
      %2388 = vmatpush1.bf16.xpose.msra.mxu0 0
      %2389 = vmatprep.subr.bf16.mxu0 0
      %2390 = vmatpush1.bf16.xpose.msra.mxu0 0
      %2391 = vmatprep.subr.bf16.mxu0 0
      %2392 = vmatpush1.bf16.xpose.msra.mxu0 0
      %2393 = vmatprep.subr.bf16.mxu0 0
      %2394 = vmatpush1.bf16.xpose.msra.mxu0 0
      %2395 = vmatprep.subr.bf16.mxu0 0
      %2396 = vmatpush1.bf16.xpose.msra.mxu0 0
      %2397 = vmatprep.subr.bf16.mxu0 0
      %2398 = vmatpush1.bf16.xpose.msra.mxu0 0
      %2399 = vmatprep.subr.bf16.mxu0 0
      %2400 = vmatpush1.bf16.xpose.msra.mxu0 %v2383
      %2401 = vmatprep.subr.bf16.mxu0 0
      %2402 = vmatpush2.bf16.xpose.msra.mxu0 0
      %2403 = vmatprep.subr.bf16.mxu0 0
      %2404 = vmatpush2.bf16.xpose.msra.mxu0 0
      %2405 = vmatprep.subr.bf16.mxu0 0
      %2406 = vmatpush2.bf16.xpose.msra.mxu0 0
      %2407 = vmatprep.subr.bf16.mxu0 0
      %2408 = vmatpush2.bf16.xpose.msra.mxu0 0
      %2409 = vmatprep.subr.bf16.mxu0 0
      %2410 = vmatpush2.bf16.xpose.msra.mxu0 0
      %2411 = vmatprep.subr.bf16.mxu0 0
      %2412 = vmatpush2.bf16.xpose.msra.mxu0 0
      %2413 = vmatprep.subr.bf16.mxu0 0
      %2414 = vmatpush2.bf16.xpose.msra.mxu0 0
      %2415 = vmatprep.subr.bf16.mxu0 0
      %2416 = vmatpush2.bf16.xpose.msra.mxu0 0
      %2417 = vmatprep.mubr.bf16.mxu0 0
      %2418 = vmatmul.mubr.bf16.gmra.mxu0 %v2380
      %v2419 = vpop.f32.mrf.mxu0
      %v2420 = vadd.f32 %v2074, %v2419
      %v2421 = vpop.f32.mrf.mxu0
      %v2422 = vpop.f32.mrf.mxu0
      %v2423 = vpop.f32.mrf.mxu0
      %2424 = vdwg.mxu0
      %2425 = vrot.lane.b32.xlu0 %v621, 112
      %v2426 = vpop.permute.xlu0 %2425
      %2427 = vrot.lane.b32.xlu0 %v621, 80
      %v2428 = vpop.permute.xlu0 %2427
      %v2430 = vsel %vm238, %v2426, 0
      %v2433 = vsel %vm238, %v2428, 0
      %2435 = vmatprep.subr.bf16.mxu0 0
      %2436 = vmatpush1.bf16.xpose.msra.mxu0 0
      %2437 = vmatprep.subr.bf16.mxu0 0
      %2438 = vmatpush1.bf16.xpose.msra.mxu0 0
      %2439 = vmatprep.subr.bf16.mxu0 0
      %2440 = vmatpush1.bf16.xpose.msra.mxu0 0
      %2441 = vmatprep.subr.bf16.mxu0 0
      %2442 = vmatpush1.bf16.xpose.msra.mxu0 0
      %2443 = vmatprep.subr.bf16.mxu0 0
      %2444 = vmatpush1.bf16.xpose.msra.mxu0 0
      %2445 = vmatprep.subr.bf16.mxu0 0
      %2446 = vmatpush1.bf16.xpose.msra.mxu0 0
      %2447 = vmatprep.subr.bf16.mxu0 0
      %2448 = vmatpush1.bf16.xpose.msra.mxu0 0
      %2449 = vmatprep.subr.bf16.mxu0 0
      %2450 = vmatpush1.bf16.xpose.msra.mxu0 %v2433
      %2451 = vmatprep.subr.bf16.mxu0 0
      %2452 = vmatpush2.bf16.xpose.msra.mxu0 0
      %2453 = vmatprep.subr.bf16.mxu0 0
      %2454 = vmatpush2.bf16.xpose.msra.mxu0 0
      %2455 = vmatprep.subr.bf16.mxu0 0
      %2456 = vmatpush2.bf16.xpose.msra.mxu0 0
      %2457 = vmatprep.subr.bf16.mxu0 0
      %2458 = vmatpush2.bf16.xpose.msra.mxu0 0
      %2459 = vmatprep.subr.bf16.mxu0 0
      %2460 = vmatpush2.bf16.xpose.msra.mxu0 0
      %2461 = vmatprep.subr.bf16.mxu0 0
      %2462 = vmatpush2.bf16.xpose.msra.mxu0 0
      %2463 = vmatprep.subr.bf16.mxu0 0
      %2464 = vmatpush2.bf16.xpose.msra.mxu0 0
      %2465 = vmatprep.subr.bf16.mxu0 0
      %2466 = vmatpush2.bf16.xpose.msra.mxu0 0
      %2467 = vmatprep.mubr.bf16.mxu0 0
      %2468 = vmatmul.mubr.bf16.gmra.mxu0 %v2430
      %v2469 = vpop.f32.mrf.mxu0
      %v2470 = vadd.f32 %v2074, %v2469
      %v2471 = vpop.f32.mrf.mxu0
      %v2472 = vpop.f32.mrf.mxu0
      %v2473 = vpop.f32.mrf.mxu0
      %2474 = vdwg.mxu0
      %2475 = vrot.lane.b32.xlu0 %v676, 112
      %v2476 = vpop.permute.xlu0 %2475
      %2477 = vrot.lane.b32.xlu0 %v676, 80
      %v2478 = vpop.permute.xlu0 %2477
      %v2480 = vsel %vm238, %v2476, 0
      %v2483 = vsel %vm238, %v2478, 0
      %2485 = vmatprep.subr.bf16.mxu0 0
      %2486 = vmatpush1.bf16.xpose.msra.mxu0 0
      %2487 = vmatprep.subr.bf16.mxu0 0
      %2488 = vmatpush1.bf16.xpose.msra.mxu0 0
      %2489 = vmatprep.subr.bf16.mxu0 0
      %2490 = vmatpush1.bf16.xpose.msra.mxu0 0
      %2491 = vmatprep.subr.bf16.mxu0 0
      %2492 = vmatpush1.bf16.xpose.msra.mxu0 0
      %2493 = vmatprep.subr.bf16.mxu0 0
      %2494 = vmatpush1.bf16.xpose.msra.mxu0 0
      %2495 = vmatprep.subr.bf16.mxu0 0
      %2496 = vmatpush1.bf16.xpose.msra.mxu0 0
      %2497 = vmatprep.subr.bf16.mxu0 0
      %2498 = vmatpush1.bf16.xpose.msra.mxu0 0
      %2499 = vmatprep.subr.bf16.mxu0 0
      %2500 = vmatpush1.bf16.xpose.msra.mxu0 %v2483
      %2501 = vmatprep.subr.bf16.mxu0 0
      %2502 = vmatpush2.bf16.xpose.msra.mxu0 0
      %2503 = vmatprep.subr.bf16.mxu0 0
      %2504 = vmatpush2.bf16.xpose.msra.mxu0 0
      %2505 = vmatprep.subr.bf16.mxu0 0
      %2506 = vmatpush2.bf16.xpose.msra.mxu0 0
      %2507 = vmatprep.subr.bf16.mxu0 0
      %2508 = vmatpush2.bf16.xpose.msra.mxu0 0
      %2509 = vmatprep.subr.bf16.mxu0 0
      %2510 = vmatpush2.bf16.xpose.msra.mxu0 0
      %2511 = vmatprep.subr.bf16.mxu0 0
      %2512 = vmatpush2.bf16.xpose.msra.mxu0 0
      %2513 = vmatprep.subr.bf16.mxu0 0
      %2514 = vmatpush2.bf16.xpose.msra.mxu0 0
      %2515 = vmatprep.subr.bf16.mxu0 0
      %2516 = vmatpush2.bf16.xpose.msra.mxu0 0
      %2517 = vmatprep.mubr.bf16.mxu0 0
      %2518 = vmatmul.mubr.bf16.gmra.mxu0 %v2480
      %v2519 = vpop.f32.mrf.mxu0
      %v2520 = vadd.f32 %v2074, %v2519
      %v2521 = vpop.f32.mrf.mxu0
      %v2522 = vpop.f32.mrf.mxu0
      %v2523 = vpop.f32.mrf.mxu0
      %2524 = vdwg.mxu0
      %2525 = vrot.lane.b32.xlu0 %v731, 112
      %v2526 = vpop.permute.xlu0 %2525
      %2527 = vrot.lane.b32.xlu0 %v731, 80
      %v2528 = vpop.permute.xlu0 %2527
      %v2530 = vsel %vm238, %v2526, 0
      %v2533 = vsel %vm238, %v2528, 0
      %2535 = vmatprep.subr.bf16.mxu0 0
      %2536 = vmatpush1.bf16.xpose.msra.mxu0 0
      %2537 = vmatprep.subr.bf16.mxu0 0
      %2538 = vmatpush1.bf16.xpose.msra.mxu0 0
      %2539 = vmatprep.subr.bf16.mxu0 0
      %2540 = vmatpush1.bf16.xpose.msra.mxu0 0
      %2541 = vmatprep.subr.bf16.mxu0 0
      %2542 = vmatpush1.bf16.xpose.msra.mxu0 0
      %2543 = vmatprep.subr.bf16.mxu0 0
      %2544 = vmatpush1.bf16.xpose.msra.mxu0 0
      %2545 = vmatprep.subr.bf16.mxu0 0
      %2546 = vmatpush1.bf16.xpose.msra.mxu0 0
      %2547 = vmatprep.subr.bf16.mxu0 0
      %2548 = vmatpush1.bf16.xpose.msra.mxu0 0
      %2549 = vmatprep.subr.bf16.mxu0 0
      %2550 = vmatpush1.bf16.xpose.msra.mxu0 %v2533
      %2551 = vmatprep.subr.bf16.mxu0 0
      %2552 = vmatpush2.bf16.xpose.msra.mxu0 0
      %2553 = vmatprep.subr.bf16.mxu0 0
      %2554 = vmatpush2.bf16.xpose.msra.mxu0 0
      %2555 = vmatprep.subr.bf16.mxu0 0
      %2556 = vmatpush2.bf16.xpose.msra.mxu0 0
      %2557 = vmatprep.subr.bf16.mxu0 0
      %2558 = vmatpush2.bf16.xpose.msra.mxu0 0
      %2559 = vmatprep.subr.bf16.mxu0 0
      %2560 = vmatpush2.bf16.xpose.msra.mxu0 0
      %2561 = vmatprep.subr.bf16.mxu0 0
      %2562 = vmatpush2.bf16.xpose.msra.mxu0 0
      %2563 = vmatprep.subr.bf16.mxu0 0
      %2564 = vmatpush2.bf16.xpose.msra.mxu0 0
      %2565 = vmatprep.subr.bf16.mxu0 0
      %2566 = vmatpush2.bf16.xpose.msra.mxu0 0
      %2567 = vmatprep.mubr.bf16.mxu0 0
      %2568 = vmatmul.mubr.bf16.gmra.mxu0 %v2530
      %v2569 = vpop.f32.mrf.mxu0
      %v2570 = vadd.f32 %v2074, %v2569
      %v2571 = vpop.f32.mrf.mxu0
      %v2572 = vpop.f32.mrf.mxu0
      %v2573 = vpop.f32.mrf.mxu0
      %2574 = vdwg.mxu0
      %2575 = vrot.lane.b32.xlu0 %v786, 112
      %v2576 = vpop.permute.xlu0 %2575
      %2577 = vrot.lane.b32.xlu0 %v786, 80
      %v2578 = vpop.permute.xlu0 %2577
      %v2580 = vsel %vm238, %v2576, 0
      %v2583 = vsel %vm238, %v2578, 0
      %2585 = vmatprep.subr.bf16.mxu0 0
      %2586 = vmatpush1.bf16.xpose.msra.mxu0 0
      %2587 = vmatprep.subr.bf16.mxu0 0
      %2588 = vmatpush1.bf16.xpose.msra.mxu0 0
      %2589 = vmatprep.subr.bf16.mxu0 0
      %2590 = vmatpush1.bf16.xpose.msra.mxu0 0
      %2591 = vmatprep.subr.bf16.mxu0 0
      %2592 = vmatpush1.bf16.xpose.msra.mxu0 0
      %2593 = vmatprep.subr.bf16.mxu0 0
      %2594 = vmatpush1.bf16.xpose.msra.mxu0 0
      %2595 = vmatprep.subr.bf16.mxu0 0
      %2596 = vmatpush1.bf16.xpose.msra.mxu0 0
      %2597 = vmatprep.subr.bf16.mxu0 0
      %2598 = vmatpush1.bf16.xpose.msra.mxu0 0
      %2599 = vmatprep.subr.bf16.mxu0 0
      %2600 = vmatpush1.bf16.xpose.msra.mxu0 %v2583
      %2601 = vmatprep.subr.bf16.mxu0 0
      %2602 = vmatpush2.bf16.xpose.msra.mxu0 0
      %2603 = vmatprep.subr.bf16.mxu0 0
      %2604 = vmatpush2.bf16.xpose.msra.mxu0 0
      %2605 = vmatprep.subr.bf16.mxu0 0
      %2606 = vmatpush2.bf16.xpose.msra.mxu0 0
      %2607 = vmatprep.subr.bf16.mxu0 0
      %2608 = vmatpush2.bf16.xpose.msra.mxu0 0
      %2609 = vmatprep.subr.bf16.mxu0 0
      %2610 = vmatpush2.bf16.xpose.msra.mxu0 0
      %2611 = vmatprep.subr.bf16.mxu0 0
      %2612 = vmatpush2.bf16.xpose.msra.mxu0 0
      %2613 = vmatprep.subr.bf16.mxu0 0
      %2614 = vmatpush2.bf16.xpose.msra.mxu0 0
      %2615 = vmatprep.subr.bf16.mxu0 0
      %2616 = vmatpush2.bf16.xpose.msra.mxu0 0
      %2617 = vmatprep.mubr.bf16.mxu0 0
      %2618 = vmatmul.mubr.bf16.gmra.mxu0 %v2580
      %v2619 = vpop.f32.mrf.mxu0
      %v2620 = vadd.f32 %v2074, %v2619
      %v2621 = vpop.f32.mrf.mxu0
      %v2622 = vpop.f32.mrf.mxu0
      %v2623 = vpop.f32.mrf.mxu0
      %2624 = vdwg.mxu0
      %2625 = vrot.lane.b32.xlu0 %v841, 112
      %v2626 = vpop.permute.xlu0 %2625
      %2627 = vrot.lane.b32.xlu0 %v841, 80
      %v2628 = vpop.permute.xlu0 %2627
      %v2630 = vsel %vm238, %v2626, 0
      %v2633 = vsel %vm238, %v2628, 0
      %2635 = vmatprep.subr.bf16.mxu0 0
      %2636 = vmatpush1.bf16.xpose.msra.mxu0 0
      %2637 = vmatprep.subr.bf16.mxu0 0
      %2638 = vmatpush1.bf16.xpose.msra.mxu0 0
      %2639 = vmatprep.subr.bf16.mxu0 0
      %2640 = vmatpush1.bf16.xpose.msra.mxu0 0
      %2641 = vmatprep.subr.bf16.mxu0 0
      %2642 = vmatpush1.bf16.xpose.msra.mxu0 0
      %2643 = vmatprep.subr.bf16.mxu0 0
      %2644 = vmatpush1.bf16.xpose.msra.mxu0 0
      %2645 = vmatprep.subr.bf16.mxu0 0
      %2646 = vmatpush1.bf16.xpose.msra.mxu0 0
      %2647 = vmatprep.subr.bf16.mxu0 0
      %2648 = vmatpush1.bf16.xpose.msra.mxu0 0
      %2649 = vmatprep.subr.bf16.mxu0 0
      %2650 = vmatpush1.bf16.xpose.msra.mxu0 %v2633
      %2651 = vmatprep.subr.bf16.mxu0 0
      %2652 = vmatpush2.bf16.xpose.msra.mxu0 0
      %2653 = vmatprep.subr.bf16.mxu0 0
      %2654 = vmatpush2.bf16.xpose.msra.mxu0 0
      %2655 = vmatprep.subr.bf16.mxu0 0
      %2656 = vmatpush2.bf16.xpose.msra.mxu0 0
      %2657 = vmatprep.subr.bf16.mxu0 0
      %2658 = vmatpush2.bf16.xpose.msra.mxu0 0
      %2659 = vmatprep.subr.bf16.mxu0 0
      %2660 = vmatpush2.bf16.xpose.msra.mxu0 0
      %2661 = vmatprep.subr.bf16.mxu0 0
      %2662 = vmatpush2.bf16.xpose.msra.mxu0 0
      %2663 = vmatprep.subr.bf16.mxu0 0
      %2664 = vmatpush2.bf16.xpose.msra.mxu0 0
      %2665 = vmatprep.subr.bf16.mxu0 0
      %2666 = vmatpush2.bf16.xpose.msra.mxu0 0
      %2667 = vmatprep.mubr.bf16.mxu0 0
      %2668 = vmatmul.mubr.bf16.gmra.mxu0 %v2630
      %v2669 = vpop.f32.mrf.mxu0
      %v2670 = vadd.f32 %v2074, %v2669
      %v2671 = vpop.f32.mrf.mxu0
      %v2672 = vpop.f32.mrf.mxu0
      %v2673 = vpop.f32.mrf.mxu0
      %2674 = vdwg.mxu0
      %2675 = vrot.lane.b32.xlu0 %v896, 112
      %v2676 = vpop.permute.xlu0 %2675
      %2677 = vrot.lane.b32.xlu0 %v896, 80
      %v2678 = vpop.permute.xlu0 %2677
      %v2680 = vsel %vm238, %v2676, 0
      %v2683 = vsel %vm238, %v2678, 0
      %2685 = vmatprep.subr.bf16.mxu0 0
      %2686 = vmatpush1.bf16.xpose.msra.mxu0 0
      %2687 = vmatprep.subr.bf16.mxu0 0
      %2688 = vmatpush1.bf16.xpose.msra.mxu0 0
      %2689 = vmatprep.subr.bf16.mxu0 0
      %2690 = vmatpush1.bf16.xpose.msra.mxu0 0
      %2691 = vmatprep.subr.bf16.mxu0 0
      %2692 = vmatpush1.bf16.xpose.msra.mxu0 0
      %2693 = vmatprep.subr.bf16.mxu0 0
      %2694 = vmatpush1.bf16.xpose.msra.mxu0 0
      %2695 = vmatprep.subr.bf16.mxu0 0
      %2696 = vmatpush1.bf16.xpose.msra.mxu0 0
      %2697 = vmatprep.subr.bf16.mxu0 0
      %2698 = vmatpush1.bf16.xpose.msra.mxu0 0
      %2699 = vmatprep.subr.bf16.mxu0 0
      %2700 = vmatpush1.bf16.xpose.msra.mxu0 %v2683
      %2701 = vmatprep.subr.bf16.mxu0 0
      %2702 = vmatpush2.bf16.xpose.msra.mxu0 0
      %2703 = vmatprep.subr.bf16.mxu0 0
      %2704 = vmatpush2.bf16.xpose.msra.mxu0 0
      %2705 = vmatprep.subr.bf16.mxu0 0
      %2706 = vmatpush2.bf16.xpose.msra.mxu0 0
      %2707 = vmatprep.subr.bf16.mxu0 0
      %2708 = vmatpush2.bf16.xpose.msra.mxu0 0
      %2709 = vmatprep.subr.bf16.mxu0 0
      %2710 = vmatpush2.bf16.xpose.msra.mxu0 0
      %2711 = vmatprep.subr.bf16.mxu0 0
      %2712 = vmatpush2.bf16.xpose.msra.mxu0 0
      %2713 = vmatprep.subr.bf16.mxu0 0
      %2714 = vmatpush2.bf16.xpose.msra.mxu0 0
      %2715 = vmatprep.subr.bf16.mxu0 0
      %2716 = vmatpush2.bf16.xpose.msra.mxu0 0
      %2717 = vmatprep.mubr.bf16.mxu0 0
      %2718 = vmatmul.mubr.bf16.gmra.mxu0 %v2680
      %v2719 = vpop.f32.mrf.mxu0
      %v2720 = vadd.f32 %v2074, %v2719
      %v2721 = vpop.f32.mrf.mxu0
      %v2722 = vpop.f32.mrf.mxu0
      %v2723 = vpop.f32.mrf.mxu0
      %2724 = vdwg.mxu0
      %2725 = vrot.lane.b32.xlu0 %v951, 112
      %v2726 = vpop.permute.xlu0 %2725
      %2727 = vrot.lane.b32.xlu0 %v951, 80
      %v2728 = vpop.permute.xlu0 %2727
      %v2730 = vsel %vm238, %v2726, 0
      %v2733 = vsel %vm238, %v2728, 0
      %2735 = vmatprep.subr.bf16.mxu0 0
      %2736 = vmatpush1.bf16.xpose.msra.mxu0 0
      %2737 = vmatprep.subr.bf16.mxu0 0
      %2738 = vmatpush1.bf16.xpose.msra.mxu0 0
      %2739 = vmatprep.subr.bf16.mxu0 0
      %2740 = vmatpush1.bf16.xpose.msra.mxu0 0
      %2741 = vmatprep.subr.bf16.mxu0 0
      %2742 = vmatpush1.bf16.xpose.msra.mxu0 0
      %2743 = vmatprep.subr.bf16.mxu0 0
      %2744 = vmatpush1.bf16.xpose.msra.mxu0 0
      %2745 = vmatprep.subr.bf16.mxu0 0
      %2746 = vmatpush1.bf16.xpose.msra.mxu0 0
      %2747 = vmatprep.subr.bf16.mxu0 0
      %2748 = vmatpush1.bf16.xpose.msra.mxu0 0
      %2749 = vmatprep.subr.bf16.mxu0 0
      %2750 = vmatpush1.bf16.xpose.msra.mxu0 %v2733
      %2751 = vmatprep.subr.bf16.mxu0 0
      %2752 = vmatpush2.bf16.xpose.msra.mxu0 0
      %2753 = vmatprep.subr.bf16.mxu0 0
      %2754 = vmatpush2.bf16.xpose.msra.mxu0 0
      %2755 = vmatprep.subr.bf16.mxu0 0
      %2756 = vmatpush2.bf16.xpose.msra.mxu0 0
      %2757 = vmatprep.subr.bf16.mxu0 0
      %2758 = vmatpush2.bf16.xpose.msra.mxu0 0
      %2759 = vmatprep.subr.bf16.mxu0 0
      %2760 = vmatpush2.bf16.xpose.msra.mxu0 0
      %2761 = vmatprep.subr.bf16.mxu0 0
      %2762 = vmatpush2.bf16.xpose.msra.mxu0 0
      %2763 = vmatprep.subr.bf16.mxu0 0
      %2764 = vmatpush2.bf16.xpose.msra.mxu0 0
      %2765 = vmatprep.subr.bf16.mxu0 0
      %2766 = vmatpush2.bf16.xpose.msra.mxu0 0
      %2767 = vmatprep.mubr.bf16.mxu0 0
      %2768 = vmatmul.mubr.bf16.gmra.mxu0 %v2730
      %v2769 = vpop.f32.mrf.mxu0
      %v2770 = vadd.f32 %v2074, %v2769
      %v2771 = vpop.f32.mrf.mxu0
      %v2772 = vpop.f32.mrf.mxu0
      %v2773 = vpop.f32.mrf.mxu0
      %2774 = vdwg.mxu0
      %2775 = vrot.lane.b32.xlu0 %v1006, 112
      %v2776 = vpop.permute.xlu0 %2775
      %2777 = vrot.lane.b32.xlu0 %v1006, 80
      %v2778 = vpop.permute.xlu0 %2777
      %v2780 = vsel %vm238, %v2776, 0
      %v2783 = vsel %vm238, %v2778, 0
      %2785 = vmatprep.subr.bf16.mxu0 0
      %2786 = vmatpush1.bf16.xpose.msra.mxu0 0
      %2787 = vmatprep.subr.bf16.mxu0 0
      %2788 = vmatpush1.bf16.xpose.msra.mxu0 0
      %2789 = vmatprep.subr.bf16.mxu0 0
      %2790 = vmatpush1.bf16.xpose.msra.mxu0 0
      %2791 = vmatprep.subr.bf16.mxu0 0
      %2792 = vmatpush1.bf16.xpose.msra.mxu0 0
      %2793 = vmatprep.subr.bf16.mxu0 0
      %2794 = vmatpush1.bf16.xpose.msra.mxu0 0
      %2795 = vmatprep.subr.bf16.mxu0 0
      %2796 = vmatpush1.bf16.xpose.msra.mxu0 0
      %2797 = vmatprep.subr.bf16.mxu0 0
      %2798 = vmatpush1.bf16.xpose.msra.mxu0 0
      %2799 = vmatprep.subr.bf16.mxu0 0
      %2800 = vmatpush1.bf16.xpose.msra.mxu0 %v2783
      %2801 = vmatprep.subr.bf16.mxu0 0
      %2802 = vmatpush2.bf16.xpose.msra.mxu0 0
      %2803 = vmatprep.subr.bf16.mxu0 0
      %2804 = vmatpush2.bf16.xpose.msra.mxu0 0
      %2805 = vmatprep.subr.bf16.mxu0 0
      %2806 = vmatpush2.bf16.xpose.msra.mxu0 0
      %2807 = vmatprep.subr.bf16.mxu0 0
      %2808 = vmatpush2.bf16.xpose.msra.mxu0 0
      %2809 = vmatprep.subr.bf16.mxu0 0
      %2810 = vmatpush2.bf16.xpose.msra.mxu0 0
      %2811 = vmatprep.subr.bf16.mxu0 0
      %2812 = vmatpush2.bf16.xpose.msra.mxu0 0
      %2813 = vmatprep.subr.bf16.mxu0 0
      %2814 = vmatpush2.bf16.xpose.msra.mxu0 0
      %2815 = vmatprep.subr.bf16.mxu0 0
      %2816 = vmatpush2.bf16.xpose.msra.mxu0 0
      %2817 = vmatprep.mubr.bf16.mxu0 0
      %2818 = vmatmul.mubr.bf16.gmra.mxu0 %v2780
      %v2819 = vpop.f32.mrf.mxu0
      %v2820 = vadd.f32 %v2074, %v2819
      %v2821 = vpop.f32.mrf.mxu0
      %v2822 = vpop.f32.mrf.mxu0
      %v2823 = vpop.f32.mrf.mxu0
      %2824 = vdwg.mxu0
      %2825 = vrot.lane.b32.xlu0 %v1061, 112
      %v2826 = vpop.permute.xlu0 %2825
      %2827 = vrot.lane.b32.xlu0 %v1061, 80
      %v2828 = vpop.permute.xlu0 %2827
      %v2830 = vsel %vm238, %v2826, 0
      %v2833 = vsel %vm238, %v2828, 0
      %2835 = vmatprep.subr.bf16.mxu0 0
      %2836 = vmatpush1.bf16.xpose.msra.mxu0 0
      %2837 = vmatprep.subr.bf16.mxu0 0
      %2838 = vmatpush1.bf16.xpose.msra.mxu0 0
      %2839 = vmatprep.subr.bf16.mxu0 0
      %2840 = vmatpush1.bf16.xpose.msra.mxu0 0
      %2841 = vmatprep.subr.bf16.mxu0 0
      %2842 = vmatpush1.bf16.xpose.msra.mxu0 0
      %2843 = vmatprep.subr.bf16.mxu0 0
      %2844 = vmatpush1.bf16.xpose.msra.mxu0 0
      %2845 = vmatprep.subr.bf16.mxu0 0
      %2846 = vmatpush1.bf16.xpose.msra.mxu0 0
      %2847 = vmatprep.subr.bf16.mxu0 0
      %2848 = vmatpush1.bf16.xpose.msra.mxu0 0
      %2849 = vmatprep.subr.bf16.mxu0 0
      %2850 = vmatpush1.bf16.xpose.msra.mxu0 %v2833
      %2851 = vmatprep.subr.bf16.mxu0 0
      %2852 = vmatpush2.bf16.xpose.msra.mxu0 0
      %2853 = vmatprep.subr.bf16.mxu0 0
      %2854 = vmatpush2.bf16.xpose.msra.mxu0 0
      %2855 = vmatprep.subr.bf16.mxu0 0
      %2856 = vmatpush2.bf16.xpose.msra.mxu0 0
      %2857 = vmatprep.subr.bf16.mxu0 0
      %2858 = vmatpush2.bf16.xpose.msra.mxu0 0
      %2859 = vmatprep.subr.bf16.mxu0 0
      %2860 = vmatpush2.bf16.xpose.msra.mxu0 0
      %2861 = vmatprep.subr.bf16.mxu0 0
      %2862 = vmatpush2.bf16.xpose.msra.mxu0 0
      %2863 = vmatprep.subr.bf16.mxu0 0
      %2864 = vmatpush2.bf16.xpose.msra.mxu0 0
      %2865 = vmatprep.subr.bf16.mxu0 0
      %2866 = vmatpush2.bf16.xpose.msra.mxu0 0
      %2867 = vmatprep.mubr.bf16.mxu0 0
      %2868 = vmatmul.mubr.bf16.gmra.mxu0 %v2830
      %v2869 = vpop.f32.mrf.mxu0
      %v2870 = vadd.f32 %v2074, %v2869
      %v2871 = vpop.f32.mrf.mxu0
      %v2872 = vpop.f32.mrf.mxu0
      %v2873 = vpop.f32.mrf.mxu0
      %2874 = vdwg.mxu0
      %v2875 = vsel %vm1110, %v2120, -inf
      %2876 = vmax.xlane.f32.xlu0 %v2875
      %v2877 = vpop.xlane.xlu0 %2876
      %v2878 = vsel %vm1110, %v2170, -inf
      %2879 = vmax.xlane.f32.xlu0 %v2878
      %v2880 = vpop.xlane.xlu0 %2879
      %v2881 = vsel %vm1110, %v2220, -inf
      %2882 = vmax.xlane.f32.xlu0 %v2881
      %v2883 = vpop.xlane.xlu0 %2882
      %v2884 = vsel %vm1110, %v2270, -inf
      %2885 = vmax.xlane.f32.xlu0 %v2884
      %v2886 = vpop.xlane.xlu0 %2885
      %v2887 = vsel %vm1110, %v2320, -inf
      %2888 = vmax.xlane.f32.xlu0 %v2887
      %v2889 = vpop.xlane.xlu0 %2888
      %v2890 = vsel %vm1110, %v2370, -inf
      %2891 = vmax.xlane.f32.xlu0 %v2890
      %v2892 = vpop.xlane.xlu0 %2891
      %v2893 = vsel %vm1110, %v2420, -inf
      %2894 = vmax.xlane.f32.xlu0 %v2893
      %v2895 = vpop.xlane.xlu0 %2894
      %v2896 = vsel %vm1110, %v2470, -inf
      %2897 = vmax.xlane.f32.xlu0 %v2896
      %v2898 = vpop.xlane.xlu0 %2897
      %v2899 = vsel %vm1110, %v2520, -inf
      %2900 = vmax.xlane.f32.xlu0 %v2899
      %v2901 = vpop.xlane.xlu0 %2900
      %v2902 = vsel %vm1110, %v2570, -inf
      %2903 = vmax.xlane.f32.xlu0 %v2902
      %v2904 = vpop.xlane.xlu0 %2903
      %v2905 = vsel %vm1110, %v2620, -inf
      %2906 = vmax.xlane.f32.xlu0 %v2905
      %v2907 = vpop.xlane.xlu0 %2906
      %v2908 = vsel %vm1110, %v2670, -inf
      %2909 = vmax.xlane.f32.xlu0 %v2908
      %v2910 = vpop.xlane.xlu0 %2909
      %v2911 = vsel %vm1110, %v2720, -inf
      %2912 = vmax.xlane.f32.xlu0 %v2911
      %v2913 = vpop.xlane.xlu0 %2912
      %v2914 = vsel %vm1110, %v2770, -inf
      %2915 = vmax.xlane.f32.xlu0 %v2914
      %v2916 = vpop.xlane.xlu0 %2915
      %v2917 = vsel %vm1110, %v2820, -inf
      %2918 = vmax.xlane.f32.xlu0 %v2917
      %v2919 = vpop.xlane.xlu0 %2918
      %v2920 = vsel %vm1110, %v2870, -inf
      %2921 = vmax.xlane.f32.xlu0 %v2920
      %v2922 = vpop.xlane.xlu0 %2921
      %v2923 = vsub.f32 %v2120, %v2877
      %v2924 = vsub.f32 %v2170, %v2880
      %v2925 = vsub.f32 %v2220, %v2883
      %v2926 = vsub.f32 %v2270, %v2886
      %v2927 = vsub.f32 %v2320, %v2889
      %v2928 = vsub.f32 %v2370, %v2892
      %v2929 = vsub.f32 %v2420, %v2895
      %v2930 = vsub.f32 %v2470, %v2898
      %v2931 = vsub.f32 %v2520, %v2901
      %v2932 = vsub.f32 %v2570, %v2904
      %v2933 = vsub.f32 %v2620, %v2907
      %v2934 = vsub.f32 %v2670, %v2910
      %v2935 = vsub.f32 %v2720, %v2913
      %v2936 = vsub.f32 %v2770, %v2916
      %v2937 = vsub.f32 %v2820, %v2919
      %v2938 = vsub.f32 %v2870, %v2922
      %v2939 = vmul.f32 %v2923, 1.442695
      %v2940 = vpow.pop %v2939
      %v2941 = vmul.f32 %v2924, 1.442695
      %v2942 = vpow.pop %v2941
      %v2943 = vmul.f32 %v2925, 1.442695
      %v2944 = vpow.pop %v2943
      %v2945 = vmul.f32 %v2926, 1.442695
      %v2946 = vpow.pop %v2945
      %v2947 = vmul.f32 %v2927, 1.442695
      %v2948 = vpow.pop %v2947
      %v2949 = vmul.f32 %v2928, 1.442695
      %v2950 = vpow.pop %v2949
      %v2951 = vmul.f32 %v2929, 1.442695
      %v2952 = vpow.pop %v2951
      %v2953 = vmul.f32 %v2930, 1.442695
      %v2954 = vpow.pop %v2953
      %v2955 = vmul.f32 %v2931, 1.442695
      %v2956 = vpow.pop %v2955
      %v2957 = vmul.f32 %v2932, 1.442695
      %v2958 = vpow.pop %v2957
      %v2959 = vmul.f32 %v2933, 1.442695
      %v2960 = vpow.pop %v2959
      %v2961 = vmul.f32 %v2934, 1.442695
      %v2962 = vpow.pop %v2961
      %v2963 = vmul.f32 %v2935, 1.442695
      %v2964 = vpow.pop %v2963
      %v2965 = vmul.f32 %v2936, 1.442695
      %v2966 = vpow.pop %v2965
      %v2967 = vmul.f32 %v2937, 1.442695
      %v2968 = vpow.pop %v2967
      %v2969 = vmul.f32 %v2938, 1.442695
      %v2970 = vpow.pop %v2969
      %v2971 = vsel %vm1110, %v2940, 0.0
      %2972 = vadd.xlane.f32.xlu0 %v2971
      %v2973 = vpop.xlane.xlu0 %2972
      %v2974 = vsel %vm1110, %v2942, 0.0
      %2975 = vadd.xlane.f32.xlu0 %v2974
      %v2976 = vpop.xlane.xlu0 %2975
      %v2977 = vsel %vm1110, %v2944, 0.0
      %2978 = vadd.xlane.f32.xlu0 %v2977
      %v2979 = vpop.xlane.xlu0 %2978
      %v2980 = vsel %vm1110, %v2946, 0.0
      %2981 = vadd.xlane.f32.xlu0 %v2980
      %v2982 = vpop.xlane.xlu0 %2981
      %v2983 = vsel %vm1110, %v2948, 0.0
      %2984 = vadd.xlane.f32.xlu0 %v2983
      %v2985 = vpop.xlane.xlu0 %2984
      %v2986 = vsel %vm1110, %v2950, 0.0
      %2987 = vadd.xlane.f32.xlu0 %v2986
      %v2988 = vpop.xlane.xlu0 %2987
      %v2989 = vsel %vm1110, %v2952, 0.0
      %2990 = vadd.xlane.f32.xlu0 %v2989
      %v2991 = vpop.xlane.xlu0 %2990
      %v2992 = vsel %vm1110, %v2954, 0.0
      %2993 = vadd.xlane.f32.xlu0 %v2992
      %v2994 = vpop.xlane.xlu0 %2993
      %v2995 = vsel %vm1110, %v2956, 0.0
      %2996 = vadd.xlane.f32.xlu0 %v2995
      %v2997 = vpop.xlane.xlu0 %2996
      %v2998 = vsel %vm1110, %v2958, 0.0
      %2999 = vadd.xlane.f32.xlu0 %v2998
      %v3000 = vpop.xlane.xlu0 %2999
      %v3001 = vsel %vm1110, %v2960, 0.0
      %3002 = vadd.xlane.f32.xlu0 %v3001
      %v3003 = vpop.xlane.xlu0 %3002
      %v3004 = vsel %vm1110, %v2962, 0.0
      %3005 = vadd.xlane.f32.xlu0 %v3004
      %v3006 = vpop.xlane.xlu0 %3005
      %v3007 = vsel %vm1110, %v2964, 0.0
      %3008 = vadd.xlane.f32.xlu0 %v3007
      %v3009 = vpop.xlane.xlu0 %3008
      %v3010 = vsel %vm1110, %v2966, 0.0
      %3011 = vadd.xlane.f32.xlu0 %v3010
      %v3012 = vpop.xlane.xlu0 %3011
      %v3013 = vsel %vm1110, %v2968, 0.0
      %3014 = vadd.xlane.f32.xlu0 %v3013
      %v3015 = vpop.xlane.xlu0 %3014
      %v3016 = vsel %vm1110, %v2970, 0.0
      %3017 = vadd.xlane.f32.xlu0 %v3016
      %v3018 = vpop.xlane.xlu0 %3017
      %v3019 = vrcp.pop %v2973
      %v3020 = vrcp.pop %v2976
      %v3021 = vrcp.pop %v2979
      %v3022 = vrcp.pop %v2982
      %v3023 = vrcp.pop %v2985
      %v3024 = vrcp.pop %v2988
      %v3025 = vrcp.pop %v2991
      %v3026 = vrcp.pop %v2994
      %v3027 = vrcp.pop %v2997
      %v3028 = vrcp.pop %v3000
      %v3029 = vrcp.pop %v3003
      %v3030 = vrcp.pop %v3006
      %v3031 = vrcp.pop %v3009
      %v3032 = vrcp.pop %v3012
      %v3033 = vrcp.pop %v3015
      %v3034 = vrcp.pop %v3018
      %v3035 = vmul.f32 %v2940, %v3019
      %v3036 = vmul.f32 %v2942, %v3020
      %v3037 = vmul.f32 %v2944, %v3021
      %v3038 = vmul.f32 %v2946, %v3022
      %v3039 = vmul.f32 %v2948, %v3023
      %v3040 = vmul.f32 %v2950, %v3024
      %v3041 = vmul.f32 %v2952, %v3025
      %v3042 = vmul.f32 %v2954, %v3026
      %v3043 = vmul.f32 %v2956, %v3027
      %v3044 = vmul.f32 %v2958, %v3028
      %v3045 = vmul.f32 %v2960, %v3029
      %v3046 = vmul.f32 %v2962, %v3030
      %v3047 = vmul.f32 %v2964, %v3031
      %v3048 = vmul.f32 %v2966, %v3032
      %v3049 = vmul.f32 %v2968, %v3033
      %v3050 = vmul.f32 %v2970, %v3034
      %v3051 = vpack.c.bf16 %v3035, %v3035
      %v3052 = vpack.c.bf16 %v3036, %v3036
      %v3053 = vpack.c.bf16 %v3037, %v3037
      %v3054 = vpack.c.bf16 %v3038, %v3038
      %v3055 = vpack.c.bf16 %v3039, %v3039
      %v3056 = vpack.c.bf16 %v3040, %v3040
      %v3057 = vpack.c.bf16 %v3041, %v3041
      %v3058 = vpack.c.bf16 %v3042, %v3042
      %v3059 = vpack.c.bf16 %v3043, %v3043
      %v3060 = vpack.c.bf16 %v3044, %v3044
      %v3061 = vpack.c.bf16 %v3045, %v3045
      %v3062 = vpack.c.bf16 %v3046, %v3046
      %v3063 = vpack.c.bf16 %v3047, %v3047
      %v3064 = vpack.c.bf16 %v3048, %v3048
      %v3065 = vpack.c.bf16 %v3049, %v3049
      %v3066 = vpack.c.bf16 %v3050, %v3050
      %3067 = vrot.lane.b32.xlu0 %v235, 48
      %v3068 = vpop.permute.xlu0 %3067
      %v3070 = vsel %vm1305, %v3051, 0
      %v3073 = vsel %vm1309, %v3068, 0
      %3075 = vmatprep.subr.bf16.mxu0 0
      %3076 = vmatpush1.bf16.msra.mxu0 0
      %3077 = vmatprep.subr.bf16.mxu0 0
      %3078 = vmatpush1.bf16.msra.mxu0 0
      %3079 = vmatprep.subr.bf16.mxu0 0
      %3080 = vmatpush1.bf16.msra.mxu0 0
      %3081 = vmatprep.subr.bf16.mxu0 0
      %3082 = vmatpush1.bf16.msra.mxu0 0
      %3083 = vmatprep.subr.bf16.mxu0 0
      %3084 = vmatpush1.bf16.msra.mxu0 0
      %3085 = vmatprep.subr.bf16.mxu0 0
      %3086 = vmatpush1.bf16.msra.mxu0 0
      %3087 = vmatprep.subr.bf16.mxu0 0
      %3088 = vmatpush1.bf16.msra.mxu0 0
      %3089 = vmatprep.subr.bf16.mxu0 0
      %3090 = vmatpush1.bf16.msra.mxu0 %v3073
      %3091 = vmatprep.subr.bf16.mxu0 0
      %3092 = vmatpush2.bf16.msra.mxu0 0
      %3093 = vmatprep.subr.bf16.mxu0 0
      %3094 = vmatpush2.bf16.msra.mxu0 0
      %3095 = vmatprep.subr.bf16.mxu0 0
      %3096 = vmatpush2.bf16.msra.mxu0 0
      %3097 = vmatprep.subr.bf16.mxu0 0
      %3098 = vmatpush2.bf16.msra.mxu0 0
      %3099 = vmatprep.subr.bf16.mxu0 0
      %3100 = vmatpush2.bf16.msra.mxu0 0
      %3101 = vmatprep.subr.bf16.mxu0 0
      %3102 = vmatpush2.bf16.msra.mxu0 0
      %3103 = vmatprep.subr.bf16.mxu0 0
      %3104 = vmatpush2.bf16.msra.mxu0 0
      %3105 = vmatprep.subr.bf16.mxu0 0
      %3106 = vmatpush2.bf16.msra.mxu0 0
      %3107 = vmatprep.mubr.bf16.mxu0 0
      %3108 = vmatmul.mubr.bf16.gmra.mxu0 %v3070
      %v3109 = vpop.f32.mrf.mxu0
      %v3110 = vadd.f32 0.0, %v3109
      %v3111 = vpop.f32.mrf.mxu0
      %v3112 = vpop.f32.mrf.mxu0
      %v3113 = vpop.f32.mrf.mxu0
      %3114 = vdwg.mxu0
      %3115 = vrot.lane.b32.xlu0 %v291, 48
      %v3116 = vpop.permute.xlu0 %3115
      %v3118 = vsel %vm1305, %v3052, 0
      %v3121 = vsel %vm1309, %v3116, 0
      %3123 = vmatprep.subr.bf16.mxu0 0
      %3124 = vmatpush1.bf16.msra.mxu0 0
      %3125 = vmatprep.subr.bf16.mxu0 0
      %3126 = vmatpush1.bf16.msra.mxu0 0
      %3127 = vmatprep.subr.bf16.mxu0 0
      %3128 = vmatpush1.bf16.msra.mxu0 0
      %3129 = vmatprep.subr.bf16.mxu0 0
      %3130 = vmatpush1.bf16.msra.mxu0 0
      %3131 = vmatprep.subr.bf16.mxu0 0
      %3132 = vmatpush1.bf16.msra.mxu0 0
      %3133 = vmatprep.subr.bf16.mxu0 0
      %3134 = vmatpush1.bf16.msra.mxu0 0
      %3135 = vmatprep.subr.bf16.mxu0 0
      %3136 = vmatpush1.bf16.msra.mxu0 0
      %3137 = vmatprep.subr.bf16.mxu0 0
      %3138 = vmatpush1.bf16.msra.mxu0 %v3121
      %3139 = vmatprep.subr.bf16.mxu0 0
      %3140 = vmatpush2.bf16.msra.mxu0 0
      %3141 = vmatprep.subr.bf16.mxu0 0
      %3142 = vmatpush2.bf16.msra.mxu0 0
      %3143 = vmatprep.subr.bf16.mxu0 0
      %3144 = vmatpush2.bf16.msra.mxu0 0
      %3145 = vmatprep.subr.bf16.mxu0 0
      %3146 = vmatpush2.bf16.msra.mxu0 0
      %3147 = vmatprep.subr.bf16.mxu0 0
      %3148 = vmatpush2.bf16.msra.mxu0 0
      %3149 = vmatprep.subr.bf16.mxu0 0
      %3150 = vmatpush2.bf16.msra.mxu0 0
      %3151 = vmatprep.subr.bf16.mxu0 0
      %3152 = vmatpush2.bf16.msra.mxu0 0
      %3153 = vmatprep.subr.bf16.mxu0 0
      %3154 = vmatpush2.bf16.msra.mxu0 0
      %3155 = vmatprep.mubr.bf16.mxu0 0
      %3156 = vmatmul.mubr.bf16.gmra.mxu0 %v3118
      %v3157 = vpop.f32.mrf.mxu0
      %v3158 = vadd.f32 0.0, %v3157
      %v3159 = vpop.f32.mrf.mxu0
      %v3160 = vpop.f32.mrf.mxu0
      %v3161 = vpop.f32.mrf.mxu0
      %3162 = vdwg.mxu0
      %3163 = vrot.lane.b32.xlu0 %v346, 48
      %v3164 = vpop.permute.xlu0 %3163
      %v3166 = vsel %vm1305, %v3053, 0
      %v3169 = vsel %vm1309, %v3164, 0
      %3171 = vmatprep.subr.bf16.mxu0 0
      %3172 = vmatpush1.bf16.msra.mxu0 0
      %3173 = vmatprep.subr.bf16.mxu0 0
      %3174 = vmatpush1.bf16.msra.mxu0 0
      %3175 = vmatprep.subr.bf16.mxu0 0
      %3176 = vmatpush1.bf16.msra.mxu0 0
      %3177 = vmatprep.subr.bf16.mxu0 0
      %3178 = vmatpush1.bf16.msra.mxu0 0
      %3179 = vmatprep.subr.bf16.mxu0 0
      %3180 = vmatpush1.bf16.msra.mxu0 0
      %3181 = vmatprep.subr.bf16.mxu0 0
      %3182 = vmatpush1.bf16.msra.mxu0 0
      %3183 = vmatprep.subr.bf16.mxu0 0
      %3184 = vmatpush1.bf16.msra.mxu0 0
      %3185 = vmatprep.subr.bf16.mxu0 0
      %3186 = vmatpush1.bf16.msra.mxu0 %v3169
      %3187 = vmatprep.subr.bf16.mxu0 0
      %3188 = vmatpush2.bf16.msra.mxu0 0
      %3189 = vmatprep.subr.bf16.mxu0 0
      %3190 = vmatpush2.bf16.msra.mxu0 0
      %3191 = vmatprep.subr.bf16.mxu0 0
      %3192 = vmatpush2.bf16.msra.mxu0 0
      %3193 = vmatprep.subr.bf16.mxu0 0
      %3194 = vmatpush2.bf16.msra.mxu0 0
      %3195 = vmatprep.subr.bf16.mxu0 0
      %3196 = vmatpush2.bf16.msra.mxu0 0
      %3197 = vmatprep.subr.bf16.mxu0 0
      %3198 = vmatpush2.bf16.msra.mxu0 0
      %3199 = vmatprep.subr.bf16.mxu0 0
      %3200 = vmatpush2.bf16.msra.mxu0 0
      %3201 = vmatprep.subr.bf16.mxu0 0
      %3202 = vmatpush2.bf16.msra.mxu0 0
      %3203 = vmatprep.mubr.bf16.mxu0 0
      %3204 = vmatmul.mubr.bf16.gmra.mxu0 %v3166
      %v3205 = vpop.f32.mrf.mxu0
      %v3206 = vadd.f32 0.0, %v3205
      %v3207 = vpop.f32.mrf.mxu0
      %v3208 = vpop.f32.mrf.mxu0
      %v3209 = vpop.f32.mrf.mxu0
      %3210 = vdwg.mxu0
      %3211 = vrot.lane.b32.xlu0 %v401, 48
      %v3212 = vpop.permute.xlu0 %3211
      %v3214 = vsel %vm1305, %v3054, 0
      %v3217 = vsel %vm1309, %v3212, 0
      %3219 = vmatprep.subr.bf16.mxu0 0
      %3220 = vmatpush1.bf16.msra.mxu0 0
      %3221 = vmatprep.subr.bf16.mxu0 0
      %3222 = vmatpush1.bf16.msra.mxu0 0
      %3223 = vmatprep.subr.bf16.mxu0 0
      %3224 = vmatpush1.bf16.msra.mxu0 0
      %3225 = vmatprep.subr.bf16.mxu0 0
      %3226 = vmatpush1.bf16.msra.mxu0 0
      %3227 = vmatprep.subr.bf16.mxu0 0
      %3228 = vmatpush1.bf16.msra.mxu0 0
      %3229 = vmatprep.subr.bf16.mxu0 0
      %3230 = vmatpush1.bf16.msra.mxu0 0
      %3231 = vmatprep.subr.bf16.mxu0 0
      %3232 = vmatpush1.bf16.msra.mxu0 0
      %3233 = vmatprep.subr.bf16.mxu0 0
      %3234 = vmatpush1.bf16.msra.mxu0 %v3217
      %3235 = vmatprep.subr.bf16.mxu0 0
      %3236 = vmatpush2.bf16.msra.mxu0 0
      %3237 = vmatprep.subr.bf16.mxu0 0
      %3238 = vmatpush2.bf16.msra.mxu0 0
      %3239 = vmatprep.subr.bf16.mxu0 0
      %3240 = vmatpush2.bf16.msra.mxu0 0
      %3241 = vmatprep.subr.bf16.mxu0 0
      %3242 = vmatpush2.bf16.msra.mxu0 0
      %3243 = vmatprep.subr.bf16.mxu0 0
      %3244 = vmatpush2.bf16.msra.mxu0 0
      %3245 = vmatprep.subr.bf16.mxu0 0
      %3246 = vmatpush2.bf16.msra.mxu0 0
      %3247 = vmatprep.subr.bf16.mxu0 0
      %3248 = vmatpush2.bf16.msra.mxu0 0
      %3249 = vmatprep.subr.bf16.mxu0 0
      %3250 = vmatpush2.bf16.msra.mxu0 0
      %3251 = vmatprep.mubr.bf16.mxu0 0
      %3252 = vmatmul.mubr.bf16.gmra.mxu0 %v3214
      %v3253 = vpop.f32.mrf.mxu0
      %v3254 = vadd.f32 0.0, %v3253
      %v3255 = vpop.f32.mrf.mxu0
      %v3256 = vpop.f32.mrf.mxu0
      %v3257 = vpop.f32.mrf.mxu0
      %3258 = vdwg.mxu0
      %3259 = vrot.lane.b32.xlu0 %v456, 48
      %v3260 = vpop.permute.xlu0 %3259
      %v3262 = vsel %vm1305, %v3055, 0
      %v3265 = vsel %vm1309, %v3260, 0
      %3267 = vmatprep.subr.bf16.mxu0 0
      %3268 = vmatpush1.bf16.msra.mxu0 0
      %3269 = vmatprep.subr.bf16.mxu0 0
      %3270 = vmatpush1.bf16.msra.mxu0 0
      %3271 = vmatprep.subr.bf16.mxu0 0
      %3272 = vmatpush1.bf16.msra.mxu0 0
      %3273 = vmatprep.subr.bf16.mxu0 0
      %3274 = vmatpush1.bf16.msra.mxu0 0
      %3275 = vmatprep.subr.bf16.mxu0 0
      %3276 = vmatpush1.bf16.msra.mxu0 0
      %3277 = vmatprep.subr.bf16.mxu0 0
      %3278 = vmatpush1.bf16.msra.mxu0 0
      %3279 = vmatprep.subr.bf16.mxu0 0
      %3280 = vmatpush1.bf16.msra.mxu0 0
      %3281 = vmatprep.subr.bf16.mxu0 0
      %3282 = vmatpush1.bf16.msra.mxu0 %v3265
      %3283 = vmatprep.subr.bf16.mxu0 0
      %3284 = vmatpush2.bf16.msra.mxu0 0
      %3285 = vmatprep.subr.bf16.mxu0 0
      %3286 = vmatpush2.bf16.msra.mxu0 0
      %3287 = vmatprep.subr.bf16.mxu0 0
      %3288 = vmatpush2.bf16.msra.mxu0 0
      %3289 = vmatprep.subr.bf16.mxu0 0
      %3290 = vmatpush2.bf16.msra.mxu0 0
      %3291 = vmatprep.subr.bf16.mxu0 0
      %3292 = vmatpush2.bf16.msra.mxu0 0
      %3293 = vmatprep.subr.bf16.mxu0 0
      %3294 = vmatpush2.bf16.msra.mxu0 0
      %3295 = vmatprep.subr.bf16.mxu0 0
      %3296 = vmatpush2.bf16.msra.mxu0 0
      %3297 = vmatprep.subr.bf16.mxu0 0
      %3298 = vmatpush2.bf16.msra.mxu0 0
      %3299 = vmatprep.mubr.bf16.mxu0 0
      %3300 = vmatmul.mubr.bf16.gmra.mxu0 %v3262
      %v3301 = vpop.f32.mrf.mxu0
      %v3302 = vadd.f32 0.0, %v3301
      %v3303 = vpop.f32.mrf.mxu0
      %v3304 = vpop.f32.mrf.mxu0
      %v3305 = vpop.f32.mrf.mxu0
      %3306 = vdwg.mxu0
      %3307 = vrot.lane.b32.xlu0 %v511, 48
      %v3308 = vpop.permute.xlu0 %3307
      %v3310 = vsel %vm1305, %v3056, 0
      %v3313 = vsel %vm1309, %v3308, 0
      %3315 = vmatprep.subr.bf16.mxu0 0
      %3316 = vmatpush1.bf16.msra.mxu0 0
      %3317 = vmatprep.subr.bf16.mxu0 0
      %3318 = vmatpush1.bf16.msra.mxu0 0
      %3319 = vmatprep.subr.bf16.mxu0 0
      %3320 = vmatpush1.bf16.msra.mxu0 0
      %3321 = vmatprep.subr.bf16.mxu0 0
      %3322 = vmatpush1.bf16.msra.mxu0 0
      %3323 = vmatprep.subr.bf16.mxu0 0
      %3324 = vmatpush1.bf16.msra.mxu0 0
      %3325 = vmatprep.subr.bf16.mxu0 0
      %3326 = vmatpush1.bf16.msra.mxu0 0
      %3327 = vmatprep.subr.bf16.mxu0 0
      %3328 = vmatpush1.bf16.msra.mxu0 0
      %3329 = vmatprep.subr.bf16.mxu0 0
      %3330 = vmatpush1.bf16.msra.mxu0 %v3313
      %3331 = vmatprep.subr.bf16.mxu0 0
      %3332 = vmatpush2.bf16.msra.mxu0 0
      %3333 = vmatprep.subr.bf16.mxu0 0
      %3334 = vmatpush2.bf16.msra.mxu0 0
      %3335 = vmatprep.subr.bf16.mxu0 0
      %3336 = vmatpush2.bf16.msra.mxu0 0
      %3337 = vmatprep.subr.bf16.mxu0 0
      %3338 = vmatpush2.bf16.msra.mxu0 0
      %3339 = vmatprep.subr.bf16.mxu0 0
      %3340 = vmatpush2.bf16.msra.mxu0 0
      %3341 = vmatprep.subr.bf16.mxu0 0
      %3342 = vmatpush2.bf16.msra.mxu0 0
      %3343 = vmatprep.subr.bf16.mxu0 0
      %3344 = vmatpush2.bf16.msra.mxu0 0
      %3345 = vmatprep.subr.bf16.mxu0 0
      %3346 = vmatpush2.bf16.msra.mxu0 0
      %3347 = vmatprep.mubr.bf16.mxu0 0
      %3348 = vmatmul.mubr.bf16.gmra.mxu0 %v3310
      %v3349 = vpop.f32.mrf.mxu0
      %v3350 = vadd.f32 0.0, %v3349
      %v3351 = vpop.f32.mrf.mxu0
      %v3352 = vpop.f32.mrf.mxu0
      %v3353 = vpop.f32.mrf.mxu0
      %3354 = vdwg.mxu0
      %3355 = vrot.lane.b32.xlu0 %v566, 48
      %v3356 = vpop.permute.xlu0 %3355
      %v3358 = vsel %vm1305, %v3057, 0
      %v3361 = vsel %vm1309, %v3356, 0
      %3363 = vmatprep.subr.bf16.mxu0 0
      %3364 = vmatpush1.bf16.msra.mxu0 0
      %3365 = vmatprep.subr.bf16.mxu0 0
      %3366 = vmatpush1.bf16.msra.mxu0 0
      %3367 = vmatprep.subr.bf16.mxu0 0
      %3368 = vmatpush1.bf16.msra.mxu0 0
      %3369 = vmatprep.subr.bf16.mxu0 0
      %3370 = vmatpush1.bf16.msra.mxu0 0
      %3371 = vmatprep.subr.bf16.mxu0 0
      %3372 = vmatpush1.bf16.msra.mxu0 0
      %3373 = vmatprep.subr.bf16.mxu0 0
      %3374 = vmatpush1.bf16.msra.mxu0 0
      %3375 = vmatprep.subr.bf16.mxu0 0
      %3376 = vmatpush1.bf16.msra.mxu0 0
      %3377 = vmatprep.subr.bf16.mxu0 0
      %3378 = vmatpush1.bf16.msra.mxu0 %v3361
      %3379 = vmatprep.subr.bf16.mxu0 0
      %3380 = vmatpush2.bf16.msra.mxu0 0
      %3381 = vmatprep.subr.bf16.mxu0 0
      %3382 = vmatpush2.bf16.msra.mxu0 0
      %3383 = vmatprep.subr.bf16.mxu0 0
      %3384 = vmatpush2.bf16.msra.mxu0 0
      %3385 = vmatprep.subr.bf16.mxu0 0
      %3386 = vmatpush2.bf16.msra.mxu0 0
      %3387 = vmatprep.subr.bf16.mxu0 0
      %3388 = vmatpush2.bf16.msra.mxu0 0
      %3389 = vmatprep.subr.bf16.mxu0 0
      %3390 = vmatpush2.bf16.msra.mxu0 0
      %3391 = vmatprep.subr.bf16.mxu0 0
      %3392 = vmatpush2.bf16.msra.mxu0 0
      %3393 = vmatprep.subr.bf16.mxu0 0
      %3394 = vmatpush2.bf16.msra.mxu0 0
      %3395 = vmatprep.mubr.bf16.mxu0 0
      %3396 = vmatmul.mubr.bf16.gmra.mxu0 %v3358
      %v3397 = vpop.f32.mrf.mxu0
      %v3398 = vadd.f32 0.0, %v3397
      %v3399 = vpop.f32.mrf.mxu0
      %v3400 = vpop.f32.mrf.mxu0
      %v3401 = vpop.f32.mrf.mxu0
      %3402 = vdwg.mxu0
      %3403 = vrot.lane.b32.xlu0 %v621, 48
      %v3404 = vpop.permute.xlu0 %3403
      %v3406 = vsel %vm1305, %v3058, 0
      %v3409 = vsel %vm1309, %v3404, 0
      %3411 = vmatprep.subr.bf16.mxu0 0
      %3412 = vmatpush1.bf16.msra.mxu0 0
      %3413 = vmatprep.subr.bf16.mxu0 0
      %3414 = vmatpush1.bf16.msra.mxu0 0
      %3415 = vmatprep.subr.bf16.mxu0 0
      %3416 = vmatpush1.bf16.msra.mxu0 0
      %3417 = vmatprep.subr.bf16.mxu0 0
      %3418 = vmatpush1.bf16.msra.mxu0 0
      %3419 = vmatprep.subr.bf16.mxu0 0
      %3420 = vmatpush1.bf16.msra.mxu0 0
      %3421 = vmatprep.subr.bf16.mxu0 0
      %3422 = vmatpush1.bf16.msra.mxu0 0
      %3423 = vmatprep.subr.bf16.mxu0 0
      %3424 = vmatpush1.bf16.msra.mxu0 0
      %3425 = vmatprep.subr.bf16.mxu0 0
      %3426 = vmatpush1.bf16.msra.mxu0 %v3409
      %3427 = vmatprep.subr.bf16.mxu0 0
      %3428 = vmatpush2.bf16.msra.mxu0 0
      %3429 = vmatprep.subr.bf16.mxu0 0
      %3430 = vmatpush2.bf16.msra.mxu0 0
      %3431 = vmatprep.subr.bf16.mxu0 0
      %3432 = vmatpush2.bf16.msra.mxu0 0
      %3433 = vmatprep.subr.bf16.mxu0 0
      %3434 = vmatpush2.bf16.msra.mxu0 0
      %3435 = vmatprep.subr.bf16.mxu0 0
      %3436 = vmatpush2.bf16.msra.mxu0 0
      %3437 = vmatprep.subr.bf16.mxu0 0
      %3438 = vmatpush2.bf16.msra.mxu0 0
      %3439 = vmatprep.subr.bf16.mxu0 0
      %3440 = vmatpush2.bf16.msra.mxu0 0
      %3441 = vmatprep.subr.bf16.mxu0 0
      %3442 = vmatpush2.bf16.msra.mxu0 0
      %3443 = vmatprep.mubr.bf16.mxu0 0
      %3444 = vmatmul.mubr.bf16.gmra.mxu0 %v3406
      %v3445 = vpop.f32.mrf.mxu0
      %v3446 = vadd.f32 0.0, %v3445
      %v3447 = vpop.f32.mrf.mxu0
      %v3448 = vpop.f32.mrf.mxu0
      %v3449 = vpop.f32.mrf.mxu0
      %3450 = vdwg.mxu0
      %3451 = vrot.lane.b32.xlu0 %v676, 48
      %v3452 = vpop.permute.xlu0 %3451
      %v3454 = vsel %vm1305, %v3059, 0
      %v3457 = vsel %vm1309, %v3452, 0
      %3459 = vmatprep.subr.bf16.mxu0 0
      %3460 = vmatpush1.bf16.msra.mxu0 0
      %3461 = vmatprep.subr.bf16.mxu0 0
      %3462 = vmatpush1.bf16.msra.mxu0 0
      %3463 = vmatprep.subr.bf16.mxu0 0
      %3464 = vmatpush1.bf16.msra.mxu0 0
      %3465 = vmatprep.subr.bf16.mxu0 0
      %3466 = vmatpush1.bf16.msra.mxu0 0
      %3467 = vmatprep.subr.bf16.mxu0 0
      %3468 = vmatpush1.bf16.msra.mxu0 0
      %3469 = vmatprep.subr.bf16.mxu0 0
      %3470 = vmatpush1.bf16.msra.mxu0 0
      %3471 = vmatprep.subr.bf16.mxu0 0
      %3472 = vmatpush1.bf16.msra.mxu0 0
      %3473 = vmatprep.subr.bf16.mxu0 0
      %3474 = vmatpush1.bf16.msra.mxu0 %v3457
      %3475 = vmatprep.subr.bf16.mxu0 0
      %3476 = vmatpush2.bf16.msra.mxu0 0
      %3477 = vmatprep.subr.bf16.mxu0 0
      %3478 = vmatpush2.bf16.msra.mxu0 0
      %3479 = vmatprep.subr.bf16.mxu0 0
      %3480 = vmatpush2.bf16.msra.mxu0 0
      %3481 = vmatprep.subr.bf16.mxu0 0
      %3482 = vmatpush2.bf16.msra.mxu0 0
      %3483 = vmatprep.subr.bf16.mxu0 0
      %3484 = vmatpush2.bf16.msra.mxu0 0
      %3485 = vmatprep.subr.bf16.mxu0 0
      %3486 = vmatpush2.bf16.msra.mxu0 0
      %3487 = vmatprep.subr.bf16.mxu0 0
      %3488 = vmatpush2.bf16.msra.mxu0 0
      %3489 = vmatprep.subr.bf16.mxu0 0
      %3490 = vmatpush2.bf16.msra.mxu0 0
      %3491 = vmatprep.mubr.bf16.mxu0 0
      %3492 = vmatmul.mubr.bf16.gmra.mxu0 %v3454
      %v3493 = vpop.f32.mrf.mxu0
      %v3494 = vadd.f32 0.0, %v3493
      %v3495 = vpop.f32.mrf.mxu0
      %v3496 = vpop.f32.mrf.mxu0
      %v3497 = vpop.f32.mrf.mxu0
      %3498 = vdwg.mxu0
      %3499 = vrot.lane.b32.xlu0 %v731, 48
      %v3500 = vpop.permute.xlu0 %3499
      %v3502 = vsel %vm1305, %v3060, 0
      %v3505 = vsel %vm1309, %v3500, 0
      %3507 = vmatprep.subr.bf16.mxu0 0
      %3508 = vmatpush1.bf16.msra.mxu0 0
      %3509 = vmatprep.subr.bf16.mxu0 0
      %3510 = vmatpush1.bf16.msra.mxu0 0
      %3511 = vmatprep.subr.bf16.mxu0 0
      %3512 = vmatpush1.bf16.msra.mxu0 0
      %3513 = vmatprep.subr.bf16.mxu0 0
      %3514 = vmatpush1.bf16.msra.mxu0 0
      %3515 = vmatprep.subr.bf16.mxu0 0
      %3516 = vmatpush1.bf16.msra.mxu0 0
      %3517 = vmatprep.subr.bf16.mxu0 0
      %3518 = vmatpush1.bf16.msra.mxu0 0
      %3519 = vmatprep.subr.bf16.mxu0 0
      %3520 = vmatpush1.bf16.msra.mxu0 0
      %3521 = vmatprep.subr.bf16.mxu0 0
      %3522 = vmatpush1.bf16.msra.mxu0 %v3505
      %3523 = vmatprep.subr.bf16.mxu0 0
      %3524 = vmatpush2.bf16.msra.mxu0 0
      %3525 = vmatprep.subr.bf16.mxu0 0
      %3526 = vmatpush2.bf16.msra.mxu0 0
      %3527 = vmatprep.subr.bf16.mxu0 0
      %3528 = vmatpush2.bf16.msra.mxu0 0
      %3529 = vmatprep.subr.bf16.mxu0 0
      %3530 = vmatpush2.bf16.msra.mxu0 0
      %3531 = vmatprep.subr.bf16.mxu0 0
      %3532 = vmatpush2.bf16.msra.mxu0 0
      %3533 = vmatprep.subr.bf16.mxu0 0
      %3534 = vmatpush2.bf16.msra.mxu0 0
      %3535 = vmatprep.subr.bf16.mxu0 0
      %3536 = vmatpush2.bf16.msra.mxu0 0
      %3537 = vmatprep.subr.bf16.mxu0 0
      %3538 = vmatpush2.bf16.msra.mxu0 0
      %3539 = vmatprep.mubr.bf16.mxu0 0
      %3540 = vmatmul.mubr.bf16.gmra.mxu0 %v3502
      %v3541 = vpop.f32.mrf.mxu0
      %v3542 = vadd.f32 0.0, %v3541
      %v3543 = vpop.f32.mrf.mxu0
      %v3544 = vpop.f32.mrf.mxu0
      %v3545 = vpop.f32.mrf.mxu0
      %3546 = vdwg.mxu0
      %3547 = vrot.lane.b32.xlu0 %v786, 48
      %v3548 = vpop.permute.xlu0 %3547
      %v3550 = vsel %vm1305, %v3061, 0
      %v3553 = vsel %vm1309, %v3548, 0
      %3555 = vmatprep.subr.bf16.mxu0 0
      %3556 = vmatpush1.bf16.msra.mxu0 0
      %3557 = vmatprep.subr.bf16.mxu0 0
      %3558 = vmatpush1.bf16.msra.mxu0 0
      %3559 = vmatprep.subr.bf16.mxu0 0
      %3560 = vmatpush1.bf16.msra.mxu0 0
      %3561 = vmatprep.subr.bf16.mxu0 0
      %3562 = vmatpush1.bf16.msra.mxu0 0
      %3563 = vmatprep.subr.bf16.mxu0 0
      %3564 = vmatpush1.bf16.msra.mxu0 0
      %3565 = vmatprep.subr.bf16.mxu0 0
      %3566 = vmatpush1.bf16.msra.mxu0 0
      %3567 = vmatprep.subr.bf16.mxu0 0
      %3568 = vmatpush1.bf16.msra.mxu0 0
      %3569 = vmatprep.subr.bf16.mxu0 0
      %3570 = vmatpush1.bf16.msra.mxu0 %v3553
      %3571 = vmatprep.subr.bf16.mxu0 0
      %3572 = vmatpush2.bf16.msra.mxu0 0
      %3573 = vmatprep.subr.bf16.mxu0 0
      %3574 = vmatpush2.bf16.msra.mxu0 0
      %3575 = vmatprep.subr.bf16.mxu0 0
      %3576 = vmatpush2.bf16.msra.mxu0 0
      %3577 = vmatprep.subr.bf16.mxu0 0
      %3578 = vmatpush2.bf16.msra.mxu0 0
      %3579 = vmatprep.subr.bf16.mxu0 0
      %3580 = vmatpush2.bf16.msra.mxu0 0
      %3581 = vmatprep.subr.bf16.mxu0 0
      %3582 = vmatpush2.bf16.msra.mxu0 0
      %3583 = vmatprep.subr.bf16.mxu0 0
      %3584 = vmatpush2.bf16.msra.mxu0 0
      %3585 = vmatprep.subr.bf16.mxu0 0
      %3586 = vmatpush2.bf16.msra.mxu0 0
      %3587 = vmatprep.mubr.bf16.mxu0 0
      %3588 = vmatmul.mubr.bf16.gmra.mxu0 %v3550
      %v3589 = vpop.f32.mrf.mxu0
      %v3590 = vadd.f32 0.0, %v3589
      %v3591 = vpop.f32.mrf.mxu0
      %v3592 = vpop.f32.mrf.mxu0
      %v3593 = vpop.f32.mrf.mxu0
      %3594 = vdwg.mxu0
      %3595 = vrot.lane.b32.xlu0 %v841, 48
      %v3596 = vpop.permute.xlu0 %3595
      %v3598 = vsel %vm1305, %v3062, 0
      %v3601 = vsel %vm1309, %v3596, 0
      %3603 = vmatprep.subr.bf16.mxu0 0
      %3604 = vmatpush1.bf16.msra.mxu0 0
      %3605 = vmatprep.subr.bf16.mxu0 0
      %3606 = vmatpush1.bf16.msra.mxu0 0
      %3607 = vmatprep.subr.bf16.mxu0 0
      %3608 = vmatpush1.bf16.msra.mxu0 0
      %3609 = vmatprep.subr.bf16.mxu0 0
      %3610 = vmatpush1.bf16.msra.mxu0 0
      %3611 = vmatprep.subr.bf16.mxu0 0
      %3612 = vmatpush1.bf16.msra.mxu0 0
      %3613 = vmatprep.subr.bf16.mxu0 0
      %3614 = vmatpush1.bf16.msra.mxu0 0
      %3615 = vmatprep.subr.bf16.mxu0 0
      %3616 = vmatpush1.bf16.msra.mxu0 0
      %3617 = vmatprep.subr.bf16.mxu0 0
      %3618 = vmatpush1.bf16.msra.mxu0 %v3601
      %3619 = vmatprep.subr.bf16.mxu0 0
      %3620 = vmatpush2.bf16.msra.mxu0 0
      %3621 = vmatprep.subr.bf16.mxu0 0
      %3622 = vmatpush2.bf16.msra.mxu0 0
      %3623 = vmatprep.subr.bf16.mxu0 0
      %3624 = vmatpush2.bf16.msra.mxu0 0
      %3625 = vmatprep.subr.bf16.mxu0 0
      %3626 = vmatpush2.bf16.msra.mxu0 0
      %3627 = vmatprep.subr.bf16.mxu0 0
      %3628 = vmatpush2.bf16.msra.mxu0 0
      %3629 = vmatprep.subr.bf16.mxu0 0
      %3630 = vmatpush2.bf16.msra.mxu0 0
      %3631 = vmatprep.subr.bf16.mxu0 0
      %3632 = vmatpush2.bf16.msra.mxu0 0
      %3633 = vmatprep.subr.bf16.mxu0 0
      %3634 = vmatpush2.bf16.msra.mxu0 0
      %3635 = vmatprep.mubr.bf16.mxu0 0
      %3636 = vmatmul.mubr.bf16.gmra.mxu0 %v3598
      %v3637 = vpop.f32.mrf.mxu0
      %v3638 = vadd.f32 0.0, %v3637
      %v3639 = vpop.f32.mrf.mxu0
      %v3640 = vpop.f32.mrf.mxu0
      %v3641 = vpop.f32.mrf.mxu0
      %3642 = vdwg.mxu0
      %3643 = vrot.lane.b32.xlu0 %v896, 48
      %v3644 = vpop.permute.xlu0 %3643
      %v3646 = vsel %vm1305, %v3063, 0
      %v3649 = vsel %vm1309, %v3644, 0
      %3651 = vmatprep.subr.bf16.mxu0 0
      %3652 = vmatpush1.bf16.msra.mxu0 0
      %3653 = vmatprep.subr.bf16.mxu0 0
      %3654 = vmatpush1.bf16.msra.mxu0 0
      %3655 = vmatprep.subr.bf16.mxu0 0
      %3656 = vmatpush1.bf16.msra.mxu0 0
      %3657 = vmatprep.subr.bf16.mxu0 0
      %3658 = vmatpush1.bf16.msra.mxu0 0
      %3659 = vmatprep.subr.bf16.mxu0 0
      %3660 = vmatpush1.bf16.msra.mxu0 0
      %3661 = vmatprep.subr.bf16.mxu0 0
      %3662 = vmatpush1.bf16.msra.mxu0 0
      %3663 = vmatprep.subr.bf16.mxu0 0
      %3664 = vmatpush1.bf16.msra.mxu0 0
      %3665 = vmatprep.subr.bf16.mxu0 0
      %3666 = vmatpush1.bf16.msra.mxu0 %v3649
      %3667 = vmatprep.subr.bf16.mxu0 0
      %3668 = vmatpush2.bf16.msra.mxu0 0
      %3669 = vmatprep.subr.bf16.mxu0 0
      %3670 = vmatpush2.bf16.msra.mxu0 0
      %3671 = vmatprep.subr.bf16.mxu0 0
      %3672 = vmatpush2.bf16.msra.mxu0 0
      %3673 = vmatprep.subr.bf16.mxu0 0
      %3674 = vmatpush2.bf16.msra.mxu0 0
      %3675 = vmatprep.subr.bf16.mxu0 0
      %3676 = vmatpush2.bf16.msra.mxu0 0
      %3677 = vmatprep.subr.bf16.mxu0 0
      %3678 = vmatpush2.bf16.msra.mxu0 0
      %3679 = vmatprep.subr.bf16.mxu0 0
      %3680 = vmatpush2.bf16.msra.mxu0 0
      %3681 = vmatprep.subr.bf16.mxu0 0
      %3682 = vmatpush2.bf16.msra.mxu0 0
      %3683 = vmatprep.mubr.bf16.mxu0 0
      %3684 = vmatmul.mubr.bf16.gmra.mxu0 %v3646
      %v3685 = vpop.f32.mrf.mxu0
      %v3686 = vadd.f32 0.0, %v3685
      %v3687 = vpop.f32.mrf.mxu0
      %v3688 = vpop.f32.mrf.mxu0
      %v3689 = vpop.f32.mrf.mxu0
      %3690 = vdwg.mxu0
      %3691 = vrot.lane.b32.xlu0 %v951, 48
      %v3692 = vpop.permute.xlu0 %3691
      %v3694 = vsel %vm1305, %v3064, 0
      %v3697 = vsel %vm1309, %v3692, 0
      %3699 = vmatprep.subr.bf16.mxu0 0
      %3700 = vmatpush1.bf16.msra.mxu0 0
      %3701 = vmatprep.subr.bf16.mxu0 0
      %3702 = vmatpush1.bf16.msra.mxu0 0
      %3703 = vmatprep.subr.bf16.mxu0 0
      %3704 = vmatpush1.bf16.msra.mxu0 0
      %3705 = vmatprep.subr.bf16.mxu0 0
      %3706 = vmatpush1.bf16.msra.mxu0 0
      %3707 = vmatprep.subr.bf16.mxu0 0
      %3708 = vmatpush1.bf16.msra.mxu0 0
      %3709 = vmatprep.subr.bf16.mxu0 0
      %3710 = vmatpush1.bf16.msra.mxu0 0
      %3711 = vmatprep.subr.bf16.mxu0 0
      %3712 = vmatpush1.bf16.msra.mxu0 0
      %3713 = vmatprep.subr.bf16.mxu0 0
      %3714 = vmatpush1.bf16.msra.mxu0 %v3697
      %3715 = vmatprep.subr.bf16.mxu0 0
      %3716 = vmatpush2.bf16.msra.mxu0 0
      %3717 = vmatprep.subr.bf16.mxu0 0
      %3718 = vmatpush2.bf16.msra.mxu0 0
      %3719 = vmatprep.subr.bf16.mxu0 0
      %3720 = vmatpush2.bf16.msra.mxu0 0
      %3721 = vmatprep.subr.bf16.mxu0 0
      %3722 = vmatpush2.bf16.msra.mxu0 0
      %3723 = vmatprep.subr.bf16.mxu0 0
      %3724 = vmatpush2.bf16.msra.mxu0 0
      %3725 = vmatprep.subr.bf16.mxu0 0
      %3726 = vmatpush2.bf16.msra.mxu0 0
      %3727 = vmatprep.subr.bf16.mxu0 0
      %3728 = vmatpush2.bf16.msra.mxu0 0
      %3729 = vmatprep.subr.bf16.mxu0 0
      %3730 = vmatpush2.bf16.msra.mxu0 0
      %3731 = vmatprep.mubr.bf16.mxu0 0
      %3732 = vmatmul.mubr.bf16.gmra.mxu0 %v3694
      %v3733 = vpop.f32.mrf.mxu0
      %v3734 = vadd.f32 0.0, %v3733
      %v3735 = vpop.f32.mrf.mxu0
      %v3736 = vpop.f32.mrf.mxu0
      %v3737 = vpop.f32.mrf.mxu0
      %3738 = vdwg.mxu0
      %3739 = vrot.lane.b32.xlu0 %v1006, 48
      %v3740 = vpop.permute.xlu0 %3739
      %v3742 = vsel %vm1305, %v3065, 0
      %v3745 = vsel %vm1309, %v3740, 0
      %3747 = vmatprep.subr.bf16.mxu0 0
      %3748 = vmatpush1.bf16.msra.mxu0 0
      %3749 = vmatprep.subr.bf16.mxu0 0
      %3750 = vmatpush1.bf16.msra.mxu0 0
      %3751 = vmatprep.subr.bf16.mxu0 0
      %3752 = vmatpush1.bf16.msra.mxu0 0
      %3753 = vmatprep.subr.bf16.mxu0 0
      %3754 = vmatpush1.bf16.msra.mxu0 0
      %3755 = vmatprep.subr.bf16.mxu0 0
      %3756 = vmatpush1.bf16.msra.mxu0 0
      %3757 = vmatprep.subr.bf16.mxu0 0
      %3758 = vmatpush1.bf16.msra.mxu0 0
      %3759 = vmatprep.subr.bf16.mxu0 0
      %3760 = vmatpush1.bf16.msra.mxu0 0
      %3761 = vmatprep.subr.bf16.mxu0 0
      %3762 = vmatpush1.bf16.msra.mxu0 %v3745
      %3763 = vmatprep.subr.bf16.mxu0 0
      %3764 = vmatpush2.bf16.msra.mxu0 0
      %3765 = vmatprep.subr.bf16.mxu0 0
      %3766 = vmatpush2.bf16.msra.mxu0 0
      %3767 = vmatprep.subr.bf16.mxu0 0
      %3768 = vmatpush2.bf16.msra.mxu0 0
      %3769 = vmatprep.subr.bf16.mxu0 0
      %3770 = vmatpush2.bf16.msra.mxu0 0
      %3771 = vmatprep.subr.bf16.mxu0 0
      %3772 = vmatpush2.bf16.msra.mxu0 0
      %3773 = vmatprep.subr.bf16.mxu0 0
      %3774 = vmatpush2.bf16.msra.mxu0 0
      %3775 = vmatprep.subr.bf16.mxu0 0
      %3776 = vmatpush2.bf16.msra.mxu0 0
      %3777 = vmatprep.subr.bf16.mxu0 0
      %3778 = vmatpush2.bf16.msra.mxu0 0
      %3779 = vmatprep.mubr.bf16.mxu0 0
      %3780 = vmatmul.mubr.bf16.gmra.mxu0 %v3742
      %v3781 = vpop.f32.mrf.mxu0
      %v3782 = vadd.f32 0.0, %v3781
      %v3783 = vpop.f32.mrf.mxu0
      %v3784 = vpop.f32.mrf.mxu0
      %v3785 = vpop.f32.mrf.mxu0
      %3786 = vdwg.mxu0
      %3787 = vrot.lane.b32.xlu0 %v1061, 48
      %v3788 = vpop.permute.xlu0 %3787
      %v3790 = vsel %vm1305, %v3066, 0
      %v3793 = vsel %vm1309, %v3788, 0
      %3795 = vmatprep.subr.bf16.mxu0 0
      %3796 = vmatpush1.bf16.msra.mxu0 0
      %3797 = vmatprep.subr.bf16.mxu0 0
      %3798 = vmatpush1.bf16.msra.mxu0 0
      %3799 = vmatprep.subr.bf16.mxu0 0
      %3800 = vmatpush1.bf16.msra.mxu0 0
      %3801 = vmatprep.subr.bf16.mxu0 0
      %3802 = vmatpush1.bf16.msra.mxu0 0
      %3803 = vmatprep.subr.bf16.mxu0 0
      %3804 = vmatpush1.bf16.msra.mxu0 0
      %3805 = vmatprep.subr.bf16.mxu0 0
      %3806 = vmatpush1.bf16.msra.mxu0 0
      %3807 = vmatprep.subr.bf16.mxu0 0
      %3808 = vmatpush1.bf16.msra.mxu0 0
      %3809 = vmatprep.subr.bf16.mxu0 0
      %3810 = vmatpush1.bf16.msra.mxu0 %v3793
      %3811 = vmatprep.subr.bf16.mxu0 0
      %3812 = vmatpush2.bf16.msra.mxu0 0
      %3813 = vmatprep.subr.bf16.mxu0 0
      %3814 = vmatpush2.bf16.msra.mxu0 0
      %3815 = vmatprep.subr.bf16.mxu0 0
      %3816 = vmatpush2.bf16.msra.mxu0 0
      %3817 = vmatprep.subr.bf16.mxu0 0
      %3818 = vmatpush2.bf16.msra.mxu0 0
      %3819 = vmatprep.subr.bf16.mxu0 0
      %3820 = vmatpush2.bf16.msra.mxu0 0
      %3821 = vmatprep.subr.bf16.mxu0 0
      %3822 = vmatpush2.bf16.msra.mxu0 0
      %3823 = vmatprep.subr.bf16.mxu0 0
      %3824 = vmatpush2.bf16.msra.mxu0 0
      %3825 = vmatprep.subr.bf16.mxu0 0
      %3826 = vmatpush2.bf16.msra.mxu0 0
      %3827 = vmatprep.mubr.bf16.mxu0 0
      %3828 = vmatmul.mubr.bf16.gmra.mxu0 %v3790
      %v3829 = vpop.f32.mrf.mxu0
      %v3830 = vadd.f32 0.0, %v3829
      %v3831 = vpop.f32.mrf.mxu0
      %v3832 = vpop.f32.mrf.mxu0
      %v3833 = vpop.f32.mrf.mxu0
      %3834 = vdwg.mxu0
      %3851 = vrot.lane.b32.xlu0 %v3110, 16
      %v3852 = vpop.permute.xlu0 %3851
      %3853 = vrot.lane.b32.xlu0 %v3158, 16
      %v3854 = vpop.permute.xlu0 %3853
      %3855 = vrot.lane.b32.xlu0 %v3206, 16
      %v3856 = vpop.permute.xlu0 %3855
      %3857 = vrot.lane.b32.xlu0 %v3254, 16
      %v3858 = vpop.permute.xlu0 %3857
      %3859 = vrot.lane.b32.xlu0 %v3302, 16
      %v3860 = vpop.permute.xlu0 %3859
      %3861 = vrot.lane.b32.xlu0 %v3350, 16
      %v3862 = vpop.permute.xlu0 %3861
      %3863 = vrot.lane.b32.xlu0 %v3398, 16
      %v3864 = vpop.permute.xlu0 %3863
      %3865 = vrot.lane.b32.xlu0 %v3446, 16
      %v3866 = vpop.permute.xlu0 %3865
      %3867 = vrot.lane.b32.xlu0 %v3494, 16
      %v3868 = vpop.permute.xlu0 %3867
      %3869 = vrot.lane.b32.xlu0 %v3542, 16
      %v3870 = vpop.permute.xlu0 %3869
      %3871 = vrot.lane.b32.xlu0 %v3590, 16
      %v3872 = vpop.permute.xlu0 %3871
      %3873 = vrot.lane.b32.xlu0 %v3638, 16
      %v3874 = vpop.permute.xlu0 %3873
      %3875 = vrot.lane.b32.xlu0 %v3686, 16
      %v3876 = vpop.permute.xlu0 %3875
      %3877 = vrot.lane.b32.xlu0 %v3734, 16
      %v3878 = vpop.permute.xlu0 %3877
      %3879 = vrot.lane.b32.xlu0 %v3782, 16
      %v3880 = vpop.permute.xlu0 %3879
      %3881 = vrot.lane.b32.xlu0 %v3830, 16
      %v3882 = vpop.permute.xlu0 %3881
      %v3899 = vsel %vm238, %v1348, %v3852
      %v3900 = vsel %vm238, %v1396, %v3854
      %v3901 = vsel %vm238, %v1444, %v3856
      %v3902 = vsel %vm238, %v1492, %v3858
      %v3903 = vsel %vm238, %v1540, %v3860
      %v3904 = vsel %vm238, %v1588, %v3862
      %v3905 = vsel %vm238, %v1636, %v3864
      %v3906 = vsel %vm238, %v1684, %v3866
      %v3907 = vsel %vm238, %v1732, %v3868
      %v3908 = vsel %vm238, %v1780, %v3870
      %v3909 = vsel %vm238, %v1828, %v3872
      %v3910 = vsel %vm238, %v1876, %v3874
      %v3911 = vsel %vm238, %v1924, %v3876
      %v3912 = vsel %vm238, %v1972, %v3878
      %v3913 = vsel %vm238, %v2020, %v3880
      %v3914 = vsel %vm238, %v2068, %v3882
      %v3931 = vcombine.low %v3899, %v3900
      %v3932 = vcombine.low %v3901, %v3902
      %v3933 = vcombine.low %v3903, %v3904
      %v3934 = vcombine.low %v3905, %v3906
      %v3935 = vcombine.low %v3907, %v3908
      %v3936 = vcombine.low %v3909, %v3910
      %v3937 = vcombine.low %v3911, %v3912
      %v3938 = vcombine.low %v3913, %v3914
      %v3947 = vpack.c.bf16 %v3932, %v3931
      %v3948 = vpack.c.bf16 %v3934, %v3933
      %v3949 = vpack.c.bf16 %v3936, %v3935
      %v3950 = vpack.c.bf16 %v3938, %v3937
      %v3955 = vunpack.c.l.b16 %v3947
      %v3956 = vunpack.c.h.b16 %v3947
      %v3957 = vunpack.c.l.b16 %v3948
      %v3958 = vunpack.c.h.b16 %v3948
      %v3959 = vunpack.c.l.b16 %v3949
      %v3960 = vunpack.c.h.b16 %v3949
      %v3961 = vunpack.c.l.b16 %v3950
      %v3962 = vunpack.c.h.b16 %v3950
      %v3963 = vpack.c.b16 %v3955, %v3955
      %v3964 = vpack.c.b16 %v3956, %v3956
      %v3965 = vpack.c.b16 %v3957, %v3957
      %v3966 = vpack.c.b16 %v3958, %v3958
      %v3967 = vpack.c.b16 %v3959, %v3959
      %v3968 = vpack.c.b16 %v3960, %v3960
      %v3969 = vpack.c.b16 %v3961, %v3961
      %v3970 = vpack.c.b16 %v3962, %v3962
      %vm3979 = vcmask 257024
      %3980 = vst.msk [vmem:[%s145] sm:$0xf] %vm3979, %v3963
      %3981 = vst.msk [vmem:[%s145 + $0x4] sm:$0xf] %vm3979, %v3964
      %3982 = vst.msk [vmem:[%s145 + $0x8] sm:$0xf] %vm3979, %v3965
      %3983 = vst.msk [vmem:[%s145 + $0xc] sm:$0xf] %vm3979, %v3966
      %3984 = vst.msk [vmem:[%s145 + $0x10] sm:$0xf] %vm3979, %v3967
      %3985 = vst.msk [vmem:[%s145 + $0x14] sm:$0xf] %vm3979, %v3968
      %3986 = vst.msk [vmem:[%s145 + $0x18] sm:$0xf] %vm3979, %v3969
      %3987 = vst.msk [vmem:[%s145 + $0x1c] sm:$0xf] %vm3979, %v3970
      %s3988 = smul.u32 8, %s13
      %p3989 = scmp.lt.s32.totalorder %s3988, 15
      %s3990 = scalar_select %p3989, %s3988, 15
      %s3991 = smul.addr %s3990, 4
      %s3992 = scalar_lea.vmem %s2, %s3991
      // Predicated region
      $region29: #{_lambda_.16} parent=27 // pred_check
        %p3993 = pneg %p78
      $region30: #{_lambda_.16} parent=27 // pred_check_branch
        %3995 = sbr.rel (%p3993) target = $region32
      $region31: #{_lambda_.16} parent=27 // pred_region
        %s3996 = smul.u32 8, %s13
      $region32: #{_lambda_.16} parent=27 // pred_fallthru
        _
    $region28: #{_lambda_.16} parent=5 // pred_fallthru
      _
    %p3997 = scmp.le.s32.totalorder 2, %s8
    // Predicated region
    $region33: #{_lambda_.16} parent=5 // pred_check
      %p3998 = pneg %p3997
    $region34: #{_lambda_.16} parent=5 // pred_check_branch
      %4000 = sbr.rel (%p3998) target = $region36
    $region35: #{_lambda_.16} parent=5 // pred_region
      %s4001 = ssub.s32 %s8, 2
      // Predicated region
      $region37: #{_lambda_.16} parent=35 // pred_check
        %p4002 = pneg %p84
      $region38: #{_lambda_.16} parent=35 // pred_check_branch
        %4004 = sbr.rel (%p4002) target = $region40
      $region39: #{_lambda_.16} parent=35 // pred_region
        %s4005 = smul.u32 8, %s14
        %p4006 = scmp.lt.s32.totalorder %s4005, 15
        %s4007 = scalar_select %p4006, %s4005, 15
        %s4008 = smul.addr %s4007, 4
        %s4009 = scalar_lea.vmem %s2, %s4008
      $region40: #{_lambda_.16} parent=35 // pred_fallthru
        _
    $region36: #{_lambda_.16} parent=5 // pred_fallthru
      _
  $region6: #{_lambda_.16} parent=0 // loop_footer
    %s12 = sadd.s32 1, %s8
  $region7: #{_lambda_.16} parent=0 // loop_footer_branch
    %7 = sbr.rel target = $region3
  $region8: #{_lambda_.16} parent=0 // loop_exit
    _

// kernel: _lambda_.22
$region0: #{_lambda_.22}
  #allocation0 [shape = 'u32[]', space=smem, size = 0x4, offset = 0x4, fixed_abs, tag = 'smem constant byte address 0x4 - core index']
  #allocation1 [shape = 'u32[144,128]{1,0:T(1,128)}', space=vmem, size = 0x12000, scoped, tag = 'internal scratch']
  %s0 = inlined_call_operand.vmem [shape: f32[32,64], index: 0, kind: input, shape index: {}]
  %s1 = inlined_call_operand.vmem [shape: f32[1,64], index: 1, kind: input, shape index: {}]
  %s2 = inlined_call_operand.vmem [shape: f32[1,64], index: 2, kind: input, shape index: {}]
  %s3 = inlined_call_operand.vmem [shape: bf16[64,192], index: 3, kind: input, shape index: {}]
  %s4 = inlined_call_operand.vmem [shape: bf16[32,192], index: 4, kind: output, shape index: {}]
  %s5 = sld [smem:[#allocation0]]
  $region49: #{_lambda_.22} parent=0
    _
  %s7 = ssub.s32 1, %s5
  %s8 = scalar_select 0, %s7, %s5
  loop: start=0, step=1, limit=4
  $region2: #{_lambda_.22} parent=0 // loop_pre_header
    _
  $region3: #{_lambda_.22} parent=0 // loop_header
    %s10 = sphi 0, %s14
    %p11 = scmp.ge.s32.totalorder %s10, 4
    %s20 = sphi 0, %s22
    %s23 = sphi 0, %s20
    %s24 = sphi 0, %s23
    %s40 = sphi 0, %s24
    %s44 = sphi 0, %s44
    %s46 = sphi 0, %s44
    %s47 = sphi 0, %s46
    %s61 = sphi 0, %s47
    %s65 = sphi 0, %s65
    %s67 = sphi 0, %s65
    %s68 = sphi 0, %s67
    %s82 = sphi 0, %s68
    %s86 = sphi 0, %s86
    %s88 = sphi 0, %s86
    %s89 = sphi 0, %s88
    %s103 = sphi 0, %s89
    %s109 = sphi 0, %s111
    %s112 = sphi 0, %s109
    %s113 = sphi 0, %s112
    %s129 = sphi 0, %s113
  $region4: #{_lambda_.22} parent=0 // loop_header_branch
    %13 = sbr.rel (%p11) target = $region8
  $region5: #{_lambda_.22} parent=0 // loop_body
    %s15 = ssub.s32 %s10, 1
    %s16 = ssub.s32 %s10, 2
    %s17 = sadd.s32 %s10, 1
    %s18 = ssub.s32 %s10, %s17
    %p19 = scmp.eq.s32.totalorder %s18, 0
    %s21 = sadd.s32 %s20, 1
    %s22 = scalar_select %p19, %s20, %s21
    %p25 = pneg %p19
    %p26 = scmp.eq.s32.totalorder %s10, 1
    %p27 = por %p25, %p26
    %p28 = scmp.ne.s32.totalorder %s20, %s23
    %p29 = scmp.eq.s32.totalorder %s10, 0
    %p30 = por %p28, %p29
    %p31 = scmp.ne.s32.totalorder %s20, %s23
    %p32 = scmp.eq.s32.totalorder %s15, 1
    %p33 = por %p31, %p32
    %p34 = scmp.ne.s32.totalorder %s23, %s24
    %p35 = scmp.eq.s32.totalorder %s15, 0
    %p36 = por %p34, %p35
    %p37 = scmp.ne.s32.totalorder %s23, %s24
    %p38 = scmp.eq.s32.totalorder %s16, 1
    %p39 = por %p37, %p38
    %p41 = scmp.ne.s32.totalorder %s24, %s40
    %p42 = scmp.eq.s32.totalorder %s16, 0
    %p43 = por %p41, %p42
    %s45 = sadd.s32 %s44, 1
    %p48 = scmp.eq.s32.totalorder %s10, 1
    %p49 = scmp.ne.s32.totalorder %s44, %s46
    %p50 = scmp.eq.s32.totalorder %s10, 0
    %p51 = por %p49, %p50
    %p52 = scmp.ne.s32.totalorder %s44, %s46
    %p53 = scmp.eq.s32.totalorder %s15, 1
    %p54 = por %p52, %p53
    %p55 = scmp.ne.s32.totalorder %s46, %s47
    %p56 = scmp.eq.s32.totalorder %s15, 0
    %p57 = por %p55, %p56
    %p58 = scmp.ne.s32.totalorder %s46, %s47
    %p59 = scmp.eq.s32.totalorder %s16, 1
    %p60 = por %p58, %p59
    %p62 = scmp.ne.s32.totalorder %s47, %s61
    %p63 = scmp.eq.s32.totalorder %s16, 0
    %p64 = por %p62, %p63
    %s66 = sadd.s32 %s65, 1
    %p69 = scmp.eq.s32.totalorder %s10, 1
    %p70 = scmp.ne.s32.totalorder %s65, %s67
    %p71 = scmp.eq.s32.totalorder %s10, 0
    %p72 = por %p70, %p71
    %p73 = scmp.ne.s32.totalorder %s65, %s67
    %p74 = scmp.eq.s32.totalorder %s15, 1
    %p75 = por %p73, %p74
    %p76 = scmp.ne.s32.totalorder %s67, %s68
    %p77 = scmp.eq.s32.totalorder %s15, 0
    %p78 = por %p76, %p77
    %p79 = scmp.ne.s32.totalorder %s67, %s68
    %p80 = scmp.eq.s32.totalorder %s16, 1
    %p81 = por %p79, %p80
    %p83 = scmp.ne.s32.totalorder %s68, %s82
    %p84 = scmp.eq.s32.totalorder %s16, 0
    %p85 = por %p83, %p84
    %s87 = sadd.s32 %s86, 1
    %p90 = scmp.eq.s32.totalorder %s10, 1
    %p91 = scmp.ne.s32.totalorder %s86, %s88
    %p92 = scmp.eq.s32.totalorder %s10, 0
    %p93 = por %p91, %p92
    %p94 = scmp.ne.s32.totalorder %s86, %s88
    %p95 = scmp.eq.s32.totalorder %s15, 1
    %p96 = por %p94, %p95
    %p97 = scmp.ne.s32.totalorder %s88, %s89
    %p98 = scmp.eq.s32.totalorder %s15, 0
    %p99 = por %p97, %p98
    %p100 = scmp.ne.s32.totalorder %s88, %s89
    %p101 = scmp.eq.s32.totalorder %s16, 1
    %p102 = por %p100, %p101
    %p104 = scmp.ne.s32.totalorder %s89, %s103
    %p105 = scmp.eq.s32.totalorder %s16, 0
    %p106 = por %p104, %p105
    %s107 = ssub.s32 %s10, %s17
    %p108 = scmp.eq.s32.totalorder %s107, 0
    %s110 = sadd.s32 %s109, 1
    %s111 = scalar_select %p108, %s109, %s110
    %p114 = pneg %p108
    %p115 = scmp.eq.s32.totalorder %s10, 1
    %p116 = por %p114, %p115
    %p117 = scmp.ne.s32.totalorder %s109, %s112
    %p118 = scmp.eq.s32.totalorder %s10, 0
    %p119 = por %p117, %p118
    %p120 = scmp.ne.s32.totalorder %s109, %s112
    %p121 = scmp.eq.s32.totalorder %s15, 1
    %p122 = por %p120, %p121
    %p123 = scmp.ne.s32.totalorder %s112, %s113
    %p124 = scmp.eq.s32.totalorder %s15, 0
    %p125 = por %p123, %p124
    %p126 = scmp.ne.s32.totalorder %s112, %s113
    %p127 = scmp.eq.s32.totalorder %s16, 1
    %p128 = por %p126, %p127
    %p130 = scmp.ne.s32.totalorder %s113, %s129
    %p131 = scmp.eq.s32.totalorder %s16, 0
    %p132 = por %p130, %p131
    %p133 = scmp.le.s32.totalorder 1, %s10
    %p134 = scmp.lt.s32.totalorder %s10, 3
    %p135 = pnand %p133, %p134
    %p136 = pneg %p135
    // Predicated region
    $region9: #{_lambda_.22} parent=5 // pred_check
      _
    $region10: #{_lambda_.22} parent=5 // pred_check_branch
      %138 = sbr.rel (%p135) target = $region12
    $region11: #{_lambda_.22} parent=5 // pred_region
      %s139 = ssub.s32 %s10, 1
      // Predicated region
      $region13: #{_lambda_.22} parent=11 // pred_check
        %p140 = pneg %p57
      $region14: #{_lambda_.22} parent=11 // pred_check_branch
        %142 = sbr.rel (%p140) target = $region16
      $region15: #{_lambda_.22} parent=11 // pred_region
        _
      $region16: #{_lambda_.22} parent=11 // pred_fallthru
        _
      // Predicated region
      $region17: #{_lambda_.22} parent=11 // pred_check
        %p143 = pneg %p78
      $region18: #{_lambda_.22} parent=11 // pred_check_branch
        %145 = sbr.rel (%p143) target = $region20
      $region19: #{_lambda_.22} parent=11 // pred_region
        _
      $region20: #{_lambda_.22} parent=11 // pred_fallthru
        _
      // Predicated region
      $region21: #{_lambda_.22} parent=11 // pred_check
        %p146 = pneg %p99
      $region22: #{_lambda_.22} parent=11 // pred_check_branch
        %148 = sbr.rel (%p146) target = $region24
      $region23: #{_lambda_.22} parent=11 // pred_region
        _
      $region24: #{_lambda_.22} parent=11 // pred_fallthru
        _
    $region12: #{_lambda_.22} parent=5 // pred_fallthru
      _
    %p149 = scmp.lt.s32.totalorder %s10, 2
    // Predicated region
    $region25: #{_lambda_.22} parent=5 // pred_check
      %p150 = pneg %p149
    $region26: #{_lambda_.22} parent=5 // pred_check_branch
      %152 = sbr.rel (%p150) target = $region28
    $region27: #{_lambda_.22} parent=5 // pred_region
      // Predicated region
      $region29: #{_lambda_.22} parent=27 // pred_check
        %p153 = pneg %p30
      $region30: #{_lambda_.22} parent=27 // pred_check_branch
        %155 = sbr.rel (%p153) target = $region32
      $region31: #{_lambda_.22} parent=27 // pred_region
        %s156 = smul.u32 2, %s10
        %p157 = scmp.lt.s32.totalorder %s156, 3
        %s158 = scalar_select %p157, %s156, 3
        %s159 = smul.addr %s158, 8
        %s160 = scalar_lea.vmem %s0, %s159
        %s161 = smul.u32 2, %s10
      $region32: #{_lambda_.22} parent=27 // pred_fallthru
        _
    $region28: #{_lambda_.22} parent=5 // pred_fallthru
      _
    %p162 = scmp.le.s32.totalorder 1, %s10
    %p163 = scmp.lt.s32.totalorder %s10, 3
    %p164 = pnand %p162, %p163
    %p165 = pneg %p164
    // Predicated region
    $region33: #{_lambda_.22} parent=5 // pred_check
      _
    $region34: #{_lambda_.22} parent=5 // pred_check_branch
      %167 = sbr.rel (%p164) target = $region36
    $region35: #{_lambda_.22} parent=5 // pred_region
      %s168 = ssub.s32 %s10, 1
      %s169 = smul.u32 2, %s15
      %p170 = scmp.lt.s32.totalorder %s169, 3
      %s171 = scalar_select %p170, %s169, 3
      %s172 = smul.addr %s171, 8
      %s173 = scalar_lea.vmem %s0, %s172
      %p174 = pneg %p36
      %p175 = pneg %p33
      %p176 = pneg %p57
      %p177 = pneg %p54
      %p178 = pneg %p78
      %p179 = pneg %p75
      %p180 = pneg %p99
      %p181 = pneg %p96
      %p182 = pneg %p125
      %p183 = pneg %p122
      %s184 = smul.u32 2, %s15
      %p185 = scmp.lt.s32.totalorder %s184, 3
      %s186 = scalar_select %p185, %s184, 3
      %s187 = smul.addr %s186, 2
      %s188 = smul.addr %s187, 4
      %s189 = scalar_lea.vmem %s4, %s188
      %s190 = smul.u32 2, %s15
      %p191 = scmp.lt.s32.totalorder %s190, 3
      %s192 = scalar_select %p191, %s190, 3
      %s193 = smul.addr %s192, 8
      %s194 = scalar_lea.vmem %s0, %s193
      %s195 = smul.u32 2, %s15
      %s196 = smul.u32 2, %s15
      %p197 = scmp.lt.s32.totalorder %s196, 3
      %s198 = scalar_select %p197, %s196, 3
      %s199 = smul.addr %s198, 2
      %s200 = smul.addr %s199, 4
      %s201 = scalar_lea.vmem %s4, %s200
      %s202 = smul.u32 2, %s15
      %v204 = vld [vmem:[%s194] sm:$0xff]
      %v205 = vld [vmem:[%s194 + $0x8] sm:$0xff]
      %v206 = vld [vmem:[%s1] sm:$0x1]
      %v207 = vld [vmem:[%s2] sm:$0x1]
      %vm208 = vcmask 523264
      %v209 = vsel %vm208, %v204, 0.0
      %210 = vadd.xlane.f32.xlu0 %v209
      %v211 = vpop.xlane.xlu0 %210
      %v212 = vsel %vm208, %v205, 0.0
      %213 = vadd.xlane.f32.xlu0 %v212
      %v214 = vpop.xlane.xlu0 %213
      %v215 = vrcp.pop 64.0
      %v216 = vmul.f32 %v211, %v215
      %v217 = vmul.f32 %v214, %v215
      %v218 = vsub.f32 %v204, %v216
      %v219 = vsub.f32 %v205, %v217
      %v220 = vmul.f32 %v218, %v218
      %v221 = vmul.f32 %v219, %v219
      %v222 = vsel %vm208, %v220, 0.0
      %223 = vadd.xlane.f32.xlu0 %v222
      %v224 = vpop.xlane.xlu0 %223
      %v225 = vsel %vm208, %v221, 0.0
      %226 = vadd.xlane.f32.xlu0 %v225
      %v227 = vpop.xlane.xlu0 %226
      %v228 = vmul.f32 %v224, %v215
      %v229 = vmul.f32 %v227, %v215
      %v230 = vadd.f32 %v228, 1e-05
      %v231 = vadd.f32 %v229, 1e-05
      %v232 = vrsqrt.pop %v230
      %v233 = vrsqrt.pop %v231
      %v234 = vmul.f32 %v218, %v232
      %v235 = vmul.f32 %v219, %v233
      %v237 = vlaneseq
      %v238 = vshrl.u32 %v237, 7
      %v239 = vsub.s32 0, %v238
      %v240 = vrot.slane %v206, %v239
      %v242 = vmul.f32 %v234, %v240
      %v243 = vmul.f32 %v235, %v240
      %v245 = vlaneseq
      %v246 = vshrl.u32 %v245, 7
      %v247 = vsub.s32 0, %v246
      %v248 = vrot.slane %v207, %v247
      %v250 = vadd.f32 %v242, %v248
      %v251 = vadd.f32 %v243, %v248
      %v252 = vpack.c.bf16 %v251, %v250
      %v253 = vld [vmem:[%s3] sm:$0xff]
      %v254 = vld [vmem:[%s3 + $0x8] sm:$0xff]
      %v255 = vld [vmem:[%s3 + $0x10] sm:$0xff]
      %v256 = vld [vmem:[%s3 + $0x18] sm:$0xff]
      %v257 = vld [vmem:[%s3 + $0x20] sm:$0xff]
      %v258 = vld [vmem:[%s3 + $0x28] sm:$0xff]
      %v259 = vld [vmem:[%s3 + $0x30] sm:$0xff]
      %v260 = vld [vmem:[%s3 + $0x38] sm:$0xff]
      %v269 = vunpack.c.l.b16 %v253
      %v270 = vunpack.c.h.b16 %v253
      %v271 = vunpack.c.l.b16 %v254
      %v272 = vunpack.c.h.b16 %v254
      %v273 = vunpack.c.l.b16 %v255
      %v274 = vunpack.c.h.b16 %v255
      %v275 = vunpack.c.l.b16 %v256
      %v276 = vunpack.c.h.b16 %v256
      %v277 = vunpack.c.l.b16 %v257
      %v278 = vunpack.c.h.b16 %v257
      %v279 = vunpack.c.l.b16 %v258
      %v280 = vunpack.c.h.b16 %v258
      %v281 = vunpack.c.l.b16 %v259
      %v282 = vunpack.c.h.b16 %v259
      %v283 = vunpack.c.l.b16 %v260
      %v284 = vunpack.c.h.b16 %v260
      %v285 = vpack.c.b16 %v271, %v269
      %v286 = vpack.c.b16 %v272, %v270
      %v287 = vpack.c.b16 %v275, %v273
      %v288 = vpack.c.b16 %v276, %v274
      %v289 = vpack.c.b16 %v279, %v277
      %v290 = vpack.c.b16 %v280, %v278
      %v291 = vpack.c.b16 %v283, %v281
      %v292 = vpack.c.b16 %v284, %v282
      %v302 = vsel %vm208, %v252, 0
      %304 = vmatprep.subr.bf16.mxu0 0
      %305 = vmatpush1.bf16.msra.mxu0 0
      %306 = vmatprep.subr.bf16.mxu0 0
      %307 = vmatpush1.bf16.msra.mxu0 0
      %308 = vmatprep.subr.bf16.mxu0 0
      %309 = vmatpush1.bf16.msra.mxu0 0
      %310 = vmatprep.subr.bf16.mxu0 0
      %311 = vmatpush1.bf16.msra.mxu0 0
      %312 = vmatprep.subr.bf16.mxu0 %v292
      %313 = vmatpush1.bf16.msra.mxu0 %v291
      %314 = vmatprep.subr.bf16.mxu0 %v290
      %315 = vmatpush1.bf16.msra.mxu0 %v289
      %316 = vmatprep.subr.bf16.mxu0 %v288
      %317 = vmatpush1.bf16.msra.mxu0 %v287
      %318 = vmatprep.subr.bf16.mxu0 %v286
      %319 = vmatpush1.bf16.msra.mxu0 %v285
      %320 = vmatprep.subr.bf16.mxu0 0
      %321 = vmatpush2.bf16.msra.mxu0 0
      %322 = vmatprep.subr.bf16.mxu0 0
      %323 = vmatpush2.bf16.msra.mxu0 0
      %324 = vmatprep.subr.bf16.mxu0 0
      %325 = vmatpush2.bf16.msra.mxu0 0
      %326 = vmatprep.subr.bf16.mxu0 0
      %327 = vmatpush2.bf16.msra.mxu0 0
      %328 = vmatprep.subr.bf16.mxu0 0
      %329 = vmatpush2.bf16.msra.mxu0 0
      %330 = vmatprep.subr.bf16.mxu0 0
      %331 = vmatpush2.bf16.msra.mxu0 0
      %332 = vmatprep.subr.bf16.mxu0 0
      %333 = vmatpush2.bf16.msra.mxu0 0
      %334 = vmatprep.subr.bf16.mxu0 0
      %335 = vmatpush2.bf16.msra.mxu0 0
      %336 = vmatprep.mubr.bf16.mxu0 0
      %337 = vmatmul.mubr.bf16.gmra.mxu0 %v302
      %v338 = vpop.f32.mrf.mxu0
      %v339 = vadd.f32 0.0, %v338
      %v340 = vpop.f32.mrf.mxu0
      %v341 = vadd.f32 0.0, %v340
      %v342 = vpop.f32.mrf.mxu0
      %v343 = vadd.f32 0.0, %v342
      %v344 = vpop.f32.mrf.mxu0
      %v345 = vadd.f32 0.0, %v344
      %346 = vdwg.mxu0
      %v347 = vpack.c.bf16 %v343, %v339
      %v348 = vpack.c.bf16 %v345, %v341
      %v351 = vunpack.c.l.b16 %v347
      %v352 = vunpack.c.l.b16 %v348
      %v353 = vunpack.c.h.b16 %v347
      %v354 = vunpack.c.h.b16 %v348
      %v355 = vpack.c.b16 %v352, %v351
      %v356 = vpack.c.b16 %v354, %v353
      %vm359 = vcmask 1043456
      %vm360 = vcmask 523268
      %vm361 = vmor %vm360, %vm359
      %362 = vst.msk [vmem:[%s201] sm:$0xff] %vm361, %v355
      %363 = vst.msk [vmem:[%s201 + $0x8] sm:$0xff] %vm361, %v356
      %s364 = smul.u32 2, %s15
      %p365 = scmp.lt.s32.totalorder %s364, 3
      %s366 = scalar_select %p365, %s364, 3
      %s367 = smul.addr %s366, 2
      %s368 = smul.addr %s367, 4
      %s369 = scalar_lea.vmem %s4, %s368
      // Predicated region
      $region37: #{_lambda_.22} parent=35 // pred_check
        %p370 = pneg %p122
      $region38: #{_lambda_.22} parent=35 // pred_check_branch
        %372 = sbr.rel (%p370) target = $region40
      $region39: #{_lambda_.22} parent=35 // pred_region
        %s373 = smul.u32 2, %s15
      $region40: #{_lambda_.22} parent=35 // pred_fallthru
        _
    $region36: #{_lambda_.22} parent=5 // pred_fallthru
      _
    %p374 = scmp.le.s32.totalorder 2, %s10
    // Predicated region
    $region41: #{_lambda_.22} parent=5 // pred_check
      %p375 = pneg %p374
    $region42: #{_lambda_.22} parent=5 // pred_check_branch
      %377 = sbr.rel (%p375) target = $region44
    $region43: #{_lambda_.22} parent=5 // pred_region
      %s378 = ssub.s32 %s10, 2
      // Predicated region
      $region45: #{_lambda_.22} parent=43 // pred_check
        %p379 = pneg %p128
      $region46: #{_lambda_.22} parent=43 // pred_check_branch
        %381 = sbr.rel (%p379) target = $region48
      $region47: #{_lambda_.22} parent=43 // pred_region
        %s382 = smul.u32 2, %s16
        %p383 = scmp.lt.s32.totalorder %s382, 3
        %s384 = scalar_select %p383, %s382, 3
        %s385 = smul.addr %s384, 2
        %s386 = smul.addr %s385, 4
        %s387 = scalar_lea.vmem %s4, %s386
      $region48: #{_lambda_.22} parent=43 // pred_fallthru
        _
    $region44: #{_lambda_.22} parent=5 // pred_fallthru
      _
  $region6: #{_lambda_.22} parent=0 // loop_footer
    %s14 = sadd.s32 1, %s10
  $region7: #{_lambda_.22} parent=0 // loop_footer_branch
    %9 = sbr.rel target = $region3
  $region8: #{_lambda_.22} parent=0 // loop_exit
    _

// kernel: _lambda_.21
$region0: #{_lambda_.21}
  #allocation0 [shape = 'u32[]', space=smem, size = 0x4, offset = 0x4, fixed_abs, tag = 'smem constant byte address 0x4 - core index']
  #allocation1 [shape = 'u32[144,128]{1,0:T(1,128)}', space=vmem, size = 0x12000, scoped, tag = 'internal scratch']
  #allocation2 [shape = 'f32[16,64]{1,0:T(8,128)}', space=vmem, size = 0x2000, scoped, tag = 'scratch operand']
  %s0 = inlined_call_operand.vmem [shape: bf16[32,288], index: 0, kind: input, shape index: {}]
  %s1 = inlined_call_operand.vmem [shape: bf16[288,64], index: 1, kind: input, shape index: {}]
  %s2 = inlined_call_operand.vmem [shape: f32[1,64], index: 2, kind: input, shape index: {}]
  %s3 = inlined_call_operand.vmem [shape: f32[32,64], index: 3, kind: output, shape index: {}]
  %s4 = sld [smem:[#allocation0]]
  $region53: #{_lambda_.21} parent=0
    _
  %s6 = ssub.s32 1, %s4
  %s7 = scalar_select 0, %s6, %s4
  loop: start=0, step=1, limit=4
  $region2: #{_lambda_.21} parent=0 // loop_pre_header
    _
  $region3: #{_lambda_.21} parent=0 // loop_header
    %s9 = sphi 0, %s13
    %p10 = scmp.ge.s32.totalorder %s9, 4
    %s16 = sphi 0, %s28
    %s17 = sphi 0, %s24
    %s18 = sphi 0, %s16
    %s19 = sphi 0, %s17
    %s20 = sphi 0, %s18
    %s21 = sphi 0, %s19
    %s33 = sphi 0, %s35
    %s36 = sphi 0, %s33
    %s37 = sphi 0, %s36
    %s53 = sphi 0, %s37
    %s59 = sphi 0, %s61
    %s62 = sphi 0, %s59
    %s63 = sphi 0, %s62
    %s79 = sphi 0, %s63
    %s83 = sphi 0, %s83
    %s85 = sphi 0, %s83
    %s86 = sphi 0, %s85
    %s100 = sphi 0, %s86
    %s106 = sphi 0, %s108
    %s109 = sphi 0, %s106
    %s110 = sphi 0, %s109
    %s126 = sphi 0, %s110
  $region4: #{_lambda_.21} parent=0 // loop_header_branch
    %12 = sbr.rel (%p10) target = $region8
  $region5: #{_lambda_.21} parent=0 // loop_body
    %s14 = ssub.s32 %s9, 1
    %s15 = ssub.s32 %s9, 2
    %s22 = sadd.s32 1, %s17
    %p23 = scmp.ge.s32.totalorder %s22, 1
    %s24 = scalar_select %p23, 0, %s22
    %s25 = sadd.s32 1, %s16
    %s26 = scalar_select %p23, %s25, %s16
    %p27 = scmp.ge.s32.totalorder %s26, 2
    %s28 = scalar_select %p27, 0, %s26
    %s29 = ssub.s32 %s16, %s28
    %s30 = ssub.s32 %s17, %s24
    %s31 = sor.u32 %s29, %s30
    %p32 = scmp.eq.s32.totalorder %s31, 0
    %s34 = sadd.s32 %s33, 1
    %s35 = scalar_select %p32, %s33, %s34
    %p38 = pneg %p32
    %p39 = scmp.eq.s32.totalorder %s9, 1
    %p40 = por %p38, %p39
    %p41 = scmp.ne.s32.totalorder %s33, %s36
    %p42 = scmp.eq.s32.totalorder %s9, 0
    %p43 = por %p41, %p42
    %p44 = scmp.ne.s32.totalorder %s33, %s36
    %p45 = scmp.eq.s32.totalorder %s14, 1
    %p46 = por %p44, %p45
    %p47 = scmp.ne.s32.totalorder %s36, %s37
    %p48 = scmp.eq.s32.totalorder %s14, 0
    %p49 = por %p47, %p48
    %p50 = scmp.ne.s32.totalorder %s36, %s37
    %p51 = scmp.eq.s32.totalorder %s15, 1
    %p52 = por %p50, %p51
    %p54 = scmp.ne.s32.totalorder %s37, %s53
    %p55 = scmp.eq.s32.totalorder %s15, 0
    %p56 = por %p54, %p55
    %s57 = ssub.s32 %s17, %s24
    %p58 = scmp.eq.s32.totalorder %s57, 0
    %s60 = sadd.s32 %s59, 1
    %s61 = scalar_select %p58, %s59, %s60
    %p64 = pneg %p58
    %p65 = scmp.eq.s32.totalorder %s9, 1
    %p66 = por %p64, %p65
    %p67 = scmp.ne.s32.totalorder %s59, %s62
    %p68 = scmp.eq.s32.totalorder %s9, 0
    %p69 = por %p67, %p68
    %p70 = scmp.ne.s32.totalorder %s59, %s62
    %p71 = scmp.eq.s32.totalorder %s14, 1
    %p72 = por %p70, %p71
    %p73 = scmp.ne.s32.totalorder %s62, %s63
    %p74 = scmp.eq.s32.totalorder %s14, 0
    %p75 = por %p73, %p74
    %p76 = scmp.ne.s32.totalorder %s62, %s63
    %p77 = scmp.eq.s32.totalorder %s15, 1
    %p78 = por %p76, %p77
    %p80 = scmp.ne.s32.totalorder %s63, %s79
    %p81 = scmp.eq.s32.totalorder %s15, 0
    %p82 = por %p80, %p81
    %s84 = sadd.s32 %s83, 1
    %p87 = scmp.eq.s32.totalorder %s9, 1
    %p88 = scmp.ne.s32.totalorder %s83, %s85
    %p89 = scmp.eq.s32.totalorder %s9, 0
    %p90 = por %p88, %p89
    %p91 = scmp.ne.s32.totalorder %s83, %s85
    %p92 = scmp.eq.s32.totalorder %s14, 1
    %p93 = por %p91, %p92
    %p94 = scmp.ne.s32.totalorder %s85, %s86
    %p95 = scmp.eq.s32.totalorder %s14, 0
    %p96 = por %p94, %p95
    %p97 = scmp.ne.s32.totalorder %s85, %s86
    %p98 = scmp.eq.s32.totalorder %s15, 1
    %p99 = por %p97, %p98
    %p101 = scmp.ne.s32.totalorder %s86, %s100
    %p102 = scmp.eq.s32.totalorder %s15, 0
    %p103 = por %p101, %p102
    %s104 = ssub.s32 %s16, %s28
    %p105 = scmp.eq.s32.totalorder %s104, 0
    %s107 = sadd.s32 %s106, 1
    %s108 = scalar_select %p105, %s106, %s107
    %p111 = pneg %p105
    %p112 = scmp.eq.s32.totalorder %s9, 1
    %p113 = por %p111, %p112
    %p114 = scmp.ne.s32.totalorder %s106, %s109
    %p115 = scmp.eq.s32.totalorder %s9, 0
    %p116 = por %p114, %p115
    %p117 = scmp.ne.s32.totalorder %s106, %s109
    %p118 = scmp.eq.s32.totalorder %s14, 1
    %p119 = por %p117, %p118
    %p120 = scmp.ne.s32.totalorder %s109, %s110
    %p121 = scmp.eq.s32.totalorder %s14, 0
    %p122 = por %p120, %p121
    %p123 = scmp.ne.s32.totalorder %s109, %s110
    %p124 = scmp.eq.s32.totalorder %s15, 1
    %p125 = por %p123, %p124
    %p127 = scmp.ne.s32.totalorder %s110, %s126
    %p128 = scmp.eq.s32.totalorder %s15, 0
    %p129 = por %p127, %p128
    %p130 = scmp.le.s32.totalorder 1, %s9
    %p131 = scmp.lt.s32.totalorder %s9, 3
    %p132 = pnand %p130, %p131
    %p133 = pneg %p132
    // Predicated region
    $region9: #{_lambda_.21} parent=5 // pred_check
      _
    $region10: #{_lambda_.21} parent=5 // pred_check_branch
      %135 = sbr.rel (%p132) target = $region12
    $region11: #{_lambda_.21} parent=5 // pred_region
      %s136 = ssub.s32 %s9, 1
      // Predicated region
      $region13: #{_lambda_.21} parent=11 // pred_check
        %p137 = pneg %p75
      $region14: #{_lambda_.21} parent=11 // pred_check_branch
        %139 = sbr.rel (%p137) target = $region16
      $region15: #{_lambda_.21} parent=11 // pred_region
        %s140 = smul.u32 36, %s19
        %p141 = scmp.lt.s32.totalorder %s140, 35
        %s142 = scalar_select %p141, %s140, 35
        %s143 = smul.addr %s142, 4
        %s144 = scalar_lea.vmem %s1, %s143
        %s145 = smul.u32 36, %s19
      $region16: #{_lambda_.21} parent=11 // pred_fallthru
        _
      // Predicated region
      $region17: #{_lambda_.21} parent=11 // pred_check
        %p146 = pneg %p96
      $region18: #{_lambda_.21} parent=11 // pred_check_branch
        %148 = sbr.rel (%p146) target = $region20
      $region19: #{_lambda_.21} parent=11 // pred_region
        _
      $region20: #{_lambda_.21} parent=11 // pred_fallthru
        _
    $region12: #{_lambda_.21} parent=5 // pred_fallthru
      _
    %p149 = scmp.lt.s32.totalorder %s9, 2
    // Predicated region
    $region21: #{_lambda_.21} parent=5 // pred_check
      %p150 = pneg %p149
    $region22: #{_lambda_.21} parent=5 // pred_check_branch
      %152 = sbr.rel (%p150) target = $region24
    $region23: #{_lambda_.21} parent=5 // pred_region
      // Predicated region
      $region25: #{_lambda_.21} parent=23 // pred_check
        %p153 = pneg %p43
      $region26: #{_lambda_.21} parent=23 // pred_check_branch
        %155 = sbr.rel (%p153) target = $region28
      $region27: #{_lambda_.21} parent=23 // pred_region
        %s156 = smul.u32 2, %s16
        %s157 = smul.u32 3, %s17
        %p158 = scmp.lt.s32.totalorder %s156, 3
        %s159 = scalar_select %p158, %s156, 3
        %p160 = scmp.lt.s32.totalorder %s157, 2
        %s161 = scalar_select %p160, %s157, 2
        %s162 = smul.addr %s159, 3
        %s163 = sadd.s32 %s161, %s162
        %s164 = smul.addr %s163, 4
        %s165 = scalar_lea.vmem %s0, %s164
        %s166 = smul.u32 2, %s16
        %s167 = smul.u32 3, %s17
      $region28: #{_lambda_.21} parent=23 // pred_fallthru
        _
    $region24: #{_lambda_.21} parent=5 // pred_fallthru
      _
    %p168 = scmp.le.s32.totalorder 1, %s9
    %p169 = scmp.lt.s32.totalorder %s9, 3
    %p170 = pnand %p168, %p169
    %p171 = pneg %p170
    // Predicated region
    $region29: #{_lambda_.21} parent=5 // pred_check
      _
    $region30: #{_lambda_.21} parent=5 // pred_check_branch
      %173 = sbr.rel (%p170) target = $region32
    $region31: #{_lambda_.21} parent=5 // pred_region
      %s174 = ssub.s32 %s9, 1
      %s175 = smul.u32 2, %s18
      %s176 = smul.u32 3, %s19
      %p177 = scmp.lt.s32.totalorder %s175, 3
      %s178 = scalar_select %p177, %s175, 3
      %p179 = scmp.lt.s32.totalorder %s176, 2
      %s180 = scalar_select %p179, %s176, 2
      %s181 = smul.addr %s178, 3
      %s182 = sadd.s32 %s180, %s181
      %s183 = smul.addr %s182, 4
      %s184 = scalar_lea.vmem %s0, %s183
      %p185 = pneg %p49
      %p186 = pneg %p46
      %s187 = smul.u32 36, %s19
      %p188 = scmp.lt.s32.totalorder %s187, 35
      %s189 = scalar_select %p188, %s187, 35
      %s190 = smul.addr %s189, 4
      %s191 = scalar_lea.vmem %s1, %s190
      %p192 = pneg %p75
      %p193 = pneg %p72
      %p194 = pneg %p96
      %p195 = pneg %p93
      %p196 = pneg %p122
      %p197 = pneg %p119
      %s198 = smul.u32 2, %s18
      %p199 = scmp.lt.s32.totalorder %s198, 3
      %s200 = scalar_select %p199, %s198, 3
      %s201 = smul.addr %s200, 8
      %s202 = scalar_lea.vmem %s3, %s201
      %s203 = smul.u32 2, %s18
      %s204 = smul.u32 3, %s19
      %p205 = scmp.lt.s32.totalorder %s203, 3
      %s206 = scalar_select %p205, %s203, 3
      %p207 = scmp.lt.s32.totalorder %s204, 2
      %s208 = scalar_select %p207, %s204, 2
      %s209 = smul.addr %s206, 3
      %s210 = sadd.s32 %s208, %s209
      %s211 = smul.addr %s210, 4
      %s212 = scalar_lea.vmem %s0, %s211
      %s213 = smul.u32 2, %s18
      %s214 = smul.u32 3, %s19
      %s215 = smul.u32 36, %s19
      %p216 = scmp.lt.s32.totalorder %s215, 35
      %s217 = scalar_select %p216, %s215, 35
      %s218 = smul.addr %s217, 4
      %s219 = scalar_lea.vmem %s1, %s218
      %s220 = smul.u32 36, %s19
      %s221 = smul.u32 2, %s18
      %p222 = scmp.lt.s32.totalorder %s221, 3
      %s223 = scalar_select %p222, %s221, 3
      %s224 = smul.addr %s223, 8
      %s225 = scalar_lea.vmem %s3, %s224
      %s226 = smul.u32 2, %s18
      %p228 = scmp.eq.s32.totalorder %s19, 0
      // Predicated region
      $region33: #{_lambda_.21} parent=31 // pred_check
        %p229 = pneg %p228
      $region34: #{_lambda_.21} parent=31 // pred_check_branch
        %231 = sbr.rel (%p229) target = $region36
      $region35: #{_lambda_.21} parent=31 // pred_region
        %vm232 = vcmask 523264
        %233 = vst.msk [vmem:[#allocation2] sm:$0xff] %vm232, 0.0
        %234 = vst.msk [vmem:[#allocation2 + $0x8] sm:$0xff] %vm232, 0.0
      $region36: #{_lambda_.21} parent=31 // pred_fallthru
        _
      %v235 = vld [vmem:[#allocation2] sm:$0xff]
      %v236 = vld [vmem:[#allocation2 + $0x8] sm:$0xff]
      %v237 = vld [vmem:[%s212] sm:$0xff]
      %v238 = vld [vmem:[%s212 + $0x8] sm:$0xf]
      %v239 = vld [vmem:[%s212 + $0xc] sm:$0xff]
      %v240 = vld [vmem:[%s212 + $0x14] sm:$0xf]
      %v241 = vld [vmem:[%s219] sm:$0xf]
      %v242 = vld [vmem:[%s219 + $0x4] sm:$0xf]
      %v243 = vld [vmem:[%s219 + $0x8] sm:$0xf]
      %v244 = vld [vmem:[%s219 + $0xc] sm:$0xf]
      %v245 = vld [vmem:[%s219 + $0x10] sm:$0xf]
      %v246 = vld [vmem:[%s219 + $0x14] sm:$0xf]
      %v247 = vld [vmem:[%s219 + $0x18] sm:$0xf]
      %v248 = vld [vmem:[%s219 + $0x1c] sm:$0xf]
      %v249 = vld [vmem:[%s219 + $0x20] sm:$0xf]
      %v250 = vld [vmem:[%s219 + $0x24] sm:$0xf]
      %v251 = vld [vmem:[%s219 + $0x28] sm:$0xf]
      %v252 = vld [vmem:[%s219 + $0x2c] sm:$0xf]
      %v253 = vld [vmem:[%s219 + $0x30] sm:$0xf]
      %v254 = vld [vmem:[%s219 + $0x34] sm:$0xf]
      %v255 = vld [vmem:[%s219 + $0x38] sm:$0xf]
      %v256 = vld [vmem:[%s219 + $0x3c] sm:$0xf]
      %v257 = vld [vmem:[%s219 + $0x40] sm:$0xf]
      %v258 = vld [vmem:[%s219 + $0x44] sm:$0xf]
      %v259 = vld [vmem:[%s219 + $0x48] sm:$0xf]
      %v260 = vld [vmem:[%s219 + $0x4c] sm:$0xf]
      %v261 = vld [vmem:[%s219 + $0x50] sm:$0xf]
      %v262 = vld [vmem:[%s219 + $0x54] sm:$0xf]
      %v263 = vld [vmem:[%s219 + $0x58] sm:$0xf]
      %v264 = vld [vmem:[%s219 + $0x5c] sm:$0xf]
      %v265 = vld [vmem:[%s219 + $0x60] sm:$0xf]
      %v266 = vld [vmem:[%s219 + $0x64] sm:$0xf]
      %v267 = vld [vmem:[%s219 + $0x68] sm:$0xf]
      %v268 = vld [vmem:[%s219 + $0x6c] sm:$0xf]
      %v269 = vld [vmem:[%s219 + $0x70] sm:$0xf]
      %v270 = vld [vmem:[%s219 + $0x74] sm:$0xf]
      %v271 = vld [vmem:[%s219 + $0x78] sm:$0xf]
      %v272 = vld [vmem:[%s219 + $0x7c] sm:$0xf]
      %v273 = vld [vmem:[%s219 + $0x80] sm:$0xf]
      %v274 = vld [vmem:[%s219 + $0x84] sm:$0xf]
      %v275 = vld [vmem:[%s219 + $0x88] sm:$0xf]
      %v276 = vld [vmem:[%s219 + $0x8c] sm:$0xf]
      %v281 = vunpack.c.l.b16 %v237
      %v282 = vunpack.c.h.b16 %v237
      %v283 = vunpack.c.l.b16 %v238
      %v284 = vunpack.c.l.b16 %v239
      %v285 = vunpack.c.h.b16 %v239
      %v286 = vunpack.c.l.b16 %v240
      %v287 = vpack.c.b16 %v284, %v281
      %v288 = vpack.c.b16 %v285, %v282
      %v289 = vpack.c.b16 %v286, %v283
      %v328 = vunpack.c.l.b16 %v241
      %v329 = vunpack.c.l.b16 %v242
      %v330 = vunpack.c.l.b16 %v243
      %v331 = vunpack.c.l.b16 %v244
      %v332 = vunpack.c.l.b16 %v245
      %v333 = vunpack.c.l.b16 %v246
      %v334 = vunpack.c.l.b16 %v247
      %v335 = vunpack.c.l.b16 %v248
      %v336 = vunpack.c.l.b16 %v249
      %v337 = vunpack.c.l.b16 %v250
      %v338 = vunpack.c.l.b16 %v251
      %v339 = vunpack.c.l.b16 %v252
      %v340 = vunpack.c.l.b16 %v253
      %v341 = vunpack.c.l.b16 %v254
      %v342 = vunpack.c.l.b16 %v255
      %v343 = vunpack.c.l.b16 %v256
      %v344 = vunpack.c.l.b16 %v257
      %v345 = vunpack.c.l.b16 %v258
      %v346 = vunpack.c.l.b16 %v259
      %v347 = vunpack.c.l.b16 %v260
      %v348 = vunpack.c.l.b16 %v261
      %v349 = vunpack.c.l.b16 %v262
      %v350 = vunpack.c.l.b16 %v263
      %v351 = vunpack.c.l.b16 %v264
      %v352 = vunpack.c.l.b16 %v265
      %v353 = vunpack.c.l.b16 %v266
      %v354 = vunpack.c.l.b16 %v267
      %v355 = vunpack.c.l.b16 %v268
      %v356 = vunpack.c.l.b16 %v269
      %v357 = vunpack.c.l.b16 %v270
      %v358 = vunpack.c.l.b16 %v271
      %v359 = vunpack.c.l.b16 %v272
      %v360 = vunpack.c.l.b16 %v273
      %v361 = vunpack.c.l.b16 %v274
      %v362 = vunpack.c.l.b16 %v275
      %v363 = vunpack.c.l.b16 %v276
      %v364 = vpack.c.b16 %v329, %v328
      %v365 = vpack.c.b16 %v331, %v330
      %v366 = vpack.c.b16 %v333, %v332
      %v367 = vpack.c.b16 %v335, %v334
      %v368 = vpack.c.b16 %v337, %v336
      %v369 = vpack.c.b16 %v339, %v338
      %v370 = vpack.c.b16 %v341, %v340
      %v371 = vpack.c.b16 %v343, %v342
      %v372 = vpack.c.b16 %v345, %v344
      %v373 = vpack.c.b16 %v347, %v346
      %v374 = vpack.c.b16 %v349, %v348
      %v375 = vpack.c.b16 %v351, %v350
      %v376 = vpack.c.b16 %v353, %v352
      %v377 = vpack.c.b16 %v355, %v354
      %v378 = vpack.c.b16 %v357, %v356
      %v379 = vpack.c.b16 %v359, %v358
      %v380 = vpack.c.b16 %v361, %v360
      %v381 = vpack.c.b16 %v363, %v362
      %vm400 = vcmask 261120
      %v402 = vsel %vm400, %v289, 0
      %404 = vmatprep.subr.bf16.mxu0 0
      %405 = vmatpush1.bf16.msra.mxu0 %v371
      %406 = vmatprep.subr.bf16.mxu0 0
      %407 = vmatpush1.bf16.msra.mxu0 %v370
      %408 = vmatprep.subr.bf16.mxu0 0
      %409 = vmatpush1.bf16.msra.mxu0 %v369
      %410 = vmatprep.subr.bf16.mxu0 0
      %411 = vmatpush1.bf16.msra.mxu0 %v368
      %412 = vmatprep.subr.bf16.mxu0 0
      %413 = vmatpush1.bf16.msra.mxu0 %v367
      %414 = vmatprep.subr.bf16.mxu0 0
      %415 = vmatpush1.bf16.msra.mxu0 %v366
      %416 = vmatprep.subr.bf16.mxu0 0
      %417 = vmatpush1.bf16.msra.mxu0 %v365
      %418 = vmatprep.subr.bf16.mxu0 0
      %419 = vmatpush1.bf16.msra.mxu0 %v364
      %420 = vmatprep.subr.bf16.mxu0 0
      %421 = vmatpush2.bf16.msra.mxu0 %v379
      %422 = vmatprep.subr.bf16.mxu0 0
      %423 = vmatpush2.bf16.msra.mxu0 %v378
      %424 = vmatprep.subr.bf16.mxu0 0
      %425 = vmatpush2.bf16.msra.mxu0 %v377
      %426 = vmatprep.subr.bf16.mxu0 0
      %427 = vmatpush2.bf16.msra.mxu0 %v376
      %428 = vmatprep.subr.bf16.mxu0 0
      %429 = vmatpush2.bf16.msra.mxu0 %v375
      %430 = vmatprep.subr.bf16.mxu0 0
      %431 = vmatpush2.bf16.msra.mxu0 %v374
      %432 = vmatprep.subr.bf16.mxu0 0
      %433 = vmatpush2.bf16.msra.mxu0 %v373
      %434 = vmatprep.subr.bf16.mxu0 0
      %435 = vmatpush2.bf16.msra.mxu0 %v372
      %436 = vmatprep.mubr.bf16.mxu0 %v288
      %437 = vmatmul.mubr.bf16.gmra.mxu0 %v287
      %v438 = vpop.f32.mrf.mxu0
      %v439 = vadd.f32 0.0, %v438
      %v440 = vpop.f32.mrf.mxu0
      %v441 = vpop.f32.mrf.mxu0
      %v442 = vadd.f32 0.0, %v441
      %v443 = vpop.f32.mrf.mxu0
      %444 = vdwg.mxu0
      %445 = vmatprep.subr.bf16.mxu0 0
      %446 = vmatpush1.bf16.msra.mxu0 0
      %447 = vmatprep.subr.bf16.mxu0 0
      %448 = vmatpush1.bf16.msra.mxu0 0
      %449 = vmatprep.subr.bf16.mxu0 0
      %450 = vmatpush1.bf16.msra.mxu0 0
      %451 = vmatprep.subr.bf16.mxu0 0
      %452 = vmatpush1.bf16.msra.mxu0 0
      %453 = vmatprep.subr.bf16.mxu0 0
      %454 = vmatpush1.bf16.msra.mxu0 0
      %455 = vmatprep.subr.bf16.mxu0 0
      %456 = vmatpush1.bf16.msra.mxu0 0
      %457 = vmatprep.subr.bf16.mxu0 0
      %458 = vmatpush1.bf16.msra.mxu0 %v381
      %459 = vmatprep.subr.bf16.mxu0 0
      %460 = vmatpush1.bf16.msra.mxu0 %v380
      %461 = vmatprep.subr.bf16.mxu0 0
      %462 = vmatpush2.bf16.msra.mxu0 0
      %463 = vmatprep.subr.bf16.mxu0 0
      %464 = vmatpush2.bf16.msra.mxu0 0
      %465 = vmatprep.subr.bf16.mxu0 0
      %466 = vmatpush2.bf16.msra.mxu0 0
      %467 = vmatprep.subr.bf16.mxu0 0
      %468 = vmatpush2.bf16.msra.mxu0 0
      %469 = vmatprep.subr.bf16.mxu0 0
      %470 = vmatpush2.bf16.msra.mxu0 0
      %471 = vmatprep.subr.bf16.mxu0 0
      %472 = vmatpush2.bf16.msra.mxu0 0
      %473 = vmatprep.subr.bf16.mxu0 0
      %474 = vmatpush2.bf16.msra.mxu0 0
      %475 = vmatprep.subr.bf16.mxu0 0
      %476 = vmatpush2.bf16.msra.mxu0 0
      %477 = vmatprep.mubr.bf16.mxu0 0
      %478 = vmatmul.mubr.bf16.gmra.mxu0 %v402
      %v479 = vpop.f32.mrf.mxu0
      %v480 = vadd.f32 %v439, %v479
      %v481 = vpop.f32.mrf.mxu0
      %v482 = vpop.f32.mrf.mxu0
      %v483 = vadd.f32 %v442, %v482
      %v484 = vpop.f32.mrf.mxu0
      %485 = vdwg.mxu0
      %v486 = vadd.f32 %v235, %v480
      %v487 = vadd.f32 %v236, %v483
      %vm488 = vcmask 523264
      %489 = vst.msk [vmem:[#allocation2] sm:$0xff] %vm488, %v486
      %490 = vst.msk [vmem:[#allocation2 + $0x8] sm:$0xff] %vm488, %v487
      // Predicated region
      $region37: #{_lambda_.21} parent=31 // pred_check
        %p491 = pneg %p228
      $region38: #{_lambda_.21} parent=31 // pred_check_branch
        %493 = sbr.rel (%p491) target = $region40
      $region39: #{_lambda_.21} parent=31 // pred_region
        %v494 = vld [vmem:[#allocation2] sm:$0xff]
        %v495 = vld [vmem:[#allocation2 + $0x8] sm:$0xff]
        %v496 = vld [vmem:[%s2] sm:$0x1]
        %v498 = vlaneseq
        %v499 = vshrl.u32 %v498, 7
        %v500 = vsub.s32 0, %v499
        %v501 = vrot.slane %v496, %v500
        %v503 = vadd.f32 %v494, %v501
        %v504 = vadd.f32 %v495, %v501
        %505 = vst.msk [vmem:[%s225] sm:$0xff] %vm488, %v503
        %506 = vst.msk [vmem:[%s225 + $0x8] sm:$0xff] %vm488, %v504
      $region40: #{_lambda_.21} parent=31 // pred_fallthru
        _
      %s507 = smul.u32 2, %s18
      %p508 = scmp.lt.s32.totalorder %s507, 3
      %s509 = scalar_select %p508, %s507, 3
      %s510 = smul.addr %s509, 8
      %s511 = scalar_lea.vmem %s3, %s510
      // Predicated region
      $region41: #{_lambda_.21} parent=31 // pred_check
        %p512 = pneg %p119
      $region42: #{_lambda_.21} parent=31 // pred_check_branch
        %514 = sbr.rel (%p512) target = $region44
      $region43: #{_lambda_.21} parent=31 // pred_region
        %s515 = smul.u32 2, %s18
      $region44: #{_lambda_.21} parent=31 // pred_fallthru
        _
    $region32: #{_lambda_.21} parent=5 // pred_fallthru
      _
    %p516 = scmp.le.s32.totalorder 2, %s9
    // Predicated region
    $region45: #{_lambda_.21} parent=5 // pred_check
      %p517 = pneg %p516
    $region46: #{_lambda_.21} parent=5 // pred_check_branch
      %519 = sbr.rel (%p517) target = $region48
    $region47: #{_lambda_.21} parent=5 // pred_region
      %s520 = ssub.s32 %s9, 2
      // Predicated region
      $region49: #{_lambda_.21} parent=47 // pred_check
        %p521 = pneg %p125
      $region50: #{_lambda_.21} parent=47 // pred_check_branch
        %523 = sbr.rel (%p521) target = $region52
      $region51: #{_lambda_.21} parent=47 // pred_region
        %s524 = smul.u32 2, %s20
        %p525 = scmp.lt.s32.totalorder %s524, 3
        %s526 = scalar_select %p525, %s524, 3
        %s527 = smul.addr %s526, 8
        %s528 = scalar_lea.vmem %s3, %s527
      $region52: #{_lambda_.21} parent=47 // pred_fallthru
        _
    $region48: #{_lambda_.21} parent=5 // pred_fallthru
      _
  $region6: #{_lambda_.21} parent=0 // loop_footer
    %s13 = sadd.s32 1, %s9
  $region7: #{_lambda_.21} parent=0 // loop_footer_branch
    %8 = sbr.rel target = $region3
  $region8: #{_lambda_.21} parent=0 // loop_exit
    _

// kernel: _lambda_.24
$region0: #{_lambda_.24}
  #allocation0 [shape = 'u32[]', space=smem, size = 0x4, offset = 0x4, fixed_abs, tag = 'smem constant byte address 0x4 - core index']
  #allocation1 [shape = 'u32[144,128]{1,0:T(1,128)}', space=vmem, size = 0x12000, scoped, tag = 'internal scratch']
  %s0 = inlined_call_operand.vmem [shape: bf16[32,64], index: 0, kind: input, shape index: {}]
  %s1 = inlined_call_operand.vmem [shape: f32[32,64], index: 1, kind: input, shape index: {}]
  %s2 = inlined_call_operand.vmem [shape: bf16[64,64], index: 2, kind: input, shape index: {}]
  %s3 = inlined_call_operand.vmem [shape: f32[1,64], index: 3, kind: input, shape index: {}, may-alias: {3,10}]
  %s4 = inlined_call_operand.vmem [shape: f32[1,64], index: 4, kind: input, shape index: {}]
  %s5 = inlined_call_operand.vmem [shape: f32[1,64], index: 5, kind: input, shape index: {}, may-alias: {5,9}]
  %s6 = inlined_call_operand.vmem [shape: bf16[64,256], index: 6, kind: input, shape index: {}]
  %s7 = inlined_call_operand.vmem [shape: f32[1,256], index: 7, kind: input, shape index: {}]
  %s8 = inlined_call_operand.vmem [shape: bf16[256,64], index: 8, kind: input, shape index: {}]
  %s9 = inlined_call_operand.vmem [shape: f32[1,64], index: 9, kind: input, shape index: {}, may-alias: {5,9}]
  %s10 = inlined_call_operand.vmem [shape: f32[1,64], index: 10, kind: input, shape index: {}, may-alias: {3,10}]
  %s11 = inlined_call_operand.vmem [shape: f32[32,64], index: 11, kind: output, shape index: {}]
  %s12 = sld [smem:[#allocation0]]
  $region77: #{_lambda_.24} parent=0
    _
  %s14 = ssub.s32 1, %s12
  %s15 = scalar_select 0, %s14, %s12
  loop: start=0, step=1, limit=4
  $region2: #{_lambda_.24} parent=0 // loop_pre_header
    _
  $region3: #{_lambda_.24} parent=0 // loop_header
    %s17 = sphi 0, %s21
    %p18 = scmp.ge.s32.totalorder %s17, 4
    %s27 = sphi 0, %s29
    %s30 = sphi 0, %s27
    %s31 = sphi 0, %s30
    %s47 = sphi 0, %s31
    %s53 = sphi 0, %s55
    %s56 = sphi 0, %s53
    %s57 = sphi 0, %s56
    %s73 = sphi 0, %s57
    %s77 = sphi 0, %s77
    %s79 = sphi 0, %s77
    %s80 = sphi 0, %s79
    %s94 = sphi 0, %s80
    %s98 = sphi 0, %s98
    %s100 = sphi 0, %s98
    %s101 = sphi 0, %s100
    %s115 = sphi 0, %s101
    %s119 = sphi 0, %s119
    %s121 = sphi 0, %s119
    %s122 = sphi 0, %s121
    %s136 = sphi 0, %s122
    %s140 = sphi 0, %s140
    %s142 = sphi 0, %s140
    %s143 = sphi 0, %s142
    %s157 = sphi 0, %s143
    %s161 = sphi 0, %s161
    %s163 = sphi 0, %s161
    %s164 = sphi 0, %s163
    %s178 = sphi 0, %s164
    %s182 = sphi 0, %s182
    %s184 = sphi 0, %s182
    %s185 = sphi 0, %s184
    %s199 = sphi 0, %s185
    %s203 = sphi 0, %s203
    %s205 = sphi 0, %s203
    %s206 = sphi 0, %s205
    %s220 = sphi 0, %s206
    %s224 = sphi 0, %s224
    %s226 = sphi 0, %s224
    %s227 = sphi 0, %s226
    %s241 = sphi 0, %s227
    %s245 = sphi 0, %s245
    %s247 = sphi 0, %s245
    %s248 = sphi 0, %s247
    %s262 = sphi 0, %s248
    %s268 = sphi 0, %s270
    %s271 = sphi 0, %s268
    %s272 = sphi 0, %s271
    %s288 = sphi 0, %s272
  $region4: #{_lambda_.24} parent=0 // loop_header_branch
    %20 = sbr.rel (%p18) target = $region8
  $region5: #{_lambda_.24} parent=0 // loop_body
    %s22 = ssub.s32 %s17, 1
    %s23 = ssub.s32 %s17, 2
    %s24 = sadd.s32 %s17, 1
    %s25 = ssub.s32 %s17, %s24
    %p26 = scmp.eq.s32.totalorder %s25, 0
    %s28 = sadd.s32 %s27, 1
    %s29 = scalar_select %p26, %s27, %s28
    %p32 = pneg %p26
    %p33 = scmp.eq.s32.totalorder %s17, 1
    %p34 = por %p32, %p33
    %p35 = scmp.ne.s32.totalorder %s27, %s30
    %p36 = scmp.eq.s32.totalorder %s17, 0
    %p37 = por %p35, %p36
    %p38 = scmp.ne.s32.totalorder %s27, %s30
    %p39 = scmp.eq.s32.totalorder %s22, 1
    %p40 = por %p38, %p39
    %p41 = scmp.ne.s32.totalorder %s30, %s31
    %p42 = scmp.eq.s32.totalorder %s22, 0
    %p43 = por %p41, %p42
    %p44 = scmp.ne.s32.totalorder %s30, %s31
    %p45 = scmp.eq.s32.totalorder %s23, 1
    %p46 = por %p44, %p45
    %p48 = scmp.ne.s32.totalorder %s31, %s47
    %p49 = scmp.eq.s32.totalorder %s23, 0
    %p50 = por %p48, %p49
    %s51 = ssub.s32 %s17, %s24
    %p52 = scmp.eq.s32.totalorder %s51, 0
    %s54 = sadd.s32 %s53, 1
    %s55 = scalar_select %p52, %s53, %s54
    %p58 = pneg %p52
    %p59 = scmp.eq.s32.totalorder %s17, 1
    %p60 = por %p58, %p59
    %p61 = scmp.ne.s32.totalorder %s53, %s56
    %p62 = scmp.eq.s32.totalorder %s17, 0
    %p63 = por %p61, %p62
    %p64 = scmp.ne.s32.totalorder %s53, %s56
    %p65 = scmp.eq.s32.totalorder %s22, 1
    %p66 = por %p64, %p65
    %p67 = scmp.ne.s32.totalorder %s56, %s57
    %p68 = scmp.eq.s32.totalorder %s22, 0
    %p69 = por %p67, %p68
    %p70 = scmp.ne.s32.totalorder %s56, %s57
    %p71 = scmp.eq.s32.totalorder %s23, 1
    %p72 = por %p70, %p71
    %p74 = scmp.ne.s32.totalorder %s57, %s73
    %p75 = scmp.eq.s32.totalorder %s23, 0
    %p76 = por %p74, %p75
    %s78 = sadd.s32 %s77, 1
    %p81 = scmp.eq.s32.totalorder %s17, 1
    %p82 = scmp.ne.s32.totalorder %s77, %s79
    %p83 = scmp.eq.s32.totalorder %s17, 0
    %p84 = por %p82, %p83
    %p85 = scmp.ne.s32.totalorder %s77, %s79
    %p86 = scmp.eq.s32.totalorder %s22, 1
    %p87 = por %p85, %p86
    %p88 = scmp.ne.s32.totalorder %s79, %s80
    %p89 = scmp.eq.s32.totalorder %s22, 0
    %p90 = por %p88, %p89
    %p91 = scmp.ne.s32.totalorder %s79, %s80
    %p92 = scmp.eq.s32.totalorder %s23, 1
    %p93 = por %p91, %p92
    %p95 = scmp.ne.s32.totalorder %s80, %s94
    %p96 = scmp.eq.s32.totalorder %s23, 0
    %p97 = por %p95, %p96
    %s99 = sadd.s32 %s98, 1
    %p102 = scmp.eq.s32.totalorder %s17, 1
    %p103 = scmp.ne.s32.totalorder %s98, %s100
    %p104 = scmp.eq.s32.totalorder %s17, 0
    %p105 = por %p103, %p104
    %p106 = scmp.ne.s32.totalorder %s98, %s100
    %p107 = scmp.eq.s32.totalorder %s22, 1
    %p108 = por %p106, %p107
    %p109 = scmp.ne.s32.totalorder %s100, %s101
    %p110 = scmp.eq.s32.totalorder %s22, 0
    %p111 = por %p109, %p110
    %p112 = scmp.ne.s32.totalorder %s100, %s101
    %p113 = scmp.eq.s32.totalorder %s23, 1
    %p114 = por %p112, %p113
    %p116 = scmp.ne.s32.totalorder %s101, %s115
    %p117 = scmp.eq.s32.totalorder %s23, 0
    %p118 = por %p116, %p117
    %s120 = sadd.s32 %s119, 1
    %p123 = scmp.eq.s32.totalorder %s17, 1
    %p124 = scmp.ne.s32.totalorder %s119, %s121
    %p125 = scmp.eq.s32.totalorder %s17, 0
    %p126 = por %p124, %p125
    %p127 = scmp.ne.s32.totalorder %s119, %s121
    %p128 = scmp.eq.s32.totalorder %s22, 1
    %p129 = por %p127, %p128
    %p130 = scmp.ne.s32.totalorder %s121, %s122
    %p131 = scmp.eq.s32.totalorder %s22, 0
    %p132 = por %p130, %p131
    %p133 = scmp.ne.s32.totalorder %s121, %s122
    %p134 = scmp.eq.s32.totalorder %s23, 1
    %p135 = por %p133, %p134
    %p137 = scmp.ne.s32.totalorder %s122, %s136
    %p138 = scmp.eq.s32.totalorder %s23, 0
    %p139 = por %p137, %p138
    %s141 = sadd.s32 %s140, 1
    %p144 = scmp.eq.s32.totalorder %s17, 1
    %p145 = scmp.ne.s32.totalorder %s140, %s142
    %p146 = scmp.eq.s32.totalorder %s17, 0
    %p147 = por %p145, %p146
    %p148 = scmp.ne.s32.totalorder %s140, %s142
    %p149 = scmp.eq.s32.totalorder %s22, 1
    %p150 = por %p148, %p149
    %p151 = scmp.ne.s32.totalorder %s142, %s143
    %p152 = scmp.eq.s32.totalorder %s22, 0
    %p153 = por %p151, %p152
    %p154 = scmp.ne.s32.totalorder %s142, %s143
    %p155 = scmp.eq.s32.totalorder %s23, 1
    %p156 = por %p154, %p155
    %p158 = scmp.ne.s32.totalorder %s143, %s157
    %p159 = scmp.eq.s32.totalorder %s23, 0
    %p160 = por %p158, %p159
    %s162 = sadd.s32 %s161, 1
    %p165 = scmp.eq.s32.totalorder %s17, 1
    %p166 = scmp.ne.s32.totalorder %s161, %s163
    %p167 = scmp.eq.s32.totalorder %s17, 0
    %p168 = por %p166, %p167
    %p169 = scmp.ne.s32.totalorder %s161, %s163
    %p170 = scmp.eq.s32.totalorder %s22, 1
    %p171 = por %p169, %p170
    %p172 = scmp.ne.s32.totalorder %s163, %s164
    %p173 = scmp.eq.s32.totalorder %s22, 0
    %p174 = por %p172, %p173
    %p175 = scmp.ne.s32.totalorder %s163, %s164
    %p176 = scmp.eq.s32.totalorder %s23, 1
    %p177 = por %p175, %p176
    %p179 = scmp.ne.s32.totalorder %s164, %s178
    %p180 = scmp.eq.s32.totalorder %s23, 0
    %p181 = por %p179, %p180
    %s183 = sadd.s32 %s182, 1
    %p186 = scmp.eq.s32.totalorder %s17, 1
    %p187 = scmp.ne.s32.totalorder %s182, %s184
    %p188 = scmp.eq.s32.totalorder %s17, 0
    %p189 = por %p187, %p188
    %p190 = scmp.ne.s32.totalorder %s182, %s184
    %p191 = scmp.eq.s32.totalorder %s22, 1
    %p192 = por %p190, %p191
    %p193 = scmp.ne.s32.totalorder %s184, %s185
    %p194 = scmp.eq.s32.totalorder %s22, 0
    %p195 = por %p193, %p194
    %p196 = scmp.ne.s32.totalorder %s184, %s185
    %p197 = scmp.eq.s32.totalorder %s23, 1
    %p198 = por %p196, %p197
    %p200 = scmp.ne.s32.totalorder %s185, %s199
    %p201 = scmp.eq.s32.totalorder %s23, 0
    %p202 = por %p200, %p201
    %s204 = sadd.s32 %s203, 1
    %p207 = scmp.eq.s32.totalorder %s17, 1
    %p208 = scmp.ne.s32.totalorder %s203, %s205
    %p209 = scmp.eq.s32.totalorder %s17, 0
    %p210 = por %p208, %p209
    %p211 = scmp.ne.s32.totalorder %s203, %s205
    %p212 = scmp.eq.s32.totalorder %s22, 1
    %p213 = por %p211, %p212
    %p214 = scmp.ne.s32.totalorder %s205, %s206
    %p215 = scmp.eq.s32.totalorder %s22, 0
    %p216 = por %p214, %p215
    %p217 = scmp.ne.s32.totalorder %s205, %s206
    %p218 = scmp.eq.s32.totalorder %s23, 1
    %p219 = por %p217, %p218
    %p221 = scmp.ne.s32.totalorder %s206, %s220
    %p222 = scmp.eq.s32.totalorder %s23, 0
    %p223 = por %p221, %p222
    %s225 = sadd.s32 %s224, 1
    %p228 = scmp.eq.s32.totalorder %s17, 1
    %p229 = scmp.ne.s32.totalorder %s224, %s226
    %p230 = scmp.eq.s32.totalorder %s17, 0
    %p231 = por %p229, %p230
    %p232 = scmp.ne.s32.totalorder %s224, %s226
    %p233 = scmp.eq.s32.totalorder %s22, 1
    %p234 = por %p232, %p233
    %p235 = scmp.ne.s32.totalorder %s226, %s227
    %p236 = scmp.eq.s32.totalorder %s22, 0
    %p237 = por %p235, %p236
    %p238 = scmp.ne.s32.totalorder %s226, %s227
    %p239 = scmp.eq.s32.totalorder %s23, 1
    %p240 = por %p238, %p239
    %p242 = scmp.ne.s32.totalorder %s227, %s241
    %p243 = scmp.eq.s32.totalorder %s23, 0
    %p244 = por %p242, %p243
    %s246 = sadd.s32 %s245, 1
    %p249 = scmp.eq.s32.totalorder %s17, 1
    %p250 = scmp.ne.s32.totalorder %s245, %s247
    %p251 = scmp.eq.s32.totalorder %s17, 0
    %p252 = por %p250, %p251
    %p253 = scmp.ne.s32.totalorder %s245, %s247
    %p254 = scmp.eq.s32.totalorder %s22, 1
    %p255 = por %p253, %p254
    %p256 = scmp.ne.s32.totalorder %s247, %s248
    %p257 = scmp.eq.s32.totalorder %s22, 0
    %p258 = por %p256, %p257
    %p259 = scmp.ne.s32.totalorder %s247, %s248
    %p260 = scmp.eq.s32.totalorder %s23, 1
    %p261 = por %p259, %p260
    %p263 = scmp.ne.s32.totalorder %s248, %s262
    %p264 = scmp.eq.s32.totalorder %s23, 0
    %p265 = por %p263, %p264
    %s266 = ssub.s32 %s17, %s24
    %p267 = scmp.eq.s32.totalorder %s266, 0
    %s269 = sadd.s32 %s268, 1
    %s270 = scalar_select %p267, %s268, %s269
    %p273 = pneg %p267
    %p274 = scmp.eq.s32.totalorder %s17, 1
    %p275 = por %p273, %p274
    %p276 = scmp.ne.s32.totalorder %s268, %s271
    %p277 = scmp.eq.s32.totalorder %s17, 0
    %p278 = por %p276, %p277
    %p279 = scmp.ne.s32.totalorder %s268, %s271
    %p280 = scmp.eq.s32.totalorder %s22, 1
    %p281 = por %p279, %p280
    %p282 = scmp.ne.s32.totalorder %s271, %s272
    %p283 = scmp.eq.s32.totalorder %s22, 0
    %p284 = por %p282, %p283
    %p285 = scmp.ne.s32.totalorder %s271, %s272
    %p286 = scmp.eq.s32.totalorder %s23, 1
    %p287 = por %p285, %p286
    %p289 = scmp.ne.s32.totalorder %s272, %s288
    %p290 = scmp.eq.s32.totalorder %s23, 0
    %p291 = por %p289, %p290
    %p292 = scmp.le.s32.totalorder 1, %s17
    %p293 = scmp.lt.s32.totalorder %s17, 3
    %p294 = pnand %p292, %p293
    %p295 = pneg %p294
    // Predicated region
    $region9: #{_lambda_.24} parent=5 // pred_check
      _
    $region10: #{_lambda_.24} parent=5 // pred_check_branch
      %297 = sbr.rel (%p294) target = $region12
    $region11: #{_lambda_.24} parent=5 // pred_region
      %s298 = ssub.s32 %s17, 1
      // Predicated region
      $region13: #{_lambda_.24} parent=11 // pred_check
        %p299 = pneg %p90
      $region14: #{_lambda_.24} parent=11 // pred_check_branch
        %301 = sbr.rel (%p299) target = $region16
      $region15: #{_lambda_.24} parent=11 // pred_region
        _
      $region16: #{_lambda_.24} parent=11 // pred_fallthru
        _
      // Predicated region
      $region17: #{_lambda_.24} parent=11 // pred_check
        %p302 = pneg %p111
      $region18: #{_lambda_.24} parent=11 // pred_check_branch
        %304 = sbr.rel (%p302) target = $region20
      $region19: #{_lambda_.24} parent=11 // pred_region
        _
      $region20: #{_lambda_.24} parent=11 // pred_fallthru
        _
      // Predicated region
      $region21: #{_lambda_.24} parent=11 // pred_check
        %p305 = pneg %p132
      $region22: #{_lambda_.24} parent=11 // pred_check_branch
        %307 = sbr.rel (%p305) target = $region24
      $region23: #{_lambda_.24} parent=11 // pred_region
        _
      $region24: #{_lambda_.24} parent=11 // pred_fallthru
        _
      // Predicated region
      $region25: #{_lambda_.24} parent=11 // pred_check
        %p308 = pneg %p153
      $region26: #{_lambda_.24} parent=11 // pred_check_branch
        %310 = sbr.rel (%p308) target = $region28
      $region27: #{_lambda_.24} parent=11 // pred_region
        _
      $region28: #{_lambda_.24} parent=11 // pred_fallthru
        _
      // Predicated region
      $region29: #{_lambda_.24} parent=11 // pred_check
        %p311 = pneg %p174
      $region30: #{_lambda_.24} parent=11 // pred_check_branch
        %313 = sbr.rel (%p311) target = $region32
      $region31: #{_lambda_.24} parent=11 // pred_region
        _
      $region32: #{_lambda_.24} parent=11 // pred_fallthru
        _
      // Predicated region
      $region33: #{_lambda_.24} parent=11 // pred_check
        %p314 = pneg %p195
      $region34: #{_lambda_.24} parent=11 // pred_check_branch
        %316 = sbr.rel (%p314) target = $region36
      $region35: #{_lambda_.24} parent=11 // pred_region
        _
      $region36: #{_lambda_.24} parent=11 // pred_fallthru
        _
      // Predicated region
      $region37: #{_lambda_.24} parent=11 // pred_check
        %p317 = pneg %p216
      $region38: #{_lambda_.24} parent=11 // pred_check_branch
        %319 = sbr.rel (%p317) target = $region40
      $region39: #{_lambda_.24} parent=11 // pred_region
        _
      $region40: #{_lambda_.24} parent=11 // pred_fallthru
        _
      // Predicated region
      $region41: #{_lambda_.24} parent=11 // pred_check
        %p320 = pneg %p237
      $region42: #{_lambda_.24} parent=11 // pred_check_branch
        %322 = sbr.rel (%p320) target = $region44
      $region43: #{_lambda_.24} parent=11 // pred_region
        _
      $region44: #{_lambda_.24} parent=11 // pred_fallthru
        _
      // Predicated region
      $region45: #{_lambda_.24} parent=11 // pred_check
        %p323 = pneg %p258
      $region46: #{_lambda_.24} parent=11 // pred_check_branch
        %325 = sbr.rel (%p323) target = $region48
      $region47: #{_lambda_.24} parent=11 // pred_region
        _
      $region48: #{_lambda_.24} parent=11 // pred_fallthru
        _
    $region12: #{_lambda_.24} parent=5 // pred_fallthru
      _
    %p326 = scmp.lt.s32.totalorder %s17, 2
    // Predicated region
    $region49: #{_lambda_.24} parent=5 // pred_check
      %p327 = pneg %p326
    $region50: #{_lambda_.24} parent=5 // pred_check_branch
      %329 = sbr.rel (%p327) target = $region52
    $region51: #{_lambda_.24} parent=5 // pred_region
      // Predicated region
      $region53: #{_lambda_.24} parent=51 // pred_check
        %p330 = pneg %p37
      $region54: #{_lambda_.24} parent=51 // pred_check_branch
        %332 = sbr.rel (%p330) target = $region56
      $region55: #{_lambda_.24} parent=51 // pred_region
        %s333 = smul.u32 2, %s17
        %p334 = scmp.lt.s32.totalorder %s333, 3
        %s335 = scalar_select %p334, %s333, 3
        %s336 = smul.addr %s335, 4
        %s337 = scalar_lea.vmem %s0, %s336
        %s338 = smul.u32 2, %s17
      $region56: #{_lambda_.24} parent=51 // pred_fallthru
        _
      // Predicated region
      $region57: #{_lambda_.24} parent=51 // pred_check
        %p339 = pneg %p63
      $region58: #{_lambda_.24} parent=51 // pred_check_branch
        %341 = sbr.rel (%p339) target = $region60
      $region59: #{_lambda_.24} parent=51 // pred_region
        %s342 = smul.u32 2, %s17
        %p343 = scmp.lt.s32.totalorder %s342, 3
        %s344 = scalar_select %p343, %s342, 3
        %s345 = smul.addr %s344, 8
        %s346 = scalar_lea.vmem %s1, %s345
        %s347 = smul.u32 2, %s17
      $region60: #{_lambda_.24} parent=51 // pred_fallthru
        _
    $region52: #{_lambda_.24} parent=5 // pred_fallthru
      _
    %p348 = scmp.le.s32.totalorder 1, %s17
    %p349 = scmp.lt.s32.totalorder %s17, 3
    %p350 = pnand %p348, %p349
    %p351 = pneg %p350
    // Predicated region
    $region61: #{_lambda_.24} parent=5 // pred_check
      _
    $region62: #{_lambda_.24} parent=5 // pred_check_branch
      %353 = sbr.rel (%p350) target = $region64
    $region63: #{_lambda_.24} parent=5 // pred_region
      %s354 = ssub.s32 %s17, 1
      %s355 = smul.u32 2, %s22
      %p356 = scmp.lt.s32.totalorder %s355, 3
      %s357 = scalar_select %p356, %s355, 3
      %s358 = smul.addr %s357, 4
      %s359 = scalar_lea.vmem %s0, %s358
      %p360 = pneg %p43
      %p361 = pneg %p40
      %s362 = smul.u32 2, %s22
      %p363 = scmp.lt.s32.totalorder %s362, 3
      %s364 = scalar_select %p363, %s362, 3
      %s365 = smul.addr %s364, 8
      %s366 = scalar_lea.vmem %s1, %s365
      %p367 = pneg %p69
      %p368 = pneg %p66
      %p369 = pneg %p90
      %p370 = pneg %p87
      %p371 = pneg %p111
      %p372 = pneg %p108
      %p373 = pneg %p132
      %p374 = pneg %p129
      %p375 = pneg %p153
      %p376 = pneg %p150
      %p377 = pneg %p174
      %p378 = pneg %p171
      %p379 = pneg %p195
      %p380 = pneg %p192
      %p381 = pneg %p216
      %p382 = pneg %p213
      %p383 = pneg %p237
      %p384 = pneg %p234
      %p385 = pneg %p258
      %p386 = pneg %p255
      %p387 = pneg %p284
      %p388 = pneg %p281
      %s389 = smul.u32 2, %s22
      %p390 = scmp.lt.s32.totalorder %s389, 3
      %s391 = scalar_select %p390, %s389, 3
      %s392 = smul.addr %s391, 8
      %s393 = scalar_lea.vmem %s11, %s392
      %s394 = smul.u32 2, %s22
      %p395 = scmp.lt.s32.totalorder %s394, 3
      %s396 = scalar_select %p395, %s394, 3
      %s397 = smul.addr %s396, 4
      %s398 = scalar_lea.vmem %s0, %s397
      %s399 = smul.u32 2, %s22
      %s400 = smul.u32 2, %s22
      %p401 = scmp.lt.s32.totalorder %s400, 3
      %s402 = scalar_select %p401, %s400, 3
      %s403 = smul.addr %s402, 8
      %s404 = scalar_lea.vmem %s1, %s403
      %s405 = smul.u32 2, %s22
      %s406 = smul.u32 2, %s22
      %p407 = scmp.lt.s32.totalorder %s406, 3
      %s408 = scalar_select %p407, %s406, 3
      %s409 = smul.addr %s408, 8
      %s410 = scalar_lea.vmem %s11, %s409
      %s411 = smul.u32 2, %s22
      %v413 = vld [vmem:[%s398] sm:$0xf]
      %v414 = vld [vmem:[%s398 + $0x4] sm:$0xf]
      %v415 = vld [vmem:[%s2] sm:$0xf]
      %v416 = vld [vmem:[%s2 + $0x4] sm:$0xf]
      %v417 = vld [vmem:[%s2 + $0x8] sm:$0xf]
      %v418 = vld [vmem:[%s2 + $0xc] sm:$0xf]
      %v419 = vld [vmem:[%s2 + $0x10] sm:$0xf]
      %v420 = vld [vmem:[%s2 + $0x14] sm:$0xf]
      %v421 = vld [vmem:[%s2 + $0x18] sm:$0xf]
      %v422 = vld [vmem:[%s2 + $0x1c] sm:$0xf]
      %v425 = vunpack.c.l.b16 %v413
      %v426 = vunpack.c.l.b16 %v414
      %v427 = vpack.c.b16 %v426, %v425
      %v436 = vunpack.c.l.b16 %v415
      %v437 = vunpack.c.l.b16 %v416
      %v438 = vunpack.c.l.b16 %v417
      %v439 = vunpack.c.l.b16 %v418
      %v440 = vunpack.c.l.b16 %v419
      %v441 = vunpack.c.l.b16 %v420
      %v442 = vunpack.c.l.b16 %v421
      %v443 = vunpack.c.l.b16 %v422
      %v444 = vpack.c.b16 %v437, %v436
      %v445 = vpack.c.b16 %v439, %v438
      %v446 = vpack.c.b16 %v441, %v440
      %v447 = vpack.c.b16 %v443, %v442
      %vm452 = vcmask 523264
      %v454 = vsel %vm452, %v427, 0
      %456 = vmatprep.subr.bf16.mxu0 0
      %457 = vmatpush1.bf16.msra.mxu0 0
      %458 = vmatprep.subr.bf16.mxu0 0
      %459 = vmatpush1.bf16.msra.mxu0 0
      %460 = vmatprep.subr.bf16.mxu0 0
      %461 = vmatpush1.bf16.msra.mxu0 0
      %462 = vmatprep.subr.bf16.mxu0 0
      %463 = vmatpush1.bf16.msra.mxu0 0
      %464 = vmatprep.subr.bf16.mxu0 0
      %465 = vmatpush1.bf16.msra.mxu0 %v447
      %466 = vmatprep.subr.bf16.mxu0 0
      %467 = vmatpush1.bf16.msra.mxu0 %v446
      %468 = vmatprep.subr.bf16.mxu0 0
      %469 = vmatpush1.bf16.msra.mxu0 %v445
      %470 = vmatprep.subr.bf16.mxu0 0
      %471 = vmatpush1.bf16.msra.mxu0 %v444
      %472 = vmatprep.subr.bf16.mxu0 0
      %473 = vmatpush2.bf16.msra.mxu0 0
      %474 = vmatprep.subr.bf16.mxu0 0
      %475 = vmatpush2.bf16.msra.mxu0 0
      %476 = vmatprep.subr.bf16.mxu0 0
      %477 = vmatpush2.bf16.msra.mxu0 0
      %478 = vmatprep.subr.bf16.mxu0 0
      %479 = vmatpush2.bf16.msra.mxu0 0
      %480 = vmatprep.subr.bf16.mxu0 0
      %481 = vmatpush2.bf16.msra.mxu0 0
      %482 = vmatprep.subr.bf16.mxu0 0
      %483 = vmatpush2.bf16.msra.mxu0 0
      %484 = vmatprep.subr.bf16.mxu0 0
      %485 = vmatpush2.bf16.msra.mxu0 0
      %486 = vmatprep.subr.bf16.mxu0 0
      %487 = vmatpush2.bf16.msra.mxu0 0
      %488 = vmatprep.mubr.bf16.mxu0 0
      %489 = vmatmul.mubr.bf16.gmra.mxu0 %v454
      %v490 = vpop.f32.mrf.mxu0
      %v491 = vadd.f32 0.0, %v490
      %v492 = vpop.f32.mrf.mxu0
      %v493 = vpop.f32.mrf.mxu0
      %v494 = vadd.f32 0.0, %v493
      %v495 = vpop.f32.mrf.mxu0
      %496 = vdwg.mxu0
      %v497 = vld [vmem:[%s3] sm:$0x1]
      %v499 = vlaneseq
      %v500 = vshrl.u32 %v499, 7
      %v501 = vsub.s32 0, %v500
      %v502 = vrot.slane %v497, %v501
      %v504 = vmul.f32 %v491, %v502
      %v505 = vmul.f32 %v494, %v502
      %v506 = vld [vmem:[%s404] sm:$0xff]
      %v507 = vld [vmem:[%s404 + $0x8] sm:$0xff]
      %v508 = vadd.f32 %v504, %v506
      %v509 = vadd.f32 %v505, %v507
      %v510 = vld [vmem:[%s4] sm:$0x1]
      %v511 = vld [vmem:[%s5] sm:$0x1]
      %v512 = vsel %vm452, %v508, 0.0
      %513 = vadd.xlane.f32.xlu0 %v512
      %v514 = vpop.xlane.xlu0 %513
      %v515 = vsel %vm452, %v509, 0.0
      %516 = vadd.xlane.f32.xlu0 %v515
      %v517 = vpop.xlane.xlu0 %516
      %v518 = vrcp.pop 64.0
      %v519 = vmul.f32 %v514, %v518
      %v520 = vmul.f32 %v517, %v518
      %v521 = vsub.f32 %v508, %v519
      %v522 = vsub.f32 %v509, %v520
      %v523 = vmul.f32 %v521, %v521
      %v524 = vmul.f32 %v522, %v522
      %v525 = vsel %vm452, %v523, 0.0
      %526 = vadd.xlane.f32.xlu0 %v525
      %v527 = vpop.xlane.xlu0 %526
      %v528 = vsel %vm452, %v524, 0.0
      %529 = vadd.xlane.f32.xlu0 %v528
      %v530 = vpop.xlane.xlu0 %529
      %v531 = vmul.f32 %v527, %v518
      %v532 = vmul.f32 %v530, %v518
      %v533 = vadd.f32 %v531, 1e-05
      %v534 = vadd.f32 %v532, 1e-05
      %v535 = vrsqrt.pop %v533
      %v536 = vrsqrt.pop %v534
      %v537 = vmul.f32 %v521, %v535
      %v538 = vmul.f32 %v522, %v536
      %v540 = vlaneseq
      %v541 = vshrl.u32 %v540, 7
      %v542 = vsub.s32 0, %v541
      %v543 = vrot.slane %v510, %v542
      %v545 = vmul.f32 %v537, %v543
      %v546 = vmul.f32 %v538, %v543
      %v548 = vlaneseq
      %v549 = vshrl.u32 %v548, 7
      %v550 = vsub.s32 0, %v549
      %v551 = vrot.slane %v511, %v550
      %v553 = vadd.f32 %v545, %v551
      %v554 = vadd.f32 %v546, %v551
      %v555 = vpack.c.bf16 %v554, %v553
      %v556 = vld [vmem:[%s6] sm:$0xff]
      %v557 = vld [vmem:[%s6 + $0x8] sm:$0xff]
      %v558 = vld [vmem:[%s6 + $0x10] sm:$0xff]
      %v559 = vld [vmem:[%s6 + $0x18] sm:$0xff]
      %v560 = vld [vmem:[%s6 + $0x20] sm:$0xff]
      %v561 = vld [vmem:[%s6 + $0x28] sm:$0xff]
      %v562 = vld [vmem:[%s6 + $0x30] sm:$0xff]
      %v563 = vld [vmem:[%s6 + $0x38] sm:$0xff]
      %v564 = vld [vmem:[%s7] sm:$0x3]
      %v566 = vlaneseq
      %v567 = vshrl.u32 %v566, 7
      %v568 = vsub.s32 0, %v567
      %v569 = vrot.slane %v564, %v568
      %v570 = vlaneseq
      %v571 = vshrl.u32 %v570, 7
      %v572 = vsub.s32 1, %v571
      %v573 = vrot.slane %v564, %v572
      %v584 = vunpack.c.l.b16 %v556
      %v585 = vunpack.c.h.b16 %v556
      %v586 = vunpack.c.l.b16 %v557
      %v587 = vunpack.c.h.b16 %v557
      %v588 = vunpack.c.l.b16 %v558
      %v589 = vunpack.c.h.b16 %v558
      %v590 = vunpack.c.l.b16 %v559
      %v591 = vunpack.c.h.b16 %v559
      %v592 = vunpack.c.l.b16 %v560
      %v593 = vunpack.c.h.b16 %v560
      %v594 = vunpack.c.l.b16 %v561
      %v595 = vunpack.c.h.b16 %v561
      %v596 = vunpack.c.l.b16 %v562
      %v597 = vunpack.c.h.b16 %v562
      %v598 = vunpack.c.l.b16 %v563
      %v599 = vunpack.c.h.b16 %v563
      %v600 = vpack.c.b16 %v586, %v584
      %v601 = vpack.c.b16 %v587, %v585
      %v602 = vpack.c.b16 %v590, %v588
      %v603 = vpack.c.b16 %v591, %v589
      %v604 = vpack.c.b16 %v594, %v592
      %v605 = vpack.c.b16 %v595, %v593
      %v606 = vpack.c.b16 %v598, %v596
      %v607 = vpack.c.b16 %v599, %v597
      %v617 = vsel %vm452, %v555, 0
      %619 = vmatprep.subr.bf16.mxu0 0
      %620 = vmatpush1.bf16.msra.mxu0 0
      %621 = vmatprep.subr.bf16.mxu0 0
      %622 = vmatpush1.bf16.msra.mxu0 0
      %623 = vmatprep.subr.bf16.mxu0 0
      %624 = vmatpush1.bf16.msra.mxu0 0
      %625 = vmatprep.subr.bf16.mxu0 0
      %626 = vmatpush1.bf16.msra.mxu0 0
      %627 = vmatprep.subr.bf16.mxu0 %v607
      %628 = vmatpush1.bf16.msra.mxu0 %v606
      %629 = vmatprep.subr.bf16.mxu0 %v605
      %630 = vmatpush1.bf16.msra.mxu0 %v604
      %631 = vmatprep.subr.bf16.mxu0 %v603
      %632 = vmatpush1.bf16.msra.mxu0 %v602
      %633 = vmatprep.subr.bf16.mxu0 %v601
      %634 = vmatpush1.bf16.msra.mxu0 %v600
      %635 = vmatprep.subr.bf16.mxu0 0
      %636 = vmatpush2.bf16.msra.mxu0 0
      %637 = vmatprep.subr.bf16.mxu0 0
      %638 = vmatpush2.bf16.msra.mxu0 0
      %639 = vmatprep.subr.bf16.mxu0 0
      %640 = vmatpush2.bf16.msra.mxu0 0
      %641 = vmatprep.subr.bf16.mxu0 0
      %642 = vmatpush2.bf16.msra.mxu0 0
      %643 = vmatprep.subr.bf16.mxu0 0
      %644 = vmatpush2.bf16.msra.mxu0 0
      %645 = vmatprep.subr.bf16.mxu0 0
      %646 = vmatpush2.bf16.msra.mxu0 0
      %647 = vmatprep.subr.bf16.mxu0 0
      %648 = vmatpush2.bf16.msra.mxu0 0
      %649 = vmatprep.subr.bf16.mxu0 0
      %650 = vmatpush2.bf16.msra.mxu0 0
      %651 = vmatprep.mubr.bf16.mxu0 0
      %652 = vmatmul.mubr.bf16.gmra.mxu0 %v617
      %v653 = vpop.f32.mrf.mxu0
      %v654 = vadd.f32 %v569, %v653
      %v655 = vpop.f32.mrf.mxu0
      %v656 = vadd.f32 %v573, %v655
      %v657 = vpop.f32.mrf.mxu0
      %v658 = vadd.f32 %v569, %v657
      %v659 = vpop.f32.mrf.mxu0
      %v660 = vadd.f32 %v573, %v659
      %661 = vdwg.mxu0
      %v662 = vmul.f32 %v654, 0.5
      %v663 = vmul.f32 %v656, 0.5
      %v664 = vmul.f32 %v658, 0.5
      %v665 = vmul.f32 %v660, 0.5
      %v666 = vmul.f32 %v654, 0.044715
      %v667 = vmul.f32 %v656, 0.044715
      %v668 = vmul.f32 %v658, 0.044715
      %v669 = vmul.f32 %v660, 0.044715
      %v670 = vmul.f32 %v666, %v654
      %v671 = vmul.f32 %v667, %v656
      %v672 = vmul.f32 %v668, %v658
      %v673 = vmul.f32 %v669, %v660
      %v674 = vmul.f32 %v670, %v654
      %v675 = vmul.f32 %v671, %v656
      %v676 = vmul.f32 %v672, %v658
      %v677 = vmul.f32 %v673, %v660
      %v678 = vadd.f32 %v654, %v674
      %v679 = vadd.f32 %v656, %v675
      %v680 = vadd.f32 %v658, %v676
      %v681 = vadd.f32 %v660, %v677
      %v682 = vmul.f32 %v678, 0.7978846
      %v683 = vmul.f32 %v679, 0.7978846
      %v684 = vmul.f32 %v680, 0.7978846
      %v685 = vmul.f32 %v681, 0.7978846
      %v686 = vtanh.pop %v682
      %v687 = vtanh.pop %v683
      %v688 = vtanh.pop %v684
      %v689 = vtanh.pop %v685
      %v690 = vadd.f32 %v686, 1.0
      %v691 = vadd.f32 %v687, 1.0
      %v692 = vadd.f32 %v688, 1.0
      %v693 = vadd.f32 %v689, 1.0
      %v694 = vmul.f32 %v662, %v690
      %v695 = vmul.f32 %v663, %v691
      %v696 = vmul.f32 %v664, %v692
      %v697 = vmul.f32 %v665, %v693
      %v698 = vpack.c.bf16 %v696, %v694
      %v699 = vpack.c.bf16 %v697, %v695
      %v700 = vld [vmem:[%s8] sm:$0xf]
      %v701 = vld [vmem:[%s8 + $0x4] sm:$0xf]
      %v702 = vld [vmem:[%s8 + $0x8] sm:$0xf]
      %v703 = vld [vmem:[%s8 + $0xc] sm:$0xf]
      %v704 = vld [vmem:[%s8 + $0x10] sm:$0xf]
      %v705 = vld [vmem:[%s8 + $0x14] sm:$0xf]
      %v706 = vld [vmem:[%s8 + $0x18] sm:$0xf]
      %v707 = vld [vmem:[%s8 + $0x1c] sm:$0xf]
      %v708 = vld [vmem:[%s8 + $0x20] sm:$0xf]
      %v709 = vld [vmem:[%s8 + $0x24] sm:$0xf]
      %v710 = vld [vmem:[%s8 + $0x28] sm:$0xf]
      %v711 = vld [vmem:[%s8 + $0x2c] sm:$0xf]
      %v712 = vld [vmem:[%s8 + $0x30] sm:$0xf]
      %v713 = vld [vmem:[%s8 + $0x34] sm:$0xf]
      %v714 = vld [vmem:[%s8 + $0x38] sm:$0xf]
      %v715 = vld [vmem:[%s8 + $0x3c] sm:$0xf]
      %v716 = vld [vmem:[%s8 + $0x40] sm:$0xf]
      %v717 = vld [vmem:[%s8 + $0x44] sm:$0xf]
      %v718 = vld [vmem:[%s8 + $0x48] sm:$0xf]
      %v719 = vld [vmem:[%s8 + $0x4c] sm:$0xf]
      %v720 = vld [vmem:[%s8 + $0x50] sm:$0xf]
      %v721 = vld [vmem:[%s8 + $0x54] sm:$0xf]
      %v722 = vld [vmem:[%s8 + $0x58] sm:$0xf]
      %v723 = vld [vmem:[%s8 + $0x5c] sm:$0xf]
      %v724 = vld [vmem:[%s8 + $0x60] sm:$0xf]
      %v725 = vld [vmem:[%s8 + $0x64] sm:$0xf]
      %v726 = vld [vmem:[%s8 + $0x68] sm:$0xf]
      %v727 = vld [vmem:[%s8 + $0x6c] sm:$0xf]
      %v728 = vld [vmem:[%s8 + $0x70] sm:$0xf]
      %v729 = vld [vmem:[%s8 + $0x74] sm:$0xf]
      %v730 = vld [vmem:[%s8 + $0x78] sm:$0xf]
      %v731 = vld [vmem:[%s8 + $0x7c] sm:$0xf]
      %v732 = vld [vmem:[%s9] sm:$0x1]
      %v734 = vlaneseq
      %v735 = vshrl.u32 %v734, 7
      %v736 = vsub.s32 0, %v735
      %v737 = vrot.slane %v732, %v736
      %v771 = vunpack.c.l.b16 %v700
      %v772 = vunpack.c.l.b16 %v701
      %v773 = vunpack.c.l.b16 %v702
      %v774 = vunpack.c.l.b16 %v703
      %v775 = vunpack.c.l.b16 %v704
      %v776 = vunpack.c.l.b16 %v705
      %v777 = vunpack.c.l.b16 %v706
      %v778 = vunpack.c.l.b16 %v707
      %v779 = vunpack.c.l.b16 %v708
      %v780 = vunpack.c.l.b16 %v709
      %v781 = vunpack.c.l.b16 %v710
      %v782 = vunpack.c.l.b16 %v711
      %v783 = vunpack.c.l.b16 %v712
      %v784 = vunpack.c.l.b16 %v713
      %v785 = vunpack.c.l.b16 %v714
      %v786 = vunpack.c.l.b16 %v715
      %v787 = vunpack.c.l.b16 %v716
      %v788 = vunpack.c.l.b16 %v717
      %v789 = vunpack.c.l.b16 %v718
      %v790 = vunpack.c.l.b16 %v719
      %v791 = vunpack.c.l.b16 %v720
      %v792 = vunpack.c.l.b16 %v721
      %v793 = vunpack.c.l.b16 %v722
      %v794 = vunpack.c.l.b16 %v723
      %v795 = vunpack.c.l.b16 %v724
      %v796 = vunpack.c.l.b16 %v725
      %v797 = vunpack.c.l.b16 %v726
      %v798 = vunpack.c.l.b16 %v727
      %v799 = vunpack.c.l.b16 %v728
      %v800 = vunpack.c.l.b16 %v729
      %v801 = vunpack.c.l.b16 %v730
      %v802 = vunpack.c.l.b16 %v731
      %v803 = vpack.c.b16 %v772, %v771
      %v804 = vpack.c.b16 %v774, %v773
      %v805 = vpack.c.b16 %v776, %v775
      %v806 = vpack.c.b16 %v778, %v777
      %v807 = vpack.c.b16 %v780, %v779
      %v808 = vpack.c.b16 %v782, %v781
      %v809 = vpack.c.b16 %v784, %v783
      %v810 = vpack.c.b16 %v786, %v785
      %v811 = vpack.c.b16 %v788, %v787
      %v812 = vpack.c.b16 %v790, %v789
      %v813 = vpack.c.b16 %v792, %v791
      %v814 = vpack.c.b16 %v794, %v793
      %v815 = vpack.c.b16 %v796, %v795
      %v816 = vpack.c.b16 %v798, %v797
      %v817 = vpack.c.b16 %v800, %v799
      %v818 = vpack.c.b16 %v802, %v801
      %835 = vmatprep.subr.bf16.mxu0 0
      %836 = vmatpush1.bf16.msra.mxu0 %v810
      %837 = vmatprep.subr.bf16.mxu0 0
      %838 = vmatpush1.bf16.msra.mxu0 %v809
      %839 = vmatprep.subr.bf16.mxu0 0
      %840 = vmatpush1.bf16.msra.mxu0 %v808
      %841 = vmatprep.subr.bf16.mxu0 0
      %842 = vmatpush1.bf16.msra.mxu0 %v807
      %843 = vmatprep.subr.bf16.mxu0 0
      %844 = vmatpush1.bf16.msra.mxu0 %v806
      %845 = vmatprep.subr.bf16.mxu0 0
      %846 = vmatpush1.bf16.msra.mxu0 %v805
      %847 = vmatprep.subr.bf16.mxu0 0
      %848 = vmatpush1.bf16.msra.mxu0 %v804
      %849 = vmatprep.subr.bf16.mxu0 0
      %850 = vmatpush1.bf16.msra.mxu0 %v803
      %851 = vmatprep.subr.bf16.mxu0 0
      %852 = vmatpush2.bf16.msra.mxu0 %v818
      %853 = vmatprep.subr.bf16.mxu0 0
      %854 = vmatpush2.bf16.msra.mxu0 %v817
      %855 = vmatprep.subr.bf16.mxu0 0
      %856 = vmatpush2.bf16.msra.mxu0 %v816
      %857 = vmatprep.subr.bf16.mxu0 0
      %858 = vmatpush2.bf16.msra.mxu0 %v815
      %859 = vmatprep.subr.bf16.mxu0 0
      %860 = vmatpush2.bf16.msra.mxu0 %v814
      %861 = vmatprep.subr.bf16.mxu0 0
      %862 = vmatpush2.bf16.msra.mxu0 %v813
      %863 = vmatprep.subr.bf16.mxu0 0
      %864 = vmatpush2.bf16.msra.mxu0 %v812
      %865 = vmatprep.subr.bf16.mxu0 0
      %866 = vmatpush2.bf16.msra.mxu0 %v811
      %867 = vmatprep.mubr.bf16.mxu0 %v699
      %868 = vmatmul.mubr.bf16.gmra.mxu0 %v698
      %v869 = vpop.f32.mrf.mxu0
      %v870 = vadd.f32 %v737, %v869
      %v871 = vpop.f32.mrf.mxu0
      %v872 = vpop.f32.mrf.mxu0
      %v873 = vadd.f32 %v737, %v872
      %v874 = vpop.f32.mrf.mxu0
      %875 = vdwg.mxu0
      %v876 = vld [vmem:[%s10] sm:$0x1]
      %v878 = vlaneseq
      %v879 = vshrl.u32 %v878, 7
      %v880 = vsub.s32 0, %v879
      %v881 = vrot.slane %v876, %v880
      %v883 = vmul.f32 %v870, %v881
      %v884 = vmul.f32 %v873, %v881
      %v885 = vadd.f32 %v883, %v508
      %v886 = vadd.f32 %v884, %v509
      %887 = vst.msk [vmem:[%s410] sm:$0xff] %vm452, %v885
      %888 = vst.msk [vmem:[%s410 + $0x8] sm:$0xff] %vm452, %v886
      %s889 = smul.u32 2, %s22
      %p890 = scmp.lt.s32.totalorder %s889, 3
      %s891 = scalar_select %p890, %s889, 3
      %s892 = smul.addr %s891, 8
      %s893 = scalar_lea.vmem %s11, %s892
      // Predicated region
      $region65: #{_lambda_.24} parent=63 // pred_check
        %p894 = pneg %p281
      $region66: #{_lambda_.24} parent=63 // pred_check_branch
        %896 = sbr.rel (%p894) target = $region68
      $region67: #{_lambda_.24} parent=63 // pred_region
        %s897 = smul.u32 2, %s22
      $region68: #{_lambda_.24} parent=63 // pred_fallthru
        _
    $region64: #{_lambda_.24} parent=5 // pred_fallthru
      _
    %p898 = scmp.le.s32.totalorder 2, %s17
    // Predicated region
    $region69: #{_lambda_.24} parent=5 // pred_check
      %p899 = pneg %p898
    $region70: #{_lambda_.24} parent=5 // pred_check_branch
      %901 = sbr.rel (%p899) target = $region72
    $region71: #{_lambda_.24} parent=5 // pred_region
      %s902 = ssub.s32 %s17, 2
      // Predicated region
      $region73: #{_lambda_.24} parent=71 // pred_check
        %p903 = pneg %p287
      $region74: #{_lambda_.24} parent=71 // pred_check_branch
        %905 = sbr.rel (%p903) target = $region76
      $region75: #{_lambda_.24} parent=71 // pred_region
        %s906 = smul.u32 2, %s23
        %p907 = scmp.lt.s32.totalorder %s906, 3
        %s908 = scalar_select %p907, %s906, 3
        %s909 = smul.addr %s908, 8
        %s910 = scalar_lea.vmem %s11, %s909
      $region76: #{_lambda_.24} parent=71 // pred_fallthru
        _
    $region72: #{_lambda_.24} parent=5 // pred_fallthru
      _
  $region6: #{_lambda_.24} parent=0 // loop_footer
    %s21 = sadd.s32 1, %s17
  $region7: #{_lambda_.24} parent=0 // loop_footer_branch
    %16 = sbr.rel target = $region3
  $region8: #{_lambda_.24} parent=0 // loop_exit
    _

// kernel: _lambda_.23
$region0: #{_lambda_.23}
  #allocation0 [shape = 'u32[]', space=smem, size = 0x4, offset = 0x4, fixed_abs, tag = 'smem constant byte address 0x4 - core index']
  #allocation1 [shape = 'u32[144,128]{1,0:T(1,128)}', space=vmem, size = 0x12000, scoped, tag = 'internal scratch']
  %s0 = inlined_call_operand.vmem [shape: bf16[32,192], index: 0, kind: input, shape index: {}]
  %s1 = inlined_call_operand.vmem [shape: f32[4,4,4], index: 1, kind: input, shape index: {}]
  %s2 = inlined_call_operand.vmem [shape: bf16[32,64], index: 2, kind: output, shape index: {}]
  %s3 = sld [smem:[#allocation0]]
  $region41: #{_lambda_.23} parent=0
    _
  %s5 = ssub.s32 1, %s3
  %s6 = scalar_select 0, %s5, %s3
  loop: start=0, step=1, limit=4
  $region2: #{_lambda_.23} parent=0 // loop_pre_header
    _
  $region3: #{_lambda_.23} parent=0 // loop_header
    %s8 = sphi 0, %s12
    %p9 = scmp.ge.s32.totalorder %s8, 4
    %s18 = sphi 0, %s20
    %s21 = sphi 0, %s18
    %s22 = sphi 0, %s21
    %s38 = sphi 0, %s22
    %s42 = sphi 0, %s42
    %s44 = sphi 0, %s42
    %s45 = sphi 0, %s44
    %s59 = sphi 0, %s45
    %s65 = sphi 0, %s67
    %s68 = sphi 0, %s65
    %s69 = sphi 0, %s68
    %s85 = sphi 0, %s69
  $region4: #{_lambda_.23} parent=0 // loop_header_branch
    %11 = sbr.rel (%p9) target = $region8
  $region5: #{_lambda_.23} parent=0 // loop_body
    %s13 = ssub.s32 %s8, 1
    %s14 = ssub.s32 %s8, 2
    %s15 = sadd.s32 %s8, 1
    %s16 = ssub.s32 %s8, %s15
    %p17 = scmp.eq.s32.totalorder %s16, 0
    %s19 = sadd.s32 %s18, 1
    %s20 = scalar_select %p17, %s18, %s19
    %p23 = pneg %p17
    %p24 = scmp.eq.s32.totalorder %s8, 1
    %p25 = por %p23, %p24
    %p26 = scmp.ne.s32.totalorder %s18, %s21
    %p27 = scmp.eq.s32.totalorder %s8, 0
    %p28 = por %p26, %p27
    %p29 = scmp.ne.s32.totalorder %s18, %s21
    %p30 = scmp.eq.s32.totalorder %s13, 1
    %p31 = por %p29, %p30
    %p32 = scmp.ne.s32.totalorder %s21, %s22
    %p33 = scmp.eq.s32.totalorder %s13, 0
    %p34 = por %p32, %p33
    %p35 = scmp.ne.s32.totalorder %s21, %s22
    %p36 = scmp.eq.s32.totalorder %s14, 1
    %p37 = por %p35, %p36
    %p39 = scmp.ne.s32.totalorder %s22, %s38
    %p40 = scmp.eq.s32.totalorder %s14, 0
    %p41 = por %p39, %p40
    %s43 = sadd.s32 %s42, 1
    %p46 = scmp.eq.s32.totalorder %s8, 1
    %p47 = scmp.ne.s32.totalorder %s42, %s44
    %p48 = scmp.eq.s32.totalorder %s8, 0
    %p49 = por %p47, %p48
    %p50 = scmp.ne.s32.totalorder %s42, %s44
    %p51 = scmp.eq.s32.totalorder %s13, 1
    %p52 = por %p50, %p51
    %p53 = scmp.ne.s32.totalorder %s44, %s45
    %p54 = scmp.eq.s32.totalorder %s13, 0
    %p55 = por %p53, %p54
    %p56 = scmp.ne.s32.totalorder %s44, %s45
    %p57 = scmp.eq.s32.totalorder %s14, 1
    %p58 = por %p56, %p57
    %p60 = scmp.ne.s32.totalorder %s45, %s59
    %p61 = scmp.eq.s32.totalorder %s14, 0
    %p62 = por %p60, %p61
    %s63 = ssub.s32 %s8, %s15
    %p64 = scmp.eq.s32.totalorder %s63, 0
    %s66 = sadd.s32 %s65, 1
    %s67 = scalar_select %p64, %s65, %s66
    %p70 = pneg %p64
    %p71 = scmp.eq.s32.totalorder %s8, 1
    %p72 = por %p70, %p71
    %p73 = scmp.ne.s32.totalorder %s65, %s68
    %p74 = scmp.eq.s32.totalorder %s8, 0
    %p75 = por %p73, %p74
    %p76 = scmp.ne.s32.totalorder %s65, %s68
    %p77 = scmp.eq.s32.totalorder %s13, 1
    %p78 = por %p76, %p77
    %p79 = scmp.ne.s32.totalorder %s68, %s69
    %p80 = scmp.eq.s32.totalorder %s13, 0
    %p81 = por %p79, %p80
    %p82 = scmp.ne.s32.totalorder %s68, %s69
    %p83 = scmp.eq.s32.totalorder %s14, 1
    %p84 = por %p82, %p83
    %p86 = scmp.ne.s32.totalorder %s69, %s85
    %p87 = scmp.eq.s32.totalorder %s14, 0
    %p88 = por %p86, %p87
    %p89 = scmp.le.s32.totalorder 1, %s8
    %p90 = scmp.lt.s32.totalorder %s8, 3
    %p91 = pnand %p89, %p90
    %p92 = pneg %p91
    // Predicated region
    $region9: #{_lambda_.23} parent=5 // pred_check
      _
    $region10: #{_lambda_.23} parent=5 // pred_check_branch
      %94 = sbr.rel (%p91) target = $region12
    $region11: #{_lambda_.23} parent=5 // pred_region
      %s95 = ssub.s32 %s8, 1
      // Predicated region
      $region13: #{_lambda_.23} parent=11 // pred_check
        %p96 = pneg %p55
      $region14: #{_lambda_.23} parent=11 // pred_check_branch
        %98 = sbr.rel (%p96) target = $region16
      $region15: #{_lambda_.23} parent=11 // pred_region
        _
      $region16: #{_lambda_.23} parent=11 // pred_fallthru
        _
    $region12: #{_lambda_.23} parent=5 // pred_fallthru
      _
    %p99 = scmp.lt.s32.totalorder %s8, 2
    // Predicated region
    $region17: #{_lambda_.23} parent=5 // pred_check
      %p100 = pneg %p99
    $region18: #{_lambda_.23} parent=5 // pred_check_branch
      %102 = sbr.rel (%p100) target = $region20
    $region19: #{_lambda_.23} parent=5 // pred_region
      // Predicated region
      $region21: #{_lambda_.23} parent=19 // pred_check
        %p103 = pneg %p28
      $region22: #{_lambda_.23} parent=19 // pred_check_branch
        %105 = sbr.rel (%p103) target = $region24
      $region23: #{_lambda_.23} parent=19 // pred_region
        %s106 = smul.u32 2, %s8
        %p107 = scmp.lt.s32.totalorder %s106, 3
        %s108 = scalar_select %p107, %s106, 3
        %s109 = smul.addr %s108, 2
        %s110 = smul.addr %s109, 4
        %s111 = scalar_lea.vmem %s0, %s110
        %s112 = smul.u32 2, %s8
      $region24: #{_lambda_.23} parent=19 // pred_fallthru
        _
    $region20: #{_lambda_.23} parent=5 // pred_fallthru
      _
    %p113 = scmp.le.s32.totalorder 1, %s8
    %p114 = scmp.lt.s32.totalorder %s8, 3
    %p115 = pnand %p113, %p114
    %p116 = pneg %p115
    // Predicated region
    $region25: #{_lambda_.23} parent=5 // pred_check
      _
    $region26: #{_lambda_.23} parent=5 // pred_check_branch
      %118 = sbr.rel (%p115) target = $region28
    $region27: #{_lambda_.23} parent=5 // pred_region
      %s119 = ssub.s32 %s8, 1
      %s120 = smul.u32 2, %s13
      %p121 = scmp.lt.s32.totalorder %s120, 3
      %s122 = scalar_select %p121, %s120, 3
      %s123 = smul.addr %s122, 2
      %s124 = smul.addr %s123, 4
      %s125 = scalar_lea.vmem %s0, %s124
      %p126 = pneg %p34
      %p127 = pneg %p31
      %p128 = pneg %p55
      %p129 = pneg %p52
      %p130 = pneg %p81
      %p131 = pneg %p78
      %s132 = smul.u32 2, %s13
      %p133 = scmp.lt.s32.totalorder %s132, 3
      %s134 = scalar_select %p133, %s132, 3
      %s135 = smul.addr %s134, 4
      %s136 = scalar_lea.vmem %s2, %s135
      %s137 = smul.u32 2, %s13
      %p138 = scmp.lt.s32.totalorder %s137, 3
      %s139 = scalar_select %p138, %s137, 3
      %s140 = smul.addr %s139, 2
      %s141 = smul.addr %s140, 4
      %s142 = scalar_lea.vmem %s0, %s141
      %s143 = smul.u32 2, %s13
      %s144 = smul.u32 2, %s13
      %p145 = scmp.lt.s32.totalorder %s144, 3
      %s146 = scalar_select %p145, %s144, 3
      %s147 = smul.addr %s146, 4
      %s148 = scalar_lea.vmem %s2, %s147
      %s149 = smul.u32 2, %s13
      %v151 = vld [vmem:[%s142] sm:$0xff]
      %v152 = vld [vmem:[%s142 + $0x8] sm:$0xff]
      %v156 = vunpack.c.l.s4 1983009808
      %v157 = vunpack.c.0.s8 %v156
      %v158 = vlaneseq
      %v159 = vshrl.u32 %v158, 7
      %v160 = vsub.s32 %v157, %v159
      %v161 = vrot.slane %v151, %v160
      %v162 = vcombine.high %v161, %v161
      %v164 = vunpack.c.l.s4 1983009808
      %v165 = vunpack.c.0.s8 %v164
      %v166 = vlaneseq
      %v167 = vshrl.u32 %v166, 7
      %v168 = vsub.s32 %v165, %v167
      %v169 = vrot.slane %v152, %v168
      %v170 = vcombine.high %v169, %v169
      %v171 = vld [vmem:[%s1] sm:$0xf]
      %v173 = vunpack.c.l.s4 1983009808
      %v174 = vunpack.c.0.s8 %v173
      %v175 = vlaneseq
      %v176 = vshrl.u32 %v175, 7
      %v177 = vsub.s32 %v174, %v176
      %v178 = vrot.slane %v161, %v177
      %179 = vrot.lane.b32.xlu0 %v178, 64
      %v180 = vpop.permute.xlu0 %179
      %vm181 = vcmask 130048
      %v183 = vsel %vm181, %v161, 0
      %v186 = vsel %vm181, %v180, 0
      %188 = vmatprep.subr.bf16.mxu0 0
      %189 = vmatpush1.bf16.xpose.msra.mxu0 0
      %190 = vmatprep.subr.bf16.mxu0 0
      %191 = vmatpush1.bf16.xpose.msra.mxu0 0
      %192 = vmatprep.subr.bf16.mxu0 0
      %193 = vmatpush1.bf16.xpose.msra.mxu0 0
      %194 = vmatprep.subr.bf16.mxu0 0
      %195 = vmatpush1.bf16.xpose.msra.mxu0 0
      %196 = vmatprep.subr.bf16.mxu0 0
      %197 = vmatpush1.bf16.xpose.msra.mxu0 0
      %198 = vmatprep.subr.bf16.mxu0 0
      %199 = vmatpush1.bf16.xpose.msra.mxu0 0
      %200 = vmatprep.subr.bf16.mxu0 0
      %201 = vmatpush1.bf16.xpose.msra.mxu0 0
      %202 = vmatprep.subr.bf16.mxu0 0
      %203 = vmatpush1.bf16.xpose.msra.mxu0 %v186
      %204 = vmatprep.subr.bf16.mxu0 0
      %205 = vmatpush2.bf16.xpose.msra.mxu0 0
      %206 = vmatprep.subr.bf16.mxu0 0
      %207 = vmatpush2.bf16.xpose.msra.mxu0 0
      %208 = vmatprep.subr.bf16.mxu0 0
      %209 = vmatpush2.bf16.xpose.msra.mxu0 0
      %210 = vmatprep.subr.bf16.mxu0 0
      %211 = vmatpush2.bf16.xpose.msra.mxu0 0
      %212 = vmatprep.subr.bf16.mxu0 0
      %213 = vmatpush2.bf16.xpose.msra.mxu0 0
      %214 = vmatprep.subr.bf16.mxu0 0
      %215 = vmatpush2.bf16.xpose.msra.mxu0 0
      %216 = vmatprep.subr.bf16.mxu0 0
      %217 = vmatpush2.bf16.xpose.msra.mxu0 0
      %218 = vmatprep.subr.bf16.mxu0 0
      %219 = vmatpush2.bf16.xpose.msra.mxu0 0
      %220 = vmatprep.mubr.bf16.mxu0 0
      %221 = vmatmul.mubr.bf16.gmra.mxu0 %v183
      %v222 = vpop.f32.mrf.mxu0
      %v223 = vadd.f32 %v171, %v222
      %v224 = vpop.f32.mrf.mxu0
      %v225 = vpop.f32.mrf.mxu0
      %v226 = vpop.f32.mrf.mxu0
      %227 = vdwg.mxu0
      %v229 = vunpack.c.l.s4 1983009808
      %v230 = vunpack.c.0.s8 %v229
      %v231 = vlaneseq
      %v232 = vshrl.u32 %v231, 7
      %v233 = vsub.s32 %v230, %v232
      %v234 = vrot.slane %v162, %v233
      %235 = vrot.lane.b32.xlu0 %v234, 64
      %v236 = vpop.permute.xlu0 %235
      %v238 = vsel %vm181, %v162, 0
      %v241 = vsel %vm181, %v236, 0
      %243 = vmatprep.subr.bf16.mxu0 0
      %244 = vmatpush1.bf16.xpose.msra.mxu0 0
      %245 = vmatprep.subr.bf16.mxu0 0
      %246 = vmatpush1.bf16.xpose.msra.mxu0 0
      %247 = vmatprep.subr.bf16.mxu0 0
      %248 = vmatpush1.bf16.xpose.msra.mxu0 0
      %249 = vmatprep.subr.bf16.mxu0 0
      %250 = vmatpush1.bf16.xpose.msra.mxu0 0
      %251 = vmatprep.subr.bf16.mxu0 0
      %252 = vmatpush1.bf16.xpose.msra.mxu0 0
      %253 = vmatprep.subr.bf16.mxu0 0
      %254 = vmatpush1.bf16.xpose.msra.mxu0 0
      %255 = vmatprep.subr.bf16.mxu0 0
      %256 = vmatpush1.bf16.xpose.msra.mxu0 0
      %257 = vmatprep.subr.bf16.mxu0 0
      %258 = vmatpush1.bf16.xpose.msra.mxu0 %v241
      %259 = vmatprep.subr.bf16.mxu0 0
      %260 = vmatpush2.bf16.xpose.msra.mxu0 0
      %261 = vmatprep.subr.bf16.mxu0 0
      %262 = vmatpush2.bf16.xpose.msra.mxu0 0
      %263 = vmatprep.subr.bf16.mxu0 0
      %264 = vmatpush2.bf16.xpose.msra.mxu0 0
      %265 = vmatprep.subr.bf16.mxu0 0
      %266 = vmatpush2.bf16.xpose.msra.mxu0 0
      %267 = vmatprep.subr.bf16.mxu0 0
      %268 = vmatpush2.bf16.xpose.msra.mxu0 0
      %269 = vmatprep.subr.bf16.mxu0 0
      %270 = vmatpush2.bf16.xpose.msra.mxu0 0
      %271 = vmatprep.subr.bf16.mxu0 0
      %272 = vmatpush2.bf16.xpose.msra.mxu0 0
      %273 = vmatprep.subr.bf16.mxu0 0
      %274 = vmatpush2.bf16.xpose.msra.mxu0 0
      %275 = vmatprep.mubr.bf16.mxu0 0
      %276 = vmatmul.mubr.bf16.gmra.mxu0 %v238
      %v277 = vpop.f32.mrf.mxu0
      %v278 = vadd.f32 %v171, %v277
      %v279 = vpop.f32.mrf.mxu0
      %v280 = vpop.f32.mrf.mxu0
      %v281 = vpop.f32.mrf.mxu0
      %282 = vdwg.mxu0
      %v284 = vunpack.c.l.s4 1983009808
      %v285 = vunpack.c.0.s8 %v284
      %v286 = vlaneseq
      %v287 = vshrl.u32 %v286, 7
      %v288 = vsub.s32 %v285, %v287
      %v289 = vrot.slane %v169, %v288
      %290 = vrot.lane.b32.xlu0 %v289, 64
      %v291 = vpop.permute.xlu0 %290
      %v293 = vsel %vm181, %v169, 0
      %v296 = vsel %vm181, %v291, 0
      %298 = vmatprep.subr.bf16.mxu0 0
      %299 = vmatpush1.bf16.xpose.msra.mxu0 0
      %300 = vmatprep.subr.bf16.mxu0 0
      %301 = vmatpush1.bf16.xpose.msra.mxu0 0
      %302 = vmatprep.subr.bf16.mxu0 0
      %303 = vmatpush1.bf16.xpose.msra.mxu0 0
      %304 = vmatprep.subr.bf16.mxu0 0
      %305 = vmatpush1.bf16.xpose.msra.mxu0 0
      %306 = vmatprep.subr.bf16.mxu0 0
      %307 = vmatpush1.bf16.xpose.msra.mxu0 0
      %308 = vmatprep.subr.bf16.mxu0 0
      %309 = vmatpush1.bf16.xpose.msra.mxu0 0
      %310 = vmatprep.subr.bf16.mxu0 0
      %311 = vmatpush1.bf16.xpose.msra.mxu0 0
      %312 = vmatprep.subr.bf16.mxu0 0
      %313 = vmatpush1.bf16.xpose.msra.mxu0 %v296
      %314 = vmatprep.subr.bf16.mxu0 0
      %315 = vmatpush2.bf16.xpose.msra.mxu0 0
      %316 = vmatprep.subr.bf16.mxu0 0
      %317 = vmatpush2.bf16.xpose.msra.mxu0 0
      %318 = vmatprep.subr.bf16.mxu0 0
      %319 = vmatpush2.bf16.xpose.msra.mxu0 0
      %320 = vmatprep.subr.bf16.mxu0 0
      %321 = vmatpush2.bf16.xpose.msra.mxu0 0
      %322 = vmatprep.subr.bf16.mxu0 0
      %323 = vmatpush2.bf16.xpose.msra.mxu0 0
      %324 = vmatprep.subr.bf16.mxu0 0
      %325 = vmatpush2.bf16.xpose.msra.mxu0 0
      %326 = vmatprep.subr.bf16.mxu0 0
      %327 = vmatpush2.bf16.xpose.msra.mxu0 0
      %328 = vmatprep.subr.bf16.mxu0 0
      %329 = vmatpush2.bf16.xpose.msra.mxu0 0
      %330 = vmatprep.mubr.bf16.mxu0 0
      %331 = vmatmul.mubr.bf16.gmra.mxu0 %v293
      %v332 = vpop.f32.mrf.mxu0
      %v333 = vadd.f32 %v171, %v332
      %v334 = vpop.f32.mrf.mxu0
      %v335 = vpop.f32.mrf.mxu0
      %v336 = vpop.f32.mrf.mxu0
      %337 = vdwg.mxu0
      %v339 = vunpack.c.l.s4 1983009808
      %v340 = vunpack.c.0.s8 %v339
      %v341 = vlaneseq
      %v342 = vshrl.u32 %v341, 7
      %v343 = vsub.s32 %v340, %v342
      %v344 = vrot.slane %v170, %v343
      %345 = vrot.lane.b32.xlu0 %v344, 64
      %v346 = vpop.permute.xlu0 %345
      %v348 = vsel %vm181, %v170, 0
      %v351 = vsel %vm181, %v346, 0
      %353 = vmatprep.subr.bf16.mxu0 0
      %354 = vmatpush1.bf16.xpose.msra.mxu0 0
      %355 = vmatprep.subr.bf16.mxu0 0
      %356 = vmatpush1.bf16.xpose.msra.mxu0 0
      %357 = vmatprep.subr.bf16.mxu0 0
      %358 = vmatpush1.bf16.xpose.msra.mxu0 0
      %359 = vmatprep.subr.bf16.mxu0 0
      %360 = vmatpush1.bf16.xpose.msra.mxu0 0
      %361 = vmatprep.subr.bf16.mxu0 0
      %362 = vmatpush1.bf16.xpose.msra.mxu0 0
      %363 = vmatprep.subr.bf16.mxu0 0
      %364 = vmatpush1.bf16.xpose.msra.mxu0 0
      %365 = vmatprep.subr.bf16.mxu0 0
      %366 = vmatpush1.bf16.xpose.msra.mxu0 0
      %367 = vmatprep.subr.bf16.mxu0 0
      %368 = vmatpush1.bf16.xpose.msra.mxu0 %v351
      %369 = vmatprep.subr.bf16.mxu0 0
      %370 = vmatpush2.bf16.xpose.msra.mxu0 0
      %371 = vmatprep.subr.bf16.mxu0 0
      %372 = vmatpush2.bf16.xpose.msra.mxu0 0
      %373 = vmatprep.subr.bf16.mxu0 0
      %374 = vmatpush2.bf16.xpose.msra.mxu0 0
      %375 = vmatprep.subr.bf16.mxu0 0
      %376 = vmatpush2.bf16.xpose.msra.mxu0 0
      %377 = vmatprep.subr.bf16.mxu0 0
      %378 = vmatpush2.bf16.xpose.msra.mxu0 0
      %379 = vmatprep.subr.bf16.mxu0 0
      %380 = vmatpush2.bf16.xpose.msra.mxu0 0
      %381 = vmatprep.subr.bf16.mxu0 0
      %382 = vmatpush2.bf16.xpose.msra.mxu0 0
      %383 = vmatprep.subr.bf16.mxu0 0
      %384 = vmatpush2.bf16.xpose.msra.mxu0 0
      %385 = vmatprep.mubr.bf16.mxu0 0
      %386 = vmatmul.mubr.bf16.gmra.mxu0 %v348
      %v387 = vpop.f32.mrf.mxu0
      %v388 = vadd.f32 %v171, %v387
      %v389 = vpop.f32.mrf.mxu0
      %v390 = vpop.f32.mrf.mxu0
      %v391 = vpop.f32.mrf.mxu0
      %392 = vdwg.mxu0
      %vm393 = vcmask 27648
      %v394 = vsel %vm393, %v223, -inf
      %395 = vmax.xlane.f32.xlu0 %v394
      %v396 = vpop.xlane.xlu0 %395
      %v397 = vsel %vm393, %v278, -inf
      %398 = vmax.xlane.f32.xlu0 %v397
      %v399 = vpop.xlane.xlu0 %398
      %v400 = vsel %vm393, %v333, -inf
      %401 = vmax.xlane.f32.xlu0 %v400
      %v402 = vpop.xlane.xlu0 %401
      %v403 = vsel %vm393, %v388, -inf
      %404 = vmax.xlane.f32.xlu0 %v403
      %v405 = vpop.xlane.xlu0 %404
      %v406 = vsub.f32 %v223, %v396
      %v407 = vsub.f32 %v278, %v399
      %v408 = vsub.f32 %v333, %v402
      %v409 = vsub.f32 %v388, %v405
      %v410 = vmul.f32 %v406, 1.442695
      %v411 = vpow.pop %v410
      %v412 = vmul.f32 %v407, 1.442695
      %v413 = vpow.pop %v412
      %v414 = vmul.f32 %v408, 1.442695
      %v415 = vpow.pop %v414
      %v416 = vmul.f32 %v409, 1.442695
      %v417 = vpow.pop %v416
      %v418 = vsel %vm393, %v411, 0.0
      %419 = vadd.xlane.f32.xlu0 %v418
      %v420 = vpop.xlane.xlu0 %419
      %v421 = vsel %vm393, %v413, 0.0
      %422 = vadd.xlane.f32.xlu0 %v421
      %v423 = vpop.xlane.xlu0 %422
      %v424 = vsel %vm393, %v415, 0.0
      %425 = vadd.xlane.f32.xlu0 %v424
      %v426 = vpop.xlane.xlu0 %425
      %v427 = vsel %vm393, %v417, 0.0
      %428 = vadd.xlane.f32.xlu0 %v427
      %v429 = vpop.xlane.xlu0 %428
      %v430 = vrcp.pop %v420
      %v431 = vrcp.pop %v423
      %v432 = vrcp.pop %v426
      %v433 = vrcp.pop %v429
      %v434 = vmul.f32 %v411, %v430
      %v435 = vmul.f32 %v413, %v431
      %v436 = vmul.f32 %v415, %v432
      %v437 = vmul.f32 %v417, %v433
      %v438 = vpack.c.bf16 %v434, %v434
      %v439 = vpack.c.bf16 %v435, %v435
      %v440 = vpack.c.bf16 %v436, %v436
      %v441 = vpack.c.bf16 %v437, %v437
      %v442 = vrot.slane %v161, 2
      %vm443 = vcmask 31744
      %v445 = vsel %vm443, %v438, 0
      %vm447 = vcmask 1041408
      %v449 = vsel %vm447, %v442, 0
      %451 = vmatprep.subr.bf16.mxu0 0
      %452 = vmatpush1.bf16.msra.mxu0 0
      %453 = vmatprep.subr.bf16.mxu0 0
      %454 = vmatpush1.bf16.msra.mxu0 0
      %455 = vmatprep.subr.bf16.mxu0 0
      %456 = vmatpush1.bf16.msra.mxu0 0
      %457 = vmatprep.subr.bf16.mxu0 0
      %458 = vmatpush1.bf16.msra.mxu0 0
      %459 = vmatprep.subr.bf16.mxu0 0
      %460 = vmatpush1.bf16.msra.mxu0 0
      %461 = vmatprep.subr.bf16.mxu0 0
      %462 = vmatpush1.bf16.msra.mxu0 0
      %463 = vmatprep.subr.bf16.mxu0 0
      %464 = vmatpush1.bf16.msra.mxu0 0
      %465 = vmatprep.subr.bf16.mxu0 0
      %466 = vmatpush1.bf16.msra.mxu0 %v449
      %467 = vmatprep.subr.bf16.mxu0 0
      %468 = vmatpush2.bf16.msra.mxu0 0
      %469 = vmatprep.subr.bf16.mxu0 0
      %470 = vmatpush2.bf16.msra.mxu0 0
      %471 = vmatprep.subr.bf16.mxu0 0
      %472 = vmatpush2.bf16.msra.mxu0 0
      %473 = vmatprep.subr.bf16.mxu0 0
      %474 = vmatpush2.bf16.msra.mxu0 0
      %475 = vmatprep.subr.bf16.mxu0 0
      %476 = vmatpush2.bf16.msra.mxu0 0
      %477 = vmatprep.subr.bf16.mxu0 0
      %478 = vmatpush2.bf16.msra.mxu0 0
      %479 = vmatprep.subr.bf16.mxu0 0
      %480 = vmatpush2.bf16.msra.mxu0 0
      %481 = vmatprep.subr.bf16.mxu0 0
      %482 = vmatpush2.bf16.msra.mxu0 0
      %483 = vmatprep.mubr.bf16.mxu0 0
      %484 = vmatmul.mubr.bf16.gmra.mxu0 %v445
      %v485 = vpop.f32.mrf.mxu0
      %v486 = vadd.f32 0.0, %v485
      %v487 = vpop.f32.mrf.mxu0
      %v488 = vpop.f32.mrf.mxu0
      %v489 = vpop.f32.mrf.mxu0
      %490 = vdwg.mxu0
      %v491 = vrot.slane %v162, 2
      %v493 = vsel %vm443, %v439, 0
      %v496 = vsel %vm447, %v491, 0
      %498 = vmatprep.subr.bf16.mxu0 0
      %499 = vmatpush1.bf16.msra.mxu0 0
      %500 = vmatprep.subr.bf16.mxu0 0
      %501 = vmatpush1.bf16.msra.mxu0 0
      %502 = vmatprep.subr.bf16.mxu0 0
      %503 = vmatpush1.bf16.msra.mxu0 0
      %504 = vmatprep.subr.bf16.mxu0 0
      %505 = vmatpush1.bf16.msra.mxu0 0
      %506 = vmatprep.subr.bf16.mxu0 0
      %507 = vmatpush1.bf16.msra.mxu0 0
      %508 = vmatprep.subr.bf16.mxu0 0
      %509 = vmatpush1.bf16.msra.mxu0 0
      %510 = vmatprep.subr.bf16.mxu0 0
      %511 = vmatpush1.bf16.msra.mxu0 0
      %512 = vmatprep.subr.bf16.mxu0 0
      %513 = vmatpush1.bf16.msra.mxu0 %v496
      %514 = vmatprep.subr.bf16.mxu0 0
      %515 = vmatpush2.bf16.msra.mxu0 0
      %516 = vmatprep.subr.bf16.mxu0 0
      %517 = vmatpush2.bf16.msra.mxu0 0
      %518 = vmatprep.subr.bf16.mxu0 0
      %519 = vmatpush2.bf16.msra.mxu0 0
      %520 = vmatprep.subr.bf16.mxu0 0
      %521 = vmatpush2.bf16.msra.mxu0 0
      %522 = vmatprep.subr.bf16.mxu0 0
      %523 = vmatpush2.bf16.msra.mxu0 0
      %524 = vmatprep.subr.bf16.mxu0 0
      %525 = vmatpush2.bf16.msra.mxu0 0
      %526 = vmatprep.subr.bf16.mxu0 0
      %527 = vmatpush2.bf16.msra.mxu0 0
      %528 = vmatprep.subr.bf16.mxu0 0
      %529 = vmatpush2.bf16.msra.mxu0 0
      %530 = vmatprep.mubr.bf16.mxu0 0
      %531 = vmatmul.mubr.bf16.gmra.mxu0 %v493
      %v532 = vpop.f32.mrf.mxu0
      %v533 = vadd.f32 0.0, %v532
      %v534 = vpop.f32.mrf.mxu0
      %v535 = vpop.f32.mrf.mxu0
      %v536 = vpop.f32.mrf.mxu0
      %537 = vdwg.mxu0
      %v538 = vrot.slane %v169, 2
      %v540 = vsel %vm443, %v440, 0
      %v543 = vsel %vm447, %v538, 0
      %545 = vmatprep.subr.bf16.mxu0 0
      %546 = vmatpush1.bf16.msra.mxu0 0
      %547 = vmatprep.subr.bf16.mxu0 0
      %548 = vmatpush1.bf16.msra.mxu0 0
      %549 = vmatprep.subr.bf16.mxu0 0
      %550 = vmatpush1.bf16.msra.mxu0 0
      %551 = vmatprep.subr.bf16.mxu0 0
      %552 = vmatpush1.bf16.msra.mxu0 0
      %553 = vmatprep.subr.bf16.mxu0 0
      %554 = vmatpush1.bf16.msra.mxu0 0
      %555 = vmatprep.subr.bf16.mxu0 0
      %556 = vmatpush1.bf16.msra.mxu0 0
      %557 = vmatprep.subr.bf16.mxu0 0
      %558 = vmatpush1.bf16.msra.mxu0 0
      %559 = vmatprep.subr.bf16.mxu0 0
      %560 = vmatpush1.bf16.msra.mxu0 %v543
      %561 = vmatprep.subr.bf16.mxu0 0
      %562 = vmatpush2.bf16.msra.mxu0 0
      %563 = vmatprep.subr.bf16.mxu0 0
      %564 = vmatpush2.bf16.msra.mxu0 0
      %565 = vmatprep.subr.bf16.mxu0 0
      %566 = vmatpush2.bf16.msra.mxu0 0
      %567 = vmatprep.subr.bf16.mxu0 0
      %568 = vmatpush2.bf16.msra.mxu0 0
      %569 = vmatprep.subr.bf16.mxu0 0
      %570 = vmatpush2.bf16.msra.mxu0 0
      %571 = vmatprep.subr.bf16.mxu0 0
      %572 = vmatpush2.bf16.msra.mxu0 0
      %573 = vmatprep.subr.bf16.mxu0 0
      %574 = vmatpush2.bf16.msra.mxu0 0
      %575 = vmatprep.subr.bf16.mxu0 0
      %576 = vmatpush2.bf16.msra.mxu0 0
      %577 = vmatprep.mubr.bf16.mxu0 0
      %578 = vmatmul.mubr.bf16.gmra.mxu0 %v540
      %v579 = vpop.f32.mrf.mxu0
      %v580 = vadd.f32 0.0, %v579
      %v581 = vpop.f32.mrf.mxu0
      %v582 = vpop.f32.mrf.mxu0
      %v583 = vpop.f32.mrf.mxu0
      %584 = vdwg.mxu0
      %v585 = vrot.slane %v170, 2
      %v587 = vsel %vm443, %v441, 0
      %v590 = vsel %vm447, %v585, 0
      %592 = vmatprep.subr.bf16.mxu0 0
      %593 = vmatpush1.bf16.msra.mxu0 0
      %594 = vmatprep.subr.bf16.mxu0 0
      %595 = vmatpush1.bf16.msra.mxu0 0
      %596 = vmatprep.subr.bf16.mxu0 0
      %597 = vmatpush1.bf16.msra.mxu0 0
      %598 = vmatprep.subr.bf16.mxu0 0
      %599 = vmatpush1.bf16.msra.mxu0 0
      %600 = vmatprep.subr.bf16.mxu0 0
      %601 = vmatpush1.bf16.msra.mxu0 0
      %602 = vmatprep.subr.bf16.mxu0 0
      %603 = vmatpush1.bf16.msra.mxu0 0
      %604 = vmatprep.subr.bf16.mxu0 0
      %605 = vmatpush1.bf16.msra.mxu0 0
      %606 = vmatprep.subr.bf16.mxu0 0
      %607 = vmatpush1.bf16.msra.mxu0 %v590
      %608 = vmatprep.subr.bf16.mxu0 0
      %609 = vmatpush2.bf16.msra.mxu0 0
      %610 = vmatprep.subr.bf16.mxu0 0
      %611 = vmatpush2.bf16.msra.mxu0 0
      %612 = vmatprep.subr.bf16.mxu0 0
      %613 = vmatpush2.bf16.msra.mxu0 0
      %614 = vmatprep.subr.bf16.mxu0 0
      %615 = vmatpush2.bf16.msra.mxu0 0
      %616 = vmatprep.subr.bf16.mxu0 0
      %617 = vmatpush2.bf16.msra.mxu0 0
      %618 = vmatprep.subr.bf16.mxu0 0
      %619 = vmatpush2.bf16.msra.mxu0 0
      %620 = vmatprep.subr.bf16.mxu0 0
      %621 = vmatpush2.bf16.msra.mxu0 0
      %622 = vmatprep.subr.bf16.mxu0 0
      %623 = vmatpush2.bf16.msra.mxu0 0
      %624 = vmatprep.mubr.bf16.mxu0 0
      %625 = vmatmul.mubr.bf16.gmra.mxu0 %v587
      %v626 = vpop.f32.mrf.mxu0
      %v627 = vadd.f32 0.0, %v626
      %v628 = vpop.f32.mrf.mxu0
      %v629 = vpop.f32.mrf.mxu0
      %v630 = vpop.f32.mrf.mxu0
      %631 = vdwg.mxu0
      %s632 = scalar_lea.vmem %s1, 4
      %v633 = vld [vmem:[%s632] sm:$0xf]
      %634 = vrot.lane.b32.xlu0 %v178, 112
      %v635 = vpop.permute.xlu0 %634
      %636 = vrot.lane.b32.xlu0 %v178, 48
      %v637 = vpop.permute.xlu0 %636
      %v639 = vsel %vm181, %v635, 0
      %v642 = vsel %vm181, %v637, 0
      %644 = vmatprep.subr.bf16.mxu0 0
      %645 = vmatpush1.bf16.xpose.msra.mxu0 0
      %646 = vmatprep.subr.bf16.mxu0 0
      %647 = vmatpush1.bf16.xpose.msra.mxu0 0
      %648 = vmatprep.subr.bf16.mxu0 0
      %649 = vmatpush1.bf16.xpose.msra.mxu0 0
      %650 = vmatprep.subr.bf16.mxu0 0
      %651 = vmatpush1.bf16.xpose.msra.mxu0 0
      %652 = vmatprep.subr.bf16.mxu0 0
      %653 = vmatpush1.bf16.xpose.msra.mxu0 0
      %654 = vmatprep.subr.bf16.mxu0 0
      %655 = vmatpush1.bf16.xpose.msra.mxu0 0
      %656 = vmatprep.subr.bf16.mxu0 0
      %657 = vmatpush1.bf16.xpose.msra.mxu0 0
      %658 = vmatprep.subr.bf16.mxu0 0
      %659 = vmatpush1.bf16.xpose.msra.mxu0 %v642
      %660 = vmatprep.subr.bf16.mxu0 0
      %661 = vmatpush2.bf16.xpose.msra.mxu0 0
      %662 = vmatprep.subr.bf16.mxu0 0
      %663 = vmatpush2.bf16.xpose.msra.mxu0 0
      %664 = vmatprep.subr.bf16.mxu0 0
      %665 = vmatpush2.bf16.xpose.msra.mxu0 0
      %666 = vmatprep.subr.bf16.mxu0 0
      %667 = vmatpush2.bf16.xpose.msra.mxu0 0
      %668 = vmatprep.subr.bf16.mxu0 0
      %669 = vmatpush2.bf16.xpose.msra.mxu0 0
      %670 = vmatprep.subr.bf16.mxu0 0
      %671 = vmatpush2.bf16.xpose.msra.mxu0 0
      %672 = vmatprep.subr.bf16.mxu0 0
      %673 = vmatpush2.bf16.xpose.msra.mxu0 0
      %674 = vmatprep.subr.bf16.mxu0 0
      %675 = vmatpush2.bf16.xpose.msra.mxu0 0
      %676 = vmatprep.mubr.bf16.mxu0 0
      %677 = vmatmul.mubr.bf16.gmra.mxu0 %v639
      %v678 = vpop.f32.mrf.mxu0
      %v679 = vadd.f32 %v633, %v678
      %v680 = vpop.f32.mrf.mxu0
      %v681 = vpop.f32.mrf.mxu0
      %v682 = vpop.f32.mrf.mxu0
      %683 = vdwg.mxu0
      %684 = vrot.lane.b32.xlu0 %v234, 112
      %v685 = vpop.permute.xlu0 %684
      %686 = vrot.lane.b32.xlu0 %v234, 48
      %v687 = vpop.permute.xlu0 %686
      %v689 = vsel %vm181, %v685, 0
      %v692 = vsel %vm181, %v687, 0
      %694 = vmatprep.subr.bf16.mxu0 0
      %695 = vmatpush1.bf16.xpose.msra.mxu0 0
      %696 = vmatprep.subr.bf16.mxu0 0
      %697 = vmatpush1.bf16.xpose.msra.mxu0 0
      %698 = vmatprep.subr.bf16.mxu0 0
      %699 = vmatpush1.bf16.xpose.msra.mxu0 0
      %700 = vmatprep.subr.bf16.mxu0 0
      %701 = vmatpush1.bf16.xpose.msra.mxu0 0
      %702 = vmatprep.subr.bf16.mxu0 0
      %703 = vmatpush1.bf16.xpose.msra.mxu0 0
      %704 = vmatprep.subr.bf16.mxu0 0
      %705 = vmatpush1.bf16.xpose.msra.mxu0 0
      %706 = vmatprep.subr.bf16.mxu0 0
      %707 = vmatpush1.bf16.xpose.msra.mxu0 0
      %708 = vmatprep.subr.bf16.mxu0 0
      %709 = vmatpush1.bf16.xpose.msra.mxu0 %v692
      %710 = vmatprep.subr.bf16.mxu0 0
      %711 = vmatpush2.bf16.xpose.msra.mxu0 0
      %712 = vmatprep.subr.bf16.mxu0 0
      %713 = vmatpush2.bf16.xpose.msra.mxu0 0
      %714 = vmatprep.subr.bf16.mxu0 0
      %715 = vmatpush2.bf16.xpose.msra.mxu0 0
      %716 = vmatprep.subr.bf16.mxu0 0
      %717 = vmatpush2.bf16.xpose.msra.mxu0 0
      %718 = vmatprep.subr.bf16.mxu0 0
      %719 = vmatpush2.bf16.xpose.msra.mxu0 0
      %720 = vmatprep.subr.bf16.mxu0 0
      %721 = vmatpush2.bf16.xpose.msra.mxu0 0
      %722 = vmatprep.subr.bf16.mxu0 0
      %723 = vmatpush2.bf16.xpose.msra.mxu0 0
      %724 = vmatprep.subr.bf16.mxu0 0
      %725 = vmatpush2.bf16.xpose.msra.mxu0 0
      %726 = vmatprep.mubr.bf16.mxu0 0
      %727 = vmatmul.mubr.bf16.gmra.mxu0 %v689
      %v728 = vpop.f32.mrf.mxu0
      %v729 = vadd.f32 %v633, %v728
      %v730 = vpop.f32.mrf.mxu0
      %v731 = vpop.f32.mrf.mxu0
      %v732 = vpop.f32.mrf.mxu0
      %733 = vdwg.mxu0
      %734 = vrot.lane.b32.xlu0 %v289, 112
      %v735 = vpop.permute.xlu0 %734
      %736 = vrot.lane.b32.xlu0 %v289, 48
      %v737 = vpop.permute.xlu0 %736
      %v739 = vsel %vm181, %v735, 0
      %v742 = vsel %vm181, %v737, 0
      %744 = vmatprep.subr.bf16.mxu0 0
      %745 = vmatpush1.bf16.xpose.msra.mxu0 0
      %746 = vmatprep.subr.bf16.mxu0 0
      %747 = vmatpush1.bf16.xpose.msra.mxu0 0
      %748 = vmatprep.subr.bf16.mxu0 0
      %749 = vmatpush1.bf16.xpose.msra.mxu0 0
      %750 = vmatprep.subr.bf16.mxu0 0
      %751 = vmatpush1.bf16.xpose.msra.mxu0 0
      %752 = vmatprep.subr.bf16.mxu0 0
      %753 = vmatpush1.bf16.xpose.msra.mxu0 0
      %754 = vmatprep.subr.bf16.mxu0 0
      %755 = vmatpush1.bf16.xpose.msra.mxu0 0
      %756 = vmatprep.subr.bf16.mxu0 0
      %757 = vmatpush1.bf16.xpose.msra.mxu0 0
      %758 = vmatprep.subr.bf16.mxu0 0
      %759 = vmatpush1.bf16.xpose.msra.mxu0 %v742
      %760 = vmatprep.subr.bf16.mxu0 0
      %761 = vmatpush2.bf16.xpose.msra.mxu0 0
      %762 = vmatprep.subr.bf16.mxu0 0
      %763 = vmatpush2.bf16.xpose.msra.mxu0 0
      %764 = vmatprep.subr.bf16.mxu0 0
      %765 = vmatpush2.bf16.xpose.msra.mxu0 0
      %766 = vmatprep.subr.bf16.mxu0 0
      %767 = vmatpush2.bf16.xpose.msra.mxu0 0
      %768 = vmatprep.subr.bf16.mxu0 0
      %769 = vmatpush2.bf16.xpose.msra.mxu0 0
      %770 = vmatprep.subr.bf16.mxu0 0
      %771 = vmatpush2.bf16.xpose.msra.mxu0 0
      %772 = vmatprep.subr.bf16.mxu0 0
      %773 = vmatpush2.bf16.xpose.msra.mxu0 0
      %774 = vmatprep.subr.bf16.mxu0 0
      %775 = vmatpush2.bf16.xpose.msra.mxu0 0
      %776 = vmatprep.mubr.bf16.mxu0 0
      %777 = vmatmul.mubr.bf16.gmra.mxu0 %v739
      %v778 = vpop.f32.mrf.mxu0
      %v779 = vadd.f32 %v633, %v778
      %v780 = vpop.f32.mrf.mxu0
      %v781 = vpop.f32.mrf.mxu0
      %v782 = vpop.f32.mrf.mxu0
      %783 = vdwg.mxu0
      %784 = vrot.lane.b32.xlu0 %v344, 112
      %v785 = vpop.permute.xlu0 %784
      %786 = vrot.lane.b32.xlu0 %v344, 48
      %v787 = vpop.permute.xlu0 %786
      %v789 = vsel %vm181, %v785, 0
      %v792 = vsel %vm181, %v787, 0
      %794 = vmatprep.subr.bf16.mxu0 0
      %795 = vmatpush1.bf16.xpose.msra.mxu0 0
      %796 = vmatprep.subr.bf16.mxu0 0
      %797 = vmatpush1.bf16.xpose.msra.mxu0 0
      %798 = vmatprep.subr.bf16.mxu0 0
      %799 = vmatpush1.bf16.xpose.msra.mxu0 0
      %800 = vmatprep.subr.bf16.mxu0 0
      %801 = vmatpush1.bf16.xpose.msra.mxu0 0
      %802 = vmatprep.subr.bf16.mxu0 0
      %803 = vmatpush1.bf16.xpose.msra.mxu0 0
      %804 = vmatprep.subr.bf16.mxu0 0
      %805 = vmatpush1.bf16.xpose.msra.mxu0 0
      %806 = vmatprep.subr.bf16.mxu0 0
      %807 = vmatpush1.bf16.xpose.msra.mxu0 0
      %808 = vmatprep.subr.bf16.mxu0 0
      %809 = vmatpush1.bf16.xpose.msra.mxu0 %v792
      %810 = vmatprep.subr.bf16.mxu0 0
      %811 = vmatpush2.bf16.xpose.msra.mxu0 0
      %812 = vmatprep.subr.bf16.mxu0 0
      %813 = vmatpush2.bf16.xpose.msra.mxu0 0
      %814 = vmatprep.subr.bf16.mxu0 0
      %815 = vmatpush2.bf16.xpose.msra.mxu0 0
      %816 = vmatprep.subr.bf16.mxu0 0
      %817 = vmatpush2.bf16.xpose.msra.mxu0 0
      %818 = vmatprep.subr.bf16.mxu0 0
      %819 = vmatpush2.bf16.xpose.msra.mxu0 0
      %820 = vmatprep.subr.bf16.mxu0 0
      %821 = vmatpush2.bf16.xpose.msra.mxu0 0
      %822 = vmatprep.subr.bf16.mxu0 0
      %823 = vmatpush2.bf16.xpose.msra.mxu0 0
      %824 = vmatprep.subr.bf16.mxu0 0
      %825 = vmatpush2.bf16.xpose.msra.mxu0 0
      %826 = vmatprep.mubr.bf16.mxu0 0
      %827 = vmatmul.mubr.bf16.gmra.mxu0 %v789
      %v828 = vpop.f32.mrf.mxu0
      %v829 = vadd.f32 %v633, %v828
      %v830 = vpop.f32.mrf.mxu0
      %v831 = vpop.f32.mrf.mxu0
      %v832 = vpop.f32.mrf.mxu0
      %833 = vdwg.mxu0
      %v834 = vsel %vm393, %v679, -inf
      %835 = vmax.xlane.f32.xlu0 %v834
      %v836 = vpop.xlane.xlu0 %835
      %v837 = vsel %vm393, %v729, -inf
      %838 = vmax.xlane.f32.xlu0 %v837
      %v839 = vpop.xlane.xlu0 %838
      %v840 = vsel %vm393, %v779, -inf
      %841 = vmax.xlane.f32.xlu0 %v840
      %v842 = vpop.xlane.xlu0 %841
      %v843 = vsel %vm393, %v829, -inf
      %844 = vmax.xlane.f32.xlu0 %v843
      %v845 = vpop.xlane.xlu0 %844
      %v846 = vsub.f32 %v679, %v836
      %v847 = vsub.f32 %v729, %v839
      %v848 = vsub.f32 %v779, %v842
      %v849 = vsub.f32 %v829, %v845
      %v850 = vmul.f32 %v846, 1.442695
      %v851 = vpow.pop %v850
      %v852 = vmul.f32 %v847, 1.442695
      %v853 = vpow.pop %v852
      %v854 = vmul.f32 %v848, 1.442695
      %v855 = vpow.pop %v854
      %v856 = vmul.f32 %v849, 1.442695
      %v857 = vpow.pop %v856
      %v858 = vsel %vm393, %v851, 0.0
      %859 = vadd.xlane.f32.xlu0 %v858
      %v860 = vpop.xlane.xlu0 %859
      %v861 = vsel %vm393, %v853, 0.0
      %862 = vadd.xlane.f32.xlu0 %v861
      %v863 = vpop.xlane.xlu0 %862
      %v864 = vsel %vm393, %v855, 0.0
      %865 = vadd.xlane.f32.xlu0 %v864
      %v866 = vpop.xlane.xlu0 %865
      %v867 = vsel %vm393, %v857, 0.0
      %868 = vadd.xlane.f32.xlu0 %v867
      %v869 = vpop.xlane.xlu0 %868
      %v870 = vrcp.pop %v860
      %v871 = vrcp.pop %v863
      %v872 = vrcp.pop %v866
      %v873 = vrcp.pop %v869
      %v874 = vmul.f32 %v851, %v870
      %v875 = vmul.f32 %v853, %v871
      %v876 = vmul.f32 %v855, %v872
      %v877 = vmul.f32 %v857, %v873
      %v878 = vpack.c.bf16 %v874, %v874
      %v879 = vpack.c.bf16 %v875, %v875
      %v880 = vpack.c.bf16 %v876, %v876
      %v881 = vpack.c.bf16 %v877, %v877
      %882 = vrot.lane.b32.xlu0 %v161, 112
      %v883 = vpop.permute.xlu0 %882
      %v884 = vrot.slane %v883, 2
      %v886 = vsel %vm443, %v878, 0
      %v889 = vsel %vm447, %v884, 0
      %891 = vmatprep.subr.bf16.mxu0 0
      %892 = vmatpush1.bf16.msra.mxu0 0
      %893 = vmatprep.subr.bf16.mxu0 0
      %894 = vmatpush1.bf16.msra.mxu0 0
      %895 = vmatprep.subr.bf16.mxu0 0
      %896 = vmatpush1.bf16.msra.mxu0 0
      %897 = vmatprep.subr.bf16.mxu0 0
      %898 = vmatpush1.bf16.msra.mxu0 0
      %899 = vmatprep.subr.bf16.mxu0 0
      %900 = vmatpush1.bf16.msra.mxu0 0
      %901 = vmatprep.subr.bf16.mxu0 0
      %902 = vmatpush1.bf16.msra.mxu0 0
      %903 = vmatprep.subr.bf16.mxu0 0
      %904 = vmatpush1.bf16.msra.mxu0 0
      %905 = vmatprep.subr.bf16.mxu0 0
      %906 = vmatpush1.bf16.msra.mxu0 %v889
      %907 = vmatprep.subr.bf16.mxu0 0
      %908 = vmatpush2.bf16.msra.mxu0 0
      %909 = vmatprep.subr.bf16.mxu0 0
      %910 = vmatpush2.bf16.msra.mxu0 0
      %911 = vmatprep.subr.bf16.mxu0 0
      %912 = vmatpush2.bf16.msra.mxu0 0
      %913 = vmatprep.subr.bf16.mxu0 0
      %914 = vmatpush2.bf16.msra.mxu0 0
      %915 = vmatprep.subr.bf16.mxu0 0
      %916 = vmatpush2.bf16.msra.mxu0 0
      %917 = vmatprep.subr.bf16.mxu0 0
      %918 = vmatpush2.bf16.msra.mxu0 0
      %919 = vmatprep.subr.bf16.mxu0 0
      %920 = vmatpush2.bf16.msra.mxu0 0
      %921 = vmatprep.subr.bf16.mxu0 0
      %922 = vmatpush2.bf16.msra.mxu0 0
      %923 = vmatprep.mubr.bf16.mxu0 0
      %924 = vmatmul.mubr.bf16.gmra.mxu0 %v886
      %v925 = vpop.f32.mrf.mxu0
      %v926 = vadd.f32 0.0, %v925
      %v927 = vpop.f32.mrf.mxu0
      %v928 = vpop.f32.mrf.mxu0
      %v929 = vpop.f32.mrf.mxu0
      %930 = vdwg.mxu0
      %931 = vrot.lane.b32.xlu0 %v162, 112
      %v932 = vpop.permute.xlu0 %931
      %v933 = vrot.slane %v932, 2
      %v935 = vsel %vm443, %v879, 0
      %v938 = vsel %vm447, %v933, 0
      %940 = vmatprep.subr.bf16.mxu0 0
      %941 = vmatpush1.bf16.msra.mxu0 0
      %942 = vmatprep.subr.bf16.mxu0 0
      %943 = vmatpush1.bf16.msra.mxu0 0
      %944 = vmatprep.subr.bf16.mxu0 0
      %945 = vmatpush1.bf16.msra.mxu0 0
      %946 = vmatprep.subr.bf16.mxu0 0
      %947 = vmatpush1.bf16.msra.mxu0 0
      %948 = vmatprep.subr.bf16.mxu0 0
      %949 = vmatpush1.bf16.msra.mxu0 0
      %950 = vmatprep.subr.bf16.mxu0 0
      %951 = vmatpush1.bf16.msra.mxu0 0
      %952 = vmatprep.subr.bf16.mxu0 0
      %953 = vmatpush1.bf16.msra.mxu0 0
      %954 = vmatprep.subr.bf16.mxu0 0
      %955 = vmatpush1.bf16.msra.mxu0 %v938
      %956 = vmatprep.subr.bf16.mxu0 0
      %957 = vmatpush2.bf16.msra.mxu0 0
      %958 = vmatprep.subr.bf16.mxu0 0
      %959 = vmatpush2.bf16.msra.mxu0 0
      %960 = vmatprep.subr.bf16.mxu0 0
      %961 = vmatpush2.bf16.msra.mxu0 0
      %962 = vmatprep.subr.bf16.mxu0 0
      %963 = vmatpush2.bf16.msra.mxu0 0
      %964 = vmatprep.subr.bf16.mxu0 0
      %965 = vmatpush2.bf16.msra.mxu0 0
      %966 = vmatprep.subr.bf16.mxu0 0
      %967 = vmatpush2.bf16.msra.mxu0 0
      %968 = vmatprep.subr.bf16.mxu0 0
      %969 = vmatpush2.bf16.msra.mxu0 0
      %970 = vmatprep.subr.bf16.mxu0 0
      %971 = vmatpush2.bf16.msra.mxu0 0
      %972 = vmatprep.mubr.bf16.mxu0 0
      %973 = vmatmul.mubr.bf16.gmra.mxu0 %v935
      %v974 = vpop.f32.mrf.mxu0
      %v975 = vadd.f32 0.0, %v974
      %v976 = vpop.f32.mrf.mxu0
      %v977 = vpop.f32.mrf.mxu0
      %v978 = vpop.f32.mrf.mxu0
      %979 = vdwg.mxu0
      %980 = vrot.lane.b32.xlu0 %v169, 112
      %v981 = vpop.permute.xlu0 %980
      %v982 = vrot.slane %v981, 2
      %v984 = vsel %vm443, %v880, 0
      %v987 = vsel %vm447, %v982, 0
      %989 = vmatprep.subr.bf16.mxu0 0
      %990 = vmatpush1.bf16.msra.mxu0 0
      %991 = vmatprep.subr.bf16.mxu0 0
      %992 = vmatpush1.bf16.msra.mxu0 0
      %993 = vmatprep.subr.bf16.mxu0 0
      %994 = vmatpush1.bf16.msra.mxu0 0
      %995 = vmatprep.subr.bf16.mxu0 0
      %996 = vmatpush1.bf16.msra.mxu0 0
      %997 = vmatprep.subr.bf16.mxu0 0
      %998 = vmatpush1.bf16.msra.mxu0 0
      %999 = vmatprep.subr.bf16.mxu0 0
      %1000 = vmatpush1.bf16.msra.mxu0 0
      %1001 = vmatprep.subr.bf16.mxu0 0
      %1002 = vmatpush1.bf16.msra.mxu0 0
      %1003 = vmatprep.subr.bf16.mxu0 0
      %1004 = vmatpush1.bf16.msra.mxu0 %v987
      %1005 = vmatprep.subr.bf16.mxu0 0
      %1006 = vmatpush2.bf16.msra.mxu0 0
      %1007 = vmatprep.subr.bf16.mxu0 0
      %1008 = vmatpush2.bf16.msra.mxu0 0
      %1009 = vmatprep.subr.bf16.mxu0 0
      %1010 = vmatpush2.bf16.msra.mxu0 0
      %1011 = vmatprep.subr.bf16.mxu0 0
      %1012 = vmatpush2.bf16.msra.mxu0 0
      %1013 = vmatprep.subr.bf16.mxu0 0
      %1014 = vmatpush2.bf16.msra.mxu0 0
      %1015 = vmatprep.subr.bf16.mxu0 0
      %1016 = vmatpush2.bf16.msra.mxu0 0
      %1017 = vmatprep.subr.bf16.mxu0 0
      %1018 = vmatpush2.bf16.msra.mxu0 0
      %1019 = vmatprep.subr.bf16.mxu0 0
      %1020 = vmatpush2.bf16.msra.mxu0 0
      %1021 = vmatprep.mubr.bf16.mxu0 0
      %1022 = vmatmul.mubr.bf16.gmra.mxu0 %v984
      %v1023 = vpop.f32.mrf.mxu0
      %v1024 = vadd.f32 0.0, %v1023
      %v1025 = vpop.f32.mrf.mxu0
      %v1026 = vpop.f32.mrf.mxu0
      %v1027 = vpop.f32.mrf.mxu0
      %1028 = vdwg.mxu0
      %1029 = vrot.lane.b32.xlu0 %v170, 112
      %v1030 = vpop.permute.xlu0 %1029
      %v1031 = vrot.slane %v1030, 2
      %v1033 = vsel %vm443, %v881, 0
      %v1036 = vsel %vm447, %v1031, 0
      %1038 = vmatprep.subr.bf16.mxu0 0
      %1039 = vmatpush1.bf16.msra.mxu0 0
      %1040 = vmatprep.subr.bf16.mxu0 0
      %1041 = vmatpush1.bf16.msra.mxu0 0
      %1042 = vmatprep.subr.bf16.mxu0 0
      %1043 = vmatpush1.bf16.msra.mxu0 0
      %1044 = vmatprep.subr.bf16.mxu0 0
      %1045 = vmatpush1.bf16.msra.mxu0 0
      %1046 = vmatprep.subr.bf16.mxu0 0
      %1047 = vmatpush1.bf16.msra.mxu0 0
      %1048 = vmatprep.subr.bf16.mxu0 0
      %1049 = vmatpush1.bf16.msra.mxu0 0
      %1050 = vmatprep.subr.bf16.mxu0 0
      %1051 = vmatpush1.bf16.msra.mxu0 0
      %1052 = vmatprep.subr.bf16.mxu0 0
      %1053 = vmatpush1.bf16.msra.mxu0 %v1036
      %1054 = vmatprep.subr.bf16.mxu0 0
      %1055 = vmatpush2.bf16.msra.mxu0 0
      %1056 = vmatprep.subr.bf16.mxu0 0
      %1057 = vmatpush2.bf16.msra.mxu0 0
      %1058 = vmatprep.subr.bf16.mxu0 0
      %1059 = vmatpush2.bf16.msra.mxu0 0
      %1060 = vmatprep.subr.bf16.mxu0 0
      %1061 = vmatpush2.bf16.msra.mxu0 0
      %1062 = vmatprep.subr.bf16.mxu0 0
      %1063 = vmatpush2.bf16.msra.mxu0 0
      %1064 = vmatprep.subr.bf16.mxu0 0
      %1065 = vmatpush2.bf16.msra.mxu0 0
      %1066 = vmatprep.subr.bf16.mxu0 0
      %1067 = vmatpush2.bf16.msra.mxu0 0
      %1068 = vmatprep.subr.bf16.mxu0 0
      %1069 = vmatpush2.bf16.msra.mxu0 0
      %1070 = vmatprep.mubr.bf16.mxu0 0
      %1071 = vmatmul.mubr.bf16.gmra.mxu0 %v1033
      %v1072 = vpop.f32.mrf.mxu0
      %v1073 = vadd.f32 0.0, %v1072
      %v1074 = vpop.f32.mrf.mxu0
      %v1075 = vpop.f32.mrf.mxu0
      %v1076 = vpop.f32.mrf.mxu0
      %1077 = vdwg.mxu0
      %s1078 = scalar_lea.vmem %s1, 8
      %v1079 = vld [vmem:[%s1078] sm:$0xf]
      %1080 = vrot.lane.b32.xlu0 %v178, 96
      %v1081 = vpop.permute.xlu0 %1080
      %1082 = vrot.lane.b32.xlu0 %v178, 32
      %v1083 = vpop.permute.xlu0 %1082
      %v1085 = vsel %vm181, %v1081, 0
      %v1088 = vsel %vm181, %v1083, 0
      %1090 = vmatprep.subr.bf16.mxu0 0
      %1091 = vmatpush1.bf16.xpose.msra.mxu0 0
      %1092 = vmatprep.subr.bf16.mxu0 0
      %1093 = vmatpush1.bf16.xpose.msra.mxu0 0
      %1094 = vmatprep.subr.bf16.mxu0 0
      %1095 = vmatpush1.bf16.xpose.msra.mxu0 0
      %1096 = vmatprep.subr.bf16.mxu0 0
      %1097 = vmatpush1.bf16.xpose.msra.mxu0 0
      %1098 = vmatprep.subr.bf16.mxu0 0
      %1099 = vmatpush1.bf16.xpose.msra.mxu0 0
      %1100 = vmatprep.subr.bf16.mxu0 0
      %1101 = vmatpush1.bf16.xpose.msra.mxu0 0
      %1102 = vmatprep.subr.bf16.mxu0 0
      %1103 = vmatpush1.bf16.xpose.msra.mxu0 0
      %1104 = vmatprep.subr.bf16.mxu0 0
      %1105 = vmatpush1.bf16.xpose.msra.mxu0 %v1088
      %1106 = vmatprep.subr.bf16.mxu0 0
      %1107 = vmatpush2.bf16.xpose.msra.mxu0 0
      %1108 = vmatprep.subr.bf16.mxu0 0
      %1109 = vmatpush2.bf16.xpose.msra.mxu0 0
      %1110 = vmatprep.subr.bf16.mxu0 0
      %1111 = vmatpush2.bf16.xpose.msra.mxu0 0
      %1112 = vmatprep.subr.bf16.mxu0 0
      %1113 = vmatpush2.bf16.xpose.msra.mxu0 0
      %1114 = vmatprep.subr.bf16.mxu0 0
      %1115 = vmatpush2.bf16.xpose.msra.mxu0 0
      %1116 = vmatprep.subr.bf16.mxu0 0
      %1117 = vmatpush2.bf16.xpose.msra.mxu0 0
      %1118 = vmatprep.subr.bf16.mxu0 0
      %1119 = vmatpush2.bf16.xpose.msra.mxu0 0
      %1120 = vmatprep.subr.bf16.mxu0 0
      %1121 = vmatpush2.bf16.xpose.msra.mxu0 0
      %1122 = vmatprep.mubr.bf16.mxu0 0
      %1123 = vmatmul.mubr.bf16.gmra.mxu0 %v1085
      %v1124 = vpop.f32.mrf.mxu0
      %v1125 = vadd.f32 %v1079, %v1124
      %v1126 = vpop.f32.mrf.mxu0
      %v1127 = vpop.f32.mrf.mxu0
      %v1128 = vpop.f32.mrf.mxu0
      %1129 = vdwg.mxu0
      %1130 = vrot.lane.b32.xlu0 %v234, 96
      %v1131 = vpop.permute.xlu0 %1130
      %1132 = vrot.lane.b32.xlu0 %v234, 32
      %v1133 = vpop.permute.xlu0 %1132
      %v1135 = vsel %vm181, %v1131, 0
      %v1138 = vsel %vm181, %v1133, 0
      %1140 = vmatprep.subr.bf16.mxu0 0
      %1141 = vmatpush1.bf16.xpose.msra.mxu0 0
      %1142 = vmatprep.subr.bf16.mxu0 0
      %1143 = vmatpush1.bf16.xpose.msra.mxu0 0
      %1144 = vmatprep.subr.bf16.mxu0 0
      %1145 = vmatpush1.bf16.xpose.msra.mxu0 0
      %1146 = vmatprep.subr.bf16.mxu0 0
      %1147 = vmatpush1.bf16.xpose.msra.mxu0 0
      %1148 = vmatprep.subr.bf16.mxu0 0
      %1149 = vmatpush1.bf16.xpose.msra.mxu0 0
      %1150 = vmatprep.subr.bf16.mxu0 0
      %1151 = vmatpush1.bf16.xpose.msra.mxu0 0
      %1152 = vmatprep.subr.bf16.mxu0 0
      %1153 = vmatpush1.bf16.xpose.msra.mxu0 0
      %1154 = vmatprep.subr.bf16.mxu0 0
      %1155 = vmatpush1.bf16.xpose.msra.mxu0 %v1138
      %1156 = vmatprep.subr.bf16.mxu0 0
      %1157 = vmatpush2.bf16.xpose.msra.mxu0 0
      %1158 = vmatprep.subr.bf16.mxu0 0
      %1159 = vmatpush2.bf16.xpose.msra.mxu0 0
      %1160 = vmatprep.subr.bf16.mxu0 0
      %1161 = vmatpush2.bf16.xpose.msra.mxu0 0
      %1162 = vmatprep.subr.bf16.mxu0 0
      %1163 = vmatpush2.bf16.xpose.msra.mxu0 0
      %1164 = vmatprep.subr.bf16.mxu0 0
      %1165 = vmatpush2.bf16.xpose.msra.mxu0 0
      %1166 = vmatprep.subr.bf16.mxu0 0
      %1167 = vmatpush2.bf16.xpose.msra.mxu0 0
      %1168 = vmatprep.subr.bf16.mxu0 0
      %1169 = vmatpush2.bf16.xpose.msra.mxu0 0
      %1170 = vmatprep.subr.bf16.mxu0 0
      %1171 = vmatpush2.bf16.xpose.msra.mxu0 0
      %1172 = vmatprep.mubr.bf16.mxu0 0
      %1173 = vmatmul.mubr.bf16.gmra.mxu0 %v1135
      %v1174 = vpop.f32.mrf.mxu0
      %v1175 = vadd.f32 %v1079, %v1174
      %v1176 = vpop.f32.mrf.mxu0
      %v1177 = vpop.f32.mrf.mxu0
      %v1178 = vpop.f32.mrf.mxu0
      %1179 = vdwg.mxu0
      %1180 = vrot.lane.b32.xlu0 %v289, 96
      %v1181 = vpop.permute.xlu0 %1180
      %1182 = vrot.lane.b32.xlu0 %v289, 32
      %v1183 = vpop.permute.xlu0 %1182
      %v1185 = vsel %vm181, %v1181, 0
      %v1188 = vsel %vm181, %v1183, 0
      %1190 = vmatprep.subr.bf16.mxu0 0
      %1191 = vmatpush1.bf16.xpose.msra.mxu0 0
      %1192 = vmatprep.subr.bf16.mxu0 0
      %1193 = vmatpush1.bf16.xpose.msra.mxu0 0
      %1194 = vmatprep.subr.bf16.mxu0 0
      %1195 = vmatpush1.bf16.xpose.msra.mxu0 0
      %1196 = vmatprep.subr.bf16.mxu0 0
      %1197 = vmatpush1.bf16.xpose.msra.mxu0 0
      %1198 = vmatprep.subr.bf16.mxu0 0
      %1199 = vmatpush1.bf16.xpose.msra.mxu0 0
      %1200 = vmatprep.subr.bf16.mxu0 0
      %1201 = vmatpush1.bf16.xpose.msra.mxu0 0
      %1202 = vmatprep.subr.bf16.mxu0 0
      %1203 = vmatpush1.bf16.xpose.msra.mxu0 0
      %1204 = vmatprep.subr.bf16.mxu0 0
      %1205 = vmatpush1.bf16.xpose.msra.mxu0 %v1188
      %1206 = vmatprep.subr.bf16.mxu0 0
      %1207 = vmatpush2.bf16.xpose.msra.mxu0 0
      %1208 = vmatprep.subr.bf16.mxu0 0
      %1209 = vmatpush2.bf16.xpose.msra.mxu0 0
      %1210 = vmatprep.subr.bf16.mxu0 0
      %1211 = vmatpush2.bf16.xpose.msra.mxu0 0
      %1212 = vmatprep.subr.bf16.mxu0 0
      %1213 = vmatpush2.bf16.xpose.msra.mxu0 0
      %1214 = vmatprep.subr.bf16.mxu0 0
      %1215 = vmatpush2.bf16.xpose.msra.mxu0 0
      %1216 = vmatprep.subr.bf16.mxu0 0
      %1217 = vmatpush2.bf16.xpose.msra.mxu0 0
      %1218 = vmatprep.subr.bf16.mxu0 0
      %1219 = vmatpush2.bf16.xpose.msra.mxu0 0
      %1220 = vmatprep.subr.bf16.mxu0 0
      %1221 = vmatpush2.bf16.xpose.msra.mxu0 0
      %1222 = vmatprep.mubr.bf16.mxu0 0
      %1223 = vmatmul.mubr.bf16.gmra.mxu0 %v1185
      %v1224 = vpop.f32.mrf.mxu0
      %v1225 = vadd.f32 %v1079, %v1224
      %v1226 = vpop.f32.mrf.mxu0
      %v1227 = vpop.f32.mrf.mxu0
      %v1228 = vpop.f32.mrf.mxu0
      %1229 = vdwg.mxu0
      %1230 = vrot.lane.b32.xlu0 %v344, 96
      %v1231 = vpop.permute.xlu0 %1230
      %1232 = vrot.lane.b32.xlu0 %v344, 32
      %v1233 = vpop.permute.xlu0 %1232
      %v1235 = vsel %vm181, %v1231, 0
      %v1238 = vsel %vm181, %v1233, 0
      %1240 = vmatprep.subr.bf16.mxu0 0
      %1241 = vmatpush1.bf16.xpose.msra.mxu0 0
      %1242 = vmatprep.subr.bf16.mxu0 0
      %1243 = vmatpush1.bf16.xpose.msra.mxu0 0
      %1244 = vmatprep.subr.bf16.mxu0 0
      %1245 = vmatpush1.bf16.xpose.msra.mxu0 0
      %1246 = vmatprep.subr.bf16.mxu0 0
      %1247 = vmatpush1.bf16.xpose.msra.mxu0 0
      %1248 = vmatprep.subr.bf16.mxu0 0
      %1249 = vmatpush1.bf16.xpose.msra.mxu0 0
      %1250 = vmatprep.subr.bf16.mxu0 0
      %1251 = vmatpush1.bf16.xpose.msra.mxu0 0
      %1252 = vmatprep.subr.bf16.mxu0 0
      %1253 = vmatpush1.bf16.xpose.msra.mxu0 0
      %1254 = vmatprep.subr.bf16.mxu0 0
      %1255 = vmatpush1.bf16.xpose.msra.mxu0 %v1238
      %1256 = vmatprep.subr.bf16.mxu0 0
      %1257 = vmatpush2.bf16.xpose.msra.mxu0 0
      %1258 = vmatprep.subr.bf16.mxu0 0
      %1259 = vmatpush2.bf16.xpose.msra.mxu0 0
      %1260 = vmatprep.subr.bf16.mxu0 0
      %1261 = vmatpush2.bf16.xpose.msra.mxu0 0
      %1262 = vmatprep.subr.bf16.mxu0 0
      %1263 = vmatpush2.bf16.xpose.msra.mxu0 0
      %1264 = vmatprep.subr.bf16.mxu0 0
      %1265 = vmatpush2.bf16.xpose.msra.mxu0 0
      %1266 = vmatprep.subr.bf16.mxu0 0
      %1267 = vmatpush2.bf16.xpose.msra.mxu0 0
      %1268 = vmatprep.subr.bf16.mxu0 0
      %1269 = vmatpush2.bf16.xpose.msra.mxu0 0
      %1270 = vmatprep.subr.bf16.mxu0 0
      %1271 = vmatpush2.bf16.xpose.msra.mxu0 0
      %1272 = vmatprep.mubr.bf16.mxu0 0
      %1273 = vmatmul.mubr.bf16.gmra.mxu0 %v1235
      %v1274 = vpop.f32.mrf.mxu0
      %v1275 = vadd.f32 %v1079, %v1274
      %v1276 = vpop.f32.mrf.mxu0
      %v1277 = vpop.f32.mrf.mxu0
      %v1278 = vpop.f32.mrf.mxu0
      %1279 = vdwg.mxu0
      %v1280 = vsel %vm393, %v1125, -inf
      %1281 = vmax.xlane.f32.xlu0 %v1280
      %v1282 = vpop.xlane.xlu0 %1281
      %v1283 = vsel %vm393, %v1175, -inf
      %1284 = vmax.xlane.f32.xlu0 %v1283
      %v1285 = vpop.xlane.xlu0 %1284
      %v1286 = vsel %vm393, %v1225, -inf
      %1287 = vmax.xlane.f32.xlu0 %v1286
      %v1288 = vpop.xlane.xlu0 %1287
      %v1289 = vsel %vm393, %v1275, -inf
      %1290 = vmax.xlane.f32.xlu0 %v1289
      %v1291 = vpop.xlane.xlu0 %1290
      %v1292 = vsub.f32 %v1125, %v1282
      %v1293 = vsub.f32 %v1175, %v1285
      %v1294 = vsub.f32 %v1225, %v1288
      %v1295 = vsub.f32 %v1275, %v1291
      %v1296 = vmul.f32 %v1292, 1.442695
      %v1297 = vpow.pop %v1296
      %v1298 = vmul.f32 %v1293, 1.442695
      %v1299 = vpow.pop %v1298
      %v1300 = vmul.f32 %v1294, 1.442695
      %v1301 = vpow.pop %v1300
      %v1302 = vmul.f32 %v1295, 1.442695
      %v1303 = vpow.pop %v1302
      %v1304 = vsel %vm393, %v1297, 0.0
      %1305 = vadd.xlane.f32.xlu0 %v1304
      %v1306 = vpop.xlane.xlu0 %1305
      %v1307 = vsel %vm393, %v1299, 0.0
      %1308 = vadd.xlane.f32.xlu0 %v1307
      %v1309 = vpop.xlane.xlu0 %1308
      %v1310 = vsel %vm393, %v1301, 0.0
      %1311 = vadd.xlane.f32.xlu0 %v1310
      %v1312 = vpop.xlane.xlu0 %1311
      %v1313 = vsel %vm393, %v1303, 0.0
      %1314 = vadd.xlane.f32.xlu0 %v1313
      %v1315 = vpop.xlane.xlu0 %1314
      %v1316 = vrcp.pop %v1306
      %v1317 = vrcp.pop %v1309
      %v1318 = vrcp.pop %v1312
      %v1319 = vrcp.pop %v1315
      %v1320 = vmul.f32 %v1297, %v1316
      %v1321 = vmul.f32 %v1299, %v1317
      %v1322 = vmul.f32 %v1301, %v1318
      %v1323 = vmul.f32 %v1303, %v1319
      %v1324 = vpack.c.bf16 %v1320, %v1320
      %v1325 = vpack.c.bf16 %v1321, %v1321
      %v1326 = vpack.c.bf16 %v1322, %v1322
      %v1327 = vpack.c.bf16 %v1323, %v1323
      %1328 = vrot.lane.b32.xlu0 %v161, 96
      %v1329 = vpop.permute.xlu0 %1328
      %v1330 = vrot.slane %v1329, 2
      %v1332 = vsel %vm443, %v1324, 0
      %v1335 = vsel %vm447, %v1330, 0
      %1337 = vmatprep.subr.bf16.mxu0 0
      %1338 = vmatpush1.bf16.msra.mxu0 0
      %1339 = vmatprep.subr.bf16.mxu0 0
      %1340 = vmatpush1.bf16.msra.mxu0 0
      %1341 = vmatprep.subr.bf16.mxu0 0
      %1342 = vmatpush1.bf16.msra.mxu0 0
      %1343 = vmatprep.subr.bf16.mxu0 0
      %1344 = vmatpush1.bf16.msra.mxu0 0
      %1345 = vmatprep.subr.bf16.mxu0 0
      %1346 = vmatpush1.bf16.msra.mxu0 0
      %1347 = vmatprep.subr.bf16.mxu0 0
      %1348 = vmatpush1.bf16.msra.mxu0 0
      %1349 = vmatprep.subr.bf16.mxu0 0
      %1350 = vmatpush1.bf16.msra.mxu0 0
      %1351 = vmatprep.subr.bf16.mxu0 0
      %1352 = vmatpush1.bf16.msra.mxu0 %v1335
      %1353 = vmatprep.subr.bf16.mxu0 0
      %1354 = vmatpush2.bf16.msra.mxu0 0
      %1355 = vmatprep.subr.bf16.mxu0 0
      %1356 = vmatpush2.bf16.msra.mxu0 0
      %1357 = vmatprep.subr.bf16.mxu0 0
      %1358 = vmatpush2.bf16.msra.mxu0 0
      %1359 = vmatprep.subr.bf16.mxu0 0
      %1360 = vmatpush2.bf16.msra.mxu0 0
      %1361 = vmatprep.subr.bf16.mxu0 0
      %1362 = vmatpush2.bf16.msra.mxu0 0
      %1363 = vmatprep.subr.bf16.mxu0 0
      %1364 = vmatpush2.bf16.msra.mxu0 0
      %1365 = vmatprep.subr.bf16.mxu0 0
      %1366 = vmatpush2.bf16.msra.mxu0 0
      %1367 = vmatprep.subr.bf16.mxu0 0
      %1368 = vmatpush2.bf16.msra.mxu0 0
      %1369 = vmatprep.mubr.bf16.mxu0 0
      %1370 = vmatmul.mubr.bf16.gmra.mxu0 %v1332
      %v1371 = vpop.f32.mrf.mxu0
      %v1372 = vadd.f32 0.0, %v1371
      %v1373 = vpop.f32.mrf.mxu0
      %v1374 = vpop.f32.mrf.mxu0
      %v1375 = vpop.f32.mrf.mxu0
      %1376 = vdwg.mxu0
      %1377 = vrot.lane.b32.xlu0 %v162, 96
      %v1378 = vpop.permute.xlu0 %1377
      %v1379 = vrot.slane %v1378, 2
      %v1381 = vsel %vm443, %v1325, 0
      %v1384 = vsel %vm447, %v1379, 0
      %1386 = vmatprep.subr.bf16.mxu0 0
      %1387 = vmatpush1.bf16.msra.mxu0 0
      %1388 = vmatprep.subr.bf16.mxu0 0
      %1389 = vmatpush1.bf16.msra.mxu0 0
      %1390 = vmatprep.subr.bf16.mxu0 0
      %1391 = vmatpush1.bf16.msra.mxu0 0
      %1392 = vmatprep.subr.bf16.mxu0 0
      %1393 = vmatpush1.bf16.msra.mxu0 0
      %1394 = vmatprep.subr.bf16.mxu0 0
      %1395 = vmatpush1.bf16.msra.mxu0 0
      %1396 = vmatprep.subr.bf16.mxu0 0
      %1397 = vmatpush1.bf16.msra.mxu0 0
      %1398 = vmatprep.subr.bf16.mxu0 0
      %1399 = vmatpush1.bf16.msra.mxu0 0
      %1400 = vmatprep.subr.bf16.mxu0 0
      %1401 = vmatpush1.bf16.msra.mxu0 %v1384
      %1402 = vmatprep.subr.bf16.mxu0 0
      %1403 = vmatpush2.bf16.msra.mxu0 0
      %1404 = vmatprep.subr.bf16.mxu0 0
      %1405 = vmatpush2.bf16.msra.mxu0 0
      %1406 = vmatprep.subr.bf16.mxu0 0
      %1407 = vmatpush2.bf16.msra.mxu0 0
      %1408 = vmatprep.subr.bf16.mxu0 0
      %1409 = vmatpush2.bf16.msra.mxu0 0
      %1410 = vmatprep.subr.bf16.mxu0 0
      %1411 = vmatpush2.bf16.msra.mxu0 0
      %1412 = vmatprep.subr.bf16.mxu0 0
      %1413 = vmatpush2.bf16.msra.mxu0 0
      %1414 = vmatprep.subr.bf16.mxu0 0
      %1415 = vmatpush2.bf16.msra.mxu0 0
      %1416 = vmatprep.subr.bf16.mxu0 0
      %1417 = vmatpush2.bf16.msra.mxu0 0
      %1418 = vmatprep.mubr.bf16.mxu0 0
      %1419 = vmatmul.mubr.bf16.gmra.mxu0 %v1381
      %v1420 = vpop.f32.mrf.mxu0
      %v1421 = vadd.f32 0.0, %v1420
      %v1422 = vpop.f32.mrf.mxu0
      %v1423 = vpop.f32.mrf.mxu0
      %v1424 = vpop.f32.mrf.mxu0
      %1425 = vdwg.mxu0
      %1426 = vrot.lane.b32.xlu0 %v169, 96
      %v1427 = vpop.permute.xlu0 %1426
      %v1428 = vrot.slane %v1427, 2
      %v1430 = vsel %vm443, %v1326, 0
      %v1433 = vsel %vm447, %v1428, 0
      %1435 = vmatprep.subr.bf16.mxu0 0
      %1436 = vmatpush1.bf16.msra.mxu0 0
      %1437 = vmatprep.subr.bf16.mxu0 0
      %1438 = vmatpush1.bf16.msra.mxu0 0
      %1439 = vmatprep.subr.bf16.mxu0 0
      %1440 = vmatpush1.bf16.msra.mxu0 0
      %1441 = vmatprep.subr.bf16.mxu0 0
      %1442 = vmatpush1.bf16.msra.mxu0 0
      %1443 = vmatprep.subr.bf16.mxu0 0
      %1444 = vmatpush1.bf16.msra.mxu0 0
      %1445 = vmatprep.subr.bf16.mxu0 0
      %1446 = vmatpush1.bf16.msra.mxu0 0
      %1447 = vmatprep.subr.bf16.mxu0 0
      %1448 = vmatpush1.bf16.msra.mxu0 0
      %1449 = vmatprep.subr.bf16.mxu0 0
      %1450 = vmatpush1.bf16.msra.mxu0 %v1433
      %1451 = vmatprep.subr.bf16.mxu0 0
      %1452 = vmatpush2.bf16.msra.mxu0 0
      %1453 = vmatprep.subr.bf16.mxu0 0
      %1454 = vmatpush2.bf16.msra.mxu0 0
      %1455 = vmatprep.subr.bf16.mxu0 0
      %1456 = vmatpush2.bf16.msra.mxu0 0
      %1457 = vmatprep.subr.bf16.mxu0 0
      %1458 = vmatpush2.bf16.msra.mxu0 0
      %1459 = vmatprep.subr.bf16.mxu0 0
      %1460 = vmatpush2.bf16.msra.mxu0 0
      %1461 = vmatprep.subr.bf16.mxu0 0
      %1462 = vmatpush2.bf16.msra.mxu0 0
      %1463 = vmatprep.subr.bf16.mxu0 0
      %1464 = vmatpush2.bf16.msra.mxu0 0
      %1465 = vmatprep.subr.bf16.mxu0 0
      %1466 = vmatpush2.bf16.msra.mxu0 0
      %1467 = vmatprep.mubr.bf16.mxu0 0
      %1468 = vmatmul.mubr.bf16.gmra.mxu0 %v1430
      %v1469 = vpop.f32.mrf.mxu0
      %v1470 = vadd.f32 0.0, %v1469
      %v1471 = vpop.f32.mrf.mxu0
      %v1472 = vpop.f32.mrf.mxu0
      %v1473 = vpop.f32.mrf.mxu0
      %1474 = vdwg.mxu0
      %1475 = vrot.lane.b32.xlu0 %v170, 96
      %v1476 = vpop.permute.xlu0 %1475
      %v1477 = vrot.slane %v1476, 2
      %v1479 = vsel %vm443, %v1327, 0
      %v1482 = vsel %vm447, %v1477, 0
      %1484 = vmatprep.subr.bf16.mxu0 0
      %1485 = vmatpush1.bf16.msra.mxu0 0
      %1486 = vmatprep.subr.bf16.mxu0 0
      %1487 = vmatpush1.bf16.msra.mxu0 0
      %1488 = vmatprep.subr.bf16.mxu0 0
      %1489 = vmatpush1.bf16.msra.mxu0 0
      %1490 = vmatprep.subr.bf16.mxu0 0
      %1491 = vmatpush1.bf16.msra.mxu0 0
      %1492 = vmatprep.subr.bf16.mxu0 0
      %1493 = vmatpush1.bf16.msra.mxu0 0
      %1494 = vmatprep.subr.bf16.mxu0 0
      %1495 = vmatpush1.bf16.msra.mxu0 0
      %1496 = vmatprep.subr.bf16.mxu0 0
      %1497 = vmatpush1.bf16.msra.mxu0 0
      %1498 = vmatprep.subr.bf16.mxu0 0
      %1499 = vmatpush1.bf16.msra.mxu0 %v1482
      %1500 = vmatprep.subr.bf16.mxu0 0
      %1501 = vmatpush2.bf16.msra.mxu0 0
      %1502 = vmatprep.subr.bf16.mxu0 0
      %1503 = vmatpush2.bf16.msra.mxu0 0
      %1504 = vmatprep.subr.bf16.mxu0 0
      %1505 = vmatpush2.bf16.msra.mxu0 0
      %1506 = vmatprep.subr.bf16.mxu0 0
      %1507 = vmatpush2.bf16.msra.mxu0 0
      %1508 = vmatprep.subr.bf16.mxu0 0
      %1509 = vmatpush2.bf16.msra.mxu0 0
      %1510 = vmatprep.subr.bf16.mxu0 0
      %1511 = vmatpush2.bf16.msra.mxu0 0
      %1512 = vmatprep.subr.bf16.mxu0 0
      %1513 = vmatpush2.bf16.msra.mxu0 0
      %1514 = vmatprep.subr.bf16.mxu0 0
      %1515 = vmatpush2.bf16.msra.mxu0 0
      %1516 = vmatprep.mubr.bf16.mxu0 0
      %1517 = vmatmul.mubr.bf16.gmra.mxu0 %v1479
      %v1518 = vpop.f32.mrf.mxu0
      %v1519 = vadd.f32 0.0, %v1518
      %v1520 = vpop.f32.mrf.mxu0
      %v1521 = vpop.f32.mrf.mxu0
      %v1522 = vpop.f32.mrf.mxu0
      %1523 = vdwg.mxu0
      %s1524 = scalar_lea.vmem %s1, 12
      %v1525 = vld [vmem:[%s1524] sm:$0xf]
      %1526 = vrot.lane.b32.xlu0 %v178, 80
      %v1527 = vpop.permute.xlu0 %1526
      %1528 = vrot.lane.b32.xlu0 %v178, 16
      %v1529 = vpop.permute.xlu0 %1528
      %v1531 = vsel %vm181, %v1527, 0
      %v1534 = vsel %vm181, %v1529, 0
      %1536 = vmatprep.subr.bf16.mxu0 0
      %1537 = vmatpush1.bf16.xpose.msra.mxu0 0
      %1538 = vmatprep.subr.bf16.mxu0 0
      %1539 = vmatpush1.bf16.xpose.msra.mxu0 0
      %1540 = vmatprep.subr.bf16.mxu0 0
      %1541 = vmatpush1.bf16.xpose.msra.mxu0 0
      %1542 = vmatprep.subr.bf16.mxu0 0
      %1543 = vmatpush1.bf16.xpose.msra.mxu0 0
      %1544 = vmatprep.subr.bf16.mxu0 0
      %1545 = vmatpush1.bf16.xpose.msra.mxu0 0
      %1546 = vmatprep.subr.bf16.mxu0 0
      %1547 = vmatpush1.bf16.xpose.msra.mxu0 0
      %1548 = vmatprep.subr.bf16.mxu0 0
      %1549 = vmatpush1.bf16.xpose.msra.mxu0 0
      %1550 = vmatprep.subr.bf16.mxu0 0
      %1551 = vmatpush1.bf16.xpose.msra.mxu0 %v1534
      %1552 = vmatprep.subr.bf16.mxu0 0
      %1553 = vmatpush2.bf16.xpose.msra.mxu0 0
      %1554 = vmatprep.subr.bf16.mxu0 0
      %1555 = vmatpush2.bf16.xpose.msra.mxu0 0
      %1556 = vmatprep.subr.bf16.mxu0 0
      %1557 = vmatpush2.bf16.xpose.msra.mxu0 0
      %1558 = vmatprep.subr.bf16.mxu0 0
      %1559 = vmatpush2.bf16.xpose.msra.mxu0 0
      %1560 = vmatprep.subr.bf16.mxu0 0
      %1561 = vmatpush2.bf16.xpose.msra.mxu0 0
      %1562 = vmatprep.subr.bf16.mxu0 0
      %1563 = vmatpush2.bf16.xpose.msra.mxu0 0
      %1564 = vmatprep.subr.bf16.mxu0 0
      %1565 = vmatpush2.bf16.xpose.msra.mxu0 0
      %1566 = vmatprep.subr.bf16.mxu0 0
      %1567 = vmatpush2.bf16.xpose.msra.mxu0 0
      %1568 = vmatprep.mubr.bf16.mxu0 0
      %1569 = vmatmul.mubr.bf16.gmra.mxu0 %v1531
      %v1570 = vpop.f32.mrf.mxu0
      %v1571 = vadd.f32 %v1525, %v1570
      %v1572 = vpop.f32.mrf.mxu0
      %v1573 = vpop.f32.mrf.mxu0
      %v1574 = vpop.f32.mrf.mxu0
      %1575 = vdwg.mxu0
      %1576 = vrot.lane.b32.xlu0 %v234, 80
      %v1577 = vpop.permute.xlu0 %1576
      %1578 = vrot.lane.b32.xlu0 %v234, 16
      %v1579 = vpop.permute.xlu0 %1578
      %v1581 = vsel %vm181, %v1577, 0
      %v1584 = vsel %vm181, %v1579, 0
      %1586 = vmatprep.subr.bf16.mxu0 0
      %1587 = vmatpush1.bf16.xpose.msra.mxu0 0
      %1588 = vmatprep.subr.bf16.mxu0 0
      %1589 = vmatpush1.bf16.xpose.msra.mxu0 0
      %1590 = vmatprep.subr.bf16.mxu0 0
      %1591 = vmatpush1.bf16.xpose.msra.mxu0 0
      %1592 = vmatprep.subr.bf16.mxu0 0
      %1593 = vmatpush1.bf16.xpose.msra.mxu0 0
      %1594 = vmatprep.subr.bf16.mxu0 0
      %1595 = vmatpush1.bf16.xpose.msra.mxu0 0
      %1596 = vmatprep.subr.bf16.mxu0 0
      %1597 = vmatpush1.bf16.xpose.msra.mxu0 0
      %1598 = vmatprep.subr.bf16.mxu0 0
      %1599 = vmatpush1.bf16.xpose.msra.mxu0 0
      %1600 = vmatprep.subr.bf16.mxu0 0
      %1601 = vmatpush1.bf16.xpose.msra.mxu0 %v1584
      %1602 = vmatprep.subr.bf16.mxu0 0
      %1603 = vmatpush2.bf16.xpose.msra.mxu0 0
      %1604 = vmatprep.subr.bf16.mxu0 0
      %1605 = vmatpush2.bf16.xpose.msra.mxu0 0
      %1606 = vmatprep.subr.bf16.mxu0 0
      %1607 = vmatpush2.bf16.xpose.msra.mxu0 0
      %1608 = vmatprep.subr.bf16.mxu0 0
      %1609 = vmatpush2.bf16.xpose.msra.mxu0 0
      %1610 = vmatprep.subr.bf16.mxu0 0
      %1611 = vmatpush2.bf16.xpose.msra.mxu0 0
      %1612 = vmatprep.subr.bf16.mxu0 0
      %1613 = vmatpush2.bf16.xpose.msra.mxu0 0
      %1614 = vmatprep.subr.bf16.mxu0 0
      %1615 = vmatpush2.bf16.xpose.msra.mxu0 0
      %1616 = vmatprep.subr.bf16.mxu0 0
      %1617 = vmatpush2.bf16.xpose.msra.mxu0 0
      %1618 = vmatprep.mubr.bf16.mxu0 0
      %1619 = vmatmul.mubr.bf16.gmra.mxu0 %v1581
      %v1620 = vpop.f32.mrf.mxu0
      %v1621 = vadd.f32 %v1525, %v1620
      %v1622 = vpop.f32.mrf.mxu0
      %v1623 = vpop.f32.mrf.mxu0
      %v1624 = vpop.f32.mrf.mxu0
      %1625 = vdwg.mxu0
      %1626 = vrot.lane.b32.xlu0 %v289, 80
      %v1627 = vpop.permute.xlu0 %1626
      %1628 = vrot.lane.b32.xlu0 %v289, 16
      %v1629 = vpop.permute.xlu0 %1628
      %v1631 = vsel %vm181, %v1627, 0
      %v1634 = vsel %vm181, %v1629, 0
      %1636 = vmatprep.subr.bf16.mxu0 0
      %1637 = vmatpush1.bf16.xpose.msra.mxu0 0
      %1638 = vmatprep.subr.bf16.mxu0 0
      %1639 = vmatpush1.bf16.xpose.msra.mxu0 0
      %1640 = vmatprep.subr.bf16.mxu0 0
      %1641 = vmatpush1.bf16.xpose.msra.mxu0 0
      %1642 = vmatprep.subr.bf16.mxu0 0
      %1643 = vmatpush1.bf16.xpose.msra.mxu0 0
      %1644 = vmatprep.subr.bf16.mxu0 0
      %1645 = vmatpush1.bf16.xpose.msra.mxu0 0
      %1646 = vmatprep.subr.bf16.mxu0 0
      %1647 = vmatpush1.bf16.xpose.msra.mxu0 0
      %1648 = vmatprep.subr.bf16.mxu0 0
      %1649 = vmatpush1.bf16.xpose.msra.mxu0 0
      %1650 = vmatprep.subr.bf16.mxu0 0
      %1651 = vmatpush1.bf16.xpose.msra.mxu0 %v1634
      %1652 = vmatprep.subr.bf16.mxu0 0
      %1653 = vmatpush2.bf16.xpose.msra.mxu0 0
      %1654 = vmatprep.subr.bf16.mxu0 0
      %1655 = vmatpush2.bf16.xpose.msra.mxu0 0
      %1656 = vmatprep.subr.bf16.mxu0 0
      %1657 = vmatpush2.bf16.xpose.msra.mxu0 0
      %1658 = vmatprep.subr.bf16.mxu0 0
      %1659 = vmatpush2.bf16.xpose.msra.mxu0 0
      %1660 = vmatprep.subr.bf16.mxu0 0
      %1661 = vmatpush2.bf16.xpose.msra.mxu0 0
      %1662 = vmatprep.subr.bf16.mxu0 0
      %1663 = vmatpush2.bf16.xpose.msra.mxu0 0
      %1664 = vmatprep.subr.bf16.mxu0 0
      %1665 = vmatpush2.bf16.xpose.msra.mxu0 0
      %1666 = vmatprep.subr.bf16.mxu0 0
      %1667 = vmatpush2.bf16.xpose.msra.mxu0 0
      %1668 = vmatprep.mubr.bf16.mxu0 0
      %1669 = vmatmul.mubr.bf16.gmra.mxu0 %v1631
      %v1670 = vpop.f32.mrf.mxu0
      %v1671 = vadd.f32 %v1525, %v1670
      %v1672 = vpop.f32.mrf.mxu0
      %v1673 = vpop.f32.mrf.mxu0
      %v1674 = vpop.f32.mrf.mxu0
      %1675 = vdwg.mxu0
      %1676 = vrot.lane.b32.xlu0 %v344, 80
      %v1677 = vpop.permute.xlu0 %1676
      %1678 = vrot.lane.b32.xlu0 %v344, 16
      %v1679 = vpop.permute.xlu0 %1678
      %v1681 = vsel %vm181, %v1677, 0
      %v1684 = vsel %vm181, %v1679, 0
      %1686 = vmatprep.subr.bf16.mxu0 0
      %1687 = vmatpush1.bf16.xpose.msra.mxu0 0
      %1688 = vmatprep.subr.bf16.mxu0 0
      %1689 = vmatpush1.bf16.xpose.msra.mxu0 0
      %1690 = vmatprep.subr.bf16.mxu0 0
      %1691 = vmatpush1.bf16.xpose.msra.mxu0 0
      %1692 = vmatprep.subr.bf16.mxu0 0
      %1693 = vmatpush1.bf16.xpose.msra.mxu0 0
      %1694 = vmatprep.subr.bf16.mxu0 0
      %1695 = vmatpush1.bf16.xpose.msra.mxu0 0
      %1696 = vmatprep.subr.bf16.mxu0 0
      %1697 = vmatpush1.bf16.xpose.msra.mxu0 0
      %1698 = vmatprep.subr.bf16.mxu0 0
      %1699 = vmatpush1.bf16.xpose.msra.mxu0 0
      %1700 = vmatprep.subr.bf16.mxu0 0
      %1701 = vmatpush1.bf16.xpose.msra.mxu0 %v1684
      %1702 = vmatprep.subr.bf16.mxu0 0
      %1703 = vmatpush2.bf16.xpose.msra.mxu0 0
      %1704 = vmatprep.subr.bf16.mxu0 0
      %1705 = vmatpush2.bf16.xpose.msra.mxu0 0
      %1706 = vmatprep.subr.bf16.mxu0 0
      %1707 = vmatpush2.bf16.xpose.msra.mxu0 0
      %1708 = vmatprep.subr.bf16.mxu0 0
      %1709 = vmatpush2.bf16.xpose.msra.mxu0 0
      %1710 = vmatprep.subr.bf16.mxu0 0
      %1711 = vmatpush2.bf16.xpose.msra.mxu0 0
      %1712 = vmatprep.subr.bf16.mxu0 0
      %1713 = vmatpush2.bf16.xpose.msra.mxu0 0
      %1714 = vmatprep.subr.bf16.mxu0 0
      %1715 = vmatpush2.bf16.xpose.msra.mxu0 0
      %1716 = vmatprep.subr.bf16.mxu0 0
      %1717 = vmatpush2.bf16.xpose.msra.mxu0 0
      %1718 = vmatprep.mubr.bf16.mxu0 0
      %1719 = vmatmul.mubr.bf16.gmra.mxu0 %v1681
      %v1720 = vpop.f32.mrf.mxu0
      %v1721 = vadd.f32 %v1525, %v1720
      %v1722 = vpop.f32.mrf.mxu0
      %v1723 = vpop.f32.mrf.mxu0
      %v1724 = vpop.f32.mrf.mxu0
      %1725 = vdwg.mxu0
      %v1726 = vsel %vm393, %v1571, -inf
      %1727 = vmax.xlane.f32.xlu0 %v1726
      %v1728 = vpop.xlane.xlu0 %1727
      %v1729 = vsel %vm393, %v1621, -inf
      %1730 = vmax.xlane.f32.xlu0 %v1729
      %v1731 = vpop.xlane.xlu0 %1730
      %v1732 = vsel %vm393, %v1671, -inf
      %1733 = vmax.xlane.f32.xlu0 %v1732
      %v1734 = vpop.xlane.xlu0 %1733
      %v1735 = vsel %vm393, %v1721, -inf
      %1736 = vmax.xlane.f32.xlu0 %v1735
      %v1737 = vpop.xlane.xlu0 %1736
      %v1738 = vsub.f32 %v1571, %v1728
      %v1739 = vsub.f32 %v1621, %v1731
      %v1740 = vsub.f32 %v1671, %v1734
      %v1741 = vsub.f32 %v1721, %v1737
      %v1742 = vmul.f32 %v1738, 1.442695
      %v1743 = vpow.pop %v1742
      %v1744 = vmul.f32 %v1739, 1.442695
      %v1745 = vpow.pop %v1744
      %v1746 = vmul.f32 %v1740, 1.442695
      %v1747 = vpow.pop %v1746
      %v1748 = vmul.f32 %v1741, 1.442695
      %v1749 = vpow.pop %v1748
      %v1750 = vsel %vm393, %v1743, 0.0
      %1751 = vadd.xlane.f32.xlu0 %v1750
      %v1752 = vpop.xlane.xlu0 %1751
      %v1753 = vsel %vm393, %v1745, 0.0
      %1754 = vadd.xlane.f32.xlu0 %v1753
      %v1755 = vpop.xlane.xlu0 %1754
      %v1756 = vsel %vm393, %v1747, 0.0
      %1757 = vadd.xlane.f32.xlu0 %v1756
      %v1758 = vpop.xlane.xlu0 %1757
      %v1759 = vsel %vm393, %v1749, 0.0
      %1760 = vadd.xlane.f32.xlu0 %v1759
      %v1761 = vpop.xlane.xlu0 %1760
      %v1762 = vrcp.pop %v1752
      %v1763 = vrcp.pop %v1755
      %v1764 = vrcp.pop %v1758
      %v1765 = vrcp.pop %v1761
      %v1766 = vmul.f32 %v1743, %v1762
      %v1767 = vmul.f32 %v1745, %v1763
      %v1768 = vmul.f32 %v1747, %v1764
      %v1769 = vmul.f32 %v1749, %v1765
      %v1770 = vpack.c.bf16 %v1766, %v1766
      %v1771 = vpack.c.bf16 %v1767, %v1767
      %v1772 = vpack.c.bf16 %v1768, %v1768
      %v1773 = vpack.c.bf16 %v1769, %v1769
      %1774 = vrot.lane.b32.xlu0 %v161, 80
      %v1775 = vpop.permute.xlu0 %1774
      %v1776 = vrot.slane %v1775, 2
      %v1778 = vsel %vm443, %v1770, 0
      %v1781 = vsel %vm447, %v1776, 0
      %1783 = vmatprep.subr.bf16.mxu0 0
      %1784 = vmatpush1.bf16.msra.mxu0 0
      %1785 = vmatprep.subr.bf16.mxu0 0
      %1786 = vmatpush1.bf16.msra.mxu0 0
      %1787 = vmatprep.subr.bf16.mxu0 0
      %1788 = vmatpush1.bf16.msra.mxu0 0
      %1789 = vmatprep.subr.bf16.mxu0 0
      %1790 = vmatpush1.bf16.msra.mxu0 0
      %1791 = vmatprep.subr.bf16.mxu0 0
      %1792 = vmatpush1.bf16.msra.mxu0 0
      %1793 = vmatprep.subr.bf16.mxu0 0
      %1794 = vmatpush1.bf16.msra.mxu0 0
      %1795 = vmatprep.subr.bf16.mxu0 0
      %1796 = vmatpush1.bf16.msra.mxu0 0
      %1797 = vmatprep.subr.bf16.mxu0 0
      %1798 = vmatpush1.bf16.msra.mxu0 %v1781
      %1799 = vmatprep.subr.bf16.mxu0 0
      %1800 = vmatpush2.bf16.msra.mxu0 0
      %1801 = vmatprep.subr.bf16.mxu0 0
      %1802 = vmatpush2.bf16.msra.mxu0 0
      %1803 = vmatprep.subr.bf16.mxu0 0
      %1804 = vmatpush2.bf16.msra.mxu0 0
      %1805 = vmatprep.subr.bf16.mxu0 0
      %1806 = vmatpush2.bf16.msra.mxu0 0
      %1807 = vmatprep.subr.bf16.mxu0 0
      %1808 = vmatpush2.bf16.msra.mxu0 0
      %1809 = vmatprep.subr.bf16.mxu0 0
      %1810 = vmatpush2.bf16.msra.mxu0 0
      %1811 = vmatprep.subr.bf16.mxu0 0
      %1812 = vmatpush2.bf16.msra.mxu0 0
      %1813 = vmatprep.subr.bf16.mxu0 0
      %1814 = vmatpush2.bf16.msra.mxu0 0
      %1815 = vmatprep.mubr.bf16.mxu0 0
      %1816 = vmatmul.mubr.bf16.gmra.mxu0 %v1778
      %v1817 = vpop.f32.mrf.mxu0
      %v1818 = vadd.f32 0.0, %v1817
      %v1819 = vpop.f32.mrf.mxu0
      %v1820 = vpop.f32.mrf.mxu0
      %v1821 = vpop.f32.mrf.mxu0
      %1822 = vdwg.mxu0
      %1823 = vrot.lane.b32.xlu0 %v162, 80
      %v1824 = vpop.permute.xlu0 %1823
      %v1825 = vrot.slane %v1824, 2
      %v1827 = vsel %vm443, %v1771, 0
      %v1830 = vsel %vm447, %v1825, 0
      %1832 = vmatprep.subr.bf16.mxu0 0
      %1833 = vmatpush1.bf16.msra.mxu0 0
      %1834 = vmatprep.subr.bf16.mxu0 0
      %1835 = vmatpush1.bf16.msra.mxu0 0
      %1836 = vmatprep.subr.bf16.mxu0 0
      %1837 = vmatpush1.bf16.msra.mxu0 0
      %1838 = vmatprep.subr.bf16.mxu0 0
      %1839 = vmatpush1.bf16.msra.mxu0 0
      %1840 = vmatprep.subr.bf16.mxu0 0
      %1841 = vmatpush1.bf16.msra.mxu0 0
      %1842 = vmatprep.subr.bf16.mxu0 0
      %1843 = vmatpush1.bf16.msra.mxu0 0
      %1844 = vmatprep.subr.bf16.mxu0 0
      %1845 = vmatpush1.bf16.msra.mxu0 0
      %1846 = vmatprep.subr.bf16.mxu0 0
      %1847 = vmatpush1.bf16.msra.mxu0 %v1830
      %1848 = vmatprep.subr.bf16.mxu0 0
      %1849 = vmatpush2.bf16.msra.mxu0 0
      %1850 = vmatprep.subr.bf16.mxu0 0
      %1851 = vmatpush2.bf16.msra.mxu0 0
      %1852 = vmatprep.subr.bf16.mxu0 0
      %1853 = vmatpush2.bf16.msra.mxu0 0
      %1854 = vmatprep.subr.bf16.mxu0 0
      %1855 = vmatpush2.bf16.msra.mxu0 0
      %1856 = vmatprep.subr.bf16.mxu0 0
      %1857 = vmatpush2.bf16.msra.mxu0 0
      %1858 = vmatprep.subr.bf16.mxu0 0
      %1859 = vmatpush2.bf16.msra.mxu0 0
      %1860 = vmatprep.subr.bf16.mxu0 0
      %1861 = vmatpush2.bf16.msra.mxu0 0
      %1862 = vmatprep.subr.bf16.mxu0 0
      %1863 = vmatpush2.bf16.msra.mxu0 0
      %1864 = vmatprep.mubr.bf16.mxu0 0
      %1865 = vmatmul.mubr.bf16.gmra.mxu0 %v1827
      %v1866 = vpop.f32.mrf.mxu0
      %v1867 = vadd.f32 0.0, %v1866
      %v1868 = vpop.f32.mrf.mxu0
      %v1869 = vpop.f32.mrf.mxu0
      %v1870 = vpop.f32.mrf.mxu0
      %1871 = vdwg.mxu0
      %1872 = vrot.lane.b32.xlu0 %v169, 80
      %v1873 = vpop.permute.xlu0 %1872
      %v1874 = vrot.slane %v1873, 2
      %v1876 = vsel %vm443, %v1772, 0
      %v1879 = vsel %vm447, %v1874, 0
      %1881 = vmatprep.subr.bf16.mxu0 0
      %1882 = vmatpush1.bf16.msra.mxu0 0
      %1883 = vmatprep.subr.bf16.mxu0 0
      %1884 = vmatpush1.bf16.msra.mxu0 0
      %1885 = vmatprep.subr.bf16.mxu0 0
      %1886 = vmatpush1.bf16.msra.mxu0 0
      %1887 = vmatprep.subr.bf16.mxu0 0
      %1888 = vmatpush1.bf16.msra.mxu0 0
      %1889 = vmatprep.subr.bf16.mxu0 0
      %1890 = vmatpush1.bf16.msra.mxu0 0
      %1891 = vmatprep.subr.bf16.mxu0 0
      %1892 = vmatpush1.bf16.msra.mxu0 0
      %1893 = vmatprep.subr.bf16.mxu0 0
      %1894 = vmatpush1.bf16.msra.mxu0 0
      %1895 = vmatprep.subr.bf16.mxu0 0
      %1896 = vmatpush1.bf16.msra.mxu0 %v1879
      %1897 = vmatprep.subr.bf16.mxu0 0
      %1898 = vmatpush2.bf16.msra.mxu0 0
      %1899 = vmatprep.subr.bf16.mxu0 0
      %1900 = vmatpush2.bf16.msra.mxu0 0
      %1901 = vmatprep.subr.bf16.mxu0 0
      %1902 = vmatpush2.bf16.msra.mxu0 0
      %1903 = vmatprep.subr.bf16.mxu0 0
      %1904 = vmatpush2.bf16.msra.mxu0 0
      %1905 = vmatprep.subr.bf16.mxu0 0
      %1906 = vmatpush2.bf16.msra.mxu0 0
      %1907 = vmatprep.subr.bf16.mxu0 0
      %1908 = vmatpush2.bf16.msra.mxu0 0
      %1909 = vmatprep.subr.bf16.mxu0 0
      %1910 = vmatpush2.bf16.msra.mxu0 0
      %1911 = vmatprep.subr.bf16.mxu0 0
      %1912 = vmatpush2.bf16.msra.mxu0 0
      %1913 = vmatprep.mubr.bf16.mxu0 0
      %1914 = vmatmul.mubr.bf16.gmra.mxu0 %v1876
      %v1915 = vpop.f32.mrf.mxu0
      %v1916 = vadd.f32 0.0, %v1915
      %v1917 = vpop.f32.mrf.mxu0
      %v1918 = vpop.f32.mrf.mxu0
      %v1919 = vpop.f32.mrf.mxu0
      %1920 = vdwg.mxu0
      %1921 = vrot.lane.b32.xlu0 %v170, 80
      %v1922 = vpop.permute.xlu0 %1921
      %v1923 = vrot.slane %v1922, 2
      %v1925 = vsel %vm443, %v1773, 0
      %v1928 = vsel %vm447, %v1923, 0
      %1930 = vmatprep.subr.bf16.mxu0 0
      %1931 = vmatpush1.bf16.msra.mxu0 0
      %1932 = vmatprep.subr.bf16.mxu0 0
      %1933 = vmatpush1.bf16.msra.mxu0 0
      %1934 = vmatprep.subr.bf16.mxu0 0
      %1935 = vmatpush1.bf16.msra.mxu0 0
      %1936 = vmatprep.subr.bf16.mxu0 0
      %1937 = vmatpush1.bf16.msra.mxu0 0
      %1938 = vmatprep.subr.bf16.mxu0 0
      %1939 = vmatpush1.bf16.msra.mxu0 0
      %1940 = vmatprep.subr.bf16.mxu0 0
      %1941 = vmatpush1.bf16.msra.mxu0 0
      %1942 = vmatprep.subr.bf16.mxu0 0
      %1943 = vmatpush1.bf16.msra.mxu0 0
      %1944 = vmatprep.subr.bf16.mxu0 0
      %1945 = vmatpush1.bf16.msra.mxu0 %v1928
      %1946 = vmatprep.subr.bf16.mxu0 0
      %1947 = vmatpush2.bf16.msra.mxu0 0
      %1948 = vmatprep.subr.bf16.mxu0 0
      %1949 = vmatpush2.bf16.msra.mxu0 0
      %1950 = vmatprep.subr.bf16.mxu0 0
      %1951 = vmatpush2.bf16.msra.mxu0 0
      %1952 = vmatprep.subr.bf16.mxu0 0
      %1953 = vmatpush2.bf16.msra.mxu0 0
      %1954 = vmatprep.subr.bf16.mxu0 0
      %1955 = vmatpush2.bf16.msra.mxu0 0
      %1956 = vmatprep.subr.bf16.mxu0 0
      %1957 = vmatpush2.bf16.msra.mxu0 0
      %1958 = vmatprep.subr.bf16.mxu0 0
      %1959 = vmatpush2.bf16.msra.mxu0 0
      %1960 = vmatprep.subr.bf16.mxu0 0
      %1961 = vmatpush2.bf16.msra.mxu0 0
      %1962 = vmatprep.mubr.bf16.mxu0 0
      %1963 = vmatmul.mubr.bf16.gmra.mxu0 %v1925
      %v1964 = vpop.f32.mrf.mxu0
      %v1965 = vadd.f32 0.0, %v1964
      %v1966 = vpop.f32.mrf.mxu0
      %v1967 = vpop.f32.mrf.mxu0
      %v1968 = vpop.f32.mrf.mxu0
      %1969 = vdwg.mxu0
      %1974 = vrot.lane.b32.xlu0 %v926, 16
      %v1975 = vpop.permute.xlu0 %1974
      %1976 = vrot.lane.b32.xlu0 %v975, 16
      %v1977 = vpop.permute.xlu0 %1976
      %1978 = vrot.lane.b32.xlu0 %v1024, 16
      %v1979 = vpop.permute.xlu0 %1978
      %1980 = vrot.lane.b32.xlu0 %v1073, 16
      %v1981 = vpop.permute.xlu0 %1980
      %1990 = vrot.lane.b32.xlu0 %v1372, 32
      %v1991 = vpop.permute.xlu0 %1990
      %1992 = vrot.lane.b32.xlu0 %v1421, 32
      %v1993 = vpop.permute.xlu0 %1992
      %1994 = vrot.lane.b32.xlu0 %v1470, 32
      %v1995 = vpop.permute.xlu0 %1994
      %1996 = vrot.lane.b32.xlu0 %v1519, 32
      %v1997 = vpop.permute.xlu0 %1996
      %2006 = vrot.lane.b32.xlu0 %v1818, 48
      %v2007 = vpop.permute.xlu0 %2006
      %2008 = vrot.lane.b32.xlu0 %v1867, 48
      %v2009 = vpop.permute.xlu0 %2008
      %2010 = vrot.lane.b32.xlu0 %v1916, 48
      %v2011 = vpop.permute.xlu0 %2010
      %2012 = vrot.lane.b32.xlu0 %v1965, 48
      %v2013 = vpop.permute.xlu0 %2012
      %v2018 = vsel %vm181, %v486, %v1975
      %v2019 = vsel %vm181, %v533, %v1977
      %v2020 = vsel %vm181, %v580, %v1979
      %v2021 = vsel %vm181, %v627, %v1981
      %vm2022 = vcmask 261120
      %v2023 = vsel %vm2022, %v2018, %v1991
      %v2024 = vsel %vm2022, %v2019, %v1993
      %v2025 = vsel %vm2022, %v2020, %v1995
      %v2026 = vsel %vm2022, %v2021, %v1997
      %vm2027 = vcmask 392192
      %v2028 = vsel %vm2027, %v2023, %v2007
      %v2029 = vsel %vm2027, %v2024, %v2009
      %v2030 = vsel %vm2027, %v2025, %v2011
      %v2031 = vsel %vm2027, %v2026, %v2013
      %v2036 = vcombine.low %v2028, %v2029
      %v2037 = vcombine.low %v2030, %v2031
      %v2040 = vpack.c.bf16 %v2037, %v2036
      %v2042 = vunpack.c.l.b16 %v2040
      %v2043 = vunpack.c.h.b16 %v2040
      %v2044 = vpack.c.b16 %v2042, %v2042
      %v2045 = vpack.c.b16 %v2043, %v2043
      %vm2048 = vcmask 519168
      %2049 = vst.msk [vmem:[%s148] sm:$0xf] %vm2048, %v2044
      %2050 = vst.msk [vmem:[%s148 + $0x4] sm:$0xf] %vm2048, %v2045
      %s2051 = smul.u32 2, %s13
      %p2052 = scmp.lt.s32.totalorder %s2051, 3
      %s2053 = scalar_select %p2052, %s2051, 3
      %s2054 = smul.addr %s2053, 4
      %s2055 = scalar_lea.vmem %s2, %s2054
      // Predicated region
      $region29: #{_lambda_.23} parent=27 // pred_check
        %p2056 = pneg %p78
      $region30: #{_lambda_.23} parent=27 // pred_check_branch
        %2058 = sbr.rel (%p2056) target = $region32
      $region31: #{_lambda_.23} parent=27 // pred_region
        %s2059 = smul.u32 2, %s13
      $region32: #{_lambda_.23} parent=27 // pred_fallthru
        _
    $region28: #{_lambda_.23} parent=5 // pred_fallthru
      _
    %p2060 = scmp.le.s32.totalorder 2, %s8
    // Predicated region
    $region33: #{_lambda_.23} parent=5 // pred_check
      %p2061 = pneg %p2060
    $region34: #{_lambda_.23} parent=5 // pred_check_branch
      %2063 = sbr.rel (%p2061) target = $region36
    $region35: #{_lambda_.23} parent=5 // pred_region
      %s2064 = ssub.s32 %s8, 2
      // Predicated region
      $region37: #{_lambda_.23} parent=35 // pred_check
        %p2065 = pneg %p84
      $region38: #{_lambda_.23} parent=35 // pred_check_branch
        %2067 = sbr.rel (%p2065) target = $region40
      $region39: #{_lambda_.23} parent=35 // pred_region
        %s2068 = smul.u32 2, %s14
        %p2069 = scmp.lt.s32.totalorder %s2068, 3
        %s2070 = scalar_select %p2069, %s2068, 3
        %s2071 = smul.addr %s2070, 4
        %s2072 = scalar_lea.vmem %s2, %s2071
      $region40: #{_lambda_.23} parent=35 // pred_fallthru
        _
    $region36: #{_lambda_.23} parent=5 // pred_fallthru
      _
  $region6: #{_lambda_.23} parent=0 // loop_footer
    %s12 = sadd.s32 1, %s8
  $region7: #{_lambda_.23} parent=0 // loop_footer_branch
    %7 = sbr.rel target = $region3
  $region8: #{_lambda_.23} parent=0 // loop_exit
    _

</llo_original>
